<compile_context>
chip_gen: v7x
topology: tpu7x:2x2x1
jax: 0.10.0
libtpu: 0.0.40
codegen_flags: <defaults>
</compile_context>

<pallas_src>
import functools

import jax
import jax.numpy as jnp
from jax.experimental import pallas as pl
from jax.experimental.pallas import tpu as pltpu

EXPANSION = 2  # Bottleneck.expansion in the pose-hourglass model


# ------------------------------ small helpers -------------------------------

def _rep_spec(shape):
    # operand replicated across the (1-D) grid
    return pl.BlockSpec(shape, lambda i: (0,) * len(shape))


def _pick_tm(m, row_bytes=512, vmem_budget=8 << 20):
    """Largest row-tile that divides m, fits a VMEM budget, and (preferably)
    leaves >= 2 grid steps so v7x can shard across its two TensorCores."""
    cap = max(1, vmem_budget // max(row_bytes, 1))
    cands = (1024, 512, 256, 128, 64, 32, 16, 8, 4, 2, 1)
    for tm in cands:
        if tm <= cap and m % tm == 0 and m // tm >= 2:
            return tm
    for tm in cands:
        if tm <= cap and m % tm == 0:
            return tm
    return 1


# ----------------------------- Pallas kernels -------------------------------

def _bottleneck_kernel(x_ref, s1_ref, t1_ref, w1_ref, b1_ref,
                       w2_ref, b2_ref, w3_ref, b3_ref,
                       o_ref, ap_ref, *, H, W):
    """Fused pre-activation Bottleneck for one batch element (rows = H*W)."""
    HW = H * W
    P = w1_ref.shape[1]

    x = x_ref[0]                                               # (HW, C) f32
    # relu(bn1(x))
    a1 = jnp.maximum(x * s1_ref[...] + t1_ref[...], 0.0)
    # conv1 (1x1) with bn2 folded into (w1, b1), then relu
    y1 = jnp.dot(a1.astype(jnp.bfloat16), w1_ref[...],
                 preferred_element_type=jnp.float32) + b1_ref[...]
    a2 = jnp.maximum(y1, 0.0)                                  # (HW, P) f32

    # Stage the activation for the 3x3 conv in VMEM, flat row-major with
    # (W + 1) zero guard rows on each side so row shifts outside the image
    # read zeros.
    ap_ref[...] = jnp.zeros_like(ap_ref)
    ap_ref[W + 1:W + 1 + HW, :] = a2.astype(jnp.bfloat16)

    # Column index of every flattened pixel (for masking the dx != 1 taps
    # that would otherwise wrap across image rows).
    wi = jax.lax.broadcasted_iota(jnp.int32, (HW, 1), 0) % W

    # 3x3 conv (bn3 folded into w2/b2) as 9 shifted accumulating matmuls.
    acc = jnp.zeros((HW, P), jnp.float32)
    for dy in range(3):
        for dx in range(3):
            off = (W + 1) + (dy - 1) * W + (dx - 1)
            patch = ap_ref[off:off + HW, :]                    # (HW, P) bf16
            if dx == 0:        # source column w-1: invalid where w == 0
                patch = jnp.where(wi >= 1, patch, jnp.zeros_like(patch))
            elif dx == 2:      # source column w+1: invalid where w == W-1
                patch = jnp.where(wi <= W - 2, patch, jnp.zeros_like(patch))
            acc = acc + jnp.dot(patch, w2_ref[dy * 3 + dx],
                                preferred_element_type=jnp.float32)

    a3 = jnp.maximum(acc + b2_ref[...], 0.0)                   # relu(bn3(.))
    # conv3 (1x1) + residual
    y3 = jnp.dot(a3.astype(jnp.bfloat16), w3_ref[...],
                 preferred_element_type=jnp.float32) + b3_ref[...]
    o_ref[0] = y3 + x


def _maxpool_kernel(x_ref, o_ref, *, C):
    # x block: (tm, 2, W/2, 2C) — the two pool rows and the two pool columns
    # (interleaved with channels) of tm pooled output rows.
    x = x_ref[...]
    hm = jnp.maximum(x[:, 0], x[:, 1])                         # (tm, W/2, 2C)
    o_ref[...] = jnp.maximum(hm[:, :, :C], hm[:, :, C:])       # (tm, W/2, C)


def _upadd_kernel(up_ref, low_ref, o_ref):
    # out = up1 + nearest_upsample_2x(low3), fused (no up2 materialization).
    lo = low_ref[...]                                          # (tm, w, C)
    lo2 = jnp.concatenate([lo, lo], axis=-1)                   # (tm, w, 2C)
    o_ref[...] = up_ref[...] + lo2[:, None, :, :]              # (tm, 2, w, 2C)


# --------------------------- pallas_call wrappers ----------------------------

def bottleneck_call(x, prm):
    n, h, w, c = x.shape
    p = prm["w1"].shape[1]
    hw = h * w
    x3 = x.reshape(n, hw, c)
    out = pl.pallas_call(
        functools.partial(_bottleneck_kernel, H=h, W=w),
        out_shape=jax.ShapeDtypeStruct((n, hw, c), jnp.float32),
        grid=(n,),
        in_specs=[
            pl.BlockSpec((1, hw, c), lambda i: (i, 0, 0)),
            _rep_spec((1, c)), _rep_spec((1, c)),              # s1, t1
            _rep_spec((c, p)), _rep_spec((1, p)),              # w1, b1 (bn2 folded)
            _rep_spec((9, p, p)), _rep_spec((1, p)),           # w2, b2 (bn3 folded)
            _rep_spec((p, c)), _rep_spec((1, c)),              # w3, b3
        ],
        out_specs=pl.BlockSpec((1, hw, c), lambda i: (i, 0, 0)),
        scratch_shapes=[pltpu.VMEM((hw + 2 * (w + 1), p), jnp.bfloat16)],
        compiler_params=pltpu.CompilerParams(
            dimension_semantics=("parallel",),
            vmem_limit_bytes=48 * 1024 * 1024),
    )(x3, prm["s1"], prm["t1"], prm["w1"], prm["b1"],
      prm["w2"], prm["b2"], prm["w3"], prm["b3"])
    return out.reshape(n, h, w, c)


def maxpool2x2(x):  # NHWC -> (N, H//2, W//2, C)
    n, h, w, c = x.shape
    assert h % 2 == 0 and w % 2 == 0, (h, w)
    hh, wh = h // 2, w // 2
    rows = n * hh
    xr = x.reshape(rows, 2, wh, 2 * c)          # pure reshape, no gather copies
    row_bytes = 4 * (2 * wh * 2 * c + wh * c)
    tm = _pick_tm(rows, row_bytes)
    out = pl.pallas_call(
        functools.partial(_maxpool_kernel, C=c),
        out_shape=jax.ShapeDtypeStruct((rows, wh, c), jnp.float32),
        grid=(rows // tm,),
        in_specs=[pl.BlockSpec((tm, 2, wh, 2 * c), lambda i: (i, 0, 0, 0))],
        out_specs=pl.BlockSpec((tm, wh, c), lambda i: (i, 0, 0)),
        compiler_params=pltpu.CompilerParams(dimension_semantics=("parallel",)),
    )(xr)
    return out.reshape(n, hh, wh, c)


def upsample_add(up1, low3):
    # up1: (N, 2h, 2w, C), low3: (N, h, w, C) -> up1 + nearest_upsample_2x(low3)
    n, h2, w2, c = up1.shape
    h, w = h2 // 2, w2 // 2
    rows = n * h
    upr = up1.reshape(rows, 2, w, 2 * c)        # pure reshape
    lor = low3.reshape(rows, w, c)              # pure reshape
    row_bytes = 4 * (2 * (2 * w * 2 * c) + w * c)
    tm = _pick_tm(rows, row_bytes)
    out = pl.pallas_call(
        _upadd_kernel,
        out_shape=jax.ShapeDtypeStruct((rows, 2, w, 2 * c), jnp.float32),
        grid=(rows // tm,),
        in_specs=[pl.BlockSpec((tm, 2, w, 2 * c), lambda i: (i, 0, 0, 0)),
                  pl.BlockSpec((tm, w, c), lambda i: (i, 0, 0))],
        out_specs=pl.BlockSpec((tm, 2, w, 2 * c), lambda i: (i, 0, 0, 0)),
        compiler_params=pltpu.CompilerParams(dimension_semantics=("parallel",)),
    )(upr, lor)
    return out.reshape(n, h2, w2, c)


# ------------------------------ model pieces --------------------------------

def residual_apply(block_list, x):
    for prm in block_list:
        x = bottleneck_call(x, prm)
    return x


def _hour_glass_forward(hg, n, x):
    up1 = residual_apply(hg[n - 1][0], x)
    low1 = maxpool2x2(x)
    low1 = residual_apply(hg[n - 1][1], low1)
    if n > 1:
        low2 = _hour_glass_forward(hg, n - 1, low1)
    else:
        low2 = residual_apply(hg[0][3], low1)
    low3 = residual_apply(hg[n - 1][2], low2)
    return upsample_add(up1, low3)              # up1 + nearest-upsample(low3)


def hourglass_forward(hg, depth, x_nchw):
    x = jnp.transpose(x_nchw, (0, 2, 3, 1))     # NCHW -> NHWC
    out = _hour_glass_forward(hg, depth, x)
    return jnp.transpose(out, (0, 3, 1, 2))     # NHWC -> NCHW


# --------------------------- deterministic params ---------------------------

def init_bottleneck(key, planes):
    c = planes * EXPANSION
    k = jax.random.split(key, 12)

    def bn(k0, k1, dim):
        scale = 1.0 + 0.1 * jax.random.normal(k0, (1, dim), jnp.float32)
        shift = 0.1 * jax.random.normal(k1, (1, dim), jnp.float32)
        return scale, shift

    s1, t1 = bn(k[0], k[1], c)
    s2, t2 = bn(k[2], k[3], planes)
    s3, t3 = bn(k[4], k[5], planes)
    w1 = jax.random.normal(k[6], (c, planes), jnp.float32) / jnp.sqrt(float(c))
    b1 = 0.01 * jax.random.normal(k[7], (1, planes), jnp.float32)
    w2 = (jax.random.normal(k[8], (3, 3, planes, planes), jnp.float32)
          / jnp.sqrt(9.0 * planes)).reshape(9 * planes, planes)
    b2 = 0.01 * jax.random.normal(k[9], (1, planes), jnp.float32)
    w3 = jax.random.normal(k[10], (planes, c), jnp.float32) / jnp.sqrt(float(planes))
    b3 = 0.01 * jax.random.normal(k[11], (1, c), jnp.float32)
    return dict(s1=s1, t1=t1, w1=w1, b1=b1, s2=s2, t2=t2,
                w2=w2, b2=b2, s3=s3, t3=t3, w3=w3, b3=b3)


def prep_bottleneck(raw, planes):
    """Fold bn2 into (w1,b1) and bn3 into (w2,b2); cast matmul weights to bf16."""
    s2, t2, s3, t3 = raw["s2"], raw["t2"], raw["s3"], raw["t3"]
    w1 = (raw["w1"] * s2).astype(jnp.bfloat16)                  # (C, P)
    b1 = raw["b1"] * s2 + t2                                    # (1, P)
    w2 = (raw["w2"].reshape(9, planes, planes) * s3).astype(jnp.bfloat16)
    b2 = raw["b2"] * s3 + t3                                    # (1, P)
    w3 = raw["w3"].astype(jnp.bfloat16)                         # (P, C)
    return dict(s1=raw["s1"], t1=raw["t1"], w1=w1, b1=b1,
                w2=w2, b2=b2, w3=w3, b3=raw["b3"])


def init_hourglass(key, planes, depth, num_blocks):
    hg = []
    for i in range(depth):
        n_branches = 4 if i == 0 else 3
        branches = []
        for _ in range(n_branches):
            blocks = []
            for _ in range(num_blocks):
                key, sub = jax.random.split(key)
                blocks.append(prep_bottleneck(init_bottleneck(sub, planes), planes))
            branches.append(blocks)
        hg.append(branches)
    return hg


# ----------------------------------- main ------------------------------------

if __name__ == "__main__":
    planes, depth, num_blocks = 4, 2, 1
    key = jax.random.PRNGKey(0)
    k_params, k_x = jax.random.split(key)

    hg_params = init_hourglass(k_params, planes, depth, num_blocks)
    x = jax.random.normal(k_x, (2, planes * EXPANSION, 16, 16), jnp.float32)

    fwd = jax.jit(functools.partial(hourglass_forward, hg_params, depth))
    out = fwd(x)
    jax.block_until_ready(out)

    assert out.shape == x.shape, (out.shape, x.shape)
    assert bool(jnp.all(jnp.isfinite(out)))
    print("KERNEL_OK")
</pallas_src>

<mosaic_0001>
module attributes {stable_mosaic.version = 11 : i64} {
  func.func @_maxpool_kernel(%arg0: i32, %arg1: memref<8x2x8x16xf32, #tpu.memory_space<vmem>>, %arg2: memref<8x8x8xf32, #tpu.memory_space<vmem>>) attributes {dimension_semantics = [#tpu.dimension_semantics<parallel>], iteration_bounds = array<i64: 2>, scalar_prefetch = 0 : i64, scratch_operands = 0 : i64, tpu.core_type = #tpu.core_type<tc>, window_params = [{transform_indices = @transform_0, window_bounds = array<i64: 8, 2, 8, 16>}, {transform_indices = @transform_1, window_bounds = array<i64: 8, 8, 8>}]} {
    %c0 = arith.constant 0 : index
    %c0_0 = arith.constant 0 : index
    %c0_1 = arith.constant 0 : index
    %c0_2 = arith.constant 0 : index
    %0 = vector.load %arg1[%c0, %c0_0, %c0_1, %c0_2] : memref<8x2x8x16xf32, #tpu.memory_space<vmem>>, vector<8x2x8x16xf32>
    %1 = vector.extract_strided_slice %0 {offsets = [0, 0, 0, 0], sizes = [8, 1, 8, 16], strides = [1, 1, 1, 1]} : vector<8x2x8x16xf32> to vector<8x1x8x16xf32>
    %2 = vector.shape_cast %1 : vector<8x1x8x16xf32> to vector<8x8x16xf32>
    %3 = vector.extract_strided_slice %0 {offsets = [0, 1, 0, 0], sizes = [8, 1, 8, 16], strides = [1, 1, 1, 1]} : vector<8x2x8x16xf32> to vector<8x1x8x16xf32>
    %4 = vector.shape_cast %3 : vector<8x1x8x16xf32> to vector<8x8x16xf32>
    %5 = arith.maximumf %2, %4 : vector<8x8x16xf32>
    %6 = vector.extract_strided_slice %5 {offsets = [0, 0, 0], sizes = [8, 8, 8], strides = [1, 1, 1]} : vector<8x8x16xf32> to vector<8x8x8xf32>
    %7 = vector.extract_strided_slice %5 {offsets = [0, 0, 8], sizes = [8, 8, 8], strides = [1, 1, 1]} : vector<8x8x16xf32> to vector<8x8x8xf32>
    %8 = arith.maximumf %6, %7 : vector<8x8x8xf32>
    %c0_3 = arith.constant 0 : index
    %c0_4 = arith.constant 0 : index
    %c0_5 = arith.constant 0 : index
    %9 = vector.load %arg2[%c0_3, %c0_4, %c0_5] : memref<8x8x8xf32, #tpu.memory_space<vmem>>, vector<8x8x8xf32>
    tpu.vector_store %arg2[%c0_3, %c0_4, %c0_5], %8 {strides = array<i32>} : memref<8x8x8xf32, #tpu.memory_space<vmem>>, vector<8x8x8xf32>,
    return
  }
  func.func @transform_0(%arg0: i32) -> (i32, i32, i32, i32) {
    %c0_i32 = arith.constant 0 : i32
    %c0_i32_0 = arith.constant 0 : i32
    %c0_i32_1 = arith.constant 0 : i32
    %c0_i32_2 = arith.constant 0 : i32
    return %arg0, %c0_i32, %c0_i32_0, %c0_i32_1 : i32, i32, i32, i32
  }
  func.func @transform_1(%arg0: i32) -> (i32, i32, i32) {
    %c0_i32 = arith.constant 0 : i32
    %c0_i32_0 = arith.constant 0 : i32
    %c0_i32_1 = arith.constant 0 : i32
    return %arg0, %c0_i32, %c0_i32_0 : i32, i32, i32
  }
}

module attributes {stable_mosaic.version = 11 : i64} {
  func.func @_bottleneck_kernel(%arg0: i32, %arg1: memref<1x64x8xf32, #tpu.memory_space<vmem>>, %arg2: memref<1x8xf32, #tpu.memory_space<vmem>>, %arg3: memref<1x8xf32, #tpu.memory_space<vmem>>, %arg4: memref<8x4xbf16, #tpu.memory_space<vmem>>, %arg5: memref<1x4xf32, #tpu.memory_space<vmem>>, %arg6: memref<9x4x4xbf16, #tpu.memory_space<vmem>>, %arg7: memref<1x4xf32, #tpu.memory_space<vmem>>, %arg8: memref<4x8xbf16, #tpu.memory_space<vmem>>, %arg9: memref<1x8xf32, #tpu.memory_space<vmem>>, %arg10: memref<1x64x8xf32, #tpu.memory_space<vmem>>, %arg11: memref<82x4xbf16, #tpu.memory_space<vmem>>) attributes {dimension_semantics = [#tpu.dimension_semantics<parallel>], iteration_bounds = array<i64: 2>, scalar_prefetch = 0 : i64, scratch_operands = 1 : i64, tpu.core_type = #tpu.core_type<tc>, window_params = [{transform_indices = @transform_0, window_bounds = array<i64: 1, 64, 8>}, {pipeline_mode = #tpu.pipeline_mode<synchronous>, transform_indices = @transform_1, window_bounds = array<i64: 1, 8>}, {pipeline_mode = #tpu.pipeline_mode<synchronous>, transform_indices = @transform_2, window_bounds = array<i64: 1, 8>}, {pipeline_mode = #tpu.pipeline_mode<synchronous>, transform_indices = @transform_3, window_bounds = array<i64: 8, 4>}, {pipeline_mode = #tpu.pipeline_mode<synchronous>, transform_indices = @transform_4, window_bounds = array<i64: 1, 4>}, {pipeline_mode = #tpu.pipeline_mode<synchronous>, transform_indices = @transform_5, window_bounds = array<i64: 9, 4, 4>}, {pipeline_mode = #tpu.pipeline_mode<synchronous>, transform_indices = @transform_6, window_bounds = array<i64: 1, 4>}, {pipeline_mode = #tpu.pipeline_mode<synchronous>, transform_indices = @transform_7, window_bounds = array<i64: 4, 8>}, {pipeline_mode = #tpu.pipeline_mode<synchronous>, transform_indices = @transform_8, window_bounds = array<i64: 1, 8>}, {transform_indices = @transform_9, window_bounds = array<i64: 1, 64, 8>}]} {
    %c0 = arith.constant 0 : index
    %c0_0 = arith.constant 0 : index
    %c0_1 = arith.constant 0 : index
    %0 = vector.load %arg1[%c0, %c0_0, %c0_1] : memref<1x64x8xf32, #tpu.memory_space<vmem>>, vector<1x64x8xf32>
    %1 = vector.shape_cast %0 : vector<1x64x8xf32> to vector<64x8xf32>
    %c0_2 = arith.constant 0 : index
    %c0_3 = arith.constant 0 : index
    %2 = vector.load %arg2[%c0_2, %c0_3] : memref<1x8xf32, #tpu.memory_space<vmem>>, vector<1x8xf32>
    %3 = vector.broadcast %2 : vector<1x8xf32> to vector<64x8xf32>
    %4 = arith.mulf %1, %3 : vector<64x8xf32>
    %c0_4 = arith.constant 0 : index
    %c0_5 = arith.constant 0 : index
    %5 = vector.load %arg3[%c0_4, %c0_5] : memref<1x8xf32, #tpu.memory_space<vmem>>, vector<1x8xf32>
    %6 = vector.broadcast %5 : vector<1x8xf32> to vector<64x8xf32>
    %7 = arith.addf %4, %6 : vector<64x8xf32>
    %cst = arith.constant 0.000000e+00 : f32
    %8 = vector.broadcast %cst : f32 to vector<64x8xf32>
    %9 = arith.maximumf %7, %8 : vector<64x8xf32>
    %10 = arith.truncf %9 : vector<64x8xf32> to vector<64x8xbf16>
    %c0_6 = arith.constant 0 : index
    %c0_7 = arith.constant 0 : index
    %11 = vector.load %arg4[%c0_6, %c0_7] : memref<8x4xbf16, #tpu.memory_space<vmem>>, vector<8x4xbf16>
    %cst_8 = arith.constant dense<0.000000e+00> : vector<64x4xf32>
    %12 = tpu.matmul %10, %11, %cst_8 {dimension_numbers = #tpu.dot_dimension_numbers<[1], [0], [0], [1], [0, 0, 1, 1], [], []>} : vector<64x8xbf16>, vector<8x4xbf16>, vector<64x4xf32> -> vector<64x4xf32>
    %c0_9 = arith.constant 0 : index
    %c0_10 = arith.constant 0 : index
    %13 = vector.load %arg5[%c0_9, %c0_10] : memref<1x4xf32, #tpu.memory_space<vmem>>, vector<1x4xf32>
    %14 = vector.broadcast %13 : vector<1x4xf32> to vector<64x4xf32>
    %15 = arith.addf %12, %14 : vector<64x4xf32>
    %cst_11 = arith.constant 0.000000e+00 : f32
    %16 = vector.broadcast %cst_11 : f32 to vector<64x4xf32>
    %17 = arith.maximumf %15, %16 : vector<64x4xf32>
    %cst_12 = arith.constant 0.000000e+00 : bf16
    %18 = vector.broadcast %cst_12 : bf16 to vector<82x4xbf16>
    %c0_13 = arith.constant 0 : index
    %c0_14 = arith.constant 0 : index
    %19 = vector.load %arg11[%c0_13, %c0_14] : memref<82x4xbf16, #tpu.memory_space<vmem>>, vector<82x4xbf16>
    tpu.vector_store %arg11[%c0_13, %c0_14], %18 {strides = array<i32>} : memref<82x4xbf16, #tpu.memory_space<vmem>>, vector<82x4xbf16>,
    %20 = arith.truncf %17 : vector<64x4xf32> to vector<64x4xbf16>
    %c9 = arith.constant 9 : index
    %c0_15 = arith.constant 0 : index
    %21 = vector.load %arg11[%c9, %c0_15] : memref<82x4xbf16, #tpu.memory_space<vmem>>, vector<64x4xbf16>
    tpu.vector_store %arg11[%c9, %c0_15], %20 {strides = array<i32>} : memref<82x4xbf16, #tpu.memory_space<vmem>>, vector<64x4xbf16>,
    %22 = tpu.iota {dimensions = array<i32: 0>} : vector<64x1xi32>
    %c8_i32 = arith.constant 8 : i32
    %c0_i32 = arith.constant 0 : i32
    %23 = arith.cmpi eq, %c8_i32, %c0_i32 : i32
    %c1_i32 = arith.constant 1 : i32
    %24 = arith.select %23, %c1_i32, %c8_i32 : i32
    %25 = vector.broadcast %24 : i32 to vector<64x1xi32>
    %26 = arith.remsi %22, %25 : vector<64x1xi32>
    %c0_i32_16 = arith.constant 0 : i32
    %27 = vector.broadcast %c0_i32_16 : i32 to vector<64x1xi32>
    %28 = arith.cmpi ne, %26, %27 : vector<64x1xi32>
    %c0_i32_17 = arith.constant 0 : i32
    %29 = vector.broadcast %c0_i32_17 : i32 to vector<64x1xi32>
    %30 = arith.cmpi slt, %26, %29 : vector<64x1xi32>
    %c0_i32_18 = arith.constant 0 : i32
    %31 = arith.cmpi slt, %24, %c0_i32_18 : i32
    %32 = vector.broadcast %31 : i1 to vector<64x1xi1>
    %33 = vector.broadcast %32 : vector<64x1xi1> to vector<64x1xi1>
    %34 = arith.xori %30, %33 : vector<64x1xi1>
    %35 = arith.andi %34, %28 : vector<64x1xi1>
    %36 = vector.broadcast %24 : i32 to vector<64x1xi32>
    %37 = arith.addi %26, %36 : vector<64x1xi32>
    %38 = arith.select %35, %37, %26 : vector<64x1xi1>, vector<64x1xi32>
    %cst_19 = arith.constant 0.000000e+00 : f32
    %39 = vector.broadcast %cst_19 : f32 to vector<64x4xf32>
    %c0_20 = arith.constant 0 : index
    %c0_21 = arith.constant 0 : index
    %40 = vector.load %arg11[%c0_20, %c0_21] : memref<82x4xbf16, #tpu.memory_space<vmem>>, vector<64x4xbf16>
    %c1_i32_22 = arith.constant 1 : i32
    %41 = vector.broadcast %c1_i32_22 : i32 to vector<64x1xi32>
    %42 = arith.cmpi sge, %38, %41 : vector<64x1xi32>
    %cst_23 = arith.constant 0.000000e+00 : bf16
    %43 = vector.broadcast %cst_23 : bf16 to vector<64x4xbf16>
    %44 = vector.shape_cast %42 : vector<64x1xi1> to vector<64x1xi1>
    %45 = vector.broadcast %44 : vector<64x1xi1> to vector<64x4xi1>
    %46 = arith.select %45, %40, %43 : vector<64x4xi1>, vector<64x4xbf16>
    %c0_24 = arith.constant 0 : index
    %c0_25 = arith.constant 0 : index
    %c0_26 = arith.constant 0 : index
    %47 = vector.load %arg6[%c0_24, %c0_25, %c0_26] : memref<9x4x4xbf16, #tpu.memory_space<vmem>>, vector<1x4x4xbf16>
    %48 = vector.shape_cast %47 : vector<1x4x4xbf16> to vector<4x4xbf16>
    %cst_27 = arith.constant dense<0.000000e+00> : vector<64x4xf32>
    %49 = tpu.matmul %46, %48, %cst_27 {dimension_numbers = #tpu.dot_dimension_numbers<[1], [0], [0], [1], [0, 0, 1, 1], [], []>} : vector<64x4xbf16>, vector<4x4xbf16>, vector<64x4xf32> -> vector<64x4xf32>
    %50 = arith.addf %39, %49 : vector<64x4xf32>
    %c1 = arith.constant 1 : index
    %c0_28 = arith.constant 0 : index
    %51 = vector.load %arg11[%c1, %c0_28] : memref<82x4xbf16, #tpu.memory_space<vmem>>, vector<64x4xbf16>
    %c1_29 = arith.constant 1 : index
    %c0_30 = arith.constant 0 : index
    %c0_31 = arith.constant 0 : index
    %52 = vector.load %arg6[%c1_29, %c0_30, %c0_31] : memref<9x4x4xbf16, #tpu.memory_space<vmem>>, vector<1x4x4xbf16>
    %53 = vector.shape_cast %52 : vector<1x4x4xbf16> to vector<4x4xbf16>
    %cst_32 = arith.constant dense<0.000000e+00> : vector<64x4xf32>
    %54 = tpu.matmul %51, %53, %cst_32 {dimension_numbers = #tpu.dot_dimension_numbers<[1], [0], [0], [1], [0, 0, 1, 1], [], []>} : vector<64x4xbf16>, vector<4x4xbf16>, vector<64x4xf32> -> vector<64x4xf32>
    %55 = arith.addf %50, %54 : vector<64x4xf32>
    %c2 = arith.constant 2 : index
    %c0_33 = arith.constant 0 : index
    %56 = vector.load %arg11[%c2, %c0_33] : memref<82x4xbf16, #tpu.memory_space<vmem>>, vector<64x4xbf16>
    %c6_i32 = arith.constant 6 : i32
    %57 = vector.broadcast %c6_i32 : i32 to vector<64x1xi32>
    %58 = arith.cmpi sle, %38, %57 : vector<64x1xi32>
    %cst_34 = arith.constant 0.000000e+00 : bf16
    %59 = vector.broadcast %cst_34 : bf16 to vector<64x4xbf16>
    %60 = vector.shape_cast %58 : vector<64x1xi1> to vector<64x1xi1>
    %61 = vector.broadcast %60 : vector<64x1xi1> to vector<64x4xi1>
    %62 = arith.select %61, %56, %59 : vector<64x4xi1>, vector<64x4xbf16>
    %c2_35 = arith.constant 2 : index
    %c0_36 = arith.constant 0 : index
    %c0_37 = arith.constant 0 : index
    %63 = vector.load %arg6[%c2_35, %c0_36, %c0_37] : memref<9x4x4xbf16, #tpu.memory_space<vmem>>, vector<1x4x4xbf16>
    %64 = vector.shape_cast %63 : vector<1x4x4xbf16> to vector<4x4xbf16>
    %cst_38 = arith.constant dense<0.000000e+00> : vector<64x4xf32>
    %65 = tpu.matmul %62, %64, %cst_38 {dimension_numbers = #tpu.dot_dimension_numbers<[1], [0], [0], [1], [0, 0, 1, 1], [], []>} : vector<64x4xbf16>, vector<4x4xbf16>, vector<64x4xf32> -> vector<64x4xf32>
    %66 = arith.addf %55, %65 : vector<64x4xf32>
    %c8 = arith.constant 8 : index
    %c0_39 = arith.constant 0 : index
    %67 = vector.load %arg11[%c8, %c0_39] : memref<82x4xbf16, #tpu.memory_space<vmem>>, vector<64x4xbf16>
    %c1_i32_40 = arith.constant 1 : i32
    %68 = vector.broadcast %c1_i32_40 : i32 to vector<64x1xi32>
    %69 = arith.cmpi sge, %38, %68 : vector<64x1xi32>
    %cst_41 = arith.constant 0.000000e+00 : bf16
    %70 = vector.broadcast %cst_41 : bf16 to vector<64x4xbf16>
    %71 = vector.shape_cast %69 : vector<64x1xi1> to vector<64x1xi1>
    %72 = vector.broadcast %71 : vector<64x1xi1> to vector<64x4xi1>
    %73 = arith.select %72, %67, %70 : vector<64x4xi1>, vector<64x4xbf16>
    %c3 = arith.constant 3 : index
    %c0_42 = arith.constant 0 : index
    %c0_43 = arith.constant 0 : index
    %74 = vector.load %arg6[%c3, %c0_42, %c0_43] : memref<9x4x4xbf16, #tpu.memory_space<vmem>>, vector<1x4x4xbf16>
    %75 = vector.shape_cast %74 : vector<1x4x4xbf16> to vector<4x4xbf16>
    %cst_44 = arith.constant dense<0.000000e+00> : vector<64x4xf32>
    %76 = tpu.matmul %73, %75, %cst_44 {dimension_numbers = #tpu.dot_dimension_numbers<[1], [0], [0], [1], [0, 0, 1, 1], [], []>} : vector<64x4xbf16>, vector<4x4xbf16>, vector<64x4xf32> -> vector<64x4xf32>
    %77 = arith.addf %66, %76 : vector<64x4xf32>
    %c9_45 = arith.constant 9 : index
    %c0_46 = arith.constant 0 : index
    %78 = vector.load %arg11[%c9_45, %c0_46] : memref<82x4xbf16, #tpu.memory_space<vmem>>, vector<64x4xbf16>
    %c4 = arith.constant 4 : index
    %c0_47 = arith.constant 0 : index
    %c0_48 = arith.constant 0 : index
    %79 = vector.load %arg6[%c4, %c0_47, %c0_48] : memref<9x4x4xbf16, #tpu.memory_space<vmem>>, vector<1x4x4xbf16>
    %80 = vector.shape_cast %79 : vector<1x4x4xbf16> to vector<4x4xbf16>
    %cst_49 = arith.constant dense<0.000000e+00> : vector<64x4xf32>
    %81 = tpu.matmul %78, %80, %cst_49 {dimension_numbers = #tpu.dot_dimension_numbers<[1], [0], [0], [1], [0, 0, 1, 1], [], []>} : vector<64x4xbf16>, vector<4x4xbf16>, vector<64x4xf32> -> vector<64x4xf32>
    %82 = arith.addf %77, %81 : vector<64x4xf32>
    %c10 = arith.constant 10 : index
    %c0_50 = arith.constant 0 : index
    %83 = vector.load %arg11[%c10, %c0_50] : memref<82x4xbf16, #tpu.memory_space<vmem>>, vector<64x4xbf16>
    %c6_i32_51 = arith.constant 6 : i32
    %84 = vector.broadcast %c6_i32_51 : i32 to vector<64x1xi32>
    %85 = arith.cmpi sle, %38, %84 : vector<64x1xi32>
    %cst_52 = arith.constant 0.000000e+00 : bf16
    %86 = vector.broadcast %cst_52 : bf16 to vector<64x4xbf16>
    %87 = vector.shape_cast %85 : vector<64x1xi1> to vector<64x1xi1>
    %88 = vector.broadcast %87 : vector<64x1xi1> to vector<64x4xi1>
    %89 = arith.select %88, %83, %86 : vector<64x4xi1>, vector<64x4xbf16>
    %c5 = arith.constant 5 : index
    %c0_53 = arith.constant 0 : index
    %c0_54 = arith.constant 0 : index
    %90 = vector.load %arg6[%c5, %c0_53, %c0_54] : memref<9x4x4xbf16, #tpu.memory_space<vmem>>, vector<1x4x4xbf16>
    %91 = vector.shape_cast %90 : vector<1x4x4xbf16> to vector<4x4xbf16>
    %cst_55 = arith.constant dense<0.000000e+00> : vector<64x4xf32>
    %92 = tpu.matmul %89, %91, %cst_55 {dimension_numbers = #tpu.dot_dimension_numbers<[1], [0], [0], [1], [0, 0, 1, 1], [], []>} : vector<64x4xbf16>, vector<4x4xbf16>, vector<64x4xf32> -> vector<64x4xf32>
    %93 = arith.addf %82, %92 : vector<64x4xf32>
    %c16 = arith.constant 16 : index
    %c0_56 = arith.constant 0 : index
    %94 = vector.load %arg11[%c16, %c0_56] : memref<82x4xbf16, #tpu.memory_space<vmem>>, vector<64x4xbf16>
    %c1_i32_57 = arith.constant 1 : i32
    %95 = vector.broadcast %c1_i32_57 : i32 to vector<64x1xi32>
    %96 = arith.cmpi sge, %38, %95 : vector<64x1xi32>
    %cst_58 = arith.constant 0.000000e+00 : bf16
    %97 = vector.broadcast %cst_58 : bf16 to vector<64x4xbf16>
    %98 = vector.shape_cast %96 : vector<64x1xi1> to vector<64x1xi1>
    %99 = vector.broadcast %98 : vector<64x1xi1> to vector<64x4xi1>
    %100 = arith.select %99, %94, %97 : vector<64x4xi1>, vector<64x4xbf16>
    %c6 = arith.constant 6 : index
    %c0_59 = arith.constant 0 : index
    %c0_60 = arith.constant 0 : index
    %101 = vector.load %arg6[%c6, %c0_59, %c0_60] : memref<9x4x4xbf16, #tpu.memory_space<vmem>>, vector<1x4x4xbf16>
    %102 = vector.shape_cast %101 : vector<1x4x4xbf16> to vector<4x4xbf16>
    %cst_61 = arith.constant dense<0.000000e+00> : vector<64x4xf32>
    %103 = tpu.matmul %100, %102, %cst_61 {dimension_numbers = #tpu.dot_dimension_numbers<[1], [0], [0], [1], [0, 0, 1, 1], [], []>} : vector<64x4xbf16>, vector<4x4xbf16>, vector<64x4xf32> -> vector<64x4xf32>
    %104 = arith.addf %93, %103 : vector<64x4xf32>
    %c17 = arith.constant 17 : index
    %c0_62 = arith.constant 0 : index
    %105 = vector.load %arg11[%c17, %c0_62] : memref<82x4xbf16, #tpu.memory_space<vmem>>, vector<64x4xbf16>
    %c7 = arith.constant 7 : index
    %c0_63 = arith.constant 0 : index
    %c0_64 = arith.constant 0 : index
    %106 = vector.load %arg6[%c7, %c0_63, %c0_64] : memref<9x4x4xbf16, #tpu.memory_space<vmem>>, vector<1x4x4xbf16>
    %107 = vector.shape_cast %106 : vector<1x4x4xbf16> to vector<4x4xbf16>
    %cst_65 = arith.constant dense<0.000000e+00> : vector<64x4xf32>
    %108 = tpu.matmul %105, %107, %cst_65 {dimension_numbers = #tpu.dot_dimension_numbers<[1], [0], [0], [1], [0, 0, 1, 1], [], []>} : vector<64x4xbf16>, vector<4x4xbf16>, vector<64x4xf32> -> vector<64x4xf32>
    %109 = arith.addf %104, %108 : vector<64x4xf32>
    %c18 = arith.constant 18 : index
    %c0_66 = arith.constant 0 : index
    %110 = vector.load %arg11[%c18, %c0_66] : memref<82x4xbf16, #tpu.memory_space<vmem>>, vector<64x4xbf16>
    %c6_i32_67 = arith.constant 6 : i32
    %111 = vector.broadcast %c6_i32_67 : i32 to vector<64x1xi32>
    %112 = arith.cmpi sle, %38, %111 : vector<64x1xi32>
    %cst_68 = arith.constant 0.000000e+00 : bf16
    %113 = vector.broadcast %cst_68 : bf16 to vector<64x4xbf16>
    %114 = vector.shape_cast %112 : vector<64x1xi1> to vector<64x1xi1>
    %115 = vector.broadcast %114 : vector<64x1xi1> to vector<64x4xi1>
    %116 = arith.select %115, %110, %113 : vector<64x4xi1>, vector<64x4xbf16>
    %c8_69 = arith.constant 8 : index
    %c0_70 = arith.constant 0 : index
    %c0_71 = arith.constant 0 : index
    %117 = vector.load %arg6[%c8_69, %c0_70, %c0_71] : memref<9x4x4xbf16, #tpu.memory_space<vmem>>, vector<1x4x4xbf16>
    %118 = vector.shape_cast %117 : vector<1x4x4xbf16> to vector<4x4xbf16>
    %cst_72 = arith.constant dense<0.000000e+00> : vector<64x4xf32>
    %119 = tpu.matmul %116, %118, %cst_72 {dimension_numbers = #tpu.dot_dimension_numbers<[1], [0], [0], [1], [0, 0, 1, 1], [], []>} : vector<64x4xbf16>, vector<4x4xbf16>, vector<64x4xf32> -> vector<64x4xf32>
    %120 = arith.addf %109, %119 : vector<64x4xf32>
    %c0_73 = arith.constant 0 : index
    %c0_74 = arith.constant 0 : index
    %121 = vector.load %arg7[%c0_73, %c0_74] : memref<1x4xf32, #tpu.memory_space<vmem>>, vector<1x4xf32>
    %122 = vector.broadcast %121 : vector<1x4xf32> to vector<64x4xf32>
    %123 = arith.addf %120, %122 : vector<64x4xf32>
    %cst_75 = arith.constant 0.000000e+00 : f32
    %124 = vector.broadcast %cst_75 : f32 to vector<64x4xf32>
    %125 = arith.maximumf %123, %124 : vector<64x4xf32>
    %126 = arith.truncf %125 : vector<64x4xf32> to vector<64x4xbf16>
    %c0_76 = arith.constant 0 : index
    %c0_77 = arith.constant 0 : index
    %127 = vector.load %arg8[%c0_76, %c0_77] : memref<4x8xbf16, #tpu.memory_space<vmem>>, vector<4x8xbf16>
    %cst_78 = arith.constant dense<0.000000e+00> : vector<64x8xf32>
    %128 = tpu.matmul %126, %127, %cst_78 {dimension_numbers = #tpu.dot_dimension_numbers<[1], [0], [0], [1], [0, 0, 1, 1], [], []>} : vector<64x4xbf16>, vector<4x8xbf16>, vector<64x8xf32> -> vector<64x8xf32>
    %c0_79 = arith.constant 0 : index
    %c0_80 = arith.constant 0 : index
    %129 = vector.load %arg9[%c0_79, %c0_80] : memref<1x8xf32, #tpu.memory_space<vmem>>, vector<1x8xf32>
    %130 = vector.broadcast %129 : vector<1x8xf32> to vector<64x8xf32>
    %131 = arith.addf %128, %130 : vector<64x8xf32>
    %132 = arith.addf %131, %1 : vector<64x8xf32>
    %c0_81 = arith.constant 0 : index
    %c0_82 = arith.constant 0 : index
    %c0_83 = arith.constant 0 : index
    %133 = vector.load %arg10[%c0_81, %c0_82, %c0_83] : memref<1x64x8xf32, #tpu.memory_space<vmem>>, vector<1x64x8xf32>
    %134 = vector.shape_cast %133 : vector<1x64x8xf32> to vector<64x8xf32>
    %135 = vector.shape_cast %132 : vector<64x8xf32> to vector<1x64x8xf32>
    tpu.vector_store %arg10[%c0_81, %c0_82, %c0_83], %135 {strides = array<i32>} : memref<1x64x8xf32, #tpu.memory_space<vmem>>, vector<1x64x8xf32>,
    return
  }
  func.func @transform_0(%arg0: i32) -> (i32, i32, i32) {
    %c0_i32 = arith.constant 0 : i32
    %c0_i32_0 = arith.constant 0 : i32
    %c0_i32_1 = arith.constant 0 : i32
    return %arg0, %c0_i32, %c0_i32_0 : i32, i32, i32
  }
  func.func @transform_1(%arg0: i32) -> (i32, i32) {
    %c0_i32 = arith.constant 0 : i32
    %c0_i32_0 = arith.constant 0 : i32
    %c0_i32_1 = arith.constant 0 : i32
    return %c0_i32, %c0_i32_0 : i32, i32
  }
  func.func @transform_2(%arg0: i32) -> (i32, i32) {
    %c0_i32 = arith.constant 0 : i32
    %c0_i32_0 = arith.constant 0 : i32
    %c0_i32_1 = arith.constant 0 : i32
    return %c0_i32, %c0_i32_0 : i32, i32
  }
  func.func @transform_3(%arg0: i32) -> (i32, i32) {
    %c0_i32 = arith.constant 0 : i32
    %c0_i32_0 = arith.constant 0 : i32
    %c0_i32_1 = arith.constant 0 : i32
    return %c0_i32, %c0_i32_0 : i32, i32
  }
  func.func @transform_4(%arg0: i32) -> (i32, i32) {
    %c0_i32 = arith.constant 0 : i32
    %c0_i32_0 = arith.constant 0 : i32
    %c0_i32_1 = arith.constant 0 : i32
    return %c0_i32, %c0_i32_0 : i32, i32
  }
  func.func @transform_5(%arg0: i32) -> (i32, i32, i32) {
    %c0_i32 = arith.constant 0 : i32
    %c0_i32_0 = arith.constant 0 : i32
    %c0_i32_1 = arith.constant 0 : i32
    %c0_i32_2 = arith.constant 0 : i32
    return %c0_i32, %c0_i32_0, %c0_i32_1 : i32, i32, i32
  }
  func.func @transform_6(%arg0: i32) -> (i32, i32) {
    %c0_i32 = arith.constant 0 : i32
    %c0_i32_0 = arith.constant 0 : i32
    %c0_i32_1 = arith.constant 0 : i32
    return %c0_i32, %c0_i32_0 : i32, i32
  }
  func.func @transform_7(%arg0: i32) -> (i32, i32) {
    %c0_i32 = arith.constant 0 : i32
    %c0_i32_0 = arith.constant 0 : i32
    %c0_i32_1 = arith.constant 0 : i32
    return %c0_i32, %c0_i32_0 : i32, i32
  }
  func.func @transform_8(%arg0: i32) -> (i32, i32) {
    %c0_i32 = arith.constant 0 : i32
    %c0_i32_0 = arith.constant 0 : i32
    %c0_i32_1 = arith.constant 0 : i32
    return %c0_i32, %c0_i32_0 : i32, i32
  }
  func.func @transform_9(%arg0: i32) -> (i32, i32, i32) {
    %c0_i32 = arith.constant 0 : i32
    %c0_i32_0 = arith.constant 0 : i32
    %c0_i32_1 = arith.constant 0 : i32
    return %arg0, %c0_i32, %c0_i32_0 : i32, i32, i32
  }
}

module attributes {stable_mosaic.version = 11 : i64} {
  func.func @_maxpool_kernel(%arg0: i32, %arg1: memref<4x2x4x16xf32, #tpu.memory_space<vmem>>, %arg2: memref<4x4x8xf32, #tpu.memory_space<vmem>>) attributes {dimension_semantics = [#tpu.dimension_semantics<parallel>], iteration_bounds = array<i64: 2>, scalar_prefetch = 0 : i64, scratch_operands = 0 : i64, tpu.core_type = #tpu.core_type<tc>, window_params = [{transform_indices = @transform_0, window_bounds = array<i64: 4, 2, 4, 16>}, {transform_indices = @transform_1, window_bounds = array<i64: 4, 4, 8>}]} {
    %c0 = arith.constant 0 : index
    %c0_0 = arith.constant 0 : index
    %c0_1 = arith.constant 0 : index
    %c0_2 = arith.constant 0 : index
    %0 = vector.load %arg1[%c0, %c0_0, %c0_1, %c0_2] : memref<4x2x4x16xf32, #tpu.memory_space<vmem>>, vector<4x2x4x16xf32>
    %1 = vector.extract_strided_slice %0 {offsets = [0, 0, 0, 0], sizes = [4, 1, 4, 16], strides = [1, 1, 1, 1]} : vector<4x2x4x16xf32> to vector<4x1x4x16xf32>
    %2 = vector.shape_cast %1 : vector<4x1x4x16xf32> to vector<4x4x16xf32>
    %3 = vector.extract_strided_slice %0 {offsets = [0, 1, 0, 0], sizes = [4, 1, 4, 16], strides = [1, 1, 1, 1]} : vector<4x2x4x16xf32> to vector<4x1x4x16xf32>
    %4 = vector.shape_cast %3 : vector<4x1x4x16xf32> to vector<4x4x16xf32>
    %5 = arith.maximumf %2, %4 : vector<4x4x16xf32>
    %6 = vector.extract_strided_slice %5 {offsets = [0, 0, 0], sizes = [4, 4, 8], strides = [1, 1, 1]} : vector<4x4x16xf32> to vector<4x4x8xf32>
    %7 = vector.extract_strided_slice %5 {offsets = [0, 0, 8], sizes = [4, 4, 8], strides = [1, 1, 1]} : vector<4x4x16xf32> to vector<4x4x8xf32>
    %8 = arith.maximumf %6, %7 : vector<4x4x8xf32>
    %c0_3 = arith.constant 0 : index
    %c0_4 = arith.constant 0 : index
    %c0_5 = arith.constant 0 : index
    %9 = vector.load %arg2[%c0_3, %c0_4, %c0_5] : memref<4x4x8xf32, #tpu.memory_space<vmem>>, vector<4x4x8xf32>
    tpu.vector_store %arg2[%c0_3, %c0_4, %c0_5], %8 {strides = array<i32>} : memref<4x4x8xf32, #tpu.memory_space<vmem>>, vector<4x4x8xf32>,
    return
  }
  func.func @transform_0(%arg0: i32) -> (i32, i32, i32, i32) {
    %c0_i32 = arith.constant 0 : i32
    %c0_i32_0 = arith.constant 0 : i32
    %c0_i32_1 = arith.constant 0 : i32
    %c0_i32_2 = arith.constant 0 : i32
    return %arg0, %c0_i32, %c0_i32_0, %c0_i32_1 : i32, i32, i32, i32
  }
  func.func @transform_1(%arg0: i32) -> (i32, i32, i32) {
    %c0_i32 = arith.constant 0 : i32
    %c0_i32_0 = arith.constant 0 : i32
    %c0_i32_1 = arith.constant 0 : i32
    return %arg0, %c0_i32, %c0_i32_0 : i32, i32, i32
  }
}

module attributes {stable_mosaic.version = 11 : i64} {
  func.func @_bottleneck_kernel(%arg0: i32, %arg1: memref<1x16x8xf32, #tpu.memory_space<vmem>>, %arg2: memref<1x8xf32, #tpu.memory_space<vmem>>, %arg3: memref<1x8xf32, #tpu.memory_space<vmem>>, %arg4: memref<8x4xbf16, #tpu.memory_space<vmem>>, %arg5: memref<1x4xf32, #tpu.memory_space<vmem>>, %arg6: memref<9x4x4xbf16, #tpu.memory_space<vmem>>, %arg7: memref<1x4xf32, #tpu.memory_space<vmem>>, %arg8: memref<4x8xbf16, #tpu.memory_space<vmem>>, %arg9: memref<1x8xf32, #tpu.memory_space<vmem>>, %arg10: memref<1x16x8xf32, #tpu.memory_space<vmem>>, %arg11: memref<26x4xbf16, #tpu.memory_space<vmem>>) attributes {dimension_semantics = [#tpu.dimension_semantics<parallel>], iteration_bounds = array<i64: 2>, scalar_prefetch = 0 : i64, scratch_operands = 1 : i64, tpu.core_type = #tpu.core_type<tc>, window_params = [{transform_indices = @transform_0, window_bounds = array<i64: 1, 16, 8>}, {pipeline_mode = #tpu.pipeline_mode<synchronous>, transform_indices = @transform_1, window_bounds = array<i64: 1, 8>}, {pipeline_mode = #tpu.pipeline_mode<synchronous>, transform_indices = @transform_2, window_bounds = array<i64: 1, 8>}, {pipeline_mode = #tpu.pipeline_mode<synchronous>, transform_indices = @transform_3, window_bounds = array<i64: 8, 4>}, {pipeline_mode = #tpu.pipeline_mode<synchronous>, transform_indices = @transform_4, window_bounds = array<i64: 1, 4>}, {pipeline_mode = #tpu.pipeline_mode<synchronous>, transform_indices = @transform_5, window_bounds = array<i64: 9, 4, 4>}, {pipeline_mode = #tpu.pipeline_mode<synchronous>, transform_indices = @transform_6, window_bounds = array<i64: 1, 4>}, {pipeline_mode = #tpu.pipeline_mode<synchronous>, transform_indices = @transform_7, window_bounds = array<i64: 4, 8>}, {pipeline_mode = #tpu.pipeline_mode<synchronous>, transform_indices = @transform_8, window_bounds = array<i64: 1, 8>}, {transform_indices = @transform_9, window_bounds = array<i64: 1, 16, 8>}]} {
    %c0 = arith.constant 0 : index
    %c0_0 = arith.constant 0 : index
    %c0_1 = arith.constant 0 : index
    %0 = vector.load %arg1[%c0, %c0_0, %c0_1] : memref<1x16x8xf32, #tpu.memory_space<vmem>>, vector<1x16x8xf32>
    %1 = vector.shape_cast %0 : vector<1x16x8xf32> to vector<16x8xf32>
    %c0_2 = arith.constant 0 : index
    %c0_3 = arith.constant 0 : index
    %2 = vector.load %arg2[%c0_2, %c0_3] : memref<1x8xf32, #tpu.memory_space<vmem>>, vector<1x8xf32>
    %3 = vector.broadcast %2 : vector<1x8xf32> to vector<16x8xf32>
    %4 = arith.mulf %1, %3 : vector<16x8xf32>
    %c0_4 = arith.constant 0 : index
    %c0_5 = arith.constant 0 : index
    %5 = vector.load %arg3[%c0_4, %c0_5] : memref<1x8xf32, #tpu.memory_space<vmem>>, vector<1x8xf32>
    %6 = vector.broadcast %5 : vector<1x8xf32> to vector<16x8xf32>
    %7 = arith.addf %4, %6 : vector<16x8xf32>
    %cst = arith.constant 0.000000e+00 : f32
    %8 = vector.broadcast %cst : f32 to vector<16x8xf32>
    %9 = arith.maximumf %7, %8 : vector<16x8xf32>
    %10 = arith.truncf %9 : vector<16x8xf32> to vector<16x8xbf16>
    %c0_6 = arith.constant 0 : index
    %c0_7 = arith.constant 0 : index
    %11 = vector.load %arg4[%c0_6, %c0_7] : memref<8x4xbf16, #tpu.memory_space<vmem>>, vector<8x4xbf16>
    %cst_8 = arith.constant dense<0.000000e+00> : vector<16x4xf32>
    %12 = tpu.matmul %10, %11, %cst_8 {dimension_numbers = #tpu.dot_dimension_numbers<[1], [0], [0], [1], [0, 0, 1, 1], [], []>} : vector<16x8xbf16>, vector<8x4xbf16>, vector<16x4xf32> -> vector<16x4xf32>
    %c0_9 = arith.constant 0 : index
    %c0_10 = arith.constant 0 : index
    %13 = vector.load %arg5[%c0_9, %c0_10] : memref<1x4xf32, #tpu.memory_space<vmem>>, vector<1x4xf32>
    %14 = vector.broadcast %13 : vector<1x4xf32> to vector<16x4xf32>
    %15 = arith.addf %12, %14 : vector<16x4xf32>
    %cst_11 = arith.constant 0.000000e+00 : f32
    %16 = vector.broadcast %cst_11 : f32 to vector<16x4xf32>
    %17 = arith.maximumf %15, %16 : vector<16x4xf32>
    %cst_12 = arith.constant 0.000000e+00 : bf16
    %18 = vector.broadcast %cst_12 : bf16 to vector<26x4xbf16>
    %c0_13 = arith.constant 0 : index
    %c0_14 = arith.constant 0 : index
    %19 = vector.load %arg11[%c0_13, %c0_14] : memref<26x4xbf16, #tpu.memory_space<vmem>>, vector<26x4xbf16>
    tpu.vector_store %arg11[%c0_13, %c0_14], %18 {strides = array<i32>} : memref<26x4xbf16, #tpu.memory_space<vmem>>, vector<26x4xbf16>,
    %20 = arith.truncf %17 : vector<16x4xf32> to vector<16x4xbf16>
    %c5 = arith.constant 5 : index
    %c0_15 = arith.constant 0 : index
    %21 = vector.load %arg11[%c5, %c0_15] : memref<26x4xbf16, #tpu.memory_space<vmem>>, vector<16x4xbf16>
    tpu.vector_store %arg11[%c5, %c0_15], %20 {strides = array<i32>} : memref<26x4xbf16, #tpu.memory_space<vmem>>, vector<16x4xbf16>,
    %22 = tpu.iota {dimensions = array<i32: 0>} : vector<16x1xi32>
    %c4_i32 = arith.constant 4 : i32
    %c0_i32 = arith.constant 0 : i32
    %23 = arith.cmpi eq, %c4_i32, %c0_i32 : i32
    %c1_i32 = arith.constant 1 : i32
    %24 = arith.select %23, %c1_i32, %c4_i32 : i32
    %25 = vector.broadcast %24 : i32 to vector<16x1xi32>
    %26 = arith.remsi %22, %25 : vector<16x1xi32>
    %c0_i32_16 = arith.constant 0 : i32
    %27 = vector.broadcast %c0_i32_16 : i32 to vector<16x1xi32>
    %28 = arith.cmpi ne, %26, %27 : vector<16x1xi32>
    %c0_i32_17 = arith.constant 0 : i32
    %29 = vector.broadcast %c0_i32_17 : i32 to vector<16x1xi32>
    %30 = arith.cmpi slt, %26, %29 : vector<16x1xi32>
    %c0_i32_18 = arith.constant 0 : i32
    %31 = arith.cmpi slt, %24, %c0_i32_18 : i32
    %32 = vector.broadcast %31 : i1 to vector<16x1xi1>
    %33 = vector.broadcast %32 : vector<16x1xi1> to vector<16x1xi1>
    %34 = arith.xori %30, %33 : vector<16x1xi1>
    %35 = arith.andi %34, %28 : vector<16x1xi1>
    %36 = vector.broadcast %24 : i32 to vector<16x1xi32>
    %37 = arith.addi %26, %36 : vector<16x1xi32>
    %38 = arith.select %35, %37, %26 : vector<16x1xi1>, vector<16x1xi32>
    %cst_19 = arith.constant 0.000000e+00 : f32
    %39 = vector.broadcast %cst_19 : f32 to vector<16x4xf32>
    %c0_20 = arith.constant 0 : index
    %c0_21 = arith.constant 0 : index
    %40 = vector.load %arg11[%c0_20, %c0_21] : memref<26x4xbf16, #tpu.memory_space<vmem>>, vector<16x4xbf16>
    %c1_i32_22 = arith.constant 1 : i32
    %41 = vector.broadcast %c1_i32_22 : i32 to vector<16x1xi32>
    %42 = arith.cmpi sge, %38, %41 : vector<16x1xi32>
    %cst_23 = arith.constant 0.000000e+00 : bf16
    %43 = vector.broadcast %cst_23 : bf16 to vector<16x4xbf16>
    %44 = vector.shape_cast %42 : vector<16x1xi1> to vector<16x1xi1>
    %45 = vector.broadcast %44 : vector<16x1xi1> to vector<16x4xi1>
    %46 = arith.select %45, %40, %43 : vector<16x4xi1>, vector<16x4xbf16>
    %c0_24 = arith.constant 0 : index
    %c0_25 = arith.constant 0 : index
    %c0_26 = arith.constant 0 : index
    %47 = vector.load %arg6[%c0_24, %c0_25, %c0_26] : memref<9x4x4xbf16, #tpu.memory_space<vmem>>, vector<1x4x4xbf16>
    %48 = vector.shape_cast %47 : vector<1x4x4xbf16> to vector<4x4xbf16>
    %cst_27 = arith.constant dense<0.000000e+00> : vector<16x4xf32>
    %49 = tpu.matmul %46, %48, %cst_27 {dimension_numbers = #tpu.dot_dimension_numbers<[1], [0], [0], [1], [0, 0, 1, 1], [], []>} : vector<16x4xbf16>, vector<4x4xbf16>, vector<16x4xf32> -> vector<16x4xf32>
    %50 = arith.addf %39, %49 : vector<16x4xf32>
    %c1 = arith.constant 1 : index
    %c0_28 = arith.constant 0 : index
    %51 = vector.load %arg11[%c1, %c0_28] : memref<26x4xbf16, #tpu.memory_space<vmem>>, vector<16x4xbf16>
    %c1_29 = arith.constant 1 : index
    %c0_30 = arith.constant 0 : index
    %c0_31 = arith.constant 0 : index
    %52 = vector.load %arg6[%c1_29, %c0_30, %c0_31] : memref<9x4x4xbf16, #tpu.memory_space<vmem>>, vector<1x4x4xbf16>
    %53 = vector.shape_cast %52 : vector<1x4x4xbf16> to vector<4x4xbf16>
    %cst_32 = arith.constant dense<0.000000e+00> : vector<16x4xf32>
    %54 = tpu.matmul %51, %53, %cst_32 {dimension_numbers = #tpu.dot_dimension_numbers<[1], [0], [0], [1], [0, 0, 1, 1], [], []>} : vector<16x4xbf16>, vector<4x4xbf16>, vector<16x4xf32> -> vector<16x4xf32>
    %55 = arith.addf %50, %54 : vector<16x4xf32>
    %c2 = arith.constant 2 : index
    %c0_33 = arith.constant 0 : index
    %56 = vector.load %arg11[%c2, %c0_33] : memref<26x4xbf16, #tpu.memory_space<vmem>>, vector<16x4xbf16>
    %c2_i32 = arith.constant 2 : i32
    %57 = vector.broadcast %c2_i32 : i32 to vector<16x1xi32>
    %58 = arith.cmpi sle, %38, %57 : vector<16x1xi32>
    %cst_34 = arith.constant 0.000000e+00 : bf16
    %59 = vector.broadcast %cst_34 : bf16 to vector<16x4xbf16>
    %60 = vector.shape_cast %58 : vector<16x1xi1> to vector<16x1xi1>
    %61 = vector.broadcast %60 : vector<16x1xi1> to vector<16x4xi1>
    %62 = arith.select %61, %56, %59 : vector<16x4xi1>, vector<16x4xbf16>
    %c2_35 = arith.constant 2 : index
    %c0_36 = arith.constant 0 : index
    %c0_37 = arith.constant 0 : index
    %63 = vector.load %arg6[%c2_35, %c0_36, %c0_37] : memref<9x4x4xbf16, #tpu.memory_space<vmem>>, vector<1x4x4xbf16>
    %64 = vector.shape_cast %63 : vector<1x4x4xbf16> to vector<4x4xbf16>
    %cst_38 = arith.constant dense<0.000000e+00> : vector<16x4xf32>
    %65 = tpu.matmul %62, %64, %cst_38 {dimension_numbers = #tpu.dot_dimension_numbers<[1], [0], [0], [1], [0, 0, 1, 1], [], []>} : vector<16x4xbf16>, vector<4x4xbf16>, vector<16x4xf32> -> vector<16x4xf32>
    %66 = arith.addf %55, %65 : vector<16x4xf32>
    %c4 = arith.constant 4 : index
    %c0_39 = arith.constant 0 : index
    %67 = vector.load %arg11[%c4, %c0_39] : memref<26x4xbf16, #tpu.memory_space<vmem>>, vector<16x4xbf16>
    %c1_i32_40 = arith.constant 1 : i32
    %68 = vector.broadcast %c1_i32_40 : i32 to vector<16x1xi32>
    %69 = arith.cmpi sge, %38, %68 : vector<16x1xi32>
    %cst_41 = arith.constant 0.000000e+00 : bf16
    %70 = vector.broadcast %cst_41 : bf16 to vector<16x4xbf16>
    %71 = vector.shape_cast %69 : vector<16x1xi1> to vector<16x1xi1>
    %72 = vector.broadcast %71 : vector<16x1xi1> to vector<16x4xi1>
    %73 = arith.select %72, %67, %70 : vector<16x4xi1>, vector<16x4xbf16>
    %c3 = arith.constant 3 : index
    %c0_42 = arith.constant 0 : index
    %c0_43 = arith.constant 0 : index
    %74 = vector.load %arg6[%c3, %c0_42, %c0_43] : memref<9x4x4xbf16, #tpu.memory_space<vmem>>, vector<1x4x4xbf16>
    %75 = vector.shape_cast %74 : vector<1x4x4xbf16> to vector<4x4xbf16>
    %cst_44 = arith.constant dense<0.000000e+00> : vector<16x4xf32>
    %76 = tpu.matmul %73, %75, %cst_44 {dimension_numbers = #tpu.dot_dimension_numbers<[1], [0], [0], [1], [0, 0, 1, 1], [], []>} : vector<16x4xbf16>, vector<4x4xbf16>, vector<16x4xf32> -> vector<16x4xf32>
    %77 = arith.addf %66, %76 : vector<16x4xf32>
    %c5_45 = arith.constant 5 : index
    %c0_46 = arith.constant 0 : index
    %78 = vector.load %arg11[%c5_45, %c0_46] : memref<26x4xbf16, #tpu.memory_space<vmem>>, vector<16x4xbf16>
    %c4_47 = arith.constant 4 : index
    %c0_48 = arith.constant 0 : index
    %c0_49 = arith.constant 0 : index
    %79 = vector.load %arg6[%c4_47, %c0_48, %c0_49] : memref<9x4x4xbf16, #tpu.memory_space<vmem>>, vector<1x4x4xbf16>
    %80 = vector.shape_cast %79 : vector<1x4x4xbf16> to vector<4x4xbf16>
    %cst_50 = arith.constant dense<0.000000e+00> : vector<16x4xf32>
    %81 = tpu.matmul %78, %80, %cst_50 {dimension_numbers = #tpu.dot_dimension_numbers<[1], [0], [0], [1], [0, 0, 1, 1], [], []>} : vector<16x4xbf16>, vector<4x4xbf16>, vector<16x4xf32> -> vector<16x4xf32>
    %82 = arith.addf %77, %81 : vector<16x4xf32>
    %c6 = arith.constant 6 : index
    %c0_51 = arith.constant 0 : index
    %83 = vector.load %arg11[%c6, %c0_51] : memref<26x4xbf16, #tpu.memory_space<vmem>>, vector<16x4xbf16>
    %c2_i32_52 = arith.constant 2 : i32
    %84 = vector.broadcast %c2_i32_52 : i32 to vector<16x1xi32>
    %85 = arith.cmpi sle, %38, %84 : vector<16x1xi32>
    %cst_53 = arith.constant 0.000000e+00 : bf16
    %86 = vector.broadcast %cst_53 : bf16 to vector<16x4xbf16>
    %87 = vector.shape_cast %85 : vector<16x1xi1> to vector<16x1xi1>
    %88 = vector.broadcast %87 : vector<16x1xi1> to vector<16x4xi1>
    %89 = arith.select %88, %83, %86 : vector<16x4xi1>, vector<16x4xbf16>
    %c5_54 = arith.constant 5 : index
    %c0_55 = arith.constant 0 : index
    %c0_56 = arith.constant 0 : index
    %90 = vector.load %arg6[%c5_54, %c0_55, %c0_56] : memref<9x4x4xbf16, #tpu.memory_space<vmem>>, vector<1x4x4xbf16>
    %91 = vector.shape_cast %90 : vector<1x4x4xbf16> to vector<4x4xbf16>
    %cst_57 = arith.constant dense<0.000000e+00> : vector<16x4xf32>
    %92 = tpu.matmul %89, %91, %cst_57 {dimension_numbers = #tpu.dot_dimension_numbers<[1], [0], [0], [1], [0, 0, 1, 1], [], []>} : vector<16x4xbf16>, vector<4x4xbf16>, vector<16x4xf32> -> vector<16x4xf32>
    %93 = arith.addf %82, %92 : vector<16x4xf32>
    %c8 = arith.constant 8 : index
    %c0_58 = arith.constant 0 : index
    %94 = vector.load %arg11[%c8, %c0_58] : memref<26x4xbf16, #tpu.memory_space<vmem>>, vector<16x4xbf16>
    %c1_i32_59 = arith.constant 1 : i32
    %95 = vector.broadcast %c1_i32_59 : i32 to vector<16x1xi32>
    %96 = arith.cmpi sge, %38, %95 : vector<16x1xi32>
    %cst_60 = arith.constant 0.000000e+00 : bf16
    %97 = vector.broadcast %cst_60 : bf16 to vector<16x4xbf16>
    %98 = vector.shape_cast %96 : vector<16x1xi1> to vector<16x1xi1>
    %99 = vector.broadcast %98 : vector<16x1xi1> to vector<16x4xi1>
    %100 = arith.select %99, %94, %97 : vector<16x4xi1>, vector<16x4xbf16>
    %c6_61 = arith.constant 6 : index
    %c0_62 = arith.constant 0 : index
    %c0_63 = arith.constant 0 : index
    %101 = vector.load %arg6[%c6_61, %c0_62, %c0_63] : memref<9x4x4xbf16, #tpu.memory_space<vmem>>, vector<1x4x4xbf16>
    %102 = vector.shape_cast %101 : vector<1x4x4xbf16> to vector<4x4xbf16>
    %cst_64 = arith.constant dense<0.000000e+00> : vector<16x4xf32>
    %103 = tpu.matmul %100, %102, %cst_64 {dimension_numbers = #tpu.dot_dimension_numbers<[1], [0], [0], [1], [0, 0, 1, 1], [], []>} : vector<16x4xbf16>, vector<4x4xbf16>, vector<16x4xf32> -> vector<16x4xf32>
    %104 = arith.addf %93, %103 : vector<16x4xf32>
    %c9 = arith.constant 9 : index
    %c0_65 = arith.constant 0 : index
    %105 = vector.load %arg11[%c9, %c0_65] : memref<26x4xbf16, #tpu.memory_space<vmem>>, vector<16x4xbf16>
    %c7 = arith.constant 7 : index
    %c0_66 = arith.constant 0 : index
    %c0_67 = arith.constant 0 : index
    %106 = vector.load %arg6[%c7, %c0_66, %c0_67] : memref<9x4x4xbf16, #tpu.memory_space<vmem>>, vector<1x4x4xbf16>
    %107 = vector.shape_cast %106 : vector<1x4x4xbf16> to vector<4x4xbf16>
    %cst_68 = arith.constant dense<0.000000e+00> : vector<16x4xf32>
    %108 = tpu.matmul %105, %107, %cst_68 {dimension_numbers = #tpu.dot_dimension_numbers<[1], [0], [0], [1], [0, 0, 1, 1], [], []>} : vector<16x4xbf16>, vector<4x4xbf16>, vector<16x4xf32> -> vector<16x4xf32>
    %109 = arith.addf %104, %108 : vector<16x4xf32>
    %c10 = arith.constant 10 : index
    %c0_69 = arith.constant 0 : index
    %110 = vector.load %arg11[%c10, %c0_69] : memref<26x4xbf16, #tpu.memory_space<vmem>>, vector<16x4xbf16>
    %c2_i32_70 = arith.constant 2 : i32
    %111 = vector.broadcast %c2_i32_70 : i32 to vector<16x1xi32>
    %112 = arith.cmpi sle, %38, %111 : vector<16x1xi32>
    %cst_71 = arith.constant 0.000000e+00 : bf16
    %113 = vector.broadcast %cst_71 : bf16 to vector<16x4xbf16>
    %114 = vector.shape_cast %112 : vector<16x1xi1> to vector<16x1xi1>
    %115 = vector.broadcast %114 : vector<16x1xi1> to vector<16x4xi1>
    %116 = arith.select %115, %110, %113 : vector<16x4xi1>, vector<16x4xbf16>
    %c8_72 = arith.constant 8 : index
    %c0_73 = arith.constant 0 : index
    %c0_74 = arith.constant 0 : index
    %117 = vector.load %arg6[%c8_72, %c0_73, %c0_74] : memref<9x4x4xbf16, #tpu.memory_space<vmem>>, vector<1x4x4xbf16>
    %118 = vector.shape_cast %117 : vector<1x4x4xbf16> to vector<4x4xbf16>
    %cst_75 = arith.constant dense<0.000000e+00> : vector<16x4xf32>
    %119 = tpu.matmul %116, %118, %cst_75 {dimension_numbers = #tpu.dot_dimension_numbers<[1], [0], [0], [1], [0, 0, 1, 1], [], []>} : vector<16x4xbf16>, vector<4x4xbf16>, vector<16x4xf32> -> vector<16x4xf32>
    %120 = arith.addf %109, %119 : vector<16x4xf32>
    %c0_76 = arith.constant 0 : index
    %c0_77 = arith.constant 0 : index
    %121 = vector.load %arg7[%c0_76, %c0_77] : memref<1x4xf32, #tpu.memory_space<vmem>>, vector<1x4xf32>
    %122 = vector.broadcast %121 : vector<1x4xf32> to vector<16x4xf32>
    %123 = arith.addf %120, %122 : vector<16x4xf32>
    %cst_78 = arith.constant 0.000000e+00 : f32
    %124 = vector.broadcast %cst_78 : f32 to vector<16x4xf32>
    %125 = arith.maximumf %123, %124 : vector<16x4xf32>
    %126 = arith.truncf %125 : vector<16x4xf32> to vector<16x4xbf16>
    %c0_79 = arith.constant 0 : index
    %c0_80 = arith.constant 0 : index
    %127 = vector.load %arg8[%c0_79, %c0_80] : memref<4x8xbf16, #tpu.memory_space<vmem>>, vector<4x8xbf16>
    %cst_81 = arith.constant dense<0.000000e+00> : vector<16x8xf32>
    %128 = tpu.matmul %126, %127, %cst_81 {dimension_numbers = #tpu.dot_dimension_numbers<[1], [0], [0], [1], [0, 0, 1, 1], [], []>} : vector<16x4xbf16>, vector<4x8xbf16>, vector<16x8xf32> -> vector<16x8xf32>
    %c0_82 = arith.constant 0 : index
    %c0_83 = arith.constant 0 : index
    %129 = vector.load %arg9[%c0_82, %c0_83] : memref<1x8xf32, #tpu.memory_space<vmem>>, vector<1x8xf32>
    %130 = vector.broadcast %129 : vector<1x8xf32> to vector<16x8xf32>
    %131 = arith.addf %128, %130 : vector<16x8xf32>
    %132 = arith.addf %131, %1 : vector<16x8xf32>
    %c0_84 = arith.constant 0 : index
    %c0_85 = arith.constant 0 : index
    %c0_86 = arith.constant 0 : index
    %133 = vector.load %arg10[%c0_84, %c0_85, %c0_86] : memref<1x16x8xf32, #tpu.memory_space<vmem>>, vector<1x16x8xf32>
    %134 = vector.shape_cast %133 : vector<1x16x8xf32> to vector<16x8xf32>
    %135 = vector.shape_cast %132 : vector<16x8xf32> to vector<1x16x8xf32>
    tpu.vector_store %arg10[%c0_84, %c0_85, %c0_86], %135 {strides = array<i32>} : memref<1x16x8xf32, #tpu.memory_space<vmem>>, vector<1x16x8xf32>,
    return
  }
  func.func @transform_0(%arg0: i32) -> (i32, i32, i32) {
    %c0_i32 = arith.constant 0 : i32
    %c0_i32_0 = arith.constant 0 : i32
    %c0_i32_1 = arith.constant 0 : i32
    return %arg0, %c0_i32, %c0_i32_0 : i32, i32, i32
  }
  func.func @transform_1(%arg0: i32) -> (i32, i32) {
    %c0_i32 = arith.constant 0 : i32
    %c0_i32_0 = arith.constant 0 : i32
    %c0_i32_1 = arith.constant 0 : i32
    return %c0_i32, %c0_i32_0 : i32, i32
  }
  func.func @transform_2(%arg0: i32) -> (i32, i32) {
    %c0_i32 = arith.constant 0 : i32
    %c0_i32_0 = arith.constant 0 : i32
    %c0_i32_1 = arith.constant 0 : i32
    return %c0_i32, %c0_i32_0 : i32, i32
  }
  func.func @transform_3(%arg0: i32) -> (i32, i32) {
    %c0_i32 = arith.constant 0 : i32
    %c0_i32_0 = arith.constant 0 : i32
    %c0_i32_1 = arith.constant 0 : i32
    return %c0_i32, %c0_i32_0 : i32, i32
  }
  func.func @transform_4(%arg0: i32) -> (i32, i32) {
    %c0_i32 = arith.constant 0 : i32
    %c0_i32_0 = arith.constant 0 : i32
    %c0_i32_1 = arith.constant 0 : i32
    return %c0_i32, %c0_i32_0 : i32, i32
  }
  func.func @transform_5(%arg0: i32) -> (i32, i32, i32) {
    %c0_i32 = arith.constant 0 : i32
    %c0_i32_0 = arith.constant 0 : i32
    %c0_i32_1 = arith.constant 0 : i32
    %c0_i32_2 = arith.constant 0 : i32
    return %c0_i32, %c0_i32_0, %c0_i32_1 : i32, i32, i32
  }
  func.func @transform_6(%arg0: i32) -> (i32, i32) {
    %c0_i32 = arith.constant 0 : i32
    %c0_i32_0 = arith.constant 0 : i32
    %c0_i32_1 = arith.constant 0 : i32
    return %c0_i32, %c0_i32_0 : i32, i32
  }
  func.func @transform_7(%arg0: i32) -> (i32, i32) {
    %c0_i32 = arith.constant 0 : i32
    %c0_i32_0 = arith.constant 0 : i32
    %c0_i32_1 = arith.constant 0 : i32
    return %c0_i32, %c0_i32_0 : i32, i32
  }
  func.func @transform_8(%arg0: i32) -> (i32, i32) {
    %c0_i32 = arith.constant 0 : i32
    %c0_i32_0 = arith.constant 0 : i32
    %c0_i32_1 = arith.constant 0 : i32
    return %c0_i32, %c0_i32_0 : i32, i32
  }
  func.func @transform_9(%arg0: i32) -> (i32, i32, i32) {
    %c0_i32 = arith.constant 0 : i32
    %c0_i32_0 = arith.constant 0 : i32
    %c0_i32_1 = arith.constant 0 : i32
    return %arg0, %c0_i32, %c0_i32_0 : i32, i32, i32
  }
}

module attributes {stable_mosaic.version = 11 : i64} {
  func.func @_upadd_kernel(%arg0: i32, %arg1: memref<4x2x4x16xf32, #tpu.memory_space<vmem>>, %arg2: memref<4x4x8xf32, #tpu.memory_space<vmem>>, %arg3: memref<4x2x4x16xf32, #tpu.memory_space<vmem>>) attributes {dimension_semantics = [#tpu.dimension_semantics<parallel>], iteration_bounds = array<i64: 2>, scalar_prefetch = 0 : i64, scratch_operands = 0 : i64, tpu.core_type = #tpu.core_type<tc>, window_params = [{transform_indices = @transform_0, window_bounds = array<i64: 4, 2, 4, 16>}, {transform_indices = @transform_1, window_bounds = array<i64: 4, 4, 8>}, {transform_indices = @transform_2, window_bounds = array<i64: 4, 2, 4, 16>}]} {
    %c0 = arith.constant 0 : index
    %c0_0 = arith.constant 0 : index
    %c0_1 = arith.constant 0 : index
    %0 = vector.load %arg2[%c0, %c0_0, %c0_1] : memref<4x4x8xf32, #tpu.memory_space<vmem>>, vector<4x4x8xf32>
    %1 = tpu.concatenate %0, %0 in 2 : vector<4x4x8xf32>, vector<4x4x8xf32> -> vector<4x4x16xf32>
    %c0_2 = arith.constant 0 : index
    %c0_3 = arith.constant 0 : index
    %c0_4 = arith.constant 0 : index
    %c0_5 = arith.constant 0 : index
    %2 = vector.load %arg1[%c0_2, %c0_3, %c0_4, %c0_5] : memref<4x2x4x16xf32, #tpu.memory_space<vmem>>, vector<4x2x4x16xf32>
    %3 = vector.shape_cast %1 : vector<4x4x16xf32> to vector<4x1x4x16xf32>
    %4 = vector.broadcast %3 : vector<4x1x4x16xf32> to vector<4x2x4x16xf32>
    %5 = arith.addf %2, %4 : vector<4x2x4x16xf32>
    %c0_6 = arith.constant 0 : index
    %c0_7 = arith.constant 0 : index
    %c0_8 = arith.constant 0 : index
    %c0_9 = arith.constant 0 : index
    %6 = vector.load %arg3[%c0_6, %c0_7, %c0_8, %c0_9] : memref<4x2x4x16xf32, #tpu.memory_space<vmem>>, vector<4x2x4x16xf32>
    tpu.vector_store %arg3[%c0_6, %c0_7, %c0_8, %c0_9], %5 {strides = array<i32>} : memref<4x2x4x16xf32, #tpu.memory_space<vmem>>, vector<4x2x4x16xf32>,
    return
  }
  func.func @transform_0(%arg0: i32) -> (i32, i32, i32, i32) {
    %c0_i32 = arith.constant 0 : i32
    %c0_i32_0 = arith.constant 0 : i32
    %c0_i32_1 = arith.constant 0 : i32
    %c0_i32_2 = arith.constant 0 : i32
    return %arg0, %c0_i32, %c0_i32_0, %c0_i32_1 : i32, i32, i32, i32
  }
  func.func @transform_1(%arg0: i32) -> (i32, i32, i32) {
    %c0_i32 = arith.constant 0 : i32
    %c0_i32_0 = arith.constant 0 : i32
    %c0_i32_1 = arith.constant 0 : i32
    return %arg0, %c0_i32, %c0_i32_0 : i32, i32, i32
  }
  func.func @transform_2(%arg0: i32) -> (i32, i32, i32, i32) {
    %c0_i32 = arith.constant 0 : i32
    %c0_i32_0 = arith.constant 0 : i32
    %c0_i32_1 = arith.constant 0 : i32
    %c0_i32_2 = arith.constant 0 : i32
    return %arg0, %c0_i32, %c0_i32_0, %c0_i32_1 : i32, i32, i32, i32
  }
}

module attributes {stable_mosaic.version = 11 : i64} {
  func.func @_bottleneck_kernel(%arg0: i32, %arg1: memref<1x256x8xf32, #tpu.memory_space<vmem>>, %arg2: memref<1x8xf32, #tpu.memory_space<vmem>>, %arg3: memref<1x8xf32, #tpu.memory_space<vmem>>, %arg4: memref<8x4xbf16, #tpu.memory_space<vmem>>, %arg5: memref<1x4xf32, #tpu.memory_space<vmem>>, %arg6: memref<9x4x4xbf16, #tpu.memory_space<vmem>>, %arg7: memref<1x4xf32, #tpu.memory_space<vmem>>, %arg8: memref<4x8xbf16, #tpu.memory_space<vmem>>, %arg9: memref<1x8xf32, #tpu.memory_space<vmem>>, %arg10: memref<1x256x8xf32, #tpu.memory_space<vmem>>, %arg11: memref<290x4xbf16, #tpu.memory_space<vmem>>) attributes {dimension_semantics = [#tpu.dimension_semantics<parallel>], iteration_bounds = array<i64: 2>, scalar_prefetch = 0 : i64, scratch_operands = 1 : i64, tpu.core_type = #tpu.core_type<tc>, window_params = [{transform_indices = @transform_0, window_bounds = array<i64: 1, 256, 8>}, {pipeline_mode = #tpu.pipeline_mode<synchronous>, transform_indices = @transform_1, window_bounds = array<i64: 1, 8>}, {pipeline_mode = #tpu.pipeline_mode<synchronous>, transform_indices = @transform_2, window_bounds = array<i64: 1, 8>}, {pipeline_mode = #tpu.pipeline_mode<synchronous>, transform_indices = @transform_3, window_bounds = array<i64: 8, 4>}, {pipeline_mode = #tpu.pipeline_mode<synchronous>, transform_indices = @transform_4, window_bounds = array<i64: 1, 4>}, {pipeline_mode = #tpu.pipeline_mode<synchronous>, transform_indices = @transform_5, window_bounds = array<i64: 9, 4, 4>}, {pipeline_mode = #tpu.pipeline_mode<synchronous>, transform_indices = @transform_6, window_bounds = array<i64: 1, 4>}, {pipeline_mode = #tpu.pipeline_mode<synchronous>, transform_indices = @transform_7, window_bounds = array<i64: 4, 8>}, {pipeline_mode = #tpu.pipeline_mode<synchronous>, transform_indices = @transform_8, window_bounds = array<i64: 1, 8>}, {transform_indices = @transform_9, window_bounds = array<i64: 1, 256, 8>}]} {
    %c0 = arith.constant 0 : index
    %c0_0 = arith.constant 0 : index
    %c0_1 = arith.constant 0 : index
    %0 = vector.load %arg1[%c0, %c0_0, %c0_1] : memref<1x256x8xf32, #tpu.memory_space<vmem>>, vector<1x256x8xf32>
    %1 = vector.shape_cast %0 : vector<1x256x8xf32> to vector<256x8xf32>
    %c0_2 = arith.constant 0 : index
    %c0_3 = arith.constant 0 : index
    %2 = vector.load %arg2[%c0_2, %c0_3] : memref<1x8xf32, #tpu.memory_space<vmem>>, vector<1x8xf32>
    %3 = vector.broadcast %2 : vector<1x8xf32> to vector<256x8xf32>
    %4 = arith.mulf %1, %3 : vector<256x8xf32>
    %c0_4 = arith.constant 0 : index
    %c0_5 = arith.constant 0 : index
    %5 = vector.load %arg3[%c0_4, %c0_5] : memref<1x8xf32, #tpu.memory_space<vmem>>, vector<1x8xf32>
    %6 = vector.broadcast %5 : vector<1x8xf32> to vector<256x8xf32>
    %7 = arith.addf %4, %6 : vector<256x8xf32>
    %cst = arith.constant 0.000000e+00 : f32
    %8 = vector.broadcast %cst : f32 to vector<256x8xf32>
    %9 = arith.maximumf %7, %8 : vector<256x8xf32>
    %10 = arith.truncf %9 : vector<256x8xf32> to vector<256x8xbf16>
    %c0_6 = arith.constant 0 : index
    %c0_7 = arith.constant 0 : index
    %11 = vector.load %arg4[%c0_6, %c0_7] : memref<8x4xbf16, #tpu.memory_space<vmem>>, vector<8x4xbf16>
    %cst_8 = arith.constant dense<0.000000e+00> : vector<256x4xf32>
    %12 = tpu.matmul %10, %11, %cst_8 {dimension_numbers = #tpu.dot_dimension_numbers<[1], [0], [0], [1], [0, 0, 1, 1], [], []>} : vector<256x8xbf16>, vector<8x4xbf16>, vector<256x4xf32> -> vector<256x4xf32>
    %c0_9 = arith.constant 0 : index
    %c0_10 = arith.constant 0 : index
    %13 = vector.load %arg5[%c0_9, %c0_10] : memref<1x4xf32, #tpu.memory_space<vmem>>, vector<1x4xf32>
    %14 = vector.broadcast %13 : vector<1x4xf32> to vector<256x4xf32>
    %15 = arith.addf %12, %14 : vector<256x4xf32>
    %cst_11 = arith.constant 0.000000e+00 : f32
    %16 = vector.broadcast %cst_11 : f32 to vector<256x4xf32>
    %17 = arith.maximumf %15, %16 : vector<256x4xf32>
    %cst_12 = arith.constant 0.000000e+00 : bf16
    %18 = vector.broadcast %cst_12 : bf16 to vector<290x4xbf16>
    %c0_13 = arith.constant 0 : index
    %c0_14 = arith.constant 0 : index
    %19 = vector.load %arg11[%c0_13, %c0_14] : memref<290x4xbf16, #tpu.memory_space<vmem>>, vector<290x4xbf16>
    tpu.vector_store %arg11[%c0_13, %c0_14], %18 {strides = array<i32>} : memref<290x4xbf16, #tpu.memory_space<vmem>>, vector<290x4xbf16>,
    %20 = arith.truncf %17 : vector<256x4xf32> to vector<256x4xbf16>
    %c17 = arith.constant 17 : index
    %c0_15 = arith.constant 0 : index
    %21 = vector.load %arg11[%c17, %c0_15] : memref<290x4xbf16, #tpu.memory_space<vmem>>, vector<256x4xbf16>
    tpu.vector_store %arg11[%c17, %c0_15], %20 {strides = array<i32>} : memref<290x4xbf16, #tpu.memory_space<vmem>>, vector<256x4xbf16>,
    %22 = tpu.iota {dimensions = array<i32: 0>} : vector<256x1xi32>
    %c16_i32 = arith.constant 16 : i32
    %c0_i32 = arith.constant 0 : i32
    %23 = arith.cmpi eq, %c16_i32, %c0_i32 : i32
    %c1_i32 = arith.constant 1 : i32
    %24 = arith.select %23, %c1_i32, %c16_i32 : i32
    %25 = vector.broadcast %24 : i32 to vector<256x1xi32>
    %26 = arith.remsi %22, %25 : vector<256x1xi32>
    %c0_i32_16 = arith.constant 0 : i32
    %27 = vector.broadcast %c0_i32_16 : i32 to vector<256x1xi32>
    %28 = arith.cmpi ne, %26, %27 : vector<256x1xi32>
    %c0_i32_17 = arith.constant 0 : i32
    %29 = vector.broadcast %c0_i32_17 : i32 to vector<256x1xi32>
    %30 = arith.cmpi slt, %26, %29 : vector<256x1xi32>
    %c0_i32_18 = arith.constant 0 : i32
    %31 = arith.cmpi slt, %24, %c0_i32_18 : i32
    %32 = vector.broadcast %31 : i1 to vector<256x1xi1>
    %33 = vector.broadcast %32 : vector<256x1xi1> to vector<256x1xi1>
    %34 = arith.xori %30, %33 : vector<256x1xi1>
    %35 = arith.andi %34, %28 : vector<256x1xi1>
    %36 = vector.broadcast %24 : i32 to vector<256x1xi32>
    %37 = arith.addi %26, %36 : vector<256x1xi32>
    %38 = arith.select %35, %37, %26 : vector<256x1xi1>, vector<256x1xi32>
    %cst_19 = arith.constant 0.000000e+00 : f32
    %39 = vector.broadcast %cst_19 : f32 to vector<256x4xf32>
    %c0_20 = arith.constant 0 : index
    %c0_21 = arith.constant 0 : index
    %40 = vector.load %arg11[%c0_20, %c0_21] : memref<290x4xbf16, #tpu.memory_space<vmem>>, vector<256x4xbf16>
    %c1_i32_22 = arith.constant 1 : i32
    %41 = vector.broadcast %c1_i32_22 : i32 to vector<256x1xi32>
    %42 = arith.cmpi sge, %38, %41 : vector<256x1xi32>
    %cst_23 = arith.constant 0.000000e+00 : bf16
    %43 = vector.broadcast %cst_23 : bf16 to vector<256x4xbf16>
    %44 = vector.shape_cast %42 : vector<256x1xi1> to vector<256x1xi1>
    %45 = vector.broadcast %44 : vector<256x1xi1> to vector<256x4xi1>
    %46 = arith.select %45, %40, %43 : vector<256x4xi1>, vector<256x4xbf16>
    %c0_24 = arith.constant 0 : index
    %c0_25 = arith.constant 0 : index
    %c0_26 = arith.constant 0 : index
    %47 = vector.load %arg6[%c0_24, %c0_25, %c0_26] : memref<9x4x4xbf16, #tpu.memory_space<vmem>>, vector<1x4x4xbf16>
    %48 = vector.shape_cast %47 : vector<1x4x4xbf16> to vector<4x4xbf16>
    %cst_27 = arith.constant dense<0.000000e+00> : vector<256x4xf32>
    %49 = tpu.matmul %46, %48, %cst_27 {dimension_numbers = #tpu.dot_dimension_numbers<[1], [0], [0], [1], [0, 0, 1, 1], [], []>} : vector<256x4xbf16>, vector<4x4xbf16>, vector<256x4xf32> -> vector<256x4xf32>
    %50 = arith.addf %39, %49 : vector<256x4xf32>
    %c1 = arith.constant 1 : index
    %c0_28 = arith.constant 0 : index
    %51 = vector.load %arg11[%c1, %c0_28] : memref<290x4xbf16, #tpu.memory_space<vmem>>, vector<256x4xbf16>
    %c1_29 = arith.constant 1 : index
    %c0_30 = arith.constant 0 : index
    %c0_31 = arith.constant 0 : index
    %52 = vector.load %arg6[%c1_29, %c0_30, %c0_31] : memref<9x4x4xbf16, #tpu.memory_space<vmem>>, vector<1x4x4xbf16>
    %53 = vector.shape_cast %52 : vector<1x4x4xbf16> to vector<4x4xbf16>
    %cst_32 = arith.constant dense<0.000000e+00> : vector<256x4xf32>
    %54 = tpu.matmul %51, %53, %cst_32 {dimension_numbers = #tpu.dot_dimension_numbers<[1], [0], [0], [1], [0, 0, 1, 1], [], []>} : vector<256x4xbf16>, vector<4x4xbf16>, vector<256x4xf32> -> vector<256x4xf32>
    %55 = arith.addf %50, %54 : vector<256x4xf32>
    %c2 = arith.constant 2 : index
    %c0_33 = arith.constant 0 : index
    %56 = vector.load %arg11[%c2, %c0_33] : memref<290x4xbf16, #tpu.memory_space<vmem>>, vector<256x4xbf16>
    %c14_i32 = arith.constant 14 : i32
    %57 = vector.broadcast %c14_i32 : i32 to vector<256x1xi32>
    %58 = arith.cmpi sle, %38, %57 : vector<256x1xi32>
    %cst_34 = arith.constant 0.000000e+00 : bf16
    %59 = vector.broadcast %cst_34 : bf16 to vector<256x4xbf16>
    %60 = vector.shape_cast %58 : vector<256x1xi1> to vector<256x1xi1>
    %61 = vector.broadcast %60 : vector<256x1xi1> to vector<256x4xi1>
    %62 = arith.select %61, %56, %59 : vector<256x4xi1>, vector<256x4xbf16>
    %c2_35 = arith.constant 2 : index
    %c0_36 = arith.constant 0 : index
    %c0_37 = arith.constant 0 : index
    %63 = vector.load %arg6[%c2_35, %c0_36, %c0_37] : memref<9x4x4xbf16, #tpu.memory_space<vmem>>, vector<1x4x4xbf16>
    %64 = vector.shape_cast %63 : vector<1x4x4xbf16> to vector<4x4xbf16>
    %cst_38 = arith.constant dense<0.000000e+00> : vector<256x4xf32>
    %65 = tpu.matmul %62, %64, %cst_38 {dimension_numbers = #tpu.dot_dimension_numbers<[1], [0], [0], [1], [0, 0, 1, 1], [], []>} : vector<256x4xbf16>, vector<4x4xbf16>, vector<256x4xf32> -> vector<256x4xf32>
    %66 = arith.addf %55, %65 : vector<256x4xf32>
    %c16 = arith.constant 16 : index
    %c0_39 = arith.constant 0 : index
    %67 = vector.load %arg11[%c16, %c0_39] : memref<290x4xbf16, #tpu.memory_space<vmem>>, vector<256x4xbf16>
    %c1_i32_40 = arith.constant 1 : i32
    %68 = vector.broadcast %c1_i32_40 : i32 to vector<256x1xi32>
    %69 = arith.cmpi sge, %38, %68 : vector<256x1xi32>
    %cst_41 = arith.constant 0.000000e+00 : bf16
    %70 = vector.broadcast %cst_41 : bf16 to vector<256x4xbf16>
    %71 = vector.shape_cast %69 : vector<256x1xi1> to vector<256x1xi1>
    %72 = vector.broadcast %71 : vector<256x1xi1> to vector<256x4xi1>
    %73 = arith.select %72, %67, %70 : vector<256x4xi1>, vector<256x4xbf16>
    %c3 = arith.constant 3 : index
    %c0_42 = arith.constant 0 : index
    %c0_43 = arith.constant 0 : index
    %74 = vector.load %arg6[%c3, %c0_42, %c0_43] : memref<9x4x4xbf16, #tpu.memory_space<vmem>>, vector<1x4x4xbf16>
    %75 = vector.shape_cast %74 : vector<1x4x4xbf16> to vector<4x4xbf16>
    %cst_44 = arith.constant dense<0.000000e+00> : vector<256x4xf32>
    %76 = tpu.matmul %73, %75, %cst_44 {dimension_numbers = #tpu.dot_dimension_numbers<[1], [0], [0], [1], [0, 0, 1, 1], [], []>} : vector<256x4xbf16>, vector<4x4xbf16>, vector<256x4xf32> -> vector<256x4xf32>
    %77 = arith.addf %66, %76 : vector<256x4xf32>
    %c17_45 = arith.constant 17 : index
    %c0_46 = arith.constant 0 : index
    %78 = vector.load %arg11[%c17_45, %c0_46] : memref<290x4xbf16, #tpu.memory_space<vmem>>, vector<256x4xbf16>
    %c4 = arith.constant 4 : index
    %c0_47 = arith.constant 0 : index
    %c0_48 = arith.constant 0 : index
    %79 = vector.load %arg6[%c4, %c0_47, %c0_48] : memref<9x4x4xbf16, #tpu.memory_space<vmem>>, vector<1x4x4xbf16>
    %80 = vector.shape_cast %79 : vector<1x4x4xbf16> to vector<4x4xbf16>
    %cst_49 = arith.constant dense<0.000000e+00> : vector<256x4xf32>
    %81 = tpu.matmul %78, %80, %cst_49 {dimension_numbers = #tpu.dot_dimension_numbers<[1], [0], [0], [1], [0, 0, 1, 1], [], []>} : vector<256x4xbf16>, vector<4x4xbf16>, vector<256x4xf32> -> vector<256x4xf32>
    %82 = arith.addf %77, %81 : vector<256x4xf32>
    %c18 = arith.constant 18 : index
    %c0_50 = arith.constant 0 : index
    %83 = vector.load %arg11[%c18, %c0_50] : memref<290x4xbf16, #tpu.memory_space<vmem>>, vector<256x4xbf16>
    %c14_i32_51 = arith.constant 14 : i32
    %84 = vector.broadcast %c14_i32_51 : i32 to vector<256x1xi32>
    %85 = arith.cmpi sle, %38, %84 : vector<256x1xi32>
    %cst_52 = arith.constant 0.000000e+00 : bf16
    %86 = vector.broadcast %cst_52 : bf16 to vector<256x4xbf16>
    %87 = vector.shape_cast %85 : vector<256x1xi1> to vector<256x1xi1>
    %88 = vector.broadcast %87 : vector<256x1xi1> to vector<256x4xi1>
    %89 = arith.select %88, %83, %86 : vector<256x4xi1>, vector<256x4xbf16>
    %c5 = arith.constant 5 : index
    %c0_53 = arith.constant 0 : index
    %c0_54 = arith.constant 0 : index
    %90 = vector.load %arg6[%c5, %c0_53, %c0_54] : memref<9x4x4xbf16, #tpu.memory_space<vmem>>, vector<1x4x4xbf16>
    %91 = vector.shape_cast %90 : vector<1x4x4xbf16> to vector<4x4xbf16>
    %cst_55 = arith.constant dense<0.000000e+00> : vector<256x4xf32>
    %92 = tpu.matmul %89, %91, %cst_55 {dimension_numbers = #tpu.dot_dimension_numbers<[1], [0], [0], [1], [0, 0, 1, 1], [], []>} : vector<256x4xbf16>, vector<4x4xbf16>, vector<256x4xf32> -> vector<256x4xf32>
    %93 = arith.addf %82, %92 : vector<256x4xf32>
    %c32 = arith.constant 32 : index
    %c0_56 = arith.constant 0 : index
    %94 = vector.load %arg11[%c32, %c0_56] : memref<290x4xbf16, #tpu.memory_space<vmem>>, vector<256x4xbf16>
    %c1_i32_57 = arith.constant 1 : i32
    %95 = vector.broadcast %c1_i32_57 : i32 to vector<256x1xi32>
    %96 = arith.cmpi sge, %38, %95 : vector<256x1xi32>
    %cst_58 = arith.constant 0.000000e+00 : bf16
    %97 = vector.broadcast %cst_58 : bf16 to vector<256x4xbf16>
    %98 = vector.shape_cast %96 : vector<256x1xi1> to vector<256x1xi1>
    %99 = vector.broadcast %98 : vector<256x1xi1> to vector<256x4xi1>
    %100 = arith.select %99, %94, %97 : vector<256x4xi1>, vector<256x4xbf16>
    %c6 = arith.constant 6 : index
    %c0_59 = arith.constant 0 : index
    %c0_60 = arith.constant 0 : index
    %101 = vector.load %arg6[%c6, %c0_59, %c0_60] : memref<9x4x4xbf16, #tpu.memory_space<vmem>>, vector<1x4x4xbf16>
    %102 = vector.shape_cast %101 : vector<1x4x4xbf16> to vector<4x4xbf16>
    %cst_61 = arith.constant dense<0.000000e+00> : vector<256x4xf32>
    %103 = tpu.matmul %100, %102, %cst_61 {dimension_numbers = #tpu.dot_dimension_numbers<[1], [0], [0], [1], [0, 0, 1, 1], [], []>} : vector<256x4xbf16>, vector<4x4xbf16>, vector<256x4xf32> -> vector<256x4xf32>
    %104 = arith.addf %93, %103 : vector<256x4xf32>
    %c33 = arith.constant 33 : index
    %c0_62 = arith.constant 0 : index
    %105 = vector.load %arg11[%c33, %c0_62] : memref<290x4xbf16, #tpu.memory_space<vmem>>, vector<256x4xbf16>
    %c7 = arith.constant 7 : index
    %c0_63 = arith.constant 0 : index
    %c0_64 = arith.constant 0 : index
    %106 = vector.load %arg6[%c7, %c0_63, %c0_64] : memref<9x4x4xbf16, #tpu.memory_space<vmem>>, vector<1x4x4xbf16>
    %107 = vector.shape_cast %106 : vector<1x4x4xbf16> to vector<4x4xbf16>
    %cst_65 = arith.constant dense<0.000000e+00> : vector<256x4xf32>
    %108 = tpu.matmul %105, %107, %cst_65 {dimension_numbers = #tpu.dot_dimension_numbers<[1], [0], [0], [1], [0, 0, 1, 1], [], []>} : vector<256x4xbf16>, vector<4x4xbf16>, vector<256x4xf32> -> vector<256x4xf32>
    %109 = arith.addf %104, %108 : vector<256x4xf32>
    %c34 = arith.constant 34 : index
    %c0_66 = arith.constant 0 : index
    %110 = vector.load %arg11[%c34, %c0_66] : memref<290x4xbf16, #tpu.memory_space<vmem>>, vector<256x4xbf16>
    %c14_i32_67 = arith.constant 14 : i32
    %111 = vector.broadcast %c14_i32_67 : i32 to vector<256x1xi32>
    %112 = arith.cmpi sle, %38, %111 : vector<256x1xi32>
    %cst_68 = arith.constant 0.000000e+00 : bf16
    %113 = vector.broadcast %cst_68 : bf16 to vector<256x4xbf16>
    %114 = vector.shape_cast %112 : vector<256x1xi1> to vector<256x1xi1>
    %115 = vector.broadcast %114 : vector<256x1xi1> to vector<256x4xi1>
    %116 = arith.select %115, %110, %113 : vector<256x4xi1>, vector<256x4xbf16>
    %c8 = arith.constant 8 : index
    %c0_69 = arith.constant 0 : index
    %c0_70 = arith.constant 0 : index
    %117 = vector.load %arg6[%c8, %c0_69, %c0_70] : memref<9x4x4xbf16, #tpu.memory_space<vmem>>, vector<1x4x4xbf16>
    %118 = vector.shape_cast %117 : vector<1x4x4xbf16> to vector<4x4xbf16>
    %cst_71 = arith.constant dense<0.000000e+00> : vector<256x4xf32>
    %119 = tpu.matmul %116, %118, %cst_71 {dimension_numbers = #tpu.dot_dimension_numbers<[1], [0], [0], [1], [0, 0, 1, 1], [], []>} : vector<256x4xbf16>, vector<4x4xbf16>, vector<256x4xf32> -> vector<256x4xf32>
    %120 = arith.addf %109, %119 : vector<256x4xf32>
    %c0_72 = arith.constant 0 : index
    %c0_73 = arith.constant 0 : index
    %121 = vector.load %arg7[%c0_72, %c0_73] : memref<1x4xf32, #tpu.memory_space<vmem>>, vector<1x4xf32>
    %122 = vector.broadcast %121 : vector<1x4xf32> to vector<256x4xf32>
    %123 = arith.addf %120, %122 : vector<256x4xf32>
    %cst_74 = arith.constant 0.000000e+00 : f32
    %124 = vector.broadcast %cst_74 : f32 to vector<256x4xf32>
    %125 = arith.maximumf %123, %124 : vector<256x4xf32>
    %126 = arith.truncf %125 : vector<256x4xf32> to vector<256x4xbf16>
    %c0_75 = arith.constant 0 : index
    %c0_76 = arith.constant 0 : index
    %127 = vector.load %arg8[%c0_75, %c0_76] : memref<4x8xbf16, #tpu.memory_space<vmem>>, vector<4x8xbf16>
    %cst_77 = arith.constant dense<0.000000e+00> : vector<256x8xf32>
    %128 = tpu.matmul %126, %127, %cst_77 {dimension_numbers = #tpu.dot_dimension_numbers<[1], [0], [0], [1], [0, 0, 1, 1], [], []>} : vector<256x4xbf16>, vector<4x8xbf16>, vector<256x8xf32> -> vector<256x8xf32>
    %c0_78 = arith.constant 0 : index
    %c0_79 = arith.constant 0 : index
    %129 = vector.load %arg9[%c0_78, %c0_79] : memref<1x8xf32, #tpu.memory_space<vmem>>, vector<1x8xf32>
    %130 = vector.broadcast %129 : vector<1x8xf32> to vector<256x8xf32>
    %131 = arith.addf %128, %130 : vector<256x8xf32>
    %132 = arith.addf %131, %1 : vector<256x8xf32>
    %c0_80 = arith.constant 0 : index
    %c0_81 = arith.constant 0 : index
    %c0_82 = arith.constant 0 : index
    %133 = vector.load %arg10[%c0_80, %c0_81, %c0_82] : memref<1x256x8xf32, #tpu.memory_space<vmem>>, vector<1x256x8xf32>
    %134 = vector.shape_cast %133 : vector<1x256x8xf32> to vector<256x8xf32>
    %135 = vector.shape_cast %132 : vector<256x8xf32> to vector<1x256x8xf32>
    tpu.vector_store %arg10[%c0_80, %c0_81, %c0_82], %135 {strides = array<i32>} : memref<1x256x8xf32, #tpu.memory_space<vmem>>, vector<1x256x8xf32>,
    return
  }
  func.func @transform_0(%arg0: i32) -> (i32, i32, i32) {
    %c0_i32 = arith.constant 0 : i32
    %c0_i32_0 = arith.constant 0 : i32
    %c0_i32_1 = arith.constant 0 : i32
    return %arg0, %c0_i32, %c0_i32_0 : i32, i32, i32
  }
  func.func @transform_1(%arg0: i32) -> (i32, i32) {
    %c0_i32 = arith.constant 0 : i32
    %c0_i32_0 = arith.constant 0 : i32
    %c0_i32_1 = arith.constant 0 : i32
    return %c0_i32, %c0_i32_0 : i32, i32
  }
  func.func @transform_2(%arg0: i32) -> (i32, i32) {
    %c0_i32 = arith.constant 0 : i32
    %c0_i32_0 = arith.constant 0 : i32
    %c0_i32_1 = arith.constant 0 : i32
    return %c0_i32, %c0_i32_0 : i32, i32
  }
  func.func @transform_3(%arg0: i32) -> (i32, i32) {
    %c0_i32 = arith.constant 0 : i32
    %c0_i32_0 = arith.constant 0 : i32
    %c0_i32_1 = arith.constant 0 : i32
    return %c0_i32, %c0_i32_0 : i32, i32
  }
  func.func @transform_4(%arg0: i32) -> (i32, i32) {
    %c0_i32 = arith.constant 0 : i32
    %c0_i32_0 = arith.constant 0 : i32
    %c0_i32_1 = arith.constant 0 : i32
    return %c0_i32, %c0_i32_0 : i32, i32
  }
  func.func @transform_5(%arg0: i32) -> (i32, i32, i32) {
    %c0_i32 = arith.constant 0 : i32
    %c0_i32_0 = arith.constant 0 : i32
    %c0_i32_1 = arith.constant 0 : i32
    %c0_i32_2 = arith.constant 0 : i32
    return %c0_i32, %c0_i32_0, %c0_i32_1 : i32, i32, i32
  }
  func.func @transform_6(%arg0: i32) -> (i32, i32) {
    %c0_i32 = arith.constant 0 : i32
    %c0_i32_0 = arith.constant 0 : i32
    %c0_i32_1 = arith.constant 0 : i32
    return %c0_i32, %c0_i32_0 : i32, i32
  }
  func.func @transform_7(%arg0: i32) -> (i32, i32) {
    %c0_i32 = arith.constant 0 : i32
    %c0_i32_0 = arith.constant 0 : i32
    %c0_i32_1 = arith.constant 0 : i32
    return %c0_i32, %c0_i32_0 : i32, i32
  }
  func.func @transform_8(%arg0: i32) -> (i32, i32) {
    %c0_i32 = arith.constant 0 : i32
    %c0_i32_0 = arith.constant 0 : i32
    %c0_i32_1 = arith.constant 0 : i32
    return %c0_i32, %c0_i32_0 : i32, i32
  }
  func.func @transform_9(%arg0: i32) -> (i32, i32, i32) {
    %c0_i32 = arith.constant 0 : i32
    %c0_i32_0 = arith.constant 0 : i32
    %c0_i32_1 = arith.constant 0 : i32
    return %arg0, %c0_i32, %c0_i32_0 : i32, i32, i32
  }
}

module attributes {stable_mosaic.version = 11 : i64} {
  func.func @_upadd_kernel(%arg0: i32, %arg1: memref<8x2x8x16xf32, #tpu.memory_space<vmem>>, %arg2: memref<8x8x8xf32, #tpu.memory_space<vmem>>, %arg3: memref<8x2x8x16xf32, #tpu.memory_space<vmem>>) attributes {dimension_semantics = [#tpu.dimension_semantics<parallel>], iteration_bounds = array<i64: 2>, scalar_prefetch = 0 : i64, scratch_operands = 0 : i64, tpu.core_type = #tpu.core_type<tc>, window_params = [{transform_indices = @transform_0, window_bounds = array<i64: 8, 2, 8, 16>}, {transform_indices = @transform_1, window_bounds = array<i64: 8, 8, 8>}, {transform_indices = @transform_2, window_bounds = array<i64: 8, 2, 8, 16>}]} {
    %c0 = arith.constant 0 : index
    %c0_0 = arith.constant 0 : index
    %c0_1 = arith.constant 0 : index
    %0 = vector.load %arg2[%c0, %c0_0, %c0_1] : memref<8x8x8xf32, #tpu.memory_space<vmem>>, vector<8x8x8xf32>
    %1 = tpu.concatenate %0, %0 in 2 : vector<8x8x8xf32>, vector<8x8x8xf32> -> vector<8x8x16xf32>
    %c0_2 = arith.constant 0 : index
    %c0_3 = arith.constant 0 : index
    %c0_4 = arith.constant 0 : index
    %c0_5 = arith.constant 0 : index
    %2 = vector.load %arg1[%c0_2, %c0_3, %c0_4, %c0_5] : memref<8x2x8x16xf32, #tpu.memory_space<vmem>>, vector<8x2x8x16xf32>
    %3 = vector.shape_cast %1 : vector<8x8x16xf32> to vector<8x1x8x16xf32>
    %4 = vector.broadcast %3 : vector<8x1x8x16xf32> to vector<8x2x8x16xf32>
    %5 = arith.addf %2, %4 : vector<8x2x8x16xf32>
    %c0_6 = arith.constant 0 : index
    %c0_7 = arith.constant 0 : index
    %c0_8 = arith.constant 0 : index
    %c0_9 = arith.constant 0 : index
    %6 = vector.load %arg3[%c0_6, %c0_7, %c0_8, %c0_9] : memref<8x2x8x16xf32, #tpu.memory_space<vmem>>, vector<8x2x8x16xf32>
    tpu.vector_store %arg3[%c0_6, %c0_7, %c0_8, %c0_9], %5 {strides = array<i32>} : memref<8x2x8x16xf32, #tpu.memory_space<vmem>>, vector<8x2x8x16xf32>,
    return
  }
  func.func @transform_0(%arg0: i32) -> (i32, i32, i32, i32) {
    %c0_i32 = arith.constant 0 : i32
    %c0_i32_0 = arith.constant 0 : i32
    %c0_i32_1 = arith.constant 0 : i32
    %c0_i32_2 = arith.constant 0 : i32
    return %arg0, %c0_i32, %c0_i32_0, %c0_i32_1 : i32, i32, i32, i32
  }
  func.func @transform_1(%arg0: i32) -> (i32, i32, i32) {
    %c0_i32 = arith.constant 0 : i32
    %c0_i32_0 = arith.constant 0 : i32
    %c0_i32_1 = arith.constant 0 : i32
    return %arg0, %c0_i32, %c0_i32_0 : i32, i32, i32
  }
  func.func @transform_2(%arg0: i32) -> (i32, i32, i32, i32) {
    %c0_i32 = arith.constant 0 : i32
    %c0_i32_0 = arith.constant 0 : i32
    %c0_i32_1 = arith.constant 0 : i32
    %c0_i32_2 = arith.constant 0 : i32
    return %arg0, %c0_i32, %c0_i32_0, %c0_i32_1 : i32, i32, i32, i32
  }
}

</mosaic_0001>

<llo_original>
// kernel: hourglass_forward.12
$region0: #{hourglass_forward.12}
  #allocation0 [shape = 'u32[]', space=smem, size = 0x4, offset = 0x4, fixed_abs, tag = 'smem constant byte address 0x4 - core index']
  #allocation1 [shape = 'u32[144,128]{1,0:T(1,128)}', space=vmem, size = 0x12000, scoped, tag = 'internal scratch']
  %s0 = inlined_call_operand.vmem [shape: f32[16,2,8,16], index: 0, kind: input, shape index: {}]
  %s1 = inlined_call_operand.vmem [shape: f32[16,8,8], index: 1, kind: output, shape index: {}]
  %s2 = sld [smem:[#allocation0]]
  $region37: #{hourglass_forward.12} parent=0
    _
  %s4 = ssub.s32 1, %s2
  %s5 = scalar_select 0, %s4, %s2
  loop: start=0, step=1, limit=4
  $region2: #{hourglass_forward.12} parent=0 // loop_pre_header
    _
  $region3: #{hourglass_forward.12} parent=0 // loop_header
    %s7 = sphi 0, %s11
    %p8 = scmp.ge.s32.totalorder %s7, 4
    %s17 = sphi 0, %s19
    %s20 = sphi 0, %s17
    %s21 = sphi 0, %s20
    %s37 = sphi 0, %s21
    %s43 = sphi 0, %s45
    %s46 = sphi 0, %s43
    %s47 = sphi 0, %s46
    %s63 = sphi 0, %s47
  $region4: #{hourglass_forward.12} parent=0 // loop_header_branch
    %10 = sbr.rel (%p8) target = $region8
  $region5: #{hourglass_forward.12} parent=0 // loop_body
    %s12 = ssub.s32 %s7, 1
    %s13 = ssub.s32 %s7, 2
    %s14 = sadd.s32 %s7, 1
    %s15 = ssub.s32 %s7, %s14
    %p16 = scmp.eq.s32.totalorder %s15, 0
    %s18 = sadd.s32 %s17, 1
    %s19 = scalar_select %p16, %s17, %s18
    %p22 = pneg %p16
    %p23 = scmp.eq.s32.totalorder %s7, 1
    %p24 = por %p22, %p23
    %p25 = scmp.ne.s32.totalorder %s17, %s20
    %p26 = scmp.eq.s32.totalorder %s7, 0
    %p27 = por %p25, %p26
    %p28 = scmp.ne.s32.totalorder %s17, %s20
    %p29 = scmp.eq.s32.totalorder %s12, 1
    %p30 = por %p28, %p29
    %p31 = scmp.ne.s32.totalorder %s20, %s21
    %p32 = scmp.eq.s32.totalorder %s12, 0
    %p33 = por %p31, %p32
    %p34 = scmp.ne.s32.totalorder %s20, %s21
    %p35 = scmp.eq.s32.totalorder %s13, 1
    %p36 = por %p34, %p35
    %p38 = scmp.ne.s32.totalorder %s21, %s37
    %p39 = scmp.eq.s32.totalorder %s13, 0
    %p40 = por %p38, %p39
    %s41 = ssub.s32 %s7, %s14
    %p42 = scmp.eq.s32.totalorder %s41, 0
    %s44 = sadd.s32 %s43, 1
    %s45 = scalar_select %p42, %s43, %s44
    %p48 = pneg %p42
    %p49 = scmp.eq.s32.totalorder %s7, 1
    %p50 = por %p48, %p49
    %p51 = scmp.ne.s32.totalorder %s43, %s46
    %p52 = scmp.eq.s32.totalorder %s7, 0
    %p53 = por %p51, %p52
    %p54 = scmp.ne.s32.totalorder %s43, %s46
    %p55 = scmp.eq.s32.totalorder %s12, 1
    %p56 = por %p54, %p55
    %p57 = scmp.ne.s32.totalorder %s46, %s47
    %p58 = scmp.eq.s32.totalorder %s12, 0
    %p59 = por %p57, %p58
    %p60 = scmp.ne.s32.totalorder %s46, %s47
    %p61 = scmp.eq.s32.totalorder %s13, 1
    %p62 = por %p60, %p61
    %p64 = scmp.ne.s32.totalorder %s47, %s63
    %p65 = scmp.eq.s32.totalorder %s13, 0
    %p66 = por %p64, %p65
    %p67 = scmp.le.s32.totalorder 1, %s7
    %p68 = scmp.lt.s32.totalorder %s7, 3
    %p69 = pnand %p67, %p68
    %p70 = pneg %p69
    // Predicated region
    $region9: #{hourglass_forward.12} parent=5 // pred_check
      _
    $region10: #{hourglass_forward.12} parent=5 // pred_check_branch
      %72 = sbr.rel (%p69) target = $region12
    $region11: #{hourglass_forward.12} parent=5 // pred_region
      %s73 = ssub.s32 %s7, 1
    $region12: #{hourglass_forward.12} parent=5 // pred_fallthru
      _
    %p74 = scmp.lt.s32.totalorder %s7, 2
    // Predicated region
    $region13: #{hourglass_forward.12} parent=5 // pred_check
      %p75 = pneg %p74
    $region14: #{hourglass_forward.12} parent=5 // pred_check_branch
      %77 = sbr.rel (%p75) target = $region16
    $region15: #{hourglass_forward.12} parent=5 // pred_region
      // Predicated region
      $region17: #{hourglass_forward.12} parent=15 // pred_check
        %p78 = pneg %p27
      $region18: #{hourglass_forward.12} parent=15 // pred_check_branch
        %80 = sbr.rel (%p78) target = $region20
      $region19: #{hourglass_forward.12} parent=15 // pred_region
        %s81 = smul.u32 8, %s7
        %p82 = scmp.lt.s32.totalorder %s81, 15
        %s83 = scalar_select %p82, %s81, 15
        %s84 = smul.addr %s83, 2
        %s85 = smul.addr %s84, 8
        %s86 = scalar_lea.vmem %s0, %s85
        %s87 = smul.u32 8, %s7
      $region20: #{hourglass_forward.12} parent=15 // pred_fallthru
        _
    $region16: #{hourglass_forward.12} parent=5 // pred_fallthru
      _
    %p88 = scmp.le.s32.totalorder 1, %s7
    %p89 = scmp.lt.s32.totalorder %s7, 3
    %p90 = pnand %p88, %p89
    %p91 = pneg %p90
    // Predicated region
    $region21: #{hourglass_forward.12} parent=5 // pred_check
      _
    $region22: #{hourglass_forward.12} parent=5 // pred_check_branch
      %93 = sbr.rel (%p90) target = $region24
    $region23: #{hourglass_forward.12} parent=5 // pred_region
      %s94 = ssub.s32 %s7, 1
      %s95 = smul.u32 8, %s12
      %p96 = scmp.lt.s32.totalorder %s95, 15
      %s97 = scalar_select %p96, %s95, 15
      %s98 = smul.addr %s97, 2
      %s99 = smul.addr %s98, 8
      %s100 = scalar_lea.vmem %s0, %s99
      %p101 = pneg %p33
      %p102 = pneg %p30
      %p103 = pneg %p59
      %p104 = pneg %p56
      %s105 = smul.u32 8, %s12
      %p106 = scmp.lt.s32.totalorder %s105, 15
      %s107 = scalar_select %p106, %s105, 15
      %s108 = smul.addr %s107, 8
      %s109 = scalar_lea.vmem %s1, %s108
      %s110 = smul.u32 8, %s12
      %p111 = scmp.lt.s32.totalorder %s110, 15
      %s112 = scalar_select %p111, %s110, 15
      %s113 = smul.addr %s112, 2
      %s114 = smul.addr %s113, 8
      %s115 = scalar_lea.vmem %s0, %s114
      %s116 = smul.u32 8, %s12
      %s117 = smul.u32 8, %s12
      %p118 = scmp.lt.s32.totalorder %s117, 15
      %s119 = scalar_select %p118, %s117, 15
      %s120 = smul.addr %s119, 8
      %s121 = scalar_lea.vmem %s1, %s120
      %s122 = smul.u32 8, %s12
      %v123 = vld [vmem:[%s115] sm:$0xff]
      %v124 = vld [vmem:[%s115 + $0x8] sm:$0xff]
      %v125 = vld [vmem:[%s115 + $0x10] sm:$0xff]
      %v126 = vld [vmem:[%s115 + $0x18] sm:$0xff]
      %v127 = vld [vmem:[%s115 + $0x20] sm:$0xff]
      %v128 = vld [vmem:[%s115 + $0x28] sm:$0xff]
      %v129 = vld [vmem:[%s115 + $0x30] sm:$0xff]
      %v130 = vld [vmem:[%s115 + $0x38] sm:$0xff]
      %v131 = vld [vmem:[%s115 + $0x40] sm:$0xff]
      %v132 = vld [vmem:[%s115 + $0x48] sm:$0xff]
      %v133 = vld [vmem:[%s115 + $0x50] sm:$0xff]
      %v134 = vld [vmem:[%s115 + $0x58] sm:$0xff]
      %v135 = vld [vmem:[%s115 + $0x60] sm:$0xff]
      %v136 = vld [vmem:[%s115 + $0x68] sm:$0xff]
      %v137 = vld [vmem:[%s115 + $0x70] sm:$0xff]
      %v138 = vld [vmem:[%s115 + $0x78] sm:$0xff]
      %v139 = vmax.f32 %v123, %v124
      %v140 = vmax.f32 %v125, %v126
      %v141 = vmax.f32 %v127, %v128
      %v142 = vmax.f32 %v129, %v130
      %v143 = vmax.f32 %v131, %v132
      %v144 = vmax.f32 %v133, %v134
      %v145 = vmax.f32 %v135, %v136
      %v146 = vmax.f32 %v137, %v138
      %155 = vrot.lane.b32.xlu0 %v139, 120
      %v156 = vpop.permute.xlu0 %155
      %157 = vrot.lane.b32.xlu0 %v140, 120
      %v158 = vpop.permute.xlu0 %157
      %159 = vrot.lane.b32.xlu0 %v141, 120
      %v160 = vpop.permute.xlu0 %159
      %161 = vrot.lane.b32.xlu0 %v142, 120
      %v162 = vpop.permute.xlu0 %161
      %163 = vrot.lane.b32.xlu0 %v143, 120
      %v164 = vpop.permute.xlu0 %163
      %165 = vrot.lane.b32.xlu0 %v144, 120
      %v166 = vpop.permute.xlu0 %165
      %167 = vrot.lane.b32.xlu0 %v145, 120
      %v168 = vpop.permute.xlu0 %167
      %169 = vrot.lane.b32.xlu0 %v146, 120
      %v170 = vpop.permute.xlu0 %169
      %v179 = vmax.f32 %v139, %v156
      %v180 = vmax.f32 %v140, %v158
      %v181 = vmax.f32 %v141, %v160
      %v182 = vmax.f32 %v142, %v162
      %v183 = vmax.f32 %v143, %v164
      %v184 = vmax.f32 %v144, %v166
      %v185 = vmax.f32 %v145, %v168
      %v186 = vmax.f32 %v146, %v170
      %vm187 = vcmask 64512
      %188 = vst.msk [vmem:[%s121] sm:$0xff] %vm187, %v179
      %189 = vst.msk [vmem:[%s121 + $0x8] sm:$0xff] %vm187, %v180
      %190 = vst.msk [vmem:[%s121 + $0x10] sm:$0xff] %vm187, %v181
      %191 = vst.msk [vmem:[%s121 + $0x18] sm:$0xff] %vm187, %v182
      %192 = vst.msk [vmem:[%s121 + $0x20] sm:$0xff] %vm187, %v183
      %193 = vst.msk [vmem:[%s121 + $0x28] sm:$0xff] %vm187, %v184
      %194 = vst.msk [vmem:[%s121 + $0x30] sm:$0xff] %vm187, %v185
      %195 = vst.msk [vmem:[%s121 + $0x38] sm:$0xff] %vm187, %v186
      %s196 = smul.u32 8, %s12
      %p197 = scmp.lt.s32.totalorder %s196, 15
      %s198 = scalar_select %p197, %s196, 15
      %s199 = smul.addr %s198, 8
      %s200 = scalar_lea.vmem %s1, %s199
      // Predicated region
      $region25: #{hourglass_forward.12} parent=23 // pred_check
        %p201 = pneg %p56
      $region26: #{hourglass_forward.12} parent=23 // pred_check_branch
        %203 = sbr.rel (%p201) target = $region28
      $region27: #{hourglass_forward.12} parent=23 // pred_region
        %s204 = smul.u32 8, %s12
      $region28: #{hourglass_forward.12} parent=23 // pred_fallthru
        _
    $region24: #{hourglass_forward.12} parent=5 // pred_fallthru
      _
    %p205 = scmp.le.s32.totalorder 2, %s7
    // Predicated region
    $region29: #{hourglass_forward.12} parent=5 // pred_check
      %p206 = pneg %p205
    $region30: #{hourglass_forward.12} parent=5 // pred_check_branch
      %208 = sbr.rel (%p206) target = $region32
    $region31: #{hourglass_forward.12} parent=5 // pred_region
      %s209 = ssub.s32 %s7, 2
      // Predicated region
      $region33: #{hourglass_forward.12} parent=31 // pred_check
        %p210 = pneg %p62
      $region34: #{hourglass_forward.12} parent=31 // pred_check_branch
        %212 = sbr.rel (%p210) target = $region36
      $region35: #{hourglass_forward.12} parent=31 // pred_region
        %s213 = smul.u32 8, %s13
        %p214 = scmp.lt.s32.totalorder %s213, 15
        %s215 = scalar_select %p214, %s213, 15
        %s216 = smul.addr %s215, 8
        %s217 = scalar_lea.vmem %s1, %s216
      $region36: #{hourglass_forward.12} parent=31 // pred_fallthru
        _
    $region32: #{hourglass_forward.12} parent=5 // pred_fallthru
      _
  $region6: #{hourglass_forward.12} parent=0 // loop_footer
    %s11 = sadd.s32 1, %s7
  $region7: #{hourglass_forward.12} parent=0 // loop_footer_branch
    %6 = sbr.rel target = $region3
  $region8: #{hourglass_forward.12} parent=0 // loop_exit
    _

// kernel: hourglass_forward.15
$region0: #{hourglass_forward.15}
  #allocation0 [shape = 'u32[]', space=smem, size = 0x4, offset = 0x4, fixed_abs, tag = 'smem constant byte address 0x4 - core index']
  #allocation1 [shape = 'u32[144,128]{1,0:T(1,128)}', space=vmem, size = 0x12000, scoped, tag = 'internal scratch']
  %s0 = inlined_call_operand.vmem [shape: f32[8,2,4,16], index: 0, kind: input, shape index: {}]
  %s1 = inlined_call_operand.vmem [shape: f32[8,4,8], index: 1, kind: output, shape index: {}]
  %s2 = sld [smem:[#allocation0]]
  $region37: #{hourglass_forward.15} parent=0
    _
  %s4 = ssub.s32 1, %s2
  %s5 = scalar_select 0, %s4, %s2
  loop: start=0, step=1, limit=4
  $region2: #{hourglass_forward.15} parent=0 // loop_pre_header
    _
  $region3: #{hourglass_forward.15} parent=0 // loop_header
    %s7 = sphi 0, %s11
    %p8 = scmp.ge.s32.totalorder %s7, 4
    %s17 = sphi 0, %s19
    %s20 = sphi 0, %s17
    %s21 = sphi 0, %s20
    %s37 = sphi 0, %s21
    %s43 = sphi 0, %s45
    %s46 = sphi 0, %s43
    %s47 = sphi 0, %s46
    %s63 = sphi 0, %s47
  $region4: #{hourglass_forward.15} parent=0 // loop_header_branch
    %10 = sbr.rel (%p8) target = $region8
  $region5: #{hourglass_forward.15} parent=0 // loop_body
    %s12 = ssub.s32 %s7, 1
    %s13 = ssub.s32 %s7, 2
    %s14 = sadd.s32 %s7, 1
    %s15 = ssub.s32 %s7, %s14
    %p16 = scmp.eq.s32.totalorder %s15, 0
    %s18 = sadd.s32 %s17, 1
    %s19 = scalar_select %p16, %s17, %s18
    %p22 = pneg %p16
    %p23 = scmp.eq.s32.totalorder %s7, 1
    %p24 = por %p22, %p23
    %p25 = scmp.ne.s32.totalorder %s17, %s20
    %p26 = scmp.eq.s32.totalorder %s7, 0
    %p27 = por %p25, %p26
    %p28 = scmp.ne.s32.totalorder %s17, %s20
    %p29 = scmp.eq.s32.totalorder %s12, 1
    %p30 = por %p28, %p29
    %p31 = scmp.ne.s32.totalorder %s20, %s21
    %p32 = scmp.eq.s32.totalorder %s12, 0
    %p33 = por %p31, %p32
    %p34 = scmp.ne.s32.totalorder %s20, %s21
    %p35 = scmp.eq.s32.totalorder %s13, 1
    %p36 = por %p34, %p35
    %p38 = scmp.ne.s32.totalorder %s21, %s37
    %p39 = scmp.eq.s32.totalorder %s13, 0
    %p40 = por %p38, %p39
    %s41 = ssub.s32 %s7, %s14
    %p42 = scmp.eq.s32.totalorder %s41, 0
    %s44 = sadd.s32 %s43, 1
    %s45 = scalar_select %p42, %s43, %s44
    %p48 = pneg %p42
    %p49 = scmp.eq.s32.totalorder %s7, 1
    %p50 = por %p48, %p49
    %p51 = scmp.ne.s32.totalorder %s43, %s46
    %p52 = scmp.eq.s32.totalorder %s7, 0
    %p53 = por %p51, %p52
    %p54 = scmp.ne.s32.totalorder %s43, %s46
    %p55 = scmp.eq.s32.totalorder %s12, 1
    %p56 = por %p54, %p55
    %p57 = scmp.ne.s32.totalorder %s46, %s47
    %p58 = scmp.eq.s32.totalorder %s12, 0
    %p59 = por %p57, %p58
    %p60 = scmp.ne.s32.totalorder %s46, %s47
    %p61 = scmp.eq.s32.totalorder %s13, 1
    %p62 = por %p60, %p61
    %p64 = scmp.ne.s32.totalorder %s47, %s63
    %p65 = scmp.eq.s32.totalorder %s13, 0
    %p66 = por %p64, %p65
    %p67 = scmp.le.s32.totalorder 1, %s7
    %p68 = scmp.lt.s32.totalorder %s7, 3
    %p69 = pnand %p67, %p68
    %p70 = pneg %p69
    // Predicated region
    $region9: #{hourglass_forward.15} parent=5 // pred_check
      _
    $region10: #{hourglass_forward.15} parent=5 // pred_check_branch
      %72 = sbr.rel (%p69) target = $region12
    $region11: #{hourglass_forward.15} parent=5 // pred_region
      %s73 = ssub.s32 %s7, 1
    $region12: #{hourglass_forward.15} parent=5 // pred_fallthru
      _
    %p74 = scmp.lt.s32.totalorder %s7, 2
    // Predicated region
    $region13: #{hourglass_forward.15} parent=5 // pred_check
      %p75 = pneg %p74
    $region14: #{hourglass_forward.15} parent=5 // pred_check_branch
      %77 = sbr.rel (%p75) target = $region16
    $region15: #{hourglass_forward.15} parent=5 // pred_region
      // Predicated region
      $region17: #{hourglass_forward.15} parent=15 // pred_check
        %p78 = pneg %p27
      $region18: #{hourglass_forward.15} parent=15 // pred_check_branch
        %80 = sbr.rel (%p78) target = $region20
      $region19: #{hourglass_forward.15} parent=15 // pred_region
        %s81 = smul.u32 4, %s7
        %p82 = scmp.lt.s32.totalorder %s81, 7
        %s83 = scalar_select %p82, %s81, 7
        %s84 = smul.addr %s83, 2
        %s85 = smul.addr %s84, 4
        %s86 = scalar_lea.vmem %s0, %s85
        %s87 = smul.u32 4, %s7
      $region20: #{hourglass_forward.15} parent=15 // pred_fallthru
        _
    $region16: #{hourglass_forward.15} parent=5 // pred_fallthru
      _
    %p88 = scmp.le.s32.totalorder 1, %s7
    %p89 = scmp.lt.s32.totalorder %s7, 3
    %p90 = pnand %p88, %p89
    %p91 = pneg %p90
    // Predicated region
    $region21: #{hourglass_forward.15} parent=5 // pred_check
      _
    $region22: #{hourglass_forward.15} parent=5 // pred_check_branch
      %93 = sbr.rel (%p90) target = $region24
    $region23: #{hourglass_forward.15} parent=5 // pred_region
      %s94 = ssub.s32 %s7, 1
      %s95 = smul.u32 4, %s12
      %p96 = scmp.lt.s32.totalorder %s95, 7
      %s97 = scalar_select %p96, %s95, 7
      %s98 = smul.addr %s97, 2
      %s99 = smul.addr %s98, 4
      %s100 = scalar_lea.vmem %s0, %s99
      %p101 = pneg %p33
      %p102 = pneg %p30
      %p103 = pneg %p59
      %p104 = pneg %p56
      %s105 = smul.u32 4, %s12
      %p106 = scmp.lt.s32.totalorder %s105, 7
      %s107 = scalar_select %p106, %s105, 7
      %s108 = smul.addr %s107, 4
      %s109 = scalar_lea.vmem %s1, %s108
      %s110 = smul.u32 4, %s12
      %p111 = scmp.lt.s32.totalorder %s110, 7
      %s112 = scalar_select %p111, %s110, 7
      %s113 = smul.addr %s112, 2
      %s114 = smul.addr %s113, 4
      %s115 = scalar_lea.vmem %s0, %s114
      %s116 = smul.u32 4, %s12
      %s117 = smul.u32 4, %s12
      %p118 = scmp.lt.s32.totalorder %s117, 7
      %s119 = scalar_select %p118, %s117, 7
      %s120 = smul.addr %s119, 4
      %s121 = scalar_lea.vmem %s1, %s120
      %s122 = smul.u32 4, %s12
      %v123 = vld [vmem:[%s115] sm:$0xf]
      %v124 = vld [vmem:[%s115 + $0x4] sm:$0xf]
      %v125 = vld [vmem:[%s115 + $0x8] sm:$0xf]
      %v126 = vld [vmem:[%s115 + $0xc] sm:$0xf]
      %v127 = vld [vmem:[%s115 + $0x10] sm:$0xf]
      %v128 = vld [vmem:[%s115 + $0x14] sm:$0xf]
      %v129 = vld [vmem:[%s115 + $0x18] sm:$0xf]
      %v130 = vld [vmem:[%s115 + $0x1c] sm:$0xf]
      %v131 = vmax.f32 %v123, %v124
      %v132 = vmax.f32 %v125, %v126
      %v133 = vmax.f32 %v127, %v128
      %v134 = vmax.f32 %v129, %v130
      %139 = vrot.lane.b32.xlu0 %v131, 120
      %v140 = vpop.permute.xlu0 %139
      %141 = vrot.lane.b32.xlu0 %v132, 120
      %v142 = vpop.permute.xlu0 %141
      %143 = vrot.lane.b32.xlu0 %v133, 120
      %v144 = vpop.permute.xlu0 %143
      %145 = vrot.lane.b32.xlu0 %v134, 120
      %v146 = vpop.permute.xlu0 %145
      %v151 = vmax.f32 %v131, %v140
      %v152 = vmax.f32 %v132, %v142
      %v153 = vmax.f32 %v133, %v144
      %v154 = vmax.f32 %v134, %v146
      %vm155 = vcmask 60416
      %156 = vst.msk [vmem:[%s121] sm:$0xf] %vm155, %v151
      %157 = vst.msk [vmem:[%s121 + $0x4] sm:$0xf] %vm155, %v152
      %158 = vst.msk [vmem:[%s121 + $0x8] sm:$0xf] %vm155, %v153
      %159 = vst.msk [vmem:[%s121 + $0xc] sm:$0xf] %vm155, %v154
      %s160 = smul.u32 4, %s12
      %p161 = scmp.lt.s32.totalorder %s160, 7
      %s162 = scalar_select %p161, %s160, 7
      %s163 = smul.addr %s162, 4
      %s164 = scalar_lea.vmem %s1, %s163
      // Predicated region
      $region25: #{hourglass_forward.15} parent=23 // pred_check
        %p165 = pneg %p56
      $region26: #{hourglass_forward.15} parent=23 // pred_check_branch
        %167 = sbr.rel (%p165) target = $region28
      $region27: #{hourglass_forward.15} parent=23 // pred_region
        %s168 = smul.u32 4, %s12
      $region28: #{hourglass_forward.15} parent=23 // pred_fallthru
        _
    $region24: #{hourglass_forward.15} parent=5 // pred_fallthru
      _
    %p169 = scmp.le.s32.totalorder 2, %s7
    // Predicated region
    $region29: #{hourglass_forward.15} parent=5 // pred_check
      %p170 = pneg %p169
    $region30: #{hourglass_forward.15} parent=5 // pred_check_branch
      %172 = sbr.rel (%p170) target = $region32
    $region31: #{hourglass_forward.15} parent=5 // pred_region
      %s173 = ssub.s32 %s7, 2
      // Predicated region
      $region33: #{hourglass_forward.15} parent=31 // pred_check
        %p174 = pneg %p62
      $region34: #{hourglass_forward.15} parent=31 // pred_check_branch
        %176 = sbr.rel (%p174) target = $region36
      $region35: #{hourglass_forward.15} parent=31 // pred_region
        %s177 = smul.u32 4, %s13
        %p178 = scmp.lt.s32.totalorder %s177, 7
        %s179 = scalar_select %p178, %s177, 7
        %s180 = smul.addr %s179, 4
        %s181 = scalar_lea.vmem %s1, %s180
      $region36: #{hourglass_forward.15} parent=31 // pred_fallthru
        _
    $region32: #{hourglass_forward.15} parent=5 // pred_fallthru
      _
  $region6: #{hourglass_forward.15} parent=0 // loop_footer
    %s11 = sadd.s32 1, %s7
  $region7: #{hourglass_forward.15} parent=0 // loop_footer_branch
    %6 = sbr.rel target = $region3
  $region8: #{hourglass_forward.15} parent=0 // loop_exit
    _

// kernel: hourglass_forward.19
$region0: #{hourglass_forward.19}
  #allocation0 [shape = 'u32[]', space=smem, size = 0x4, offset = 0x4, fixed_abs, tag = 'smem constant byte address 0x4 - core index']
  #allocation1 [shape = 'u32[144,128]{1,0:T(1,128)}', space=vmem, size = 0x12000, scoped, tag = 'internal scratch']
  %s0 = inlined_call_operand.vmem [shape: f32[8,2,4,16], index: 0, kind: input, shape index: {}]
  %s1 = inlined_call_operand.vmem [shape: f32[8,4,8], index: 1, kind: input, shape index: {}]
  %s2 = inlined_call_operand.vmem [shape: f32[8,2,4,16], index: 2, kind: output, shape index: {}]
  %s3 = sld [smem:[#allocation0]]
  $region41: #{hourglass_forward.19} parent=0
    _
  %s5 = ssub.s32 1, %s3
  %s6 = scalar_select 0, %s5, %s3
  loop: start=0, step=1, limit=4
  $region2: #{hourglass_forward.19} parent=0 // loop_pre_header
    _
  $region3: #{hourglass_forward.19} parent=0 // loop_header
    %s8 = sphi 0, %s12
    %p9 = scmp.ge.s32.totalorder %s8, 4
    %s18 = sphi 0, %s20
    %s21 = sphi 0, %s18
    %s22 = sphi 0, %s21
    %s38 = sphi 0, %s22
    %s44 = sphi 0, %s46
    %s47 = sphi 0, %s44
    %s48 = sphi 0, %s47
    %s64 = sphi 0, %s48
    %s70 = sphi 0, %s72
    %s73 = sphi 0, %s70
    %s74 = sphi 0, %s73
    %s90 = sphi 0, %s74
  $region4: #{hourglass_forward.19} parent=0 // loop_header_branch
    %11 = sbr.rel (%p9) target = $region8
  $region5: #{hourglass_forward.19} parent=0 // loop_body
    %s13 = ssub.s32 %s8, 1
    %s14 = ssub.s32 %s8, 2
    %s15 = sadd.s32 %s8, 1
    %s16 = ssub.s32 %s8, %s15
    %p17 = scmp.eq.s32.totalorder %s16, 0
    %s19 = sadd.s32 %s18, 1
    %s20 = scalar_select %p17, %s18, %s19
    %p23 = pneg %p17
    %p24 = scmp.eq.s32.totalorder %s8, 1
    %p25 = por %p23, %p24
    %p26 = scmp.ne.s32.totalorder %s18, %s21
    %p27 = scmp.eq.s32.totalorder %s8, 0
    %p28 = por %p26, %p27
    %p29 = scmp.ne.s32.totalorder %s18, %s21
    %p30 = scmp.eq.s32.totalorder %s13, 1
    %p31 = por %p29, %p30
    %p32 = scmp.ne.s32.totalorder %s21, %s22
    %p33 = scmp.eq.s32.totalorder %s13, 0
    %p34 = por %p32, %p33
    %p35 = scmp.ne.s32.totalorder %s21, %s22
    %p36 = scmp.eq.s32.totalorder %s14, 1
    %p37 = por %p35, %p36
    %p39 = scmp.ne.s32.totalorder %s22, %s38
    %p40 = scmp.eq.s32.totalorder %s14, 0
    %p41 = por %p39, %p40
    %s42 = ssub.s32 %s8, %s15
    %p43 = scmp.eq.s32.totalorder %s42, 0
    %s45 = sadd.s32 %s44, 1
    %s46 = scalar_select %p43, %s44, %s45
    %p49 = pneg %p43
    %p50 = scmp.eq.s32.totalorder %s8, 1
    %p51 = por %p49, %p50
    %p52 = scmp.ne.s32.totalorder %s44, %s47
    %p53 = scmp.eq.s32.totalorder %s8, 0
    %p54 = por %p52, %p53
    %p55 = scmp.ne.s32.totalorder %s44, %s47
    %p56 = scmp.eq.s32.totalorder %s13, 1
    %p57 = por %p55, %p56
    %p58 = scmp.ne.s32.totalorder %s47, %s48
    %p59 = scmp.eq.s32.totalorder %s13, 0
    %p60 = por %p58, %p59
    %p61 = scmp.ne.s32.totalorder %s47, %s48
    %p62 = scmp.eq.s32.totalorder %s14, 1
    %p63 = por %p61, %p62
    %p65 = scmp.ne.s32.totalorder %s48, %s64
    %p66 = scmp.eq.s32.totalorder %s14, 0
    %p67 = por %p65, %p66
    %s68 = ssub.s32 %s8, %s15
    %p69 = scmp.eq.s32.totalorder %s68, 0
    %s71 = sadd.s32 %s70, 1
    %s72 = scalar_select %p69, %s70, %s71
    %p75 = pneg %p69
    %p76 = scmp.eq.s32.totalorder %s8, 1
    %p77 = por %p75, %p76
    %p78 = scmp.ne.s32.totalorder %s70, %s73
    %p79 = scmp.eq.s32.totalorder %s8, 0
    %p80 = por %p78, %p79
    %p81 = scmp.ne.s32.totalorder %s70, %s73
    %p82 = scmp.eq.s32.totalorder %s13, 1
    %p83 = por %p81, %p82
    %p84 = scmp.ne.s32.totalorder %s73, %s74
    %p85 = scmp.eq.s32.totalorder %s13, 0
    %p86 = por %p84, %p85
    %p87 = scmp.ne.s32.totalorder %s73, %s74
    %p88 = scmp.eq.s32.totalorder %s14, 1
    %p89 = por %p87, %p88
    %p91 = scmp.ne.s32.totalorder %s74, %s90
    %p92 = scmp.eq.s32.totalorder %s14, 0
    %p93 = por %p91, %p92
    %p94 = scmp.le.s32.totalorder 1, %s8
    %p95 = scmp.lt.s32.totalorder %s8, 3
    %p96 = pnand %p94, %p95
    %p97 = pneg %p96
    // Predicated region
    $region9: #{hourglass_forward.19} parent=5 // pred_check
      _
    $region10: #{hourglass_forward.19} parent=5 // pred_check_branch
      %99 = sbr.rel (%p96) target = $region12
    $region11: #{hourglass_forward.19} parent=5 // pred_region
      %s100 = ssub.s32 %s8, 1
    $region12: #{hourglass_forward.19} parent=5 // pred_fallthru
      _
    %p101 = scmp.lt.s32.totalorder %s8, 2
    // Predicated region
    $region13: #{hourglass_forward.19} parent=5 // pred_check
      %p102 = pneg %p101
    $region14: #{hourglass_forward.19} parent=5 // pred_check_branch
      %104 = sbr.rel (%p102) target = $region16
    $region15: #{hourglass_forward.19} parent=5 // pred_region
      // Predicated region
      $region17: #{hourglass_forward.19} parent=15 // pred_check
        %p105 = pneg %p28
      $region18: #{hourglass_forward.19} parent=15 // pred_check_branch
        %107 = sbr.rel (%p105) target = $region20
      $region19: #{hourglass_forward.19} parent=15 // pred_region
        %s108 = smul.u32 4, %s8
        %p109 = scmp.lt.s32.totalorder %s108, 7
        %s110 = scalar_select %p109, %s108, 7
        %s111 = smul.addr %s110, 2
        %s112 = smul.addr %s111, 4
        %s113 = scalar_lea.vmem %s0, %s112
        %s114 = smul.u32 4, %s8
      $region20: #{hourglass_forward.19} parent=15 // pred_fallthru
        _
      // Predicated region
      $region21: #{hourglass_forward.19} parent=15 // pred_check
        %p115 = pneg %p54
      $region22: #{hourglass_forward.19} parent=15 // pred_check_branch
        %117 = sbr.rel (%p115) target = $region24
      $region23: #{hourglass_forward.19} parent=15 // pred_region
        %s118 = smul.u32 4, %s8
        %p119 = scmp.lt.s32.totalorder %s118, 7
        %s120 = scalar_select %p119, %s118, 7
        %s121 = smul.addr %s120, 4
        %s122 = scalar_lea.vmem %s1, %s121
        %s123 = smul.u32 4, %s8
      $region24: #{hourglass_forward.19} parent=15 // pred_fallthru
        _
    $region16: #{hourglass_forward.19} parent=5 // pred_fallthru
      _
    %p124 = scmp.le.s32.totalorder 1, %s8
    %p125 = scmp.lt.s32.totalorder %s8, 3
    %p126 = pnand %p124, %p125
    %p127 = pneg %p126
    // Predicated region
    $region25: #{hourglass_forward.19} parent=5 // pred_check
      _
    $region26: #{hourglass_forward.19} parent=5 // pred_check_branch
      %129 = sbr.rel (%p126) target = $region28
    $region27: #{hourglass_forward.19} parent=5 // pred_region
      %s130 = ssub.s32 %s8, 1
      %s131 = smul.u32 4, %s13
      %p132 = scmp.lt.s32.totalorder %s131, 7
      %s133 = scalar_select %p132, %s131, 7
      %s134 = smul.addr %s133, 2
      %s135 = smul.addr %s134, 4
      %s136 = scalar_lea.vmem %s0, %s135
      %p137 = pneg %p34
      %p138 = pneg %p31
      %s139 = smul.u32 4, %s13
      %p140 = scmp.lt.s32.totalorder %s139, 7
      %s141 = scalar_select %p140, %s139, 7
      %s142 = smul.addr %s141, 4
      %s143 = scalar_lea.vmem %s1, %s142
      %p144 = pneg %p60
      %p145 = pneg %p57
      %p146 = pneg %p86
      %p147 = pneg %p83
      %s148 = smul.u32 4, %s13
      %p149 = scmp.lt.s32.totalorder %s148, 7
      %s150 = scalar_select %p149, %s148, 7
      %s151 = smul.addr %s150, 2
      %s152 = smul.addr %s151, 4
      %s153 = scalar_lea.vmem %s2, %s152
      %s154 = smul.u32 4, %s13
      %p155 = scmp.lt.s32.totalorder %s154, 7
      %s156 = scalar_select %p155, %s154, 7
      %s157 = smul.addr %s156, 2
      %s158 = smul.addr %s157, 4
      %s159 = scalar_lea.vmem %s0, %s158
      %s160 = smul.u32 4, %s13
      %s161 = smul.u32 4, %s13
      %p162 = scmp.lt.s32.totalorder %s161, 7
      %s163 = scalar_select %p162, %s161, 7
      %s164 = smul.addr %s163, 4
      %s165 = scalar_lea.vmem %s1, %s164
      %s166 = smul.u32 4, %s13
      %s167 = smul.u32 4, %s13
      %p168 = scmp.lt.s32.totalorder %s167, 7
      %s169 = scalar_select %p168, %s167, 7
      %s170 = smul.addr %s169, 2
      %s171 = smul.addr %s170, 4
      %s172 = scalar_lea.vmem %s2, %s171
      %s173 = smul.u32 4, %s13
      %v174 = vld [vmem:[%s165] sm:$0xf]
      %v175 = vld [vmem:[%s165 + $0x4] sm:$0xf]
      %v176 = vld [vmem:[%s165 + $0x8] sm:$0xf]
      %v177 = vld [vmem:[%s165 + $0xc] sm:$0xf]
      %182 = vrot.lane.b32.xlu0 %v174, 8
      %v183 = vpop.permute.xlu0 %182
      %184 = vrot.lane.b32.xlu0 %v175, 8
      %v185 = vpop.permute.xlu0 %184
      %186 = vrot.lane.b32.xlu0 %v176, 8
      %v187 = vpop.permute.xlu0 %186
      %188 = vrot.lane.b32.xlu0 %v177, 8
      %v189 = vpop.permute.xlu0 %188
      %vm194 = vcmask 64512
      %v195 = vsel %vm194, %v174, %v183
      %v196 = vsel %vm194, %v175, %v185
      %v197 = vsel %vm194, %v176, %v187
      %v198 = vsel %vm194, %v177, %v189
      %v199 = vld [vmem:[%s159] sm:$0xf]
      %v200 = vld [vmem:[%s159 + $0x4] sm:$0xf]
      %v201 = vld [vmem:[%s159 + $0x8] sm:$0xf]
      %v202 = vld [vmem:[%s159 + $0xc] sm:$0xf]
      %v203 = vld [vmem:[%s159 + $0x10] sm:$0xf]
      %v204 = vld [vmem:[%s159 + $0x14] sm:$0xf]
      %v205 = vld [vmem:[%s159 + $0x18] sm:$0xf]
      %v206 = vld [vmem:[%s159 + $0x1c] sm:$0xf]
      %v207 = vadd.f32 %v199, %v195
      %v208 = vadd.f32 %v200, %v195
      %v209 = vadd.f32 %v201, %v196
      %v210 = vadd.f32 %v202, %v196
      %v211 = vadd.f32 %v203, %v197
      %v212 = vadd.f32 %v204, %v197
      %v213 = vadd.f32 %v205, %v198
      %v214 = vadd.f32 %v206, %v198
      %vm215 = vcmask 125952
      %216 = vst.msk [vmem:[%s172] sm:$0xf] %vm215, %v207
      %217 = vst.msk [vmem:[%s172 + $0x4] sm:$0xf] %vm215, %v208
      %218 = vst.msk [vmem:[%s172 + $0x8] sm:$0xf] %vm215, %v209
      %219 = vst.msk [vmem:[%s172 + $0xc] sm:$0xf] %vm215, %v210
      %220 = vst.msk [vmem:[%s172 + $0x10] sm:$0xf] %vm215, %v211
      %221 = vst.msk [vmem:[%s172 + $0x14] sm:$0xf] %vm215, %v212
      %222 = vst.msk [vmem:[%s172 + $0x18] sm:$0xf] %vm215, %v213
      %223 = vst.msk [vmem:[%s172 + $0x1c] sm:$0xf] %vm215, %v214
      %s224 = smul.u32 4, %s13
      %p225 = scmp.lt.s32.totalorder %s224, 7
      %s226 = scalar_select %p225, %s224, 7
      %s227 = smul.addr %s226, 2
      %s228 = smul.addr %s227, 4
      %s229 = scalar_lea.vmem %s2, %s228
      // Predicated region
      $region29: #{hourglass_forward.19} parent=27 // pred_check
        %p230 = pneg %p83
      $region30: #{hourglass_forward.19} parent=27 // pred_check_branch
        %232 = sbr.rel (%p230) target = $region32
      $region31: #{hourglass_forward.19} parent=27 // pred_region
        %s233 = smul.u32 4, %s13
      $region32: #{hourglass_forward.19} parent=27 // pred_fallthru
        _
    $region28: #{hourglass_forward.19} parent=5 // pred_fallthru
      _
    %p234 = scmp.le.s32.totalorder 2, %s8
    // Predicated region
    $region33: #{hourglass_forward.19} parent=5 // pred_check
      %p235 = pneg %p234
    $region34: #{hourglass_forward.19} parent=5 // pred_check_branch
      %237 = sbr.rel (%p235) target = $region36
    $region35: #{hourglass_forward.19} parent=5 // pred_region
      %s238 = ssub.s32 %s8, 2
      // Predicated region
      $region37: #{hourglass_forward.19} parent=35 // pred_check
        %p239 = pneg %p89
      $region38: #{hourglass_forward.19} parent=35 // pred_check_branch
        %241 = sbr.rel (%p239) target = $region40
      $region39: #{hourglass_forward.19} parent=35 // pred_region
        %s242 = smul.u32 4, %s14
        %p243 = scmp.lt.s32.totalorder %s242, 7
        %s244 = scalar_select %p243, %s242, 7
        %s245 = smul.addr %s244, 2
        %s246 = smul.addr %s245, 4
        %s247 = scalar_lea.vmem %s2, %s246
      $region40: #{hourglass_forward.19} parent=35 // pred_fallthru
        _
    $region36: #{hourglass_forward.19} parent=5 // pred_fallthru
      _
  $region6: #{hourglass_forward.19} parent=0 // loop_footer
    %s12 = sadd.s32 1, %s8
  $region7: #{hourglass_forward.19} parent=0 // loop_footer_branch
    %7 = sbr.rel target = $region3
  $region8: #{hourglass_forward.19} parent=0 // loop_exit
    _

// kernel: hourglass_forward.13
$region0: #{hourglass_forward.13}
  #allocation0 [shape = 'u32[]', space=smem, size = 0x4, offset = 0x4, fixed_abs, tag = 'smem constant byte address 0x4 - core index']
  #allocation1 [shape = 'u32[144,128]{1,0:T(1,128)}', space=vmem, size = 0x12000, scoped, tag = 'internal scratch']
  #allocation2 [shape = 'bf16[82,4]{1,0:T(8,128)(2,1)}', space=vmem, size = 0x5800, scoped, tag = 'scratch operand']
  %s0 = inlined_call_operand.vmem [shape: f32[2,64,8], index: 0, kind: input, shape index: {}]
  %s1 = inlined_call_operand.vmem [shape: f32[1,8], index: 1, kind: input, shape index: {}]
  %s2 = inlined_call_operand.vmem [shape: f32[1,8], index: 2, kind: input, shape index: {}]
  %s3 = inlined_call_operand.vmem [shape: bf16[8,4], index: 3, kind: input, shape index: {}]
  %s4 = inlined_call_operand.vmem [shape: f32[1,4], index: 4, kind: input, shape index: {}]
  %s5 = inlined_call_operand.vmem [shape: bf16[9,4,4], index: 5, kind: input, shape index: {}]
  %s6 = inlined_call_operand.vmem [shape: f32[1,4], index: 6, kind: input, shape index: {}]
  %s7 = inlined_call_operand.vmem [shape: bf16[4,8], index: 7, kind: input, shape index: {}]
  %s8 = inlined_call_operand.vmem [shape: f32[1,8], index: 8, kind: input, shape index: {}]
  %s9 = inlined_call_operand.vmem [shape: f32[2,64,8], index: 9, kind: output, shape index: {}]
  %s10 = sld [smem:[#allocation0]]
  $region69: #{hourglass_forward.13} parent=0
    _
  %s12 = ssub.s32 1, %s10
  %s13 = scalar_select 0, %s12, %s10
  loop: start=0, step=1, limit=4
  $region2: #{hourglass_forward.13} parent=0 // loop_pre_header
    _
  $region3: #{hourglass_forward.13} parent=0 // loop_header
    %s15 = sphi 0, %s19
    %p16 = scmp.ge.s32.totalorder %s15, 4
    %s25 = sphi 0, %s27
    %s28 = sphi 0, %s25
    %s29 = sphi 0, %s28
    %s45 = sphi 0, %s29
    %s49 = sphi 0, %s49
    %s51 = sphi 0, %s49
    %s52 = sphi 0, %s51
    %s66 = sphi 0, %s52
    %s70 = sphi 0, %s70
    %s72 = sphi 0, %s70
    %s73 = sphi 0, %s72
    %s87 = sphi 0, %s73
    %s91 = sphi 0, %s91
    %s93 = sphi 0, %s91
    %s94 = sphi 0, %s93
    %s108 = sphi 0, %s94
    %s112 = sphi 0, %s112
    %s114 = sphi 0, %s112
    %s115 = sphi 0, %s114
    %s129 = sphi 0, %s115
    %s133 = sphi 0, %s133
    %s135 = sphi 0, %s133
    %s136 = sphi 0, %s135
    %s150 = sphi 0, %s136
    %s154 = sphi 0, %s154
    %s156 = sphi 0, %s154
    %s157 = sphi 0, %s156
    %s171 = sphi 0, %s157
    %s175 = sphi 0, %s175
    %s177 = sphi 0, %s175
    %s178 = sphi 0, %s177
    %s192 = sphi 0, %s178
    %s196 = sphi 0, %s196
    %s198 = sphi 0, %s196
    %s199 = sphi 0, %s198
    %s213 = sphi 0, %s199
    %s219 = sphi 0, %s221
    %s222 = sphi 0, %s219
    %s223 = sphi 0, %s222
    %s239 = sphi 0, %s223
  $region4: #{hourglass_forward.13} parent=0 // loop_header_branch
    %18 = sbr.rel (%p16) target = $region8
  $region5: #{hourglass_forward.13} parent=0 // loop_body
    %s20 = ssub.s32 %s15, 1
    %s21 = ssub.s32 %s15, 2
    %s22 = sadd.s32 %s15, 1
    %s23 = ssub.s32 %s15, %s22
    %p24 = scmp.eq.s32.totalorder %s23, 0
    %s26 = sadd.s32 %s25, 1
    %s27 = scalar_select %p24, %s25, %s26
    %p30 = pneg %p24
    %p31 = scmp.eq.s32.totalorder %s15, 1
    %p32 = por %p30, %p31
    %p33 = scmp.ne.s32.totalorder %s25, %s28
    %p34 = scmp.eq.s32.totalorder %s15, 0
    %p35 = por %p33, %p34
    %p36 = scmp.ne.s32.totalorder %s25, %s28
    %p37 = scmp.eq.s32.totalorder %s20, 1
    %p38 = por %p36, %p37
    %p39 = scmp.ne.s32.totalorder %s28, %s29
    %p40 = scmp.eq.s32.totalorder %s20, 0
    %p41 = por %p39, %p40
    %p42 = scmp.ne.s32.totalorder %s28, %s29
    %p43 = scmp.eq.s32.totalorder %s21, 1
    %p44 = por %p42, %p43
    %p46 = scmp.ne.s32.totalorder %s29, %s45
    %p47 = scmp.eq.s32.totalorder %s21, 0
    %p48 = por %p46, %p47
    %s50 = sadd.s32 %s49, 1
    %p53 = scmp.eq.s32.totalorder %s15, 1
    %p54 = scmp.ne.s32.totalorder %s49, %s51
    %p55 = scmp.eq.s32.totalorder %s15, 0
    %p56 = por %p54, %p55
    %p57 = scmp.ne.s32.totalorder %s49, %s51
    %p58 = scmp.eq.s32.totalorder %s20, 1
    %p59 = por %p57, %p58
    %p60 = scmp.ne.s32.totalorder %s51, %s52
    %p61 = scmp.eq.s32.totalorder %s20, 0
    %p62 = por %p60, %p61
    %p63 = scmp.ne.s32.totalorder %s51, %s52
    %p64 = scmp.eq.s32.totalorder %s21, 1
    %p65 = por %p63, %p64
    %p67 = scmp.ne.s32.totalorder %s52, %s66
    %p68 = scmp.eq.s32.totalorder %s21, 0
    %p69 = por %p67, %p68
    %s71 = sadd.s32 %s70, 1
    %p74 = scmp.eq.s32.totalorder %s15, 1
    %p75 = scmp.ne.s32.totalorder %s70, %s72
    %p76 = scmp.eq.s32.totalorder %s15, 0
    %p77 = por %p75, %p76
    %p78 = scmp.ne.s32.totalorder %s70, %s72
    %p79 = scmp.eq.s32.totalorder %s20, 1
    %p80 = por %p78, %p79
    %p81 = scmp.ne.s32.totalorder %s72, %s73
    %p82 = scmp.eq.s32.totalorder %s20, 0
    %p83 = por %p81, %p82
    %p84 = scmp.ne.s32.totalorder %s72, %s73
    %p85 = scmp.eq.s32.totalorder %s21, 1
    %p86 = por %p84, %p85
    %p88 = scmp.ne.s32.totalorder %s73, %s87
    %p89 = scmp.eq.s32.totalorder %s21, 0
    %p90 = por %p88, %p89
    %s92 = sadd.s32 %s91, 1
    %p95 = scmp.eq.s32.totalorder %s15, 1
    %p96 = scmp.ne.s32.totalorder %s91, %s93
    %p97 = scmp.eq.s32.totalorder %s15, 0
    %p98 = por %p96, %p97
    %p99 = scmp.ne.s32.totalorder %s91, %s93
    %p100 = scmp.eq.s32.totalorder %s20, 1
    %p101 = por %p99, %p100
    %p102 = scmp.ne.s32.totalorder %s93, %s94
    %p103 = scmp.eq.s32.totalorder %s20, 0
    %p104 = por %p102, %p103
    %p105 = scmp.ne.s32.totalorder %s93, %s94
    %p106 = scmp.eq.s32.totalorder %s21, 1
    %p107 = por %p105, %p106
    %p109 = scmp.ne.s32.totalorder %s94, %s108
    %p110 = scmp.eq.s32.totalorder %s21, 0
    %p111 = por %p109, %p110
    %s113 = sadd.s32 %s112, 1
    %p116 = scmp.eq.s32.totalorder %s15, 1
    %p117 = scmp.ne.s32.totalorder %s112, %s114
    %p118 = scmp.eq.s32.totalorder %s15, 0
    %p119 = por %p117, %p118
    %p120 = scmp.ne.s32.totalorder %s112, %s114
    %p121 = scmp.eq.s32.totalorder %s20, 1
    %p122 = por %p120, %p121
    %p123 = scmp.ne.s32.totalorder %s114, %s115
    %p124 = scmp.eq.s32.totalorder %s20, 0
    %p125 = por %p123, %p124
    %p126 = scmp.ne.s32.totalorder %s114, %s115
    %p127 = scmp.eq.s32.totalorder %s21, 1
    %p128 = por %p126, %p127
    %p130 = scmp.ne.s32.totalorder %s115, %s129
    %p131 = scmp.eq.s32.totalorder %s21, 0
    %p132 = por %p130, %p131
    %s134 = sadd.s32 %s133, 1
    %p137 = scmp.eq.s32.totalorder %s15, 1
    %p138 = scmp.ne.s32.totalorder %s133, %s135
    %p139 = scmp.eq.s32.totalorder %s15, 0
    %p140 = por %p138, %p139
    %p141 = scmp.ne.s32.totalorder %s133, %s135
    %p142 = scmp.eq.s32.totalorder %s20, 1
    %p143 = por %p141, %p142
    %p144 = scmp.ne.s32.totalorder %s135, %s136
    %p145 = scmp.eq.s32.totalorder %s20, 0
    %p146 = por %p144, %p145
    %p147 = scmp.ne.s32.totalorder %s135, %s136
    %p148 = scmp.eq.s32.totalorder %s21, 1
    %p149 = por %p147, %p148
    %p151 = scmp.ne.s32.totalorder %s136, %s150
    %p152 = scmp.eq.s32.totalorder %s21, 0
    %p153 = por %p151, %p152
    %s155 = sadd.s32 %s154, 1
    %p158 = scmp.eq.s32.totalorder %s15, 1
    %p159 = scmp.ne.s32.totalorder %s154, %s156
    %p160 = scmp.eq.s32.totalorder %s15, 0
    %p161 = por %p159, %p160
    %p162 = scmp.ne.s32.totalorder %s154, %s156
    %p163 = scmp.eq.s32.totalorder %s20, 1
    %p164 = por %p162, %p163
    %p165 = scmp.ne.s32.totalorder %s156, %s157
    %p166 = scmp.eq.s32.totalorder %s20, 0
    %p167 = por %p165, %p166
    %p168 = scmp.ne.s32.totalorder %s156, %s157
    %p169 = scmp.eq.s32.totalorder %s21, 1
    %p170 = por %p168, %p169
    %p172 = scmp.ne.s32.totalorder %s157, %s171
    %p173 = scmp.eq.s32.totalorder %s21, 0
    %p174 = por %p172, %p173
    %s176 = sadd.s32 %s175, 1
    %p179 = scmp.eq.s32.totalorder %s15, 1
    %p180 = scmp.ne.s32.totalorder %s175, %s177
    %p181 = scmp.eq.s32.totalorder %s15, 0
    %p182 = por %p180, %p181
    %p183 = scmp.ne.s32.totalorder %s175, %s177
    %p184 = scmp.eq.s32.totalorder %s20, 1
    %p185 = por %p183, %p184
    %p186 = scmp.ne.s32.totalorder %s177, %s178
    %p187 = scmp.eq.s32.totalorder %s20, 0
    %p188 = por %p186, %p187
    %p189 = scmp.ne.s32.totalorder %s177, %s178
    %p190 = scmp.eq.s32.totalorder %s21, 1
    %p191 = por %p189, %p190
    %p193 = scmp.ne.s32.totalorder %s178, %s192
    %p194 = scmp.eq.s32.totalorder %s21, 0
    %p195 = por %p193, %p194
    %s197 = sadd.s32 %s196, 1
    %p200 = scmp.eq.s32.totalorder %s15, 1
    %p201 = scmp.ne.s32.totalorder %s196, %s198
    %p202 = scmp.eq.s32.totalorder %s15, 0
    %p203 = por %p201, %p202
    %p204 = scmp.ne.s32.totalorder %s196, %s198
    %p205 = scmp.eq.s32.totalorder %s20, 1
    %p206 = por %p204, %p205
    %p207 = scmp.ne.s32.totalorder %s198, %s199
    %p208 = scmp.eq.s32.totalorder %s20, 0
    %p209 = por %p207, %p208
    %p210 = scmp.ne.s32.totalorder %s198, %s199
    %p211 = scmp.eq.s32.totalorder %s21, 1
    %p212 = por %p210, %p211
    %p214 = scmp.ne.s32.totalorder %s199, %s213
    %p215 = scmp.eq.s32.totalorder %s21, 0
    %p216 = por %p214, %p215
    %s217 = ssub.s32 %s15, %s22
    %p218 = scmp.eq.s32.totalorder %s217, 0
    %s220 = sadd.s32 %s219, 1
    %s221 = scalar_select %p218, %s219, %s220
    %p224 = pneg %p218
    %p225 = scmp.eq.s32.totalorder %s15, 1
    %p226 = por %p224, %p225
    %p227 = scmp.ne.s32.totalorder %s219, %s222
    %p228 = scmp.eq.s32.totalorder %s15, 0
    %p229 = por %p227, %p228
    %p230 = scmp.ne.s32.totalorder %s219, %s222
    %p231 = scmp.eq.s32.totalorder %s20, 1
    %p232 = por %p230, %p231
    %p233 = scmp.ne.s32.totalorder %s222, %s223
    %p234 = scmp.eq.s32.totalorder %s20, 0
    %p235 = por %p233, %p234
    %p236 = scmp.ne.s32.totalorder %s222, %s223
    %p237 = scmp.eq.s32.totalorder %s21, 1
    %p238 = por %p236, %p237
    %p240 = scmp.ne.s32.totalorder %s223, %s239
    %p241 = scmp.eq.s32.totalorder %s21, 0
    %p242 = por %p240, %p241
    %p243 = scmp.le.s32.totalorder 1, %s15
    %p244 = scmp.lt.s32.totalorder %s15, 3
    %p245 = pnand %p243, %p244
    %p246 = pneg %p245
    // Predicated region
    $region9: #{hourglass_forward.13} parent=5 // pred_check
      _
    $region10: #{hourglass_forward.13} parent=5 // pred_check_branch
      %248 = sbr.rel (%p245) target = $region12
    $region11: #{hourglass_forward.13} parent=5 // pred_region
      %s249 = ssub.s32 %s15, 1
      // Predicated region
      $region13: #{hourglass_forward.13} parent=11 // pred_check
        %p250 = pneg %p62
      $region14: #{hourglass_forward.13} parent=11 // pred_check_branch
        %252 = sbr.rel (%p250) target = $region16
      $region15: #{hourglass_forward.13} parent=11 // pred_region
        _
      $region16: #{hourglass_forward.13} parent=11 // pred_fallthru
        _
      // Predicated region
      $region17: #{hourglass_forward.13} parent=11 // pred_check
        %p253 = pneg %p83
      $region18: #{hourglass_forward.13} parent=11 // pred_check_branch
        %255 = sbr.rel (%p253) target = $region20
      $region19: #{hourglass_forward.13} parent=11 // pred_region
        _
      $region20: #{hourglass_forward.13} parent=11 // pred_fallthru
        _
      // Predicated region
      $region21: #{hourglass_forward.13} parent=11 // pred_check
        %p256 = pneg %p104
      $region22: #{hourglass_forward.13} parent=11 // pred_check_branch
        %258 = sbr.rel (%p256) target = $region24
      $region23: #{hourglass_forward.13} parent=11 // pred_region
        _
      $region24: #{hourglass_forward.13} parent=11 // pred_fallthru
        _
      // Predicated region
      $region25: #{hourglass_forward.13} parent=11 // pred_check
        %p259 = pneg %p125
      $region26: #{hourglass_forward.13} parent=11 // pred_check_branch
        %261 = sbr.rel (%p259) target = $region28
      $region27: #{hourglass_forward.13} parent=11 // pred_region
        _
      $region28: #{hourglass_forward.13} parent=11 // pred_fallthru
        _
      // Predicated region
      $region29: #{hourglass_forward.13} parent=11 // pred_check
        %p262 = pneg %p146
      $region30: #{hourglass_forward.13} parent=11 // pred_check_branch
        %264 = sbr.rel (%p262) target = $region32
      $region31: #{hourglass_forward.13} parent=11 // pred_region
        _
      $region32: #{hourglass_forward.13} parent=11 // pred_fallthru
        _
      // Predicated region
      $region33: #{hourglass_forward.13} parent=11 // pred_check
        %p265 = pneg %p167
      $region34: #{hourglass_forward.13} parent=11 // pred_check_branch
        %267 = sbr.rel (%p265) target = $region36
      $region35: #{hourglass_forward.13} parent=11 // pred_region
        _
      $region36: #{hourglass_forward.13} parent=11 // pred_fallthru
        _
      // Predicated region
      $region37: #{hourglass_forward.13} parent=11 // pred_check
        %p268 = pneg %p188
      $region38: #{hourglass_forward.13} parent=11 // pred_check_branch
        %270 = sbr.rel (%p268) target = $region40
      $region39: #{hourglass_forward.13} parent=11 // pred_region
        _
      $region40: #{hourglass_forward.13} parent=11 // pred_fallthru
        _
      // Predicated region
      $region41: #{hourglass_forward.13} parent=11 // pred_check
        %p271 = pneg %p209
      $region42: #{hourglass_forward.13} parent=11 // pred_check_branch
        %273 = sbr.rel (%p271) target = $region44
      $region43: #{hourglass_forward.13} parent=11 // pred_region
        _
      $region44: #{hourglass_forward.13} parent=11 // pred_fallthru
        _
    $region12: #{hourglass_forward.13} parent=5 // pred_fallthru
      _
    %p274 = scmp.lt.s32.totalorder %s15, 2
    // Predicated region
    $region45: #{hourglass_forward.13} parent=5 // pred_check
      %p275 = pneg %p274
    $region46: #{hourglass_forward.13} parent=5 // pred_check_branch
      %277 = sbr.rel (%p275) target = $region48
    $region47: #{hourglass_forward.13} parent=5 // pred_region
      // Predicated region
      $region49: #{hourglass_forward.13} parent=47 // pred_check
        %p278 = pneg %p35
      $region50: #{hourglass_forward.13} parent=47 // pred_check_branch
        %280 = sbr.rel (%p278) target = $region52
      $region51: #{hourglass_forward.13} parent=47 // pred_region
        %p281 = scmp.lt.s32.totalorder %s15, 1
        %s282 = scalar_select %p281, %s15, 1
        %s283 = smul.addr %s282, 8
        %s284 = smul.addr %s283, 8
        %s285 = scalar_lea.vmem %s0, %s284
      $region52: #{hourglass_forward.13} parent=47 // pred_fallthru
        _
    $region48: #{hourglass_forward.13} parent=5 // pred_fallthru
      _
    %p286 = scmp.le.s32.totalorder 1, %s15
    %p287 = scmp.lt.s32.totalorder %s15, 3
    %p288 = pnand %p286, %p287
    %p289 = pneg %p288
    // Predicated region
    $region53: #{hourglass_forward.13} parent=5 // pred_check
      _
    $region54: #{hourglass_forward.13} parent=5 // pred_check_branch
      %291 = sbr.rel (%p288) target = $region56
    $region55: #{hourglass_forward.13} parent=5 // pred_region
      %s292 = ssub.s32 %s15, 1
      %p293 = scmp.lt.s32.totalorder %s20, 1
      %s294 = scalar_select %p293, %s20, 1
      %s295 = smul.addr %s294, 8
      %s296 = smul.addr %s295, 8
      %s297 = scalar_lea.vmem %s0, %s296
      %p298 = pneg %p41
      %p299 = pneg %p38
      %p300 = pneg %p62
      %p301 = pneg %p59
      %p302 = pneg %p83
      %p303 = pneg %p80
      %p304 = pneg %p104
      %p305 = pneg %p101
      %p306 = pneg %p125
      %p307 = pneg %p122
      %p308 = pneg %p146
      %p309 = pneg %p143
      %p310 = pneg %p167
      %p311 = pneg %p164
      %p312 = pneg %p188
      %p313 = pneg %p185
      %p314 = pneg %p209
      %p315 = pneg %p206
      %p316 = pneg %p235
      %p317 = pneg %p232
      %p318 = scmp.lt.s32.totalorder %s20, 1
      %s319 = scalar_select %p318, %s20, 1
      %s320 = smul.addr %s319, 8
      %s321 = smul.addr %s320, 8
      %s322 = scalar_lea.vmem %s9, %s321
      %p323 = scmp.lt.s32.totalorder %s20, 1
      %s324 = scalar_select %p323, %s20, 1
      %s325 = smul.addr %s324, 8
      %s326 = smul.addr %s325, 8
      %s327 = scalar_lea.vmem %s0, %s326
      %p328 = scmp.lt.s32.totalorder %s20, 1
      %s329 = scalar_select %p328, %s20, 1
      %s330 = smul.addr %s329, 8
      %s331 = smul.addr %s330, 8
      %s332 = scalar_lea.vmem %s9, %s331
      %v336 = vld [vmem:[%s327] sm:$0xff]
      %v337 = vld [vmem:[%s327 + $0x8] sm:$0xff]
      %v338 = vld [vmem:[%s327 + $0x10] sm:$0xff]
      %v339 = vld [vmem:[%s327 + $0x18] sm:$0xff]
      %v340 = vld [vmem:[%s327 + $0x20] sm:$0xff]
      %v341 = vld [vmem:[%s327 + $0x28] sm:$0xff]
      %v342 = vld [vmem:[%s327 + $0x30] sm:$0xff]
      %v343 = vld [vmem:[%s327 + $0x38] sm:$0xff]
      %v344 = vld [vmem:[%s1] sm:$0x1]
      %v346 = vlaneseq
      %v347 = vshrl.u32 %v346, 7
      %v348 = vsub.s32 0, %v347
      %v349 = vrot.slane %v344, %v348
      %v351 = vmul.f32 %v336, %v349
      %v352 = vmul.f32 %v337, %v349
      %v353 = vmul.f32 %v338, %v349
      %v354 = vmul.f32 %v339, %v349
      %v355 = vmul.f32 %v340, %v349
      %v356 = vmul.f32 %v341, %v349
      %v357 = vmul.f32 %v342, %v349
      %v358 = vmul.f32 %v343, %v349
      %v359 = vld [vmem:[%s2] sm:$0x1]
      %v361 = vlaneseq
      %v362 = vshrl.u32 %v361, 7
      %v363 = vsub.s32 0, %v362
      %v364 = vrot.slane %v359, %v363
      %v366 = vadd.f32 %v351, %v364
      %v367 = vadd.f32 %v352, %v364
      %v368 = vadd.f32 %v353, %v364
      %v369 = vadd.f32 %v354, %v364
      %v370 = vadd.f32 %v355, %v364
      %v371 = vadd.f32 %v356, %v364
      %v372 = vadd.f32 %v357, %v364
      %v373 = vadd.f32 %v358, %v364
      %v374 = vmax.f32 %v366, 0.0
      %v375 = vmax.f32 %v367, 0.0
      %v376 = vmax.f32 %v368, 0.0
      %v377 = vmax.f32 %v369, 0.0
      %v378 = vmax.f32 %v370, 0.0
      %v379 = vmax.f32 %v371, 0.0
      %v380 = vmax.f32 %v372, 0.0
      %v381 = vmax.f32 %v373, 0.0
      %v382 = vpack.c.bf16 %v375, %v374
      %v383 = vpack.c.bf16 %v377, %v376
      %v384 = vpack.c.bf16 %v379, %v378
      %v385 = vpack.c.bf16 %v381, %v380
      %v386 = vld [vmem:[%s3] sm:$0xf]
      %v387 = vld [vmem:[%s4] sm:$0x1]
      %v389 = vlaneseq
      %v390 = vshrl.u32 %v389, 7
      %v391 = vsub.s32 0, %v390
      %v392 = vrot.slane %v387, %v391
      %vm394 = vcmask 64512
      %v396 = vsel %vm394, %v382, 0
      %v399 = vsel %vm394, %v383, 0
      %v402 = vsel %vm394, %v384, 0
      %v405 = vsel %vm394, %v385, 0
      %vm407 = vcmask 1043456
      %v409 = vsel %vm407, %v386, 0
      %411 = vmatprep.subr.bf16.mxu0 0
      %412 = vmatpush1.bf16.msra.mxu0 %v409
      %413 = vmatprep.subr.bf16.mxu0 0
      %414 = vmatpush1.bf16.msra.mxu0 0
      %415 = vmatprep.subr.bf16.mxu0 0
      %416 = vmatpush1.bf16.msra.mxu0 0
      %417 = vmatprep.subr.bf16.mxu0 0
      %418 = vmatpush1.bf16.msra.mxu0 0
      %419 = vmatprep.subr.bf16.mxu0 0
      %420 = vmatpush1.bf16.msra.mxu0 0
      %421 = vmatprep.subr.bf16.mxu0 0
      %422 = vmatpush1.bf16.msra.mxu0 0
      %423 = vmatprep.subr.bf16.mxu0 0
      %424 = vmatpush1.bf16.msra.mxu0 0
      %425 = vmatprep.subr.bf16.mxu0 0
      %426 = vmatpush1.bf16.msra.mxu0 0
      %427 = vmatprep.subr.bf16.mxu0 0
      %428 = vmatpush1.bf16.msra.mxu0 0
      %429 = vmatprep.subr.bf16.mxu0 0
      %430 = vmatpush1.bf16.msra.mxu0 0
      %431 = vmatprep.subr.bf16.mxu0 0
      %432 = vmatpush1.bf16.msra.mxu0 0
      %433 = vmatprep.subr.bf16.mxu0 0
      %434 = vmatpush1.bf16.msra.mxu0 0
      %435 = vmatprep.subr.bf16.mxu0 0
      %436 = vmatpush1.bf16.msra.mxu0 0
      %437 = vmatprep.subr.bf16.mxu0 0
      %438 = vmatpush1.bf16.msra.mxu0 0
      %439 = vmatprep.subr.bf16.mxu0 0
      %440 = vmatpush1.bf16.msra.mxu0 0
      %441 = vmatprep.subr.bf16.mxu0 0
      %442 = vmatpush1.bf16.msra.mxu0 0
      %443 = vmatprep.mubr.bf16.mxu0 0
      %444 = vmatmul.mubr.bf16.gmra.mrb[0].mxu0 %v396
      %v445 = vpop.f32.mrb[0].mxu0
      %v446 = vadd.f32 %v392, %v445
      %v447 = vpop.f32.mrb[0].mxu0
      %v448 = vpop.f32.mrb[0].mxu0
      %v449 = vadd.f32 %v392, %v448
      %v450 = vpop.f32.mrb[0].mxu0
      %451 = vmatprep.mubr.bf16.mxu0 0
      %452 = vmatmul.mubr.bf16.gmra.mrb[0].mxu0 %v399
      %v453 = vpop.f32.mrb[0].mxu0
      %v454 = vadd.f32 %v392, %v453
      %v455 = vpop.f32.mrb[0].mxu0
      %v456 = vpop.f32.mrb[0].mxu0
      %v457 = vadd.f32 %v392, %v456
      %v458 = vpop.f32.mrb[0].mxu0
      %459 = vmatprep.mubr.bf16.mxu0 0
      %460 = vmatmul.mubr.bf16.gmra.mrb[0].mxu0 %v402
      %v461 = vpop.f32.mrb[0].mxu0
      %v462 = vadd.f32 %v392, %v461
      %v463 = vpop.f32.mrb[0].mxu0
      %v464 = vpop.f32.mrb[0].mxu0
      %v465 = vadd.f32 %v392, %v464
      %v466 = vpop.f32.mrb[0].mxu0
      %467 = vmatprep.mubr.bf16.mxu0 0
      %468 = vmatmul.mubr.bf16.gmra.mrb[0].mxu0 %v405
      %v469 = vpop.f32.mrb[0].mxu0
      %v470 = vadd.f32 %v392, %v469
      %v471 = vpop.f32.mrb[0].mxu0
      %v472 = vpop.f32.mrb[0].mxu0
      %v473 = vadd.f32 %v392, %v472
      %v474 = vpop.f32.mrb[0].mxu0
      %475 = vdwg.mxu0
      %v476 = vmax.f32 %v446, 0.0
      %v477 = vmax.f32 %v449, 0.0
      %v478 = vmax.f32 %v454, 0.0
      %v479 = vmax.f32 %v457, 0.0
      %v480 = vmax.f32 %v462, 0.0
      %v481 = vmax.f32 %v465, 0.0
      %v482 = vmax.f32 %v470, 0.0
      %v483 = vmax.f32 %v473, 0.0
      %vm484 = vcmask 27648
      %485 = vst.msk [vmem:[#allocation2] sm:$0xf] %vm484, 0
      %486 = vst.msk [vmem:[#allocation2 + $0x4] sm:$0xf] %vm484, 0
      %487 = vst.msk [vmem:[#allocation2 + $0x8] sm:$0xf] %vm484, 0
      %488 = vst.msk [vmem:[#allocation2 + $0xc] sm:$0xf] %vm484, 0
      %489 = vst.msk [vmem:[#allocation2 + $0x10] sm:$0xf] %vm484, 0
      %490 = vst.msk [vmem:[#allocation2 + $0x14] sm:$0xf] %vm484, 0
      %491 = vst.msk [vmem:[#allocation2 + $0x18] sm:$0xf] %vm484, 0
      %492 = vst.msk [vmem:[#allocation2 + $0x1c] sm:$0xf] %vm484, 0
      %493 = vst.msk [vmem:[#allocation2 + $0x20] sm:$0xf] %vm484, 0
      %494 = vst.msk [vmem:[#allocation2 + $0x24] sm:$0xf] %vm484, 0
      %vm495 = vcmask 24576
      %496 = vst.msk [vmem:[#allocation2 + $0x28] sm:$0x1] %vm495, 0
      %v497 = vpack.c.bf16 %v477, %v476
      %v498 = vpack.c.bf16 %v479, %v478
      %v499 = vpack.c.bf16 %v481, %v480
      %v500 = vpack.c.bf16 %v483, %v482
      %v505 = vunpack.c.l.b16 %v497
      %v506 = vunpack.c.h.b16 %v497
      %v507 = vunpack.c.l.b16 %v498
      %v508 = vunpack.c.h.b16 %v498
      %v509 = vunpack.c.l.b16 %v499
      %v510 = vunpack.c.h.b16 %v499
      %v511 = vunpack.c.l.b16 %v500
      %v512 = vunpack.c.h.b16 %v500
      %v513 = vpack.c.b16 %v505, %v505
      %v514 = vpack.c.b16 %v506, %v506
      %v515 = vpack.c.b16 %v507, %v507
      %v516 = vpack.c.b16 %v508, %v508
      %v517 = vpack.c.b16 %v509, %v509
      %v518 = vpack.c.b16 %v510, %v510
      %v519 = vpack.c.b16 %v511, %v511
      %v520 = vpack.c.b16 %v512, %v512
      %vm521 = vsmask.f32 256
      %vm522 = vsmask.f32 4368
      %vm523 = vmor %vm521, %vm522
      %v525 = vshrl.u32 %v513, 16
      %v527 = vrot.slane %v525, 7
      %v528 = vshll.u32 %v513, 16
      %v530 = vor.u32 %v527, %v528
      %v531 = vrot.slane %v527, 4
      %v533 = vshrl.u32 %v514, 16
      %v535 = vrot.slane %v533, 7
      %v536 = vshll.u32 %v514, 16
      %v538 = vor.u32 %v535, %v536
      %v539 = vsel %vm523, %v531, %v538
      %v540 = vrot.slane %v535, 4
      %v542 = vshrl.u32 %v515, 16
      %v544 = vrot.slane %v542, 7
      %v545 = vshll.u32 %v515, 16
      %v547 = vor.u32 %v544, %v545
      %v548 = vsel %vm523, %v540, %v547
      %v549 = vrot.slane %v544, 4
      %v551 = vshrl.u32 %v516, 16
      %v553 = vrot.slane %v551, 7
      %v554 = vshll.u32 %v516, 16
      %v556 = vor.u32 %v553, %v554
      %v557 = vsel %vm523, %v549, %v556
      %v558 = vrot.slane %v553, 4
      %v560 = vshrl.u32 %v517, 16
      %v562 = vrot.slane %v560, 7
      %v563 = vshll.u32 %v517, 16
      %v565 = vor.u32 %v562, %v563
      %v566 = vsel %vm523, %v558, %v565
      %v567 = vrot.slane %v562, 4
      %v569 = vshrl.u32 %v518, 16
      %v571 = vrot.slane %v569, 7
      %v572 = vshll.u32 %v518, 16
      %v574 = vor.u32 %v571, %v572
      %v575 = vsel %vm523, %v567, %v574
      %v576 = vrot.slane %v571, 4
      %v578 = vshrl.u32 %v519, 16
      %v580 = vrot.slane %v578, 7
      %v581 = vshll.u32 %v519, 16
      %v583 = vor.u32 %v580, %v581
      %v584 = vsel %vm523, %v576, %v583
      %v585 = vrot.slane %v580, 4
      %v587 = vshrl.u32 %v520, 16
      %v589 = vrot.slane %v587, 7
      %v590 = vshll.u32 %v520, 16
      %v592 = vor.u32 %v589, %v590
      %v593 = vsel %vm523, %v585, %v592
      %v594 = vrot.slane %v589, 4
      %vm604 = vcmask 27648
      %vm605 = vsmask.f32 7938
      %vm606 = vmand %vm604, %vm605
      %v607 = vld [vmem:[#allocation2 + $0x4] sm:$0xf]
      %v608 = vsel %vm606, %v530, %v607
      %609 = vst [vmem:[#allocation2 + $0x4] sm:$0xf] %v608
      %610 = vst.msk [vmem:[#allocation2 + $0x8] sm:$0xf] %vm484, %v539
      %611 = vst.msk [vmem:[#allocation2 + $0xc] sm:$0xf] %vm484, %v548
      %612 = vst.msk [vmem:[#allocation2 + $0x10] sm:$0xf] %vm484, %v557
      %613 = vst.msk [vmem:[#allocation2 + $0x14] sm:$0xf] %vm484, %v566
      %614 = vst.msk [vmem:[#allocation2 + $0x18] sm:$0xf] %vm484, %v575
      %615 = vst.msk [vmem:[#allocation2 + $0x1c] sm:$0xf] %vm484, %v584
      %616 = vst.msk [vmem:[#allocation2 + $0x20] sm:$0xf] %vm484, %v593
      %vm617 = vcmask 24576
      %vm618 = vmand %vm617, %vm521
      %v619 = vld [vmem:[#allocation2 + $0x24] sm:$0x1]
      %v620 = vsel %vm618, %v594, %v619
      %621 = vst [vmem:[#allocation2 + $0x24] sm:$0x1] %v620
      %v622 = vlaneseq
      %v623 = vshrl.u32 %v622, 7
      %v624 = vadd.s32 %v623, 8
      %v625 = vadd.s32 %v623, 16
      %v626 = vadd.s32 %v623, 24
      %v627 = vadd.s32 %v623, 32
      %v628 = vadd.s32 %v623, 40
      %v629 = vadd.s32 %v623, 48
      %v630 = vadd.s32 %v623, 56
      %vm631 = vcmp.lt.s32.totalorder %v623, 0
      %v632 = vsub.s32 0, %v623
      %v633 = vsel %vm631, %v632, %v623
      %v634 = vshrl.u32 %v633, 3
      %v635 = vand.u32 %v633, 7
      %v636 = vsub.s32 0, %v635
      %v637 = vsel %vm631, %v636, %v635
      %vm638 = vcmp.lt.s32.totalorder %v624, 0
      %v639 = vsub.s32 0, %v624
      %v640 = vsel %vm638, %v639, %v624
      %v641 = vshrl.u32 %v640, 3
      %v642 = vand.u32 %v640, 7
      %v643 = vsub.s32 0, %v642
      %v644 = vsel %vm638, %v643, %v642
      %vm645 = vcmp.lt.s32.totalorder %v625, 0
      %v646 = vsub.s32 0, %v625
      %v647 = vsel %vm645, %v646, %v625
      %v648 = vshrl.u32 %v647, 3
      %v649 = vand.u32 %v647, 7
      %v650 = vsub.s32 0, %v649
      %v651 = vsel %vm645, %v650, %v649
      %vm652 = vcmp.lt.s32.totalorder %v626, 0
      %v653 = vsub.s32 0, %v626
      %v654 = vsel %vm652, %v653, %v626
      %v655 = vshrl.u32 %v654, 3
      %v656 = vand.u32 %v654, 7
      %v657 = vsub.s32 0, %v656
      %v658 = vsel %vm652, %v657, %v656
      %vm659 = vcmp.lt.s32.totalorder %v627, 0
      %v660 = vsub.s32 0, %v627
      %v661 = vsel %vm659, %v660, %v627
      %v662 = vshrl.u32 %v661, 3
      %v663 = vand.u32 %v661, 7
      %v664 = vsub.s32 0, %v663
      %v665 = vsel %vm659, %v664, %v663
      %vm666 = vcmp.lt.s32.totalorder %v628, 0
      %v667 = vsub.s32 0, %v628
      %v668 = vsel %vm666, %v667, %v628
      %v669 = vshrl.u32 %v668, 3
      %v670 = vand.u32 %v668, 7
      %v671 = vsub.s32 0, %v670
      %v672 = vsel %vm666, %v671, %v670
      %vm673 = vcmp.lt.s32.totalorder %v629, 0
      %v674 = vsub.s32 0, %v629
      %v675 = vsel %vm673, %v674, %v629
      %v676 = vshrl.u32 %v675, 3
      %v677 = vand.u32 %v675, 7
      %v678 = vsub.s32 0, %v677
      %v679 = vsel %vm673, %v678, %v677
      %vm680 = vcmp.lt.s32.totalorder %v630, 0
      %v681 = vsub.s32 0, %v630
      %v682 = vsel %vm680, %v681, %v630
      %v683 = vshrl.u32 %v682, 3
      %v684 = vand.u32 %v682, 7
      %v685 = vsub.s32 0, %v684
      %v686 = vsel %vm680, %v685, %v684
      %vm687 = vcmp.ne.s32.totalorder %v637, 0
      %vm688 = vcmp.ne.s32.totalorder %v644, 0
      %vm689 = vcmp.ne.s32.totalorder %v651, 0
      %vm690 = vcmp.ne.s32.totalorder %v658, 0
      %vm691 = vcmp.ne.s32.totalorder %v665, 0
      %vm692 = vcmp.ne.s32.totalorder %v672, 0
      %vm693 = vcmp.ne.s32.totalorder %v679, 0
      %vm694 = vcmp.ne.s32.totalorder %v686, 0
      %vm695 = vcmp.lt.s32.totalorder %v637, 0
      %vm696 = vcmp.lt.s32.totalorder %v644, 0
      %vm697 = vcmp.lt.s32.totalorder %v651, 0
      %vm698 = vcmp.lt.s32.totalorder %v658, 0
      %vm699 = vcmp.lt.s32.totalorder %v665, 0
      %vm700 = vcmp.lt.s32.totalorder %v672, 0
      %vm701 = vcmp.lt.s32.totalorder %v679, 0
      %vm702 = vcmp.lt.s32.totalorder %v686, 0
      %vm703 = vmand %vm695, %vm687
      %vm704 = vmand %vm696, %vm688
      %vm705 = vmand %vm697, %vm689
      %vm706 = vmand %vm698, %vm690
      %vm707 = vmand %vm699, %vm691
      %vm708 = vmand %vm700, %vm692
      %vm709 = vmand %vm701, %vm693
      %vm710 = vmand %vm702, %vm694
      %v711 = vadd.s32 %v637, 8
      %v712 = vadd.s32 %v644, 8
      %v713 = vadd.s32 %v651, 8
      %v714 = vadd.s32 %v658, 8
      %v715 = vadd.s32 %v665, 8
      %v716 = vadd.s32 %v672, 8
      %v717 = vadd.s32 %v679, 8
      %v718 = vadd.s32 %v686, 8
      %v719 = vsel %vm703, %v711, %v637
      %v720 = vsel %vm704, %v712, %v644
      %v721 = vsel %vm705, %v713, %v651
      %v722 = vsel %vm706, %v714, %v658
      %v723 = vsel %vm707, %v715, %v665
      %v724 = vsel %vm708, %v716, %v672
      %v725 = vsel %vm709, %v717, %v679
      %v726 = vsel %vm710, %v718, %v686
      %v727 = vld [vmem:[#allocation2] sm:$0xf]
      %v728 = vld [vmem:[#allocation2 + $0x4] sm:$0xf]
      %v729 = vld [vmem:[#allocation2 + $0x8] sm:$0xf]
      %v730 = vld [vmem:[#allocation2 + $0xc] sm:$0xf]
      %v731 = vld [vmem:[#allocation2 + $0x10] sm:$0xf]
      %v732 = vld [vmem:[#allocation2 + $0x14] sm:$0xf]
      %v733 = vld [vmem:[#allocation2 + $0x18] sm:$0xf]
      %v734 = vld [vmem:[#allocation2 + $0x1c] sm:$0xf]
      %vm735 = vcmp.ge.s32.totalorder %v719, 1
      %vm736 = vcmp.ge.s32.totalorder %v720, 1
      %vm737 = vcmp.ge.s32.totalorder %v721, 1
      %vm738 = vcmp.ge.s32.totalorder %v722, 1
      %vm739 = vcmp.ge.s32.totalorder %v723, 1
      %vm740 = vcmp.ge.s32.totalorder %v724, 1
      %vm741 = vcmp.ge.s32.totalorder %v725, 1
      %vm742 = vcmp.ge.s32.totalorder %v726, 1
      %v743 = vsel %vm735, 1, 0
      %v744 = vsel %vm736, 1, 0
      %v745 = vsel %vm737, 1, 0
      %v746 = vsel %vm738, 1, 0
      %v747 = vsel %vm739, 1, 0
      %v748 = vsel %vm740, 1, 0
      %v749 = vsel %vm741, 1, 0
      %v750 = vsel %vm742, 1, 0
      %vm751 = vcmp.eq.s32.totalorder %v743, 1
      %vm752 = vcmp.eq.s32.totalorder %v744, 1
      %vm753 = vcmp.eq.s32.totalorder %v745, 1
      %vm754 = vcmp.eq.s32.totalorder %v746, 1
      %vm755 = vcmp.eq.s32.totalorder %v747, 1
      %vm756 = vcmp.eq.s32.totalorder %v748, 1
      %vm757 = vcmp.eq.s32.totalorder %v749, 1
      %vm758 = vcmp.eq.s32.totalorder %v750, 1
      %vm759 = vmpackc.low %vm751, %vm751
      %vm760 = vmpackc.low %vm752, %vm752
      %vm761 = vmpackc.low %vm753, %vm753
      %vm762 = vmpackc.low %vm754, %vm754
      %vm763 = vmpackc.low %vm755, %vm755
      %vm764 = vmpackc.low %vm756, %vm756
      %vm765 = vmpackc.low %vm757, %vm757
      %vm766 = vmpackc.low %vm758, %vm758
      %v767 = vsel %vm759, %v727, 0
      %v768 = vsel %vm760, %v728, 0
      %v769 = vsel %vm761, %v729, 0
      %v770 = vsel %vm762, %v730, 0
      %v771 = vsel %vm763, %v731, 0
      %v772 = vsel %vm764, %v732, 0
      %v773 = vsel %vm765, %v733, 0
      %v774 = vsel %vm766, %v734, 0
      %v775 = vld [vmem:[%s5] sm:$0x3]
      %v776 = vld [vmem:[#allocation2 + $0x20] sm:$0x1]
      %s777 = scalar_lea.vmem %s5, 2
      %v778 = vld [vmem:[%s777] sm:$0x3]
      %v788 = vunpack.c.l.b16 %v727
      %v789 = vunpack.c.l.b16 %v728
      %v790 = vunpack.c.l.b16 %v729
      %v791 = vunpack.c.l.b16 %v730
      %v792 = vunpack.c.l.b16 %v731
      %v793 = vunpack.c.l.b16 %v732
      %v794 = vunpack.c.l.b16 %v733
      %v795 = vunpack.c.l.b16 %v734
      %v796 = vunpack.c.l.b16 %v776
      %v797 = vpack.c.b16 %v789, %v788
      %v798 = vpack.c.b16 %v791, %v790
      %v799 = vpack.c.b16 %v793, %v792
      %v800 = vpack.c.b16 %v795, %v794
      %v801 = vpack.c.b16 %v796, %v796
      %vm802 = vsmask.f32 7424
      %v804 = vshrl.u32 %v797, 16
      %v806 = vshll.u32 %v797, 16
      %v808 = vrot.slane %v806, 1
      %v809 = vor.u32 %v804, %v808
      %v811 = vshll.u32 %v798, 16
      %v813 = vrot.slane %v811, 1
      %v814 = vsel %vm802, %v809, %v813
      %v815 = vshrl.u32 %v798, 16
      %v817 = vor.u32 %v815, %v813
      %v819 = vshll.u32 %v799, 16
      %v821 = vrot.slane %v819, 1
      %v822 = vsel %vm802, %v817, %v821
      %v823 = vshrl.u32 %v799, 16
      %v825 = vor.u32 %v823, %v821
      %v827 = vshll.u32 %v800, 16
      %v829 = vrot.slane %v827, 1
      %v830 = vsel %vm802, %v825, %v829
      %v831 = vshrl.u32 %v800, 16
      %v833 = vor.u32 %v831, %v829
      %v835 = vshll.u32 %v801, 16
      %v837 = vrot.slane %v835, 1
      %v838 = vsel %vm802, %v833, %v837
      %vm839 = vcmask 31744
      %v841 = vsel %vm839, %v814, 0
      %v844 = vsel %vm839, %v822, 0
      %v847 = vsel %vm839, %v830, 0
      %v850 = vsel %vm839, %v838, 0
      %vm852 = vcmask 1041408
      %v854 = vsel %vm852, %v778, 0
      %856 = vmatprep.subr.bf16.mxu0 0
      %857 = vmatpush1.bf16.msra.mxu0 %v854
      %858 = vmatprep.subr.bf16.mxu0 0
      %859 = vmatpush1.bf16.msra.mxu0 0
      %860 = vmatprep.subr.bf16.mxu0 0
      %861 = vmatpush1.bf16.msra.mxu0 0
      %862 = vmatprep.subr.bf16.mxu0 0
      %863 = vmatpush1.bf16.msra.mxu0 0
      %864 = vmatprep.subr.bf16.mxu0 0
      %865 = vmatpush1.bf16.msra.mxu0 0
      %866 = vmatprep.subr.bf16.mxu0 0
      %867 = vmatpush1.bf16.msra.mxu0 0
      %868 = vmatprep.subr.bf16.mxu0 0
      %869 = vmatpush1.bf16.msra.mxu0 0
      %870 = vmatprep.subr.bf16.mxu0 0
      %871 = vmatpush1.bf16.msra.mxu0 0
      %872 = vmatprep.subr.bf16.mxu0 0
      %873 = vmatpush1.bf16.msra.mxu0 0
      %874 = vmatprep.subr.bf16.mxu0 0
      %875 = vmatpush1.bf16.msra.mxu0 0
      %876 = vmatprep.subr.bf16.mxu0 0
      %877 = vmatpush1.bf16.msra.mxu0 0
      %878 = vmatprep.subr.bf16.mxu0 0
      %879 = vmatpush1.bf16.msra.mxu0 0
      %880 = vmatprep.subr.bf16.mxu0 0
      %881 = vmatpush1.bf16.msra.mxu0 0
      %882 = vmatprep.subr.bf16.mxu0 0
      %883 = vmatpush1.bf16.msra.mxu0 0
      %884 = vmatprep.subr.bf16.mxu0 0
      %885 = vmatpush1.bf16.msra.mxu0 0
      %886 = vmatprep.subr.bf16.mxu0 0
      %887 = vmatpush1.bf16.msra.mxu0 0
      %888 = vmatprep.mubr.bf16.mxu0 0
      %889 = vmatmul.mubr.bf16.gmra.mrb[0].mxu0 %v841
      %v890 = vpop.f32.mrb[0].mxu0
      %v891 = vadd.f32 0.0, %v890
      %v892 = vpop.f32.mrb[0].mxu0
      %v893 = vpop.f32.mrb[0].mxu0
      %v894 = vadd.f32 0.0, %v893
      %v895 = vpop.f32.mrb[0].mxu0
      %896 = vmatprep.mubr.bf16.mxu0 0
      %897 = vmatmul.mubr.bf16.gmra.mrb[0].mxu0 %v844
      %v898 = vpop.f32.mrb[0].mxu0
      %v899 = vadd.f32 0.0, %v898
      %v900 = vpop.f32.mrb[0].mxu0
      %v901 = vpop.f32.mrb[0].mxu0
      %v902 = vadd.f32 0.0, %v901
      %v903 = vpop.f32.mrb[0].mxu0
      %904 = vmatprep.mubr.bf16.mxu0 0
      %905 = vmatmul.mubr.bf16.gmra.mrb[0].mxu0 %v847
      %v906 = vpop.f32.mrb[0].mxu0
      %v907 = vadd.f32 0.0, %v906
      %v908 = vpop.f32.mrb[0].mxu0
      %v909 = vpop.f32.mrb[0].mxu0
      %v910 = vadd.f32 0.0, %v909
      %v911 = vpop.f32.mrb[0].mxu0
      %912 = vmatprep.mubr.bf16.mxu0 0
      %913 = vmatmul.mubr.bf16.gmra.mrb[0].mxu0 %v850
      %v914 = vpop.f32.mrb[0].mxu0
      %v915 = vadd.f32 0.0, %v914
      %v916 = vpop.f32.mrb[0].mxu0
      %v917 = vpop.f32.mrb[0].mxu0
      %v918 = vadd.f32 0.0, %v917
      %v919 = vpop.f32.mrb[0].mxu0
      %920 = vdwg.mxu0
      %v929 = vunpack.c.l.b16 %v767
      %v930 = vunpack.c.l.b16 %v768
      %v931 = vunpack.c.l.b16 %v769
      %v932 = vunpack.c.l.b16 %v770
      %v933 = vunpack.c.l.b16 %v771
      %v934 = vunpack.c.l.b16 %v772
      %v935 = vunpack.c.l.b16 %v773
      %v936 = vunpack.c.l.b16 %v774
      %v937 = vpack.c.b16 %v930, %v929
      %v938 = vpack.c.b16 %v932, %v931
      %v939 = vpack.c.b16 %v934, %v933
      %v940 = vpack.c.b16 %v936, %v935
      %v942 = vsel %vm839, %v937, 0
      %v945 = vsel %vm839, %v938, 0
      %v948 = vsel %vm839, %v939, 0
      %v951 = vsel %vm839, %v940, 0
      %v954 = vsel %vm852, %v775, 0
      %956 = vmatprep.subr.bf16.mxu0 0
      %957 = vmatpush1.bf16.msra.mxu0 %v954
      %958 = vmatprep.subr.bf16.mxu0 0
      %959 = vmatpush1.bf16.msra.mxu0 0
      %960 = vmatprep.subr.bf16.mxu0 0
      %961 = vmatpush1.bf16.msra.mxu0 0
      %962 = vmatprep.subr.bf16.mxu0 0
      %963 = vmatpush1.bf16.msra.mxu0 0
      %964 = vmatprep.subr.bf16.mxu0 0
      %965 = vmatpush1.bf16.msra.mxu0 0
      %966 = vmatprep.subr.bf16.mxu0 0
      %967 = vmatpush1.bf16.msra.mxu0 0
      %968 = vmatprep.subr.bf16.mxu0 0
      %969 = vmatpush1.bf16.msra.mxu0 0
      %970 = vmatprep.subr.bf16.mxu0 0
      %971 = vmatpush1.bf16.msra.mxu0 0
      %972 = vmatprep.subr.bf16.mxu0 0
      %973 = vmatpush1.bf16.msra.mxu0 0
      %974 = vmatprep.subr.bf16.mxu0 0
      %975 = vmatpush1.bf16.msra.mxu0 0
      %976 = vmatprep.subr.bf16.mxu0 0
      %977 = vmatpush1.bf16.msra.mxu0 0
      %978 = vmatprep.subr.bf16.mxu0 0
      %979 = vmatpush1.bf16.msra.mxu0 0
      %980 = vmatprep.subr.bf16.mxu0 0
      %981 = vmatpush1.bf16.msra.mxu0 0
      %982 = vmatprep.subr.bf16.mxu0 0
      %983 = vmatpush1.bf16.msra.mxu0 0
      %984 = vmatprep.subr.bf16.mxu0 0
      %985 = vmatpush1.bf16.msra.mxu0 0
      %986 = vmatprep.subr.bf16.mxu0 0
      %987 = vmatpush1.bf16.msra.mxu0 0
      %988 = vmatprep.mubr.bf16.mxu0 0
      %989 = vmatmul.mubr.bf16.gmra.mrb[0].mxu0 %v942
      %v990 = vpop.f32.mrb[0].mxu0
      %v991 = vadd.f32 %v891, %v990
      %v992 = vpop.f32.mrb[0].mxu0
      %v993 = vpop.f32.mrb[0].mxu0
      %v994 = vadd.f32 %v894, %v993
      %v995 = vpop.f32.mrb[0].mxu0
      %996 = vmatprep.mubr.bf16.mxu0 0
      %997 = vmatmul.mubr.bf16.gmra.mrb[0].mxu0 %v945
      %v998 = vpop.f32.mrb[0].mxu0
      %v999 = vadd.f32 %v899, %v998
      %v1000 = vpop.f32.mrb[0].mxu0
      %v1001 = vpop.f32.mrb[0].mxu0
      %v1002 = vadd.f32 %v902, %v1001
      %v1003 = vpop.f32.mrb[0].mxu0
      %1004 = vmatprep.mubr.bf16.mxu0 0
      %1005 = vmatmul.mubr.bf16.gmra.mrb[0].mxu0 %v948
      %v1006 = vpop.f32.mrb[0].mxu0
      %v1007 = vadd.f32 %v907, %v1006
      %v1008 = vpop.f32.mrb[0].mxu0
      %v1009 = vpop.f32.mrb[0].mxu0
      %v1010 = vadd.f32 %v910, %v1009
      %v1011 = vpop.f32.mrb[0].mxu0
      %1012 = vmatprep.mubr.bf16.mxu0 0
      %1013 = vmatmul.mubr.bf16.gmra.mrb[0].mxu0 %v951
      %v1014 = vpop.f32.mrb[0].mxu0
      %v1015 = vadd.f32 %v915, %v1014
      %v1016 = vpop.f32.mrb[0].mxu0
      %v1017 = vpop.f32.mrb[0].mxu0
      %v1018 = vadd.f32 %v918, %v1017
      %v1019 = vpop.f32.mrb[0].mxu0
      %1020 = vdwg.mxu0
      %v1021 = vld [vmem:[#allocation2] sm:$0xe]
      %vm1022 = vcmp.le.s32.totalorder %v719, 6
      %vm1023 = vcmp.le.s32.totalorder %v720, 6
      %vm1024 = vcmp.le.s32.totalorder %v721, 6
      %vm1025 = vcmp.le.s32.totalorder %v722, 6
      %vm1026 = vcmp.le.s32.totalorder %v723, 6
      %vm1027 = vcmp.le.s32.totalorder %v724, 6
      %vm1028 = vcmp.le.s32.totalorder %v725, 6
      %vm1029 = vcmp.le.s32.totalorder %v726, 6
      %v1030 = vsel %vm1022, 1, 0
      %v1031 = vsel %vm1023, 1, 0
      %v1032 = vsel %vm1024, 1, 0
      %v1033 = vsel %vm1025, 1, 0
      %v1034 = vsel %vm1026, 1, 0
      %v1035 = vsel %vm1027, 1, 0
      %v1036 = vsel %vm1028, 1, 0
      %v1037 = vsel %vm1029, 1, 0
      %vm1038 = vcmp.eq.s32.totalorder %v1030, 1
      %vm1039 = vcmp.eq.s32.totalorder %v1031, 1
      %vm1040 = vcmp.eq.s32.totalorder %v1032, 1
      %vm1041 = vcmp.eq.s32.totalorder %v1033, 1
      %vm1042 = vcmp.eq.s32.totalorder %v1034, 1
      %vm1043 = vcmp.eq.s32.totalorder %v1035, 1
      %vm1044 = vcmp.eq.s32.totalorder %v1036, 1
      %vm1045 = vcmp.eq.s32.totalorder %v1037, 1
      %vm1046 = vmpackc.low %vm1038, %vm1038
      %vm1047 = vmpackc.low %vm1039, %vm1039
      %vm1048 = vmpackc.low %vm1040, %vm1040
      %vm1049 = vmpackc.low %vm1041, %vm1041
      %vm1050 = vmpackc.low %vm1042, %vm1042
      %vm1051 = vmpackc.low %vm1043, %vm1043
      %vm1052 = vmpackc.low %vm1044, %vm1044
      %vm1053 = vmpackc.low %vm1045, %vm1045
      %v1054 = vsel %vm1046, 65537, 0
      %v1055 = vsel %vm1047, 65537, 0
      %v1056 = vsel %vm1048, 65537, 0
      %v1057 = vsel %vm1049, 65537, 0
      %v1058 = vsel %vm1050, 65537, 0
      %v1059 = vsel %vm1051, 65537, 0
      %v1060 = vsel %vm1052, 65537, 0
      %v1061 = vsel %vm1053, 65537, 0
      %vm1062 = vcmask 1040384
      %vm1063 = vcmask 1044484
      %vm1064 = vmor %vm1062, %vm1063
      %v1065 = vrot.slane %v1054, 7
      %v1066 = vrot.slane %v1065, 4
      %v1067 = vrot.slane %v1055, 7
      %v1068 = vsel %vm1064, %v1066, %v1067
      %v1069 = vrot.slane %v1067, 4
      %v1070 = vrot.slane %v1056, 7
      %v1071 = vsel %vm1064, %v1069, %v1070
      %v1072 = vrot.slane %v1070, 4
      %v1073 = vrot.slane %v1057, 7
      %v1074 = vsel %vm1064, %v1072, %v1073
      %v1075 = vrot.slane %v1073, 4
      %v1076 = vrot.slane %v1058, 7
      %v1077 = vsel %vm1064, %v1075, %v1076
      %v1078 = vrot.slane %v1076, 4
      %v1079 = vrot.slane %v1059, 7
      %v1080 = vsel %vm1064, %v1078, %v1079
      %v1081 = vrot.slane %v1079, 4
      %v1082 = vrot.slane %v1060, 7
      %v1083 = vsel %vm1064, %v1081, %v1082
      %v1084 = vrot.slane %v1082, 4
      %v1085 = vrot.slane %v1061, 7
      %v1086 = vsel %vm1064, %v1084, %v1085
      %v1087 = vrot.slane %v1085, 4
      %vm1088 = vcmp.ne.s16.totalorder %v1065, 0
      %vm1089 = vcmp.ne.s16.totalorder %v1068, 0
      %vm1090 = vcmp.ne.s16.totalorder %v1071, 0
      %vm1091 = vcmp.ne.s16.totalorder %v1074, 0
      %vm1092 = vcmp.ne.s16.totalorder %v1077, 0
      %vm1093 = vcmp.ne.s16.totalorder %v1080, 0
      %vm1094 = vcmp.ne.s16.totalorder %v1083, 0
      %vm1095 = vcmp.ne.s16.totalorder %v1086, 0
      %vm1096 = vcmp.ne.s16.totalorder %v1087, 0
      %v1097 = vsel %vm1088, %v1021, 0
      %v1098 = vsel %vm1089, %v728, 0
      %v1099 = vsel %vm1090, %v729, 0
      %v1100 = vsel %vm1091, %v730, 0
      %v1101 = vsel %vm1092, %v731, 0
      %v1102 = vsel %vm1093, %v732, 0
      %v1103 = vsel %vm1094, %v733, 0
      %v1104 = vsel %vm1095, %v734, 0
      %v1105 = vsel %vm1096, %v776, 0
      %s1106 = scalar_lea.vmem %s5, 4
      %v1107 = vld [vmem:[%s1106] sm:$0x3]
      %v1117 = vunpack.c.l.b16 %v1097
      %v1118 = vunpack.c.l.b16 %v1098
      %v1119 = vunpack.c.l.b16 %v1099
      %v1120 = vunpack.c.l.b16 %v1100
      %v1121 = vunpack.c.l.b16 %v1101
      %v1122 = vunpack.c.l.b16 %v1102
      %v1123 = vunpack.c.l.b16 %v1103
      %v1124 = vunpack.c.l.b16 %v1104
      %v1125 = vunpack.c.l.b16 %v1105
      %v1126 = vpack.c.b16 %v1118, %v1117
      %v1127 = vpack.c.b16 %v1120, %v1119
      %v1128 = vpack.c.b16 %v1122, %v1121
      %v1129 = vpack.c.b16 %v1124, %v1123
      %v1130 = vpack.c.b16 %v1125, %v1125
      %vm1131 = vcmask 1046528
      %v1132 = vrot.slane %v1126, 1
      %v1133 = vrot.slane %v1127, 1
      %v1134 = vsel %vm1131, %v1132, %v1133
      %v1135 = vrot.slane %v1128, 1
      %v1136 = vsel %vm1131, %v1133, %v1135
      %v1137 = vrot.slane %v1129, 1
      %v1138 = vsel %vm1131, %v1135, %v1137
      %v1139 = vrot.slane %v1130, 1
      %v1140 = vsel %vm1131, %v1137, %v1139
      %v1142 = vsel %vm839, %v1134, 0
      %v1145 = vsel %vm839, %v1136, 0
      %v1148 = vsel %vm839, %v1138, 0
      %v1151 = vsel %vm839, %v1140, 0
      %v1154 = vsel %vm852, %v1107, 0
      %1156 = vmatprep.subr.bf16.mxu0 0
      %1157 = vmatpush1.bf16.msra.mxu0 %v1154
      %1158 = vmatprep.subr.bf16.mxu0 0
      %1159 = vmatpush1.bf16.msra.mxu0 0
      %1160 = vmatprep.subr.bf16.mxu0 0
      %1161 = vmatpush1.bf16.msra.mxu0 0
      %1162 = vmatprep.subr.bf16.mxu0 0
      %1163 = vmatpush1.bf16.msra.mxu0 0
      %1164 = vmatprep.subr.bf16.mxu0 0
      %1165 = vmatpush1.bf16.msra.mxu0 0
      %1166 = vmatprep.subr.bf16.mxu0 0
      %1167 = vmatpush1.bf16.msra.mxu0 0
      %1168 = vmatprep.subr.bf16.mxu0 0
      %1169 = vmatpush1.bf16.msra.mxu0 0
      %1170 = vmatprep.subr.bf16.mxu0 0
      %1171 = vmatpush1.bf16.msra.mxu0 0
      %1172 = vmatprep.subr.bf16.mxu0 0
      %1173 = vmatpush1.bf16.msra.mxu0 0
      %1174 = vmatprep.subr.bf16.mxu0 0
      %1175 = vmatpush1.bf16.msra.mxu0 0
      %1176 = vmatprep.subr.bf16.mxu0 0
      %1177 = vmatpush1.bf16.msra.mxu0 0
      %1178 = vmatprep.subr.bf16.mxu0 0
      %1179 = vmatpush1.bf16.msra.mxu0 0
      %1180 = vmatprep.subr.bf16.mxu0 0
      %1181 = vmatpush1.bf16.msra.mxu0 0
      %1182 = vmatprep.subr.bf16.mxu0 0
      %1183 = vmatpush1.bf16.msra.mxu0 0
      %1184 = vmatprep.subr.bf16.mxu0 0
      %1185 = vmatpush1.bf16.msra.mxu0 0
      %1186 = vmatprep.subr.bf16.mxu0 0
      %1187 = vmatpush1.bf16.msra.mxu0 0
      %1188 = vmatprep.mubr.bf16.mxu0 0
      %1189 = vmatmul.mubr.bf16.gmra.mrb[0].mxu0 %v1142
      %v1190 = vpop.f32.mrb[0].mxu0
      %v1191 = vadd.f32 0.0, %v1190
      %v1192 = vpop.f32.mrb[0].mxu0
      %v1193 = vpop.f32.mrb[0].mxu0
      %v1194 = vadd.f32 0.0, %v1193
      %v1195 = vpop.f32.mrb[0].mxu0
      %1196 = vmatprep.mubr.bf16.mxu0 0
      %1197 = vmatmul.mubr.bf16.gmra.mrb[0].mxu0 %v1145
      %v1198 = vpop.f32.mrb[0].mxu0
      %v1199 = vadd.f32 0.0, %v1198
      %v1200 = vpop.f32.mrb[0].mxu0
      %v1201 = vpop.f32.mrb[0].mxu0
      %v1202 = vadd.f32 0.0, %v1201
      %v1203 = vpop.f32.mrb[0].mxu0
      %1204 = vmatprep.mubr.bf16.mxu0 0
      %1205 = vmatmul.mubr.bf16.gmra.mrb[0].mxu0 %v1148
      %v1206 = vpop.f32.mrb[0].mxu0
      %v1207 = vadd.f32 0.0, %v1206
      %v1208 = vpop.f32.mrb[0].mxu0
      %v1209 = vpop.f32.mrb[0].mxu0
      %v1210 = vadd.f32 0.0, %v1209
      %v1211 = vpop.f32.mrb[0].mxu0
      %1212 = vmatprep.mubr.bf16.mxu0 0
      %1213 = vmatmul.mubr.bf16.gmra.mrb[0].mxu0 %v1151
      %v1214 = vpop.f32.mrb[0].mxu0
      %v1215 = vadd.f32 0.0, %v1214
      %v1216 = vpop.f32.mrb[0].mxu0
      %v1217 = vpop.f32.mrb[0].mxu0
      %v1218 = vadd.f32 0.0, %v1217
      %v1219 = vpop.f32.mrb[0].mxu0
      %1220 = vdwg.mxu0
      %v1221 = vadd.f32 %v991, %v1191
      %v1222 = vadd.f32 %v994, %v1194
      %v1223 = vadd.f32 %v999, %v1199
      %v1224 = vadd.f32 %v1002, %v1202
      %v1225 = vadd.f32 %v1007, %v1207
      %v1226 = vadd.f32 %v1010, %v1210
      %v1227 = vadd.f32 %v1015, %v1215
      %v1228 = vadd.f32 %v1018, %v1218
      %v1229 = vld [vmem:[#allocation2 + $0x20] sm:$0xf]
      %v1230 = vsel %vm759, %v728, 0
      %v1231 = vsel %vm760, %v729, 0
      %v1232 = vsel %vm761, %v730, 0
      %v1233 = vsel %vm762, %v731, 0
      %v1234 = vsel %vm763, %v732, 0
      %v1235 = vsel %vm764, %v733, 0
      %v1236 = vsel %vm765, %v734, 0
      %v1237 = vsel %vm766, %v1229, 0
      %s1238 = scalar_lea.vmem %s5, 6
      %v1239 = vld [vmem:[%s1238] sm:$0x3]
      %v1248 = vunpack.c.l.b16 %v1230
      %v1249 = vunpack.c.l.b16 %v1231
      %v1250 = vunpack.c.l.b16 %v1232
      %v1251 = vunpack.c.l.b16 %v1233
      %v1252 = vunpack.c.l.b16 %v1234
      %v1253 = vunpack.c.l.b16 %v1235
      %v1254 = vunpack.c.l.b16 %v1236
      %v1255 = vunpack.c.l.b16 %v1237
      %v1256 = vpack.c.b16 %v1249, %v1248
      %v1257 = vpack.c.b16 %v1251, %v1250
      %v1258 = vpack.c.b16 %v1253, %v1252
      %v1259 = vpack.c.b16 %v1255, %v1254
      %v1261 = vsel %vm839, %v1256, 0
      %v1264 = vsel %vm839, %v1257, 0
      %v1267 = vsel %vm839, %v1258, 0
      %v1270 = vsel %vm839, %v1259, 0
      %v1273 = vsel %vm852, %v1239, 0
      %1275 = vmatprep.subr.bf16.mxu0 0
      %1276 = vmatpush1.bf16.msra.mxu0 %v1273
      %1277 = vmatprep.subr.bf16.mxu0 0
      %1278 = vmatpush1.bf16.msra.mxu0 0
      %1279 = vmatprep.subr.bf16.mxu0 0
      %1280 = vmatpush1.bf16.msra.mxu0 0
      %1281 = vmatprep.subr.bf16.mxu0 0
      %1282 = vmatpush1.bf16.msra.mxu0 0
      %1283 = vmatprep.subr.bf16.mxu0 0
      %1284 = vmatpush1.bf16.msra.mxu0 0
      %1285 = vmatprep.subr.bf16.mxu0 0
      %1286 = vmatpush1.bf16.msra.mxu0 0
      %1287 = vmatprep.subr.bf16.mxu0 0
      %1288 = vmatpush1.bf16.msra.mxu0 0
      %1289 = vmatprep.subr.bf16.mxu0 0
      %1290 = vmatpush1.bf16.msra.mxu0 0
      %1291 = vmatprep.subr.bf16.mxu0 0
      %1292 = vmatpush1.bf16.msra.mxu0 0
      %1293 = vmatprep.subr.bf16.mxu0 0
      %1294 = vmatpush1.bf16.msra.mxu0 0
      %1295 = vmatprep.subr.bf16.mxu0 0
      %1296 = vmatpush1.bf16.msra.mxu0 0
      %1297 = vmatprep.subr.bf16.mxu0 0
      %1298 = vmatpush1.bf16.msra.mxu0 0
      %1299 = vmatprep.subr.bf16.mxu0 0
      %1300 = vmatpush1.bf16.msra.mxu0 0
      %1301 = vmatprep.subr.bf16.mxu0 0
      %1302 = vmatpush1.bf16.msra.mxu0 0
      %1303 = vmatprep.subr.bf16.mxu0 0
      %1304 = vmatpush1.bf16.msra.mxu0 0
      %1305 = vmatprep.subr.bf16.mxu0 0
      %1306 = vmatpush1.bf16.msra.mxu0 0
      %1307 = vmatprep.mubr.bf16.mxu0 0
      %1308 = vmatmul.mubr.bf16.gmra.mrb[0].mxu0 %v1261
      %v1309 = vpop.f32.mrb[0].mxu0
      %v1310 = vadd.f32 0.0, %v1309
      %v1311 = vpop.f32.mrb[0].mxu0
      %v1312 = vpop.f32.mrb[0].mxu0
      %v1313 = vadd.f32 0.0, %v1312
      %v1314 = vpop.f32.mrb[0].mxu0
      %1315 = vmatprep.mubr.bf16.mxu0 0
      %1316 = vmatmul.mubr.bf16.gmra.mrb[0].mxu0 %v1264
      %v1317 = vpop.f32.mrb[0].mxu0
      %v1318 = vadd.f32 0.0, %v1317
      %v1319 = vpop.f32.mrb[0].mxu0
      %v1320 = vpop.f32.mrb[0].mxu0
      %v1321 = vadd.f32 0.0, %v1320
      %v1322 = vpop.f32.mrb[0].mxu0
      %1323 = vmatprep.mubr.bf16.mxu0 0
      %1324 = vmatmul.mubr.bf16.gmra.mrb[0].mxu0 %v1267
      %v1325 = vpop.f32.mrb[0].mxu0
      %v1326 = vadd.f32 0.0, %v1325
      %v1327 = vpop.f32.mrb[0].mxu0
      %v1328 = vpop.f32.mrb[0].mxu0
      %v1329 = vadd.f32 0.0, %v1328
      %v1330 = vpop.f32.mrb[0].mxu0
      %1331 = vmatprep.mubr.bf16.mxu0 0
      %1332 = vmatmul.mubr.bf16.gmra.mrb[0].mxu0 %v1270
      %v1333 = vpop.f32.mrb[0].mxu0
      %v1334 = vadd.f32 0.0, %v1333
      %v1335 = vpop.f32.mrb[0].mxu0
      %v1336 = vpop.f32.mrb[0].mxu0
      %v1337 = vadd.f32 0.0, %v1336
      %v1338 = vpop.f32.mrb[0].mxu0
      %1339 = vdwg.mxu0
      %v1340 = vadd.f32 %v1221, %v1310
      %v1341 = vadd.f32 %v1222, %v1313
      %v1342 = vadd.f32 %v1223, %v1318
      %v1343 = vadd.f32 %v1224, %v1321
      %v1344 = vadd.f32 %v1225, %v1326
      %v1345 = vadd.f32 %v1226, %v1329
      %v1346 = vadd.f32 %v1227, %v1334
      %v1347 = vadd.f32 %v1228, %v1337
      %v1348 = vld [vmem:[#allocation2 + $0x4] sm:$0xf]
      %v1349 = vld [vmem:[#allocation2 + $0x8] sm:$0xf]
      %v1350 = vld [vmem:[#allocation2 + $0xc] sm:$0xf]
      %v1351 = vld [vmem:[#allocation2 + $0x10] sm:$0xf]
      %v1352 = vld [vmem:[#allocation2 + $0x14] sm:$0xf]
      %v1353 = vld [vmem:[#allocation2 + $0x18] sm:$0xf]
      %v1354 = vld [vmem:[#allocation2 + $0x1c] sm:$0xf]
      %v1355 = vld [vmem:[#allocation2 + $0x20] sm:$0xf]
      %v1356 = vld [vmem:[#allocation2 + $0x24] sm:$0x1]
      %s1357 = scalar_lea.vmem %s5, 8
      %v1358 = vld [vmem:[%s1357] sm:$0x3]
      %v1368 = vunpack.c.l.b16 %v1348
      %v1369 = vunpack.c.l.b16 %v1349
      %v1370 = vunpack.c.l.b16 %v1350
      %v1371 = vunpack.c.l.b16 %v1351
      %v1372 = vunpack.c.l.b16 %v1352
      %v1373 = vunpack.c.l.b16 %v1353
      %v1374 = vunpack.c.l.b16 %v1354
      %v1375 = vunpack.c.l.b16 %v1355
      %v1376 = vunpack.c.l.b16 %v1356
      %v1377 = vpack.c.b16 %v1369, %v1368
      %v1378 = vpack.c.b16 %v1371, %v1370
      %v1379 = vpack.c.b16 %v1373, %v1372
      %v1380 = vpack.c.b16 %v1375, %v1374
      %v1381 = vpack.c.b16 %v1376, %v1376
      %v1383 = vshrl.u32 %v1377, 16
      %v1385 = vshll.u32 %v1377, 16
      %v1387 = vrot.slane %v1385, 1
      %v1388 = vor.u32 %v1383, %v1387
      %v1390 = vshll.u32 %v1378, 16
      %v1392 = vrot.slane %v1390, 1
      %v1393 = vsel %vm802, %v1388, %v1392
      %v1394 = vshrl.u32 %v1378, 16
      %v1396 = vor.u32 %v1394, %v1392
      %v1398 = vshll.u32 %v1379, 16
      %v1400 = vrot.slane %v1398, 1
      %v1401 = vsel %vm802, %v1396, %v1400
      %v1402 = vshrl.u32 %v1379, 16
      %v1404 = vor.u32 %v1402, %v1400
      %v1406 = vshll.u32 %v1380, 16
      %v1408 = vrot.slane %v1406, 1
      %v1409 = vsel %vm802, %v1404, %v1408
      %v1410 = vshrl.u32 %v1380, 16
      %v1412 = vor.u32 %v1410, %v1408
      %v1414 = vshll.u32 %v1381, 16
      %v1416 = vrot.slane %v1414, 1
      %v1417 = vsel %vm802, %v1412, %v1416
      %v1419 = vsel %vm839, %v1393, 0
      %v1422 = vsel %vm839, %v1401, 0
      %v1425 = vsel %vm839, %v1409, 0
      %v1428 = vsel %vm839, %v1417, 0
      %v1431 = vsel %vm852, %v1358, 0
      %1433 = vmatprep.subr.bf16.mxu0 0
      %1434 = vmatpush1.bf16.msra.mxu0 %v1431
      %1435 = vmatprep.subr.bf16.mxu0 0
      %1436 = vmatpush1.bf16.msra.mxu0 0
      %1437 = vmatprep.subr.bf16.mxu0 0
      %1438 = vmatpush1.bf16.msra.mxu0 0
      %1439 = vmatprep.subr.bf16.mxu0 0
      %1440 = vmatpush1.bf16.msra.mxu0 0
      %1441 = vmatprep.subr.bf16.mxu0 0
      %1442 = vmatpush1.bf16.msra.mxu0 0
      %1443 = vmatprep.subr.bf16.mxu0 0
      %1444 = vmatpush1.bf16.msra.mxu0 0
      %1445 = vmatprep.subr.bf16.mxu0 0
      %1446 = vmatpush1.bf16.msra.mxu0 0
      %1447 = vmatprep.subr.bf16.mxu0 0
      %1448 = vmatpush1.bf16.msra.mxu0 0
      %1449 = vmatprep.subr.bf16.mxu0 0
      %1450 = vmatpush1.bf16.msra.mxu0 0
      %1451 = vmatprep.subr.bf16.mxu0 0
      %1452 = vmatpush1.bf16.msra.mxu0 0
      %1453 = vmatprep.subr.bf16.mxu0 0
      %1454 = vmatpush1.bf16.msra.mxu0 0
      %1455 = vmatprep.subr.bf16.mxu0 0
      %1456 = vmatpush1.bf16.msra.mxu0 0
      %1457 = vmatprep.subr.bf16.mxu0 0
      %1458 = vmatpush1.bf16.msra.mxu0 0
      %1459 = vmatprep.subr.bf16.mxu0 0
      %1460 = vmatpush1.bf16.msra.mxu0 0
      %1461 = vmatprep.subr.bf16.mxu0 0
      %1462 = vmatpush1.bf16.msra.mxu0 0
      %1463 = vmatprep.subr.bf16.mxu0 0
      %1464 = vmatpush1.bf16.msra.mxu0 0
      %1465 = vmatprep.mubr.bf16.mxu0 0
      %1466 = vmatmul.mubr.bf16.gmra.mrb[0].mxu0 %v1419
      %v1467 = vpop.f32.mrb[0].mxu0
      %v1468 = vadd.f32 0.0, %v1467
      %v1469 = vpop.f32.mrb[0].mxu0
      %v1470 = vpop.f32.mrb[0].mxu0
      %v1471 = vadd.f32 0.0, %v1470
      %v1472 = vpop.f32.mrb[0].mxu0
      %1473 = vmatprep.mubr.bf16.mxu0 0
      %1474 = vmatmul.mubr.bf16.gmra.mrb[0].mxu0 %v1422
      %v1475 = vpop.f32.mrb[0].mxu0
      %v1476 = vadd.f32 0.0, %v1475
      %v1477 = vpop.f32.mrb[0].mxu0
      %v1478 = vpop.f32.mrb[0].mxu0
      %v1479 = vadd.f32 0.0, %v1478
      %v1480 = vpop.f32.mrb[0].mxu0
      %1481 = vmatprep.mubr.bf16.mxu0 0
      %1482 = vmatmul.mubr.bf16.gmra.mrb[0].mxu0 %v1425
      %v1483 = vpop.f32.mrb[0].mxu0
      %v1484 = vadd.f32 0.0, %v1483
      %v1485 = vpop.f32.mrb[0].mxu0
      %v1486 = vpop.f32.mrb[0].mxu0
      %v1487 = vadd.f32 0.0, %v1486
      %v1488 = vpop.f32.mrb[0].mxu0
      %1489 = vmatprep.mubr.bf16.mxu0 0
      %1490 = vmatmul.mubr.bf16.gmra.mrb[0].mxu0 %v1428
      %v1491 = vpop.f32.mrb[0].mxu0
      %v1492 = vadd.f32 0.0, %v1491
      %v1493 = vpop.f32.mrb[0].mxu0
      %v1494 = vpop.f32.mrb[0].mxu0
      %v1495 = vadd.f32 0.0, %v1494
      %v1496 = vpop.f32.mrb[0].mxu0
      %1497 = vdwg.mxu0
      %v1498 = vadd.f32 %v1340, %v1468
      %v1499 = vadd.f32 %v1341, %v1471
      %v1500 = vadd.f32 %v1342, %v1476
      %v1501 = vadd.f32 %v1343, %v1479
      %v1502 = vadd.f32 %v1344, %v1484
      %v1503 = vadd.f32 %v1345, %v1487
      %v1504 = vadd.f32 %v1346, %v1492
      %v1505 = vadd.f32 %v1347, %v1495
      %v1506 = vld [vmem:[#allocation2 + $0x4] sm:$0xe]
      %v1507 = vsel %vm1088, %v1506, 0
      %v1508 = vsel %vm1089, %v1349, 0
      %v1509 = vsel %vm1090, %v1350, 0
      %v1510 = vsel %vm1091, %v1351, 0
      %v1511 = vsel %vm1092, %v1352, 0
      %v1512 = vsel %vm1093, %v1353, 0
      %v1513 = vsel %vm1094, %v1354, 0
      %v1514 = vsel %vm1095, %v1355, 0
      %v1515 = vsel %vm1096, %v1356, 0
      %s1516 = scalar_lea.vmem %s5, 10
      %v1517 = vld [vmem:[%s1516] sm:$0x3]
      %v1527 = vunpack.c.l.b16 %v1507
      %v1528 = vunpack.c.l.b16 %v1508
      %v1529 = vunpack.c.l.b16 %v1509
      %v1530 = vunpack.c.l.b16 %v1510
      %v1531 = vunpack.c.l.b16 %v1511
      %v1532 = vunpack.c.l.b16 %v1512
      %v1533 = vunpack.c.l.b16 %v1513
      %v1534 = vunpack.c.l.b16 %v1514
      %v1535 = vunpack.c.l.b16 %v1515
      %v1536 = vpack.c.b16 %v1528, %v1527
      %v1537 = vpack.c.b16 %v1530, %v1529
      %v1538 = vpack.c.b16 %v1532, %v1531
      %v1539 = vpack.c.b16 %v1534, %v1533
      %v1540 = vpack.c.b16 %v1535, %v1535
      %v1541 = vrot.slane %v1536, 1
      %v1542 = vrot.slane %v1537, 1
      %v1543 = vsel %vm1131, %v1541, %v1542
      %v1544 = vrot.slane %v1538, 1
      %v1545 = vsel %vm1131, %v1542, %v1544
      %v1546 = vrot.slane %v1539, 1
      %v1547 = vsel %vm1131, %v1544, %v1546
      %v1548 = vrot.slane %v1540, 1
      %v1549 = vsel %vm1131, %v1546, %v1548
      %v1551 = vsel %vm839, %v1543, 0
      %v1554 = vsel %vm839, %v1545, 0
      %v1557 = vsel %vm839, %v1547, 0
      %v1560 = vsel %vm839, %v1549, 0
      %v1563 = vsel %vm852, %v1517, 0
      %1565 = vmatprep.subr.bf16.mxu0 0
      %1566 = vmatpush1.bf16.msra.mxu0 %v1563
      %1567 = vmatprep.subr.bf16.mxu0 0
      %1568 = vmatpush1.bf16.msra.mxu0 0
      %1569 = vmatprep.subr.bf16.mxu0 0
      %1570 = vmatpush1.bf16.msra.mxu0 0
      %1571 = vmatprep.subr.bf16.mxu0 0
      %1572 = vmatpush1.bf16.msra.mxu0 0
      %1573 = vmatprep.subr.bf16.mxu0 0
      %1574 = vmatpush1.bf16.msra.mxu0 0
      %1575 = vmatprep.subr.bf16.mxu0 0
      %1576 = vmatpush1.bf16.msra.mxu0 0
      %1577 = vmatprep.subr.bf16.mxu0 0
      %1578 = vmatpush1.bf16.msra.mxu0 0
      %1579 = vmatprep.subr.bf16.mxu0 0
      %1580 = vmatpush1.bf16.msra.mxu0 0
      %1581 = vmatprep.subr.bf16.mxu0 0
      %1582 = vmatpush1.bf16.msra.mxu0 0
      %1583 = vmatprep.subr.bf16.mxu0 0
      %1584 = vmatpush1.bf16.msra.mxu0 0
      %1585 = vmatprep.subr.bf16.mxu0 0
      %1586 = vmatpush1.bf16.msra.mxu0 0
      %1587 = vmatprep.subr.bf16.mxu0 0
      %1588 = vmatpush1.bf16.msra.mxu0 0
      %1589 = vmatprep.subr.bf16.mxu0 0
      %1590 = vmatpush1.bf16.msra.mxu0 0
      %1591 = vmatprep.subr.bf16.mxu0 0
      %1592 = vmatpush1.bf16.msra.mxu0 0
      %1593 = vmatprep.subr.bf16.mxu0 0
      %1594 = vmatpush1.bf16.msra.mxu0 0
      %1595 = vmatprep.subr.bf16.mxu0 0
      %1596 = vmatpush1.bf16.msra.mxu0 0
      %1597 = vmatprep.mubr.bf16.mxu0 0
      %1598 = vmatmul.mubr.bf16.gmra.mrb[0].mxu0 %v1551
      %v1599 = vpop.f32.mrb[0].mxu0
      %v1600 = vadd.f32 0.0, %v1599
      %v1601 = vpop.f32.mrb[0].mxu0
      %v1602 = vpop.f32.mrb[0].mxu0
      %v1603 = vadd.f32 0.0, %v1602
      %v1604 = vpop.f32.mrb[0].mxu0
      %1605 = vmatprep.mubr.bf16.mxu0 0
      %1606 = vmatmul.mubr.bf16.gmra.mrb[0].mxu0 %v1554
      %v1607 = vpop.f32.mrb[0].mxu0
      %v1608 = vadd.f32 0.0, %v1607
      %v1609 = vpop.f32.mrb[0].mxu0
      %v1610 = vpop.f32.mrb[0].mxu0
      %v1611 = vadd.f32 0.0, %v1610
      %v1612 = vpop.f32.mrb[0].mxu0
      %1613 = vmatprep.mubr.bf16.mxu0 0
      %1614 = vmatmul.mubr.bf16.gmra.mrb[0].mxu0 %v1557
      %v1615 = vpop.f32.mrb[0].mxu0
      %v1616 = vadd.f32 0.0, %v1615
      %v1617 = vpop.f32.mrb[0].mxu0
      %v1618 = vpop.f32.mrb[0].mxu0
      %v1619 = vadd.f32 0.0, %v1618
      %v1620 = vpop.f32.mrb[0].mxu0
      %1621 = vmatprep.mubr.bf16.mxu0 0
      %1622 = vmatmul.mubr.bf16.gmra.mrb[0].mxu0 %v1560
      %v1623 = vpop.f32.mrb[0].mxu0
      %v1624 = vadd.f32 0.0, %v1623
      %v1625 = vpop.f32.mrb[0].mxu0
      %v1626 = vpop.f32.mrb[0].mxu0
      %v1627 = vadd.f32 0.0, %v1626
      %v1628 = vpop.f32.mrb[0].mxu0
      %1629 = vdwg.mxu0
      %v1630 = vadd.f32 %v1498, %v1600
      %v1631 = vadd.f32 %v1499, %v1603
      %v1632 = vadd.f32 %v1500, %v1608
      %v1633 = vadd.f32 %v1501, %v1611
      %v1634 = vadd.f32 %v1502, %v1616
      %v1635 = vadd.f32 %v1503, %v1619
      %v1636 = vadd.f32 %v1504, %v1624
      %v1637 = vadd.f32 %v1505, %v1627
      %v1638 = vld [vmem:[#allocation2 + $0x24] sm:$0xf]
      %v1639 = vsel %vm759, %v1349, 0
      %v1640 = vsel %vm760, %v1350, 0
      %v1641 = vsel %vm761, %v1351, 0
      %v1642 = vsel %vm762, %v1352, 0
      %v1643 = vsel %vm763, %v1353, 0
      %v1644 = vsel %vm764, %v1354, 0
      %v1645 = vsel %vm765, %v1355, 0
      %v1646 = vsel %vm766, %v1638, 0
      %s1647 = scalar_lea.vmem %s5, 12
      %v1648 = vld [vmem:[%s1647] sm:$0x3]
      %v1657 = vunpack.c.l.b16 %v1639
      %v1658 = vunpack.c.l.b16 %v1640
      %v1659 = vunpack.c.l.b16 %v1641
      %v1660 = vunpack.c.l.b16 %v1642
      %v1661 = vunpack.c.l.b16 %v1643
      %v1662 = vunpack.c.l.b16 %v1644
      %v1663 = vunpack.c.l.b16 %v1645
      %v1664 = vunpack.c.l.b16 %v1646
      %v1665 = vpack.c.b16 %v1658, %v1657
      %v1666 = vpack.c.b16 %v1660, %v1659
      %v1667 = vpack.c.b16 %v1662, %v1661
      %v1668 = vpack.c.b16 %v1664, %v1663
      %v1670 = vsel %vm839, %v1665, 0
      %v1673 = vsel %vm839, %v1666, 0
      %v1676 = vsel %vm839, %v1667, 0
      %v1679 = vsel %vm839, %v1668, 0
      %v1682 = vsel %vm852, %v1648, 0
      %1684 = vmatprep.subr.bf16.mxu0 0
      %1685 = vmatpush1.bf16.msra.mxu0 %v1682
      %1686 = vmatprep.subr.bf16.mxu0 0
      %1687 = vmatpush1.bf16.msra.mxu0 0
      %1688 = vmatprep.subr.bf16.mxu0 0
      %1689 = vmatpush1.bf16.msra.mxu0 0
      %1690 = vmatprep.subr.bf16.mxu0 0
      %1691 = vmatpush1.bf16.msra.mxu0 0
      %1692 = vmatprep.subr.bf16.mxu0 0
      %1693 = vmatpush1.bf16.msra.mxu0 0
      %1694 = vmatprep.subr.bf16.mxu0 0
      %1695 = vmatpush1.bf16.msra.mxu0 0
      %1696 = vmatprep.subr.bf16.mxu0 0
      %1697 = vmatpush1.bf16.msra.mxu0 0
      %1698 = vmatprep.subr.bf16.mxu0 0
      %1699 = vmatpush1.bf16.msra.mxu0 0
      %1700 = vmatprep.subr.bf16.mxu0 0
      %1701 = vmatpush1.bf16.msra.mxu0 0
      %1702 = vmatprep.subr.bf16.mxu0 0
      %1703 = vmatpush1.bf16.msra.mxu0 0
      %1704 = vmatprep.subr.bf16.mxu0 0
      %1705 = vmatpush1.bf16.msra.mxu0 0
      %1706 = vmatprep.subr.bf16.mxu0 0
      %1707 = vmatpush1.bf16.msra.mxu0 0
      %1708 = vmatprep.subr.bf16.mxu0 0
      %1709 = vmatpush1.bf16.msra.mxu0 0
      %1710 = vmatprep.subr.bf16.mxu0 0
      %1711 = vmatpush1.bf16.msra.mxu0 0
      %1712 = vmatprep.subr.bf16.mxu0 0
      %1713 = vmatpush1.bf16.msra.mxu0 0
      %1714 = vmatprep.subr.bf16.mxu0 0
      %1715 = vmatpush1.bf16.msra.mxu0 0
      %1716 = vmatprep.mubr.bf16.mxu0 0
      %1717 = vmatmul.mubr.bf16.gmra.mrb[0].mxu0 %v1670
      %v1718 = vpop.f32.mrb[0].mxu0
      %v1719 = vadd.f32 0.0, %v1718
      %v1720 = vpop.f32.mrb[0].mxu0
      %v1721 = vpop.f32.mrb[0].mxu0
      %v1722 = vadd.f32 0.0, %v1721
      %v1723 = vpop.f32.mrb[0].mxu0
      %1724 = vmatprep.mubr.bf16.mxu0 0
      %1725 = vmatmul.mubr.bf16.gmra.mrb[0].mxu0 %v1673
      %v1726 = vpop.f32.mrb[0].mxu0
      %v1727 = vadd.f32 0.0, %v1726
      %v1728 = vpop.f32.mrb[0].mxu0
      %v1729 = vpop.f32.mrb[0].mxu0
      %v1730 = vadd.f32 0.0, %v1729
      %v1731 = vpop.f32.mrb[0].mxu0
      %1732 = vmatprep.mubr.bf16.mxu0 0
      %1733 = vmatmul.mubr.bf16.gmra.mrb[0].mxu0 %v1676
      %v1734 = vpop.f32.mrb[0].mxu0
      %v1735 = vadd.f32 0.0, %v1734
      %v1736 = vpop.f32.mrb[0].mxu0
      %v1737 = vpop.f32.mrb[0].mxu0
      %v1738 = vadd.f32 0.0, %v1737
      %v1739 = vpop.f32.mrb[0].mxu0
      %1740 = vmatprep.mubr.bf16.mxu0 0
      %1741 = vmatmul.mubr.bf16.gmra.mrb[0].mxu0 %v1679
      %v1742 = vpop.f32.mrb[0].mxu0
      %v1743 = vadd.f32 0.0, %v1742
      %v1744 = vpop.f32.mrb[0].mxu0
      %v1745 = vpop.f32.mrb[0].mxu0
      %v1746 = vadd.f32 0.0, %v1745
      %v1747 = vpop.f32.mrb[0].mxu0
      %1748 = vdwg.mxu0
      %v1749 = vadd.f32 %v1630, %v1719
      %v1750 = vadd.f32 %v1631, %v1722
      %v1751 = vadd.f32 %v1632, %v1727
      %v1752 = vadd.f32 %v1633, %v1730
      %v1753 = vadd.f32 %v1634, %v1735
      %v1754 = vadd.f32 %v1635, %v1738
      %v1755 = vadd.f32 %v1636, %v1743
      %v1756 = vadd.f32 %v1637, %v1746
      %v1757 = vld [vmem:[#allocation2 + $0x8] sm:$0xf]
      %v1758 = vld [vmem:[#allocation2 + $0xc] sm:$0xf]
      %v1759 = vld [vmem:[#allocation2 + $0x10] sm:$0xf]
      %v1760 = vld [vmem:[#allocation2 + $0x14] sm:$0xf]
      %v1761 = vld [vmem:[#allocation2 + $0x18] sm:$0xf]
      %v1762 = vld [vmem:[#allocation2 + $0x1c] sm:$0xf]
      %v1763 = vld [vmem:[#allocation2 + $0x20] sm:$0xf]
      %v1764 = vld [vmem:[#allocation2 + $0x24] sm:$0xf]
      %v1765 = vld [vmem:[#allocation2 + $0x28] sm:$0x1]
      %s1766 = scalar_lea.vmem %s5, 14
      %v1767 = vld [vmem:[%s1766] sm:$0x3]
      %v1777 = vunpack.c.l.b16 %v1757
      %v1778 = vunpack.c.l.b16 %v1758
      %v1779 = vunpack.c.l.b16 %v1759
      %v1780 = vunpack.c.l.b16 %v1760
      %v1781 = vunpack.c.l.b16 %v1761
      %v1782 = vunpack.c.l.b16 %v1762
      %v1783 = vunpack.c.l.b16 %v1763
      %v1784 = vunpack.c.l.b16 %v1764
      %v1785 = vunpack.c.l.b16 %v1765
      %v1786 = vpack.c.b16 %v1778, %v1777
      %v1787 = vpack.c.b16 %v1780, %v1779
      %v1788 = vpack.c.b16 %v1782, %v1781
      %v1789 = vpack.c.b16 %v1784, %v1783
      %v1790 = vpack.c.b16 %v1785, %v1785
      %v1792 = vshrl.u32 %v1786, 16
      %v1794 = vshll.u32 %v1786, 16
      %v1796 = vrot.slane %v1794, 1
      %v1797 = vor.u32 %v1792, %v1796
      %v1799 = vshll.u32 %v1787, 16
      %v1801 = vrot.slane %v1799, 1
      %v1802 = vsel %vm802, %v1797, %v1801
      %v1803 = vshrl.u32 %v1787, 16
      %v1805 = vor.u32 %v1803, %v1801
      %v1807 = vshll.u32 %v1788, 16
      %v1809 = vrot.slane %v1807, 1
      %v1810 = vsel %vm802, %v1805, %v1809
      %v1811 = vshrl.u32 %v1788, 16
      %v1813 = vor.u32 %v1811, %v1809
      %v1815 = vshll.u32 %v1789, 16
      %v1817 = vrot.slane %v1815, 1
      %v1818 = vsel %vm802, %v1813, %v1817
      %v1819 = vshrl.u32 %v1789, 16
      %v1821 = vor.u32 %v1819, %v1817
      %v1823 = vshll.u32 %v1790, 16
      %v1825 = vrot.slane %v1823, 1
      %v1826 = vsel %vm802, %v1821, %v1825
      %v1828 = vsel %vm839, %v1802, 0
      %v1831 = vsel %vm839, %v1810, 0
      %v1834 = vsel %vm839, %v1818, 0
      %v1837 = vsel %vm839, %v1826, 0
      %v1840 = vsel %vm852, %v1767, 0
      %1842 = vmatprep.subr.bf16.mxu0 0
      %1843 = vmatpush1.bf16.msra.mxu0 %v1840
      %1844 = vmatprep.subr.bf16.mxu0 0
      %1845 = vmatpush1.bf16.msra.mxu0 0
      %1846 = vmatprep.subr.bf16.mxu0 0
      %1847 = vmatpush1.bf16.msra.mxu0 0
      %1848 = vmatprep.subr.bf16.mxu0 0
      %1849 = vmatpush1.bf16.msra.mxu0 0
      %1850 = vmatprep.subr.bf16.mxu0 0
      %1851 = vmatpush1.bf16.msra.mxu0 0
      %1852 = vmatprep.subr.bf16.mxu0 0
      %1853 = vmatpush1.bf16.msra.mxu0 0
      %1854 = vmatprep.subr.bf16.mxu0 0
      %1855 = vmatpush1.bf16.msra.mxu0 0
      %1856 = vmatprep.subr.bf16.mxu0 0
      %1857 = vmatpush1.bf16.msra.mxu0 0
      %1858 = vmatprep.subr.bf16.mxu0 0
      %1859 = vmatpush1.bf16.msra.mxu0 0
      %1860 = vmatprep.subr.bf16.mxu0 0
      %1861 = vmatpush1.bf16.msra.mxu0 0
      %1862 = vmatprep.subr.bf16.mxu0 0
      %1863 = vmatpush1.bf16.msra.mxu0 0
      %1864 = vmatprep.subr.bf16.mxu0 0
      %1865 = vmatpush1.bf16.msra.mxu0 0
      %1866 = vmatprep.subr.bf16.mxu0 0
      %1867 = vmatpush1.bf16.msra.mxu0 0
      %1868 = vmatprep.subr.bf16.mxu0 0
      %1869 = vmatpush1.bf16.msra.mxu0 0
      %1870 = vmatprep.subr.bf16.mxu0 0
      %1871 = vmatpush1.bf16.msra.mxu0 0
      %1872 = vmatprep.subr.bf16.mxu0 0
      %1873 = vmatpush1.bf16.msra.mxu0 0
      %1874 = vmatprep.mubr.bf16.mxu0 0
      %1875 = vmatmul.mubr.bf16.gmra.mrb[0].mxu0 %v1828
      %v1876 = vpop.f32.mrb[0].mxu0
      %v1877 = vadd.f32 0.0, %v1876
      %v1878 = vpop.f32.mrb[0].mxu0
      %v1879 = vpop.f32.mrb[0].mxu0
      %v1880 = vadd.f32 0.0, %v1879
      %v1881 = vpop.f32.mrb[0].mxu0
      %1882 = vmatprep.mubr.bf16.mxu0 0
      %1883 = vmatmul.mubr.bf16.gmra.mrb[0].mxu0 %v1831
      %v1884 = vpop.f32.mrb[0].mxu0
      %v1885 = vadd.f32 0.0, %v1884
      %v1886 = vpop.f32.mrb[0].mxu0
      %v1887 = vpop.f32.mrb[0].mxu0
      %v1888 = vadd.f32 0.0, %v1887
      %v1889 = vpop.f32.mrb[0].mxu0
      %1890 = vmatprep.mubr.bf16.mxu0 0
      %1891 = vmatmul.mubr.bf16.gmra.mrb[0].mxu0 %v1834
      %v1892 = vpop.f32.mrb[0].mxu0
      %v1893 = vadd.f32 0.0, %v1892
      %v1894 = vpop.f32.mrb[0].mxu0
      %v1895 = vpop.f32.mrb[0].mxu0
      %v1896 = vadd.f32 0.0, %v1895
      %v1897 = vpop.f32.mrb[0].mxu0
      %1898 = vmatprep.mubr.bf16.mxu0 0
      %1899 = vmatmul.mubr.bf16.gmra.mrb[0].mxu0 %v1837
      %v1900 = vpop.f32.mrb[0].mxu0
      %v1901 = vadd.f32 0.0, %v1900
      %v1902 = vpop.f32.mrb[0].mxu0
      %v1903 = vpop.f32.mrb[0].mxu0
      %v1904 = vadd.f32 0.0, %v1903
      %v1905 = vpop.f32.mrb[0].mxu0
      %1906 = vdwg.mxu0
      %v1907 = vadd.f32 %v1749, %v1877
      %v1908 = vadd.f32 %v1750, %v1880
      %v1909 = vadd.f32 %v1751, %v1885
      %v1910 = vadd.f32 %v1752, %v1888
      %v1911 = vadd.f32 %v1753, %v1893
      %v1912 = vadd.f32 %v1754, %v1896
      %v1913 = vadd.f32 %v1755, %v1901
      %v1914 = vadd.f32 %v1756, %v1904
      %v1915 = vld [vmem:[#allocation2 + $0x8] sm:$0xe]
      %v1916 = vsel %vm1088, %v1915, 0
      %v1917 = vsel %vm1089, %v1758, 0
      %v1918 = vsel %vm1090, %v1759, 0
      %v1919 = vsel %vm1091, %v1760, 0
      %v1920 = vsel %vm1092, %v1761, 0
      %v1921 = vsel %vm1093, %v1762, 0
      %v1922 = vsel %vm1094, %v1763, 0
      %v1923 = vsel %vm1095, %v1764, 0
      %v1924 = vsel %vm1096, %v1765, 0
      %s1925 = scalar_lea.vmem %s5, 16
      %v1926 = vld [vmem:[%s1925] sm:$0x3]
      %v1936 = vunpack.c.l.b16 %v1916
      %v1937 = vunpack.c.l.b16 %v1917
      %v1938 = vunpack.c.l.b16 %v1918
      %v1939 = vunpack.c.l.b16 %v1919
      %v1940 = vunpack.c.l.b16 %v1920
      %v1941 = vunpack.c.l.b16 %v1921
      %v1942 = vunpack.c.l.b16 %v1922
      %v1943 = vunpack.c.l.b16 %v1923
      %v1944 = vunpack.c.l.b16 %v1924
      %v1945 = vpack.c.b16 %v1937, %v1936
      %v1946 = vpack.c.b16 %v1939, %v1938
      %v1947 = vpack.c.b16 %v1941, %v1940
      %v1948 = vpack.c.b16 %v1943, %v1942
      %v1949 = vpack.c.b16 %v1944, %v1944
      %v1950 = vrot.slane %v1945, 1
      %v1951 = vrot.slane %v1946, 1
      %v1952 = vsel %vm1131, %v1950, %v1951
      %v1953 = vrot.slane %v1947, 1
      %v1954 = vsel %vm1131, %v1951, %v1953
      %v1955 = vrot.slane %v1948, 1
      %v1956 = vsel %vm1131, %v1953, %v1955
      %v1957 = vrot.slane %v1949, 1
      %v1958 = vsel %vm1131, %v1955, %v1957
      %v1960 = vsel %vm839, %v1952, 0
      %v1963 = vsel %vm839, %v1954, 0
      %v1966 = vsel %vm839, %v1956, 0
      %v1969 = vsel %vm839, %v1958, 0
      %v1972 = vsel %vm852, %v1926, 0
      %1974 = vmatprep.subr.bf16.mxu0 0
      %1975 = vmatpush1.bf16.msra.mxu0 %v1972
      %1976 = vmatprep.subr.bf16.mxu0 0
      %1977 = vmatpush1.bf16.msra.mxu0 0
      %1978 = vmatprep.subr.bf16.mxu0 0
      %1979 = vmatpush1.bf16.msra.mxu0 0
      %1980 = vmatprep.subr.bf16.mxu0 0
      %1981 = vmatpush1.bf16.msra.mxu0 0
      %1982 = vmatprep.subr.bf16.mxu0 0
      %1983 = vmatpush1.bf16.msra.mxu0 0
      %1984 = vmatprep.subr.bf16.mxu0 0
      %1985 = vmatpush1.bf16.msra.mxu0 0
      %1986 = vmatprep.subr.bf16.mxu0 0
      %1987 = vmatpush1.bf16.msra.mxu0 0
      %1988 = vmatprep.subr.bf16.mxu0 0
      %1989 = vmatpush1.bf16.msra.mxu0 0
      %1990 = vmatprep.subr.bf16.mxu0 0
      %1991 = vmatpush1.bf16.msra.mxu0 0
      %1992 = vmatprep.subr.bf16.mxu0 0
      %1993 = vmatpush1.bf16.msra.mxu0 0
      %1994 = vmatprep.subr.bf16.mxu0 0
      %1995 = vmatpush1.bf16.msra.mxu0 0
      %1996 = vmatprep.subr.bf16.mxu0 0
      %1997 = vmatpush1.bf16.msra.mxu0 0
      %1998 = vmatprep.subr.bf16.mxu0 0
      %1999 = vmatpush1.bf16.msra.mxu0 0
      %2000 = vmatprep.subr.bf16.mxu0 0
      %2001 = vmatpush1.bf16.msra.mxu0 0
      %2002 = vmatprep.subr.bf16.mxu0 0
      %2003 = vmatpush1.bf16.msra.mxu0 0
      %2004 = vmatprep.subr.bf16.mxu0 0
      %2005 = vmatpush1.bf16.msra.mxu0 0
      %2006 = vmatprep.mubr.bf16.mxu0 0
      %2007 = vmatmul.mubr.bf16.gmra.mrb[0].mxu0 %v1960
      %v2008 = vpop.f32.mrb[0].mxu0
      %v2009 = vadd.f32 0.0, %v2008
      %v2010 = vpop.f32.mrb[0].mxu0
      %v2011 = vpop.f32.mrb[0].mxu0
      %v2012 = vadd.f32 0.0, %v2011
      %v2013 = vpop.f32.mrb[0].mxu0
      %2014 = vmatprep.mubr.bf16.mxu0 0
      %2015 = vmatmul.mubr.bf16.gmra.mrb[0].mxu0 %v1963
      %v2016 = vpop.f32.mrb[0].mxu0
      %v2017 = vadd.f32 0.0, %v2016
      %v2018 = vpop.f32.mrb[0].mxu0
      %v2019 = vpop.f32.mrb[0].mxu0
      %v2020 = vadd.f32 0.0, %v2019
      %v2021 = vpop.f32.mrb[0].mxu0
      %2022 = vmatprep.mubr.bf16.mxu0 0
      %2023 = vmatmul.mubr.bf16.gmra.mrb[0].mxu0 %v1966
      %v2024 = vpop.f32.mrb[0].mxu0
      %v2025 = vadd.f32 0.0, %v2024
      %v2026 = vpop.f32.mrb[0].mxu0
      %v2027 = vpop.f32.mrb[0].mxu0
      %v2028 = vadd.f32 0.0, %v2027
      %v2029 = vpop.f32.mrb[0].mxu0
      %2030 = vmatprep.mubr.bf16.mxu0 0
      %2031 = vmatmul.mubr.bf16.gmra.mrb[0].mxu0 %v1969
      %v2032 = vpop.f32.mrb[0].mxu0
      %v2033 = vadd.f32 0.0, %v2032
      %v2034 = vpop.f32.mrb[0].mxu0
      %v2035 = vpop.f32.mrb[0].mxu0
      %v2036 = vadd.f32 0.0, %v2035
      %v2037 = vpop.f32.mrb[0].mxu0
      %2038 = vdwg.mxu0
      %v2039 = vadd.f32 %v1907, %v2009
      %v2040 = vadd.f32 %v1908, %v2012
      %v2041 = vadd.f32 %v1909, %v2017
      %v2042 = vadd.f32 %v1910, %v2020
      %v2043 = vadd.f32 %v1911, %v2025
      %v2044 = vadd.f32 %v1912, %v2028
      %v2045 = vadd.f32 %v1913, %v2033
      %v2046 = vadd.f32 %v1914, %v2036
      %v2047 = vld [vmem:[%s6] sm:$0x1]
      %v2049 = vlaneseq
      %v2050 = vshrl.u32 %v2049, 7
      %v2051 = vsub.s32 0, %v2050
      %v2052 = vrot.slane %v2047, %v2051
      %v2054 = vadd.f32 %v2039, %v2052
      %v2055 = vadd.f32 %v2040, %v2052
      %v2056 = vadd.f32 %v2041, %v2052
      %v2057 = vadd.f32 %v2042, %v2052
      %v2058 = vadd.f32 %v2043, %v2052
      %v2059 = vadd.f32 %v2044, %v2052
      %v2060 = vadd.f32 %v2045, %v2052
      %v2061 = vadd.f32 %v2046, %v2052
      %v2062 = vmax.f32 %v2054, 0.0
      %v2063 = vmax.f32 %v2055, 0.0
      %v2064 = vmax.f32 %v2056, 0.0
      %v2065 = vmax.f32 %v2057, 0.0
      %v2066 = vmax.f32 %v2058, 0.0
      %v2067 = vmax.f32 %v2059, 0.0
      %v2068 = vmax.f32 %v2060, 0.0
      %v2069 = vmax.f32 %v2061, 0.0
      %v2070 = vpack.c.bf16 %v2063, %v2062
      %v2071 = vpack.c.bf16 %v2065, %v2064
      %v2072 = vpack.c.bf16 %v2067, %v2066
      %v2073 = vpack.c.bf16 %v2069, %v2068
      %v2074 = vld [vmem:[%s7] sm:$0x3]
      %v2075 = vld [vmem:[%s8] sm:$0x1]
      %v2077 = vlaneseq
      %v2078 = vshrl.u32 %v2077, 7
      %v2079 = vsub.s32 0, %v2078
      %v2080 = vrot.slane %v2075, %v2079
      %v2083 = vsel %vm839, %v2070, 0
      %v2086 = vsel %vm839, %v2071, 0
      %v2089 = vsel %vm839, %v2072, 0
      %v2092 = vsel %vm839, %v2073, 0
      %v2095 = vsel %vm852, %v2074, 0
      %2097 = vmatprep.subr.bf16.mxu0 0
      %2098 = vmatpush1.bf16.msra.mxu0 %v2095
      %2099 = vmatprep.subr.bf16.mxu0 0
      %2100 = vmatpush1.bf16.msra.mxu0 0
      %2101 = vmatprep.subr.bf16.mxu0 0
      %2102 = vmatpush1.bf16.msra.mxu0 0
      %2103 = vmatprep.subr.bf16.mxu0 0
      %2104 = vmatpush1.bf16.msra.mxu0 0
      %2105 = vmatprep.subr.bf16.mxu0 0
      %2106 = vmatpush1.bf16.msra.mxu0 0
      %2107 = vmatprep.subr.bf16.mxu0 0
      %2108 = vmatpush1.bf16.msra.mxu0 0
      %2109 = vmatprep.subr.bf16.mxu0 0
      %2110 = vmatpush1.bf16.msra.mxu0 0
      %2111 = vmatprep.subr.bf16.mxu0 0
      %2112 = vmatpush1.bf16.msra.mxu0 0
      %2113 = vmatprep.subr.bf16.mxu0 0
      %2114 = vmatpush1.bf16.msra.mxu0 0
      %2115 = vmatprep.subr.bf16.mxu0 0
      %2116 = vmatpush1.bf16.msra.mxu0 0
      %2117 = vmatprep.subr.bf16.mxu0 0
      %2118 = vmatpush1.bf16.msra.mxu0 0
      %2119 = vmatprep.subr.bf16.mxu0 0
      %2120 = vmatpush1.bf16.msra.mxu0 0
      %2121 = vmatprep.subr.bf16.mxu0 0
      %2122 = vmatpush1.bf16.msra.mxu0 0
      %2123 = vmatprep.subr.bf16.mxu0 0
      %2124 = vmatpush1.bf16.msra.mxu0 0
      %2125 = vmatprep.subr.bf16.mxu0 0
      %2126 = vmatpush1.bf16.msra.mxu0 0
      %2127 = vmatprep.subr.bf16.mxu0 0
      %2128 = vmatpush1.bf16.msra.mxu0 0
      %2129 = vmatprep.mubr.bf16.mxu0 0
      %2130 = vmatmul.mubr.bf16.gmra.mrb[0].mxu0 %v2083
      %v2131 = vpop.f32.mrb[0].mxu0
      %v2132 = vadd.f32 %v2080, %v2131
      %v2133 = vpop.f32.mrb[0].mxu0
      %v2134 = vpop.f32.mrb[0].mxu0
      %v2135 = vadd.f32 %v2080, %v2134
      %v2136 = vpop.f32.mrb[0].mxu0
      %2137 = vmatprep.mubr.bf16.mxu0 0
      %2138 = vmatmul.mubr.bf16.gmra.mrb[0].mxu0 %v2086
      %v2139 = vpop.f32.mrb[0].mxu0
      %v2140 = vadd.f32 %v2080, %v2139
      %v2141 = vpop.f32.mrb[0].mxu0
      %v2142 = vpop.f32.mrb[0].mxu0
      %v2143 = vadd.f32 %v2080, %v2142
      %v2144 = vpop.f32.mrb[0].mxu0
      %2145 = vmatprep.mubr.bf16.mxu0 0
      %2146 = vmatmul.mubr.bf16.gmra.mrb[0].mxu0 %v2089
      %v2147 = vpop.f32.mrb[0].mxu0
      %v2148 = vadd.f32 %v2080, %v2147
      %v2149 = vpop.f32.mrb[0].mxu0
      %v2150 = vpop.f32.mrb[0].mxu0
      %v2151 = vadd.f32 %v2080, %v2150
      %v2152 = vpop.f32.mrb[0].mxu0
      %2153 = vmatprep.mubr.bf16.mxu0 0
      %2154 = vmatmul.mubr.bf16.gmra.mrb[0].mxu0 %v2092
      %v2155 = vpop.f32.mrb[0].mxu0
      %v2156 = vadd.f32 %v2080, %v2155
      %v2157 = vpop.f32.mrb[0].mxu0
      %v2158 = vpop.f32.mrb[0].mxu0
      %v2159 = vadd.f32 %v2080, %v2158
      %v2160 = vpop.f32.mrb[0].mxu0
      %2161 = vdwg.mxu0
      %v2162 = vadd.f32 %v2132, %v336
      %v2163 = vadd.f32 %v2135, %v337
      %v2164 = vadd.f32 %v2140, %v338
      %v2165 = vadd.f32 %v2143, %v339
      %v2166 = vadd.f32 %v2148, %v340
      %v2167 = vadd.f32 %v2151, %v341
      %v2168 = vadd.f32 %v2156, %v342
      %v2169 = vadd.f32 %v2159, %v343
      %2170 = vst.msk [vmem:[%s332] sm:$0xff] %vm394, %v2162
      %2171 = vst.msk [vmem:[%s332 + $0x8] sm:$0xff] %vm394, %v2163
      %2172 = vst.msk [vmem:[%s332 + $0x10] sm:$0xff] %vm394, %v2164
      %2173 = vst.msk [vmem:[%s332 + $0x18] sm:$0xff] %vm394, %v2165
      %2174 = vst.msk [vmem:[%s332 + $0x20] sm:$0xff] %vm394, %v2166
      %2175 = vst.msk [vmem:[%s332 + $0x28] sm:$0xff] %vm394, %v2167
      %2176 = vst.msk [vmem:[%s332 + $0x30] sm:$0xff] %vm394, %v2168
      %2177 = vst.msk [vmem:[%s332 + $0x38] sm:$0xff] %vm394, %v2169
      %p2178 = scmp.lt.s32.totalorder %s20, 1
      %s2179 = scalar_select %p2178, %s20, 1
      %s2180 = smul.addr %s2179, 8
      %s2181 = smul.addr %s2180, 8
      %s2182 = scalar_lea.vmem %s9, %s2181
      // Predicated region
      $region57: #{hourglass_forward.13} parent=55 // pred_check
        %p2183 = pneg %p232
      $region58: #{hourglass_forward.13} parent=55 // pred_check_branch
        %2185 = sbr.rel (%p2183) target = $region60
      $region59: #{hourglass_forward.13} parent=55 // pred_region
        _
      $region60: #{hourglass_forward.13} parent=55 // pred_fallthru
        _
    $region56: #{hourglass_forward.13} parent=5 // pred_fallthru
      _
    %p2186 = scmp.le.s32.totalorder 2, %s15
    // Predicated region
    $region61: #{hourglass_forward.13} parent=5 // pred_check
      %p2187 = pneg %p2186
    $region62: #{hourglass_forward.13} parent=5 // pred_check_branch
      %2189 = sbr.rel (%p2187) target = $region64
    $region63: #{hourglass_forward.13} parent=5 // pred_region
      %s2190 = ssub.s32 %s15, 2
      // Predicated region
      $region65: #{hourglass_forward.13} parent=63 // pred_check
        %p2191 = pneg %p238
      $region66: #{hourglass_forward.13} parent=63 // pred_check_branch
        %2193 = sbr.rel (%p2191) target = $region68
      $region67: #{hourglass_forward.13} parent=63 // pred_region
        %p2194 = scmp.lt.s32.totalorder %s21, 1
        %s2195 = scalar_select %p2194, %s21, 1
        %s2196 = smul.addr %s2195, 8
        %s2197 = smul.addr %s2196, 8
        %s2198 = scalar_lea.vmem %s9, %s2197
      $region68: #{hourglass_forward.13} parent=63 // pred_fallthru
        _
    $region64: #{hourglass_forward.13} parent=5 // pred_fallthru
      _
  $region6: #{hourglass_forward.13} parent=0 // loop_footer
    %s19 = sadd.s32 1, %s15
  $region7: #{hourglass_forward.13} parent=0 // loop_footer_branch
    %14 = sbr.rel target = $region3
  $region8: #{hourglass_forward.13} parent=0 // loop_exit
    _

// kernel: hourglass_forward.16
$region0: #{hourglass_forward.16}
  #allocation0 [shape = 'u32[]', space=smem, size = 0x4, offset = 0x4, fixed_abs, tag = 'smem constant byte address 0x4 - core index']
  #allocation1 [shape = 'u32[144,128]{1,0:T(1,128)}', space=vmem, size = 0x12000, scoped, tag = 'internal scratch']
  #allocation2 [shape = 'bf16[26,4]{1,0:T(8,128)(2,1)}', space=vmem, size = 0x2000, scoped, tag = 'scratch operand']
  %s0 = inlined_call_operand.vmem [shape: f32[2,16,8], index: 0, kind: input, shape index: {}]
  %s1 = inlined_call_operand.vmem [shape: f32[1,8], index: 1, kind: input, shape index: {}]
  %s2 = inlined_call_operand.vmem [shape: f32[1,8], index: 2, kind: input, shape index: {}]
  %s3 = inlined_call_operand.vmem [shape: bf16[8,4], index: 3, kind: input, shape index: {}]
  %s4 = inlined_call_operand.vmem [shape: f32[1,4], index: 4, kind: input, shape index: {}]
  %s5 = inlined_call_operand.vmem [shape: bf16[9,4,4], index: 5, kind: input, shape index: {}]
  %s6 = inlined_call_operand.vmem [shape: f32[1,4], index: 6, kind: input, shape index: {}]
  %s7 = inlined_call_operand.vmem [shape: bf16[4,8], index: 7, kind: input, shape index: {}]
  %s8 = inlined_call_operand.vmem [shape: f32[1,8], index: 8, kind: input, shape index: {}]
  %s9 = inlined_call_operand.vmem [shape: f32[2,16,8], index: 9, kind: output, shape index: {}]
  %s10 = sld [smem:[#allocation0]]
  $region69: #{hourglass_forward.16} parent=0
    _
  %s12 = ssub.s32 1, %s10
  %s13 = scalar_select 0, %s12, %s10
  loop: start=0, step=1, limit=4
  $region2: #{hourglass_forward.16} parent=0 // loop_pre_header
    _
  $region3: #{hourglass_forward.16} parent=0 // loop_header
    %s15 = sphi 0, %s19
    %p16 = scmp.ge.s32.totalorder %s15, 4
    %s25 = sphi 0, %s27
    %s28 = sphi 0, %s25
    %s29 = sphi 0, %s28
    %s45 = sphi 0, %s29
    %s49 = sphi 0, %s49
    %s51 = sphi 0, %s49
    %s52 = sphi 0, %s51
    %s66 = sphi 0, %s52
    %s70 = sphi 0, %s70
    %s72 = sphi 0, %s70
    %s73 = sphi 0, %s72
    %s87 = sphi 0, %s73
    %s91 = sphi 0, %s91
    %s93 = sphi 0, %s91
    %s94 = sphi 0, %s93
    %s108 = sphi 0, %s94
    %s112 = sphi 0, %s112
    %s114 = sphi 0, %s112
    %s115 = sphi 0, %s114
    %s129 = sphi 0, %s115
    %s133 = sphi 0, %s133
    %s135 = sphi 0, %s133
    %s136 = sphi 0, %s135
    %s150 = sphi 0, %s136
    %s154 = sphi 0, %s154
    %s156 = sphi 0, %s154
    %s157 = sphi 0, %s156
    %s171 = sphi 0, %s157
    %s175 = sphi 0, %s175
    %s177 = sphi 0, %s175
    %s178 = sphi 0, %s177
    %s192 = sphi 0, %s178
    %s196 = sphi 0, %s196
    %s198 = sphi 0, %s196
    %s199 = sphi 0, %s198
    %s213 = sphi 0, %s199
    %s219 = sphi 0, %s221
    %s222 = sphi 0, %s219
    %s223 = sphi 0, %s222
    %s239 = sphi 0, %s223
  $region4: #{hourglass_forward.16} parent=0 // loop_header_branch
    %18 = sbr.rel (%p16) target = $region8
  $region5: #{hourglass_forward.16} parent=0 // loop_body
    %s20 = ssub.s32 %s15, 1
    %s21 = ssub.s32 %s15, 2
    %s22 = sadd.s32 %s15, 1
    %s23 = ssub.s32 %s15, %s22
    %p24 = scmp.eq.s32.totalorder %s23, 0
    %s26 = sadd.s32 %s25, 1
    %s27 = scalar_select %p24, %s25, %s26
    %p30 = pneg %p24
    %p31 = scmp.eq.s32.totalorder %s15, 1
    %p32 = por %p30, %p31
    %p33 = scmp.ne.s32.totalorder %s25, %s28
    %p34 = scmp.eq.s32.totalorder %s15, 0
    %p35 = por %p33, %p34
    %p36 = scmp.ne.s32.totalorder %s25, %s28
    %p37 = scmp.eq.s32.totalorder %s20, 1
    %p38 = por %p36, %p37
    %p39 = scmp.ne.s32.totalorder %s28, %s29
    %p40 = scmp.eq.s32.totalorder %s20, 0
    %p41 = por %p39, %p40
    %p42 = scmp.ne.s32.totalorder %s28, %s29
    %p43 = scmp.eq.s32.totalorder %s21, 1
    %p44 = por %p42, %p43
    %p46 = scmp.ne.s32.totalorder %s29, %s45
    %p47 = scmp.eq.s32.totalorder %s21, 0
    %p48 = por %p46, %p47
    %s50 = sadd.s32 %s49, 1
    %p53 = scmp.eq.s32.totalorder %s15, 1
    %p54 = scmp.ne.s32.totalorder %s49, %s51
    %p55 = scmp.eq.s32.totalorder %s15, 0
    %p56 = por %p54, %p55
    %p57 = scmp.ne.s32.totalorder %s49, %s51
    %p58 = scmp.eq.s32.totalorder %s20, 1
    %p59 = por %p57, %p58
    %p60 = scmp.ne.s32.totalorder %s51, %s52
    %p61 = scmp.eq.s32.totalorder %s20, 0
    %p62 = por %p60, %p61
    %p63 = scmp.ne.s32.totalorder %s51, %s52
    %p64 = scmp.eq.s32.totalorder %s21, 1
    %p65 = por %p63, %p64
    %p67 = scmp.ne.s32.totalorder %s52, %s66
    %p68 = scmp.eq.s32.totalorder %s21, 0
    %p69 = por %p67, %p68
    %s71 = sadd.s32 %s70, 1
    %p74 = scmp.eq.s32.totalorder %s15, 1
    %p75 = scmp.ne.s32.totalorder %s70, %s72
    %p76 = scmp.eq.s32.totalorder %s15, 0
    %p77 = por %p75, %p76
    %p78 = scmp.ne.s32.totalorder %s70, %s72
    %p79 = scmp.eq.s32.totalorder %s20, 1
    %p80 = por %p78, %p79
    %p81 = scmp.ne.s32.totalorder %s72, %s73
    %p82 = scmp.eq.s32.totalorder %s20, 0
    %p83 = por %p81, %p82
    %p84 = scmp.ne.s32.totalorder %s72, %s73
    %p85 = scmp.eq.s32.totalorder %s21, 1
    %p86 = por %p84, %p85
    %p88 = scmp.ne.s32.totalorder %s73, %s87
    %p89 = scmp.eq.s32.totalorder %s21, 0
    %p90 = por %p88, %p89
    %s92 = sadd.s32 %s91, 1
    %p95 = scmp.eq.s32.totalorder %s15, 1
    %p96 = scmp.ne.s32.totalorder %s91, %s93
    %p97 = scmp.eq.s32.totalorder %s15, 0
    %p98 = por %p96, %p97
    %p99 = scmp.ne.s32.totalorder %s91, %s93
    %p100 = scmp.eq.s32.totalorder %s20, 1
    %p101 = por %p99, %p100
    %p102 = scmp.ne.s32.totalorder %s93, %s94
    %p103 = scmp.eq.s32.totalorder %s20, 0
    %p104 = por %p102, %p103
    %p105 = scmp.ne.s32.totalorder %s93, %s94
    %p106 = scmp.eq.s32.totalorder %s21, 1
    %p107 = por %p105, %p106
    %p109 = scmp.ne.s32.totalorder %s94, %s108
    %p110 = scmp.eq.s32.totalorder %s21, 0
    %p111 = por %p109, %p110
    %s113 = sadd.s32 %s112, 1
    %p116 = scmp.eq.s32.totalorder %s15, 1
    %p117 = scmp.ne.s32.totalorder %s112, %s114
    %p118 = scmp.eq.s32.totalorder %s15, 0
    %p119 = por %p117, %p118
    %p120 = scmp.ne.s32.totalorder %s112, %s114
    %p121 = scmp.eq.s32.totalorder %s20, 1
    %p122 = por %p120, %p121
    %p123 = scmp.ne.s32.totalorder %s114, %s115
    %p124 = scmp.eq.s32.totalorder %s20, 0
    %p125 = por %p123, %p124
    %p126 = scmp.ne.s32.totalorder %s114, %s115
    %p127 = scmp.eq.s32.totalorder %s21, 1
    %p128 = por %p126, %p127
    %p130 = scmp.ne.s32.totalorder %s115, %s129
    %p131 = scmp.eq.s32.totalorder %s21, 0
    %p132 = por %p130, %p131
    %s134 = sadd.s32 %s133, 1
    %p137 = scmp.eq.s32.totalorder %s15, 1
    %p138 = scmp.ne.s32.totalorder %s133, %s135
    %p139 = scmp.eq.s32.totalorder %s15, 0
    %p140 = por %p138, %p139
    %p141 = scmp.ne.s32.totalorder %s133, %s135
    %p142 = scmp.eq.s32.totalorder %s20, 1
    %p143 = por %p141, %p142
    %p144 = scmp.ne.s32.totalorder %s135, %s136
    %p145 = scmp.eq.s32.totalorder %s20, 0
    %p146 = por %p144, %p145
    %p147 = scmp.ne.s32.totalorder %s135, %s136
    %p148 = scmp.eq.s32.totalorder %s21, 1
    %p149 = por %p147, %p148
    %p151 = scmp.ne.s32.totalorder %s136, %s150
    %p152 = scmp.eq.s32.totalorder %s21, 0
    %p153 = por %p151, %p152
    %s155 = sadd.s32 %s154, 1
    %p158 = scmp.eq.s32.totalorder %s15, 1
    %p159 = scmp.ne.s32.totalorder %s154, %s156
    %p160 = scmp.eq.s32.totalorder %s15, 0
    %p161 = por %p159, %p160
    %p162 = scmp.ne.s32.totalorder %s154, %s156
    %p163 = scmp.eq.s32.totalorder %s20, 1
    %p164 = por %p162, %p163
    %p165 = scmp.ne.s32.totalorder %s156, %s157
    %p166 = scmp.eq.s32.totalorder %s20, 0
    %p167 = por %p165, %p166
    %p168 = scmp.ne.s32.totalorder %s156, %s157
    %p169 = scmp.eq.s32.totalorder %s21, 1
    %p170 = por %p168, %p169
    %p172 = scmp.ne.s32.totalorder %s157, %s171
    %p173 = scmp.eq.s32.totalorder %s21, 0
    %p174 = por %p172, %p173
    %s176 = sadd.s32 %s175, 1
    %p179 = scmp.eq.s32.totalorder %s15, 1
    %p180 = scmp.ne.s32.totalorder %s175, %s177
    %p181 = scmp.eq.s32.totalorder %s15, 0
    %p182 = por %p180, %p181
    %p183 = scmp.ne.s32.totalorder %s175, %s177
    %p184 = scmp.eq.s32.totalorder %s20, 1
    %p185 = por %p183, %p184
    %p186 = scmp.ne.s32.totalorder %s177, %s178
    %p187 = scmp.eq.s32.totalorder %s20, 0
    %p188 = por %p186, %p187
    %p189 = scmp.ne.s32.totalorder %s177, %s178
    %p190 = scmp.eq.s32.totalorder %s21, 1
    %p191 = por %p189, %p190
    %p193 = scmp.ne.s32.totalorder %s178, %s192
    %p194 = scmp.eq.s32.totalorder %s21, 0
    %p195 = por %p193, %p194
    %s197 = sadd.s32 %s196, 1
    %p200 = scmp.eq.s32.totalorder %s15, 1
    %p201 = scmp.ne.s32.totalorder %s196, %s198
    %p202 = scmp.eq.s32.totalorder %s15, 0
    %p203 = por %p201, %p202
    %p204 = scmp.ne.s32.totalorder %s196, %s198
    %p205 = scmp.eq.s32.totalorder %s20, 1
    %p206 = por %p204, %p205
    %p207 = scmp.ne.s32.totalorder %s198, %s199
    %p208 = scmp.eq.s32.totalorder %s20, 0
    %p209 = por %p207, %p208
    %p210 = scmp.ne.s32.totalorder %s198, %s199
    %p211 = scmp.eq.s32.totalorder %s21, 1
    %p212 = por %p210, %p211
    %p214 = scmp.ne.s32.totalorder %s199, %s213
    %p215 = scmp.eq.s32.totalorder %s21, 0
    %p216 = por %p214, %p215
    %s217 = ssub.s32 %s15, %s22
    %p218 = scmp.eq.s32.totalorder %s217, 0
    %s220 = sadd.s32 %s219, 1
    %s221 = scalar_select %p218, %s219, %s220
    %p224 = pneg %p218
    %p225 = scmp.eq.s32.totalorder %s15, 1
    %p226 = por %p224, %p225
    %p227 = scmp.ne.s32.totalorder %s219, %s222
    %p228 = scmp.eq.s32.totalorder %s15, 0
    %p229 = por %p227, %p228
    %p230 = scmp.ne.s32.totalorder %s219, %s222
    %p231 = scmp.eq.s32.totalorder %s20, 1
    %p232 = por %p230, %p231
    %p233 = scmp.ne.s32.totalorder %s222, %s223
    %p234 = scmp.eq.s32.totalorder %s20, 0
    %p235 = por %p233, %p234
    %p236 = scmp.ne.s32.totalorder %s222, %s223
    %p237 = scmp.eq.s32.totalorder %s21, 1
    %p238 = por %p236, %p237
    %p240 = scmp.ne.s32.totalorder %s223, %s239
    %p241 = scmp.eq.s32.totalorder %s21, 0
    %p242 = por %p240, %p241
    %p243 = scmp.le.s32.totalorder 1, %s15
    %p244 = scmp.lt.s32.totalorder %s15, 3
    %p245 = pnand %p243, %p244
    %p246 = pneg %p245
    // Predicated region
    $region9: #{hourglass_forward.16} parent=5 // pred_check
      _
    $region10: #{hourglass_forward.16} parent=5 // pred_check_branch
      %248 = sbr.rel (%p245) target = $region12
    $region11: #{hourglass_forward.16} parent=5 // pred_region
      %s249 = ssub.s32 %s15, 1
      // Predicated region
      $region13: #{hourglass_forward.16} parent=11 // pred_check
        %p250 = pneg %p62
      $region14: #{hourglass_forward.16} parent=11 // pred_check_branch
        %252 = sbr.rel (%p250) target = $region16
      $region15: #{hourglass_forward.16} parent=11 // pred_region
        _
      $region16: #{hourglass_forward.16} parent=11 // pred_fallthru
        _
      // Predicated region
      $region17: #{hourglass_forward.16} parent=11 // pred_check
        %p253 = pneg %p83
      $region18: #{hourglass_forward.16} parent=11 // pred_check_branch
        %255 = sbr.rel (%p253) target = $region20
      $region19: #{hourglass_forward.16} parent=11 // pred_region
        _
      $region20: #{hourglass_forward.16} parent=11 // pred_fallthru
        _
      // Predicated region
      $region21: #{hourglass_forward.16} parent=11 // pred_check
        %p256 = pneg %p104
      $region22: #{hourglass_forward.16} parent=11 // pred_check_branch
        %258 = sbr.rel (%p256) target = $region24
      $region23: #{hourglass_forward.16} parent=11 // pred_region
        _
      $region24: #{hourglass_forward.16} parent=11 // pred_fallthru
        _
      // Predicated region
      $region25: #{hourglass_forward.16} parent=11 // pred_check
        %p259 = pneg %p125
      $region26: #{hourglass_forward.16} parent=11 // pred_check_branch
        %261 = sbr.rel (%p259) target = $region28
      $region27: #{hourglass_forward.16} parent=11 // pred_region
        _
      $region28: #{hourglass_forward.16} parent=11 // pred_fallthru
        _
      // Predicated region
      $region29: #{hourglass_forward.16} parent=11 // pred_check
        %p262 = pneg %p146
      $region30: #{hourglass_forward.16} parent=11 // pred_check_branch
        %264 = sbr.rel (%p262) target = $region32
      $region31: #{hourglass_forward.16} parent=11 // pred_region
        _
      $region32: #{hourglass_forward.16} parent=11 // pred_fallthru
        _
      // Predicated region
      $region33: #{hourglass_forward.16} parent=11 // pred_check
        %p265 = pneg %p167
      $region34: #{hourglass_forward.16} parent=11 // pred_check_branch
        %267 = sbr.rel (%p265) target = $region36
      $region35: #{hourglass_forward.16} parent=11 // pred_region
        _
      $region36: #{hourglass_forward.16} parent=11 // pred_fallthru
        _
      // Predicated region
      $region37: #{hourglass_forward.16} parent=11 // pred_check
        %p268 = pneg %p188
      $region38: #{hourglass_forward.16} parent=11 // pred_check_branch
        %270 = sbr.rel (%p268) target = $region40
      $region39: #{hourglass_forward.16} parent=11 // pred_region
        _
      $region40: #{hourglass_forward.16} parent=11 // pred_fallthru
        _
      // Predicated region
      $region41: #{hourglass_forward.16} parent=11 // pred_check
        %p271 = pneg %p209
      $region42: #{hourglass_forward.16} parent=11 // pred_check_branch
        %273 = sbr.rel (%p271) target = $region44
      $region43: #{hourglass_forward.16} parent=11 // pred_region
        _
      $region44: #{hourglass_forward.16} parent=11 // pred_fallthru
        _
    $region12: #{hourglass_forward.16} parent=5 // pred_fallthru
      _
    %p274 = scmp.lt.s32.totalorder %s15, 2
    // Predicated region
    $region45: #{hourglass_forward.16} parent=5 // pred_check
      %p275 = pneg %p274
    $region46: #{hourglass_forward.16} parent=5 // pred_check_branch
      %277 = sbr.rel (%p275) target = $region48
    $region47: #{hourglass_forward.16} parent=5 // pred_region
      // Predicated region
      $region49: #{hourglass_forward.16} parent=47 // pred_check
        %p278 = pneg %p35
      $region50: #{hourglass_forward.16} parent=47 // pred_check_branch
        %280 = sbr.rel (%p278) target = $region52
      $region51: #{hourglass_forward.16} parent=47 // pred_region
        %p281 = scmp.lt.s32.totalorder %s15, 1
        %s282 = scalar_select %p281, %s15, 1
        %s283 = smul.addr %s282, 2
        %s284 = smul.addr %s283, 8
        %s285 = scalar_lea.vmem %s0, %s284
      $region52: #{hourglass_forward.16} parent=47 // pred_fallthru
        _
    $region48: #{hourglass_forward.16} parent=5 // pred_fallthru
      _
    %p286 = scmp.le.s32.totalorder 1, %s15
    %p287 = scmp.lt.s32.totalorder %s15, 3
    %p288 = pnand %p286, %p287
    %p289 = pneg %p288
    // Predicated region
    $region53: #{hourglass_forward.16} parent=5 // pred_check
      _
    $region54: #{hourglass_forward.16} parent=5 // pred_check_branch
      %291 = sbr.rel (%p288) target = $region56
    $region55: #{hourglass_forward.16} parent=5 // pred_region
      %s292 = ssub.s32 %s15, 1
      %p293 = scmp.lt.s32.totalorder %s20, 1
      %s294 = scalar_select %p293, %s20, 1
      %s295 = smul.addr %s294, 2
      %s296 = smul.addr %s295, 8
      %s297 = scalar_lea.vmem %s0, %s296
      %p298 = pneg %p41
      %p299 = pneg %p38
      %p300 = pneg %p62
      %p301 = pneg %p59
      %p302 = pneg %p83
      %p303 = pneg %p80
      %p304 = pneg %p104
      %p305 = pneg %p101
      %p306 = pneg %p125
      %p307 = pneg %p122
      %p308 = pneg %p146
      %p309 = pneg %p143
      %p310 = pneg %p167
      %p311 = pneg %p164
      %p312 = pneg %p188
      %p313 = pneg %p185
      %p314 = pneg %p209
      %p315 = pneg %p206
      %p316 = pneg %p235
      %p317 = pneg %p232
      %p318 = scmp.lt.s32.totalorder %s20, 1
      %s319 = scalar_select %p318, %s20, 1
      %s320 = smul.addr %s319, 2
      %s321 = smul.addr %s320, 8
      %s322 = scalar_lea.vmem %s9, %s321
      %p323 = scmp.lt.s32.totalorder %s20, 1
      %s324 = scalar_select %p323, %s20, 1
      %s325 = smul.addr %s324, 2
      %s326 = smul.addr %s325, 8
      %s327 = scalar_lea.vmem %s0, %s326
      %p328 = scmp.lt.s32.totalorder %s20, 1
      %s329 = scalar_select %p328, %s20, 1
      %s330 = smul.addr %s329, 2
      %s331 = smul.addr %s330, 8
      %s332 = scalar_lea.vmem %s9, %s331
      %v336 = vld [vmem:[%s327] sm:$0xff]
      %v337 = vld [vmem:[%s327 + $0x8] sm:$0xff]
      %v338 = vld [vmem:[%s1] sm:$0x1]
      %v340 = vlaneseq
      %v341 = vshrl.u32 %v340, 7
      %v342 = vsub.s32 0, %v341
      %v343 = vrot.slane %v338, %v342
      %v345 = vmul.f32 %v336, %v343
      %v346 = vmul.f32 %v337, %v343
      %v347 = vld [vmem:[%s2] sm:$0x1]
      %v349 = vlaneseq
      %v350 = vshrl.u32 %v349, 7
      %v351 = vsub.s32 0, %v350
      %v352 = vrot.slane %v347, %v351
      %v354 = vadd.f32 %v345, %v352
      %v355 = vadd.f32 %v346, %v352
      %v356 = vmax.f32 %v354, 0.0
      %v357 = vmax.f32 %v355, 0.0
      %v358 = vpack.c.bf16 %v357, %v356
      %v359 = vld [vmem:[%s3] sm:$0xf]
      %v360 = vld [vmem:[%s4] sm:$0x1]
      %v362 = vlaneseq
      %v363 = vshrl.u32 %v362, 7
      %v364 = vsub.s32 0, %v363
      %v365 = vrot.slane %v360, %v364
      %vm367 = vcmask 64512
      %v369 = vsel %vm367, %v358, 0
      %vm371 = vcmask 1043456
      %v373 = vsel %vm371, %v359, 0
      %375 = vmatprep.subr.bf16.mxu0 0
      %376 = vmatpush1.bf16.msra.mxu0 %v373
      %377 = vmatprep.subr.bf16.mxu0 0
      %378 = vmatpush1.bf16.msra.mxu0 0
      %379 = vmatprep.subr.bf16.mxu0 0
      %380 = vmatpush1.bf16.msra.mxu0 0
      %381 = vmatprep.subr.bf16.mxu0 0
      %382 = vmatpush1.bf16.msra.mxu0 0
      %383 = vmatprep.subr.bf16.mxu0 0
      %384 = vmatpush1.bf16.msra.mxu0 0
      %385 = vmatprep.subr.bf16.mxu0 0
      %386 = vmatpush1.bf16.msra.mxu0 0
      %387 = vmatprep.subr.bf16.mxu0 0
      %388 = vmatpush1.bf16.msra.mxu0 0
      %389 = vmatprep.subr.bf16.mxu0 0
      %390 = vmatpush1.bf16.msra.mxu0 0
      %391 = vmatprep.subr.bf16.mxu0 0
      %392 = vmatpush1.bf16.msra.mxu0 0
      %393 = vmatprep.subr.bf16.mxu0 0
      %394 = vmatpush1.bf16.msra.mxu0 0
      %395 = vmatprep.subr.bf16.mxu0 0
      %396 = vmatpush1.bf16.msra.mxu0 0
      %397 = vmatprep.subr.bf16.mxu0 0
      %398 = vmatpush1.bf16.msra.mxu0 0
      %399 = vmatprep.subr.bf16.mxu0 0
      %400 = vmatpush1.bf16.msra.mxu0 0
      %401 = vmatprep.subr.bf16.mxu0 0
      %402 = vmatpush1.bf16.msra.mxu0 0
      %403 = vmatprep.subr.bf16.mxu0 0
      %404 = vmatpush1.bf16.msra.mxu0 0
      %405 = vmatprep.subr.bf16.mxu0 0
      %406 = vmatpush1.bf16.msra.mxu0 0
      %407 = vmatprep.mubr.bf16.mxu0 0
      %408 = vmatmul.mubr.bf16.gmra.mrb[0].mxu0 %v369
      %v409 = vpop.f32.mrb[0].mxu0
      %v410 = vadd.f32 %v365, %v409
      %v411 = vpop.f32.mrb[0].mxu0
      %v412 = vpop.f32.mrb[0].mxu0
      %v413 = vadd.f32 %v365, %v412
      %v414 = vpop.f32.mrb[0].mxu0
      %415 = vdwg.mxu0
      %v416 = vmax.f32 %v410, 0.0
      %v417 = vmax.f32 %v413, 0.0
      %vm418 = vcmask 27648
      %419 = vst.msk [vmem:[#allocation2] sm:$0xf] %vm418, 0
      %420 = vst.msk [vmem:[#allocation2 + $0x4] sm:$0xf] %vm418, 0
      %421 = vst.msk [vmem:[#allocation2 + $0x8] sm:$0xf] %vm418, 0
      %vm422 = vcmask 24576
      %423 = vst.msk [vmem:[#allocation2 + $0xc] sm:$0x1] %vm422, 0
      %v424 = vpack.c.bf16 %v417, %v416
      %v426 = vunpack.c.l.b16 %v424
      %v427 = vunpack.c.h.b16 %v424
      %v428 = vpack.c.b16 %v426, %v426
      %v429 = vpack.c.b16 %v427, %v427
      %vm430 = vsmask.f32 2304
      %vm431 = vsmask.f32 6416
      %vm432 = vmor %vm430, %vm431
      %v434 = vshrl.u32 %v428, 16
      %v436 = vrot.slane %v434, 5
      %v437 = vshll.u32 %v428, 16
      %v439 = vrot.slane %v437, 6
      %v440 = vor.u32 %v436, %v439
      %v441 = vrot.slane %v440, 4
      %v443 = vshrl.u32 %v429, 16
      %v445 = vrot.slane %v443, 5
      %v446 = vshll.u32 %v429, 16
      %v448 = vrot.slane %v446, 6
      %v449 = vor.u32 %v445, %v448
      %v450 = vsel %vm432, %v441, %v449
      %v451 = vrot.slane %v449, 4
      %vm455 = vcmask 27650
      %vm456 = vsmask.f32 7946
      %vm457 = vmand %vm455, %vm456
      %v458 = vld [vmem:[#allocation2] sm:$0xc]
      %v459 = vsel %vm457, %v440, %v458
      %460 = vst [vmem:[#allocation2] sm:$0xc] %v459
      %461 = vst.msk [vmem:[#allocation2 + $0x4] sm:$0xf] %vm418, %v450
      %vm462 = vcmask 26624
      %vm463 = vmand %vm462, %vm430
      %v464 = vld [vmem:[#allocation2 + $0x8] sm:$0x7]
      %v465 = vsel %vm463, %v451, %v464
      %466 = vst [vmem:[#allocation2 + $0x8] sm:$0x7] %v465
      %v467 = vlaneseq
      %v468 = vshrl.u32 %v467, 7
      %v469 = vadd.s32 %v468, 8
      %vm470 = vcmp.lt.s32.totalorder %v468, 0
      %v471 = vsub.s32 0, %v468
      %v472 = vsel %vm470, %v471, %v468
      %v473 = vshrl.u32 %v472, 2
      %v474 = vand.u32 %v472, 3
      %v475 = vsub.s32 0, %v474
      %v476 = vsel %vm470, %v475, %v474
      %vm477 = vcmp.lt.s32.totalorder %v469, 0
      %v478 = vsub.s32 0, %v469
      %v479 = vsel %vm477, %v478, %v469
      %v480 = vshrl.u32 %v479, 2
      %v481 = vand.u32 %v479, 3
      %v482 = vsub.s32 0, %v481
      %v483 = vsel %vm477, %v482, %v481
      %vm484 = vcmp.ne.s32.totalorder %v476, 0
      %vm485 = vcmp.ne.s32.totalorder %v483, 0
      %vm486 = vcmp.lt.s32.totalorder %v476, 0
      %vm487 = vcmp.lt.s32.totalorder %v483, 0
      %vm488 = vmand %vm486, %vm484
      %vm489 = vmand %vm487, %vm485
      %v490 = vadd.s32 %v476, 4
      %v491 = vadd.s32 %v483, 4
      %v492 = vsel %vm488, %v490, %v476
      %v493 = vsel %vm489, %v491, %v483
      %v494 = vld [vmem:[#allocation2] sm:$0xf]
      %v495 = vld [vmem:[#allocation2 + $0x4] sm:$0xf]
      %vm496 = vcmp.ge.s32.totalorder %v492, 1
      %vm497 = vcmp.ge.s32.totalorder %v493, 1
      %v498 = vsel %vm496, 1, 0
      %v499 = vsel %vm497, 1, 0
      %vm500 = vcmp.eq.s32.totalorder %v498, 1
      %vm501 = vcmp.eq.s32.totalorder %v499, 1
      %vm502 = vmpackc.low %vm500, %vm500
      %vm503 = vmpackc.low %vm501, %vm501
      %v504 = vsel %vm502, %v494, 0
      %v505 = vsel %vm503, %v495, 0
      %v506 = vld [vmem:[%s5] sm:$0x3]
      %v507 = vld [vmem:[#allocation2 + $0x8] sm:$0x1]
      %s508 = scalar_lea.vmem %s5, 2
      %v509 = vld [vmem:[%s508] sm:$0x3]
      %v513 = vunpack.c.l.b16 %v494
      %v514 = vunpack.c.l.b16 %v495
      %v515 = vunpack.c.l.b16 %v507
      %v516 = vpack.c.b16 %v514, %v513
      %v517 = vpack.c.b16 %v515, %v515
      %vm518 = vsmask.f32 7424
      %v520 = vshrl.u32 %v516, 16
      %v522 = vshll.u32 %v516, 16
      %v524 = vrot.slane %v522, 1
      %v525 = vor.u32 %v520, %v524
      %v527 = vshll.u32 %v517, 16
      %v529 = vrot.slane %v527, 1
      %v530 = vsel %vm518, %v525, %v529
      %vm531 = vcmask 31744
      %v533 = vsel %vm531, %v530, 0
      %vm535 = vcmask 1041408
      %v537 = vsel %vm535, %v509, 0
      %539 = vmatprep.subr.bf16.mxu0 0
      %540 = vmatpush1.bf16.msra.mxu0 %v537
      %541 = vmatprep.subr.bf16.mxu0 0
      %542 = vmatpush1.bf16.msra.mxu0 0
      %543 = vmatprep.subr.bf16.mxu0 0
      %544 = vmatpush1.bf16.msra.mxu0 0
      %545 = vmatprep.subr.bf16.mxu0 0
      %546 = vmatpush1.bf16.msra.mxu0 0
      %547 = vmatprep.subr.bf16.mxu0 0
      %548 = vmatpush1.bf16.msra.mxu0 0
      %549 = vmatprep.subr.bf16.mxu0 0
      %550 = vmatpush1.bf16.msra.mxu0 0
      %551 = vmatprep.subr.bf16.mxu0 0
      %552 = vmatpush1.bf16.msra.mxu0 0
      %553 = vmatprep.subr.bf16.mxu0 0
      %554 = vmatpush1.bf16.msra.mxu0 0
      %555 = vmatprep.subr.bf16.mxu0 0
      %556 = vmatpush1.bf16.msra.mxu0 0
      %557 = vmatprep.subr.bf16.mxu0 0
      %558 = vmatpush1.bf16.msra.mxu0 0
      %559 = vmatprep.subr.bf16.mxu0 0
      %560 = vmatpush1.bf16.msra.mxu0 0
      %561 = vmatprep.subr.bf16.mxu0 0
      %562 = vmatpush1.bf16.msra.mxu0 0
      %563 = vmatprep.subr.bf16.mxu0 0
      %564 = vmatpush1.bf16.msra.mxu0 0
      %565 = vmatprep.subr.bf16.mxu0 0
      %566 = vmatpush1.bf16.msra.mxu0 0
      %567 = vmatprep.subr.bf16.mxu0 0
      %568 = vmatpush1.bf16.msra.mxu0 0
      %569 = vmatprep.subr.bf16.mxu0 0
      %570 = vmatpush1.bf16.msra.mxu0 0
      %571 = vmatprep.mubr.bf16.mxu0 0
      %572 = vmatmul.mubr.bf16.gmra.mrb[0].mxu0 %v533
      %v573 = vpop.f32.mrb[0].mxu0
      %v574 = vadd.f32 0.0, %v573
      %v575 = vpop.f32.mrb[0].mxu0
      %v576 = vpop.f32.mrb[0].mxu0
      %v577 = vadd.f32 0.0, %v576
      %v578 = vpop.f32.mrb[0].mxu0
      %579 = vdwg.mxu0
      %v582 = vunpack.c.l.b16 %v504
      %v583 = vunpack.c.l.b16 %v505
      %v584 = vpack.c.b16 %v583, %v582
      %v586 = vsel %vm531, %v584, 0
      %v589 = vsel %vm535, %v506, 0
      %591 = vmatprep.subr.bf16.mxu0 0
      %592 = vmatpush1.bf16.msra.mxu0 %v589
      %593 = vmatprep.subr.bf16.mxu0 0
      %594 = vmatpush1.bf16.msra.mxu0 0
      %595 = vmatprep.subr.bf16.mxu0 0
      %596 = vmatpush1.bf16.msra.mxu0 0
      %597 = vmatprep.subr.bf16.mxu0 0
      %598 = vmatpush1.bf16.msra.mxu0 0
      %599 = vmatprep.subr.bf16.mxu0 0
      %600 = vmatpush1.bf16.msra.mxu0 0
      %601 = vmatprep.subr.bf16.mxu0 0
      %602 = vmatpush1.bf16.msra.mxu0 0
      %603 = vmatprep.subr.bf16.mxu0 0
      %604 = vmatpush1.bf16.msra.mxu0 0
      %605 = vmatprep.subr.bf16.mxu0 0
      %606 = vmatpush1.bf16.msra.mxu0 0
      %607 = vmatprep.subr.bf16.mxu0 0
      %608 = vmatpush1.bf16.msra.mxu0 0
      %609 = vmatprep.subr.bf16.mxu0 0
      %610 = vmatpush1.bf16.msra.mxu0 0
      %611 = vmatprep.subr.bf16.mxu0 0
      %612 = vmatpush1.bf16.msra.mxu0 0
      %613 = vmatprep.subr.bf16.mxu0 0
      %614 = vmatpush1.bf16.msra.mxu0 0
      %615 = vmatprep.subr.bf16.mxu0 0
      %616 = vmatpush1.bf16.msra.mxu0 0
      %617 = vmatprep.subr.bf16.mxu0 0
      %618 = vmatpush1.bf16.msra.mxu0 0
      %619 = vmatprep.subr.bf16.mxu0 0
      %620 = vmatpush1.bf16.msra.mxu0 0
      %621 = vmatprep.subr.bf16.mxu0 0
      %622 = vmatpush1.bf16.msra.mxu0 0
      %623 = vmatprep.mubr.bf16.mxu0 0
      %624 = vmatmul.mubr.bf16.gmra.mrb[0].mxu0 %v586
      %v625 = vpop.f32.mrb[0].mxu0
      %v626 = vadd.f32 %v574, %v625
      %v627 = vpop.f32.mrb[0].mxu0
      %v628 = vpop.f32.mrb[0].mxu0
      %v629 = vadd.f32 %v577, %v628
      %v630 = vpop.f32.mrb[0].mxu0
      %631 = vdwg.mxu0
      %v632 = vld [vmem:[#allocation2] sm:$0xe]
      %vm633 = vcmp.le.s32.totalorder %v492, 2
      %vm634 = vcmp.le.s32.totalorder %v493, 2
      %v635 = vsel %vm633, 1, 0
      %v636 = vsel %vm634, 1, 0
      %vm637 = vcmp.eq.s32.totalorder %v635, 1
      %vm638 = vcmp.eq.s32.totalorder %v636, 1
      %vm639 = vmpackc.low %vm637, %vm637
      %vm640 = vmpackc.low %vm638, %vm638
      %v641 = vsel %vm639, 65537, 0
      %v642 = vsel %vm640, 65537, 0
      %vm643 = vcmask 1040384
      %vm644 = vcmask 1044484
      %vm645 = vmor %vm643, %vm644
      %v646 = vrot.slane %v641, 7
      %v647 = vrot.slane %v646, 4
      %v648 = vrot.slane %v642, 7
      %v649 = vsel %vm645, %v647, %v648
      %v650 = vrot.slane %v648, 4
      %vm651 = vcmp.ne.s16.totalorder %v646, 0
      %vm652 = vcmp.ne.s16.totalorder %v649, 0
      %vm653 = vcmp.ne.s16.totalorder %v650, 0
      %v654 = vsel %vm651, %v632, 0
      %v655 = vsel %vm652, %v495, 0
      %v656 = vsel %vm653, %v507, 0
      %s657 = scalar_lea.vmem %s5, 4
      %v658 = vld [vmem:[%s657] sm:$0x3]
      %v662 = vunpack.c.l.b16 %v654
      %v663 = vunpack.c.l.b16 %v655
      %v664 = vunpack.c.l.b16 %v656
      %v665 = vpack.c.b16 %v663, %v662
      %v666 = vpack.c.b16 %v664, %v664
      %vm667 = vcmask 1046528
      %v668 = vrot.slane %v665, 1
      %v669 = vrot.slane %v666, 1
      %v670 = vsel %vm667, %v668, %v669
      %v672 = vsel %vm531, %v670, 0
      %v675 = vsel %vm535, %v658, 0
      %677 = vmatprep.subr.bf16.mxu0 0
      %678 = vmatpush1.bf16.msra.mxu0 %v675
      %679 = vmatprep.subr.bf16.mxu0 0
      %680 = vmatpush1.bf16.msra.mxu0 0
      %681 = vmatprep.subr.bf16.mxu0 0
      %682 = vmatpush1.bf16.msra.mxu0 0
      %683 = vmatprep.subr.bf16.mxu0 0
      %684 = vmatpush1.bf16.msra.mxu0 0
      %685 = vmatprep.subr.bf16.mxu0 0
      %686 = vmatpush1.bf16.msra.mxu0 0
      %687 = vmatprep.subr.bf16.mxu0 0
      %688 = vmatpush1.bf16.msra.mxu0 0
      %689 = vmatprep.subr.bf16.mxu0 0
      %690 = vmatpush1.bf16.msra.mxu0 0
      %691 = vmatprep.subr.bf16.mxu0 0
      %692 = vmatpush1.bf16.msra.mxu0 0
      %693 = vmatprep.subr.bf16.mxu0 0
      %694 = vmatpush1.bf16.msra.mxu0 0
      %695 = vmatprep.subr.bf16.mxu0 0
      %696 = vmatpush1.bf16.msra.mxu0 0
      %697 = vmatprep.subr.bf16.mxu0 0
      %698 = vmatpush1.bf16.msra.mxu0 0
      %699 = vmatprep.subr.bf16.mxu0 0
      %700 = vmatpush1.bf16.msra.mxu0 0
      %701 = vmatprep.subr.bf16.mxu0 0
      %702 = vmatpush1.bf16.msra.mxu0 0
      %703 = vmatprep.subr.bf16.mxu0 0
      %704 = vmatpush1.bf16.msra.mxu0 0
      %705 = vmatprep.subr.bf16.mxu0 0
      %706 = vmatpush1.bf16.msra.mxu0 0
      %707 = vmatprep.subr.bf16.mxu0 0
      %708 = vmatpush1.bf16.msra.mxu0 0
      %709 = vmatprep.mubr.bf16.mxu0 0
      %710 = vmatmul.mubr.bf16.gmra.mrb[0].mxu0 %v672
      %v711 = vpop.f32.mrb[0].mxu0
      %v712 = vadd.f32 0.0, %v711
      %v713 = vpop.f32.mrb[0].mxu0
      %v714 = vpop.f32.mrb[0].mxu0
      %v715 = vadd.f32 0.0, %v714
      %v716 = vpop.f32.mrb[0].mxu0
      %717 = vdwg.mxu0
      %v718 = vadd.f32 %v626, %v712
      %v719 = vadd.f32 %v629, %v715
      %v720 = vld [vmem:[#allocation2] sm:$0xc]
      %v721 = vld [vmem:[#allocation2 + $0x8] sm:$0x3]
      %v722 = vsel %vm502, 65537, 0
      %v723 = vsel %vm503, 65537, 0
      %vm724 = vcmask 1041408
      %vm725 = vcmask 1045508
      %vm726 = vmor %vm724, %vm725
      %v727 = vrot.slane %v722, 6
      %v728 = vrot.slane %v727, 4
      %v729 = vrot.slane %v723, 6
      %v730 = vsel %vm726, %v728, %v729
      %v731 = vrot.slane %v729, 4
      %vm732 = vcmp.ne.s16.totalorder %v727, 0
      %vm733 = vcmp.ne.s16.totalorder %v730, 0
      %vm734 = vcmp.ne.s16.totalorder %v731, 0
      %v735 = vsel %vm732, %v720, 0
      %v736 = vsel %vm733, %v495, 0
      %v737 = vsel %vm734, %v721, 0
      %s738 = scalar_lea.vmem %s5, 6
      %v739 = vld [vmem:[%s738] sm:$0x3]
      %v743 = vunpack.c.l.b16 %v735
      %v744 = vunpack.c.l.b16 %v736
      %v745 = vunpack.c.l.b16 %v737
      %v746 = vpack.c.b16 %v744, %v743
      %v747 = vpack.c.b16 %v745, %v745
      %vm748 = vcmask 1045504
      %v749 = vrot.slane %v746, 2
      %v750 = vrot.slane %v747, 2
      %v751 = vsel %vm748, %v749, %v750
      %v753 = vsel %vm531, %v751, 0
      %v756 = vsel %vm535, %v739, 0
      %758 = vmatprep.subr.bf16.mxu0 0
      %759 = vmatpush1.bf16.msra.mxu0 %v756
      %760 = vmatprep.subr.bf16.mxu0 0
      %761 = vmatpush1.bf16.msra.mxu0 0
      %762 = vmatprep.subr.bf16.mxu0 0
      %763 = vmatpush1.bf16.msra.mxu0 0
      %764 = vmatprep.subr.bf16.mxu0 0
      %765 = vmatpush1.bf16.msra.mxu0 0
      %766 = vmatprep.subr.bf16.mxu0 0
      %767 = vmatpush1.bf16.msra.mxu0 0
      %768 = vmatprep.subr.bf16.mxu0 0
      %769 = vmatpush1.bf16.msra.mxu0 0
      %770 = vmatprep.subr.bf16.mxu0 0
      %771 = vmatpush1.bf16.msra.mxu0 0
      %772 = vmatprep.subr.bf16.mxu0 0
      %773 = vmatpush1.bf16.msra.mxu0 0
      %774 = vmatprep.subr.bf16.mxu0 0
      %775 = vmatpush1.bf16.msra.mxu0 0
      %776 = vmatprep.subr.bf16.mxu0 0
      %777 = vmatpush1.bf16.msra.mxu0 0
      %778 = vmatprep.subr.bf16.mxu0 0
      %779 = vmatpush1.bf16.msra.mxu0 0
      %780 = vmatprep.subr.bf16.mxu0 0
      %781 = vmatpush1.bf16.msra.mxu0 0
      %782 = vmatprep.subr.bf16.mxu0 0
      %783 = vmatpush1.bf16.msra.mxu0 0
      %784 = vmatprep.subr.bf16.mxu0 0
      %785 = vmatpush1.bf16.msra.mxu0 0
      %786 = vmatprep.subr.bf16.mxu0 0
      %787 = vmatpush1.bf16.msra.mxu0 0
      %788 = vmatprep.subr.bf16.mxu0 0
      %789 = vmatpush1.bf16.msra.mxu0 0
      %790 = vmatprep.mubr.bf16.mxu0 0
      %791 = vmatmul.mubr.bf16.gmra.mrb[0].mxu0 %v753
      %v792 = vpop.f32.mrb[0].mxu0
      %v793 = vadd.f32 0.0, %v792
      %v794 = vpop.f32.mrb[0].mxu0
      %v795 = vpop.f32.mrb[0].mxu0
      %v796 = vadd.f32 0.0, %v795
      %v797 = vpop.f32.mrb[0].mxu0
      %798 = vdwg.mxu0
      %v799 = vadd.f32 %v718, %v793
      %v800 = vadd.f32 %v719, %v796
      %v801 = vld [vmem:[#allocation2 + $0x8] sm:$0x7]
      %s802 = scalar_lea.vmem %s5, 8
      %v803 = vld [vmem:[%s802] sm:$0x3]
      %v806 = vunpack.c.l.b16 %v720
      %v807 = vunpack.c.l.b16 %v801
      %v808 = vpack.c.b16 %v514, %v806
      %v809 = vpack.c.b16 %v807, %v807
      %vm810 = vsmask.f32 5376
      %v812 = vshrl.u32 %v808, 16
      %v814 = vrot.slane %v812, 2
      %v815 = vshll.u32 %v808, 16
      %v817 = vrot.slane %v815, 3
      %v818 = vor.u32 %v814, %v817
      %v820 = vshrl.u32 %v809, 16
      %v822 = vrot.slane %v820, 2
      %v823 = vshll.u32 %v809, 16
      %v825 = vrot.slane %v823, 3
      %v826 = vor.u32 %v822, %v825
      %v827 = vsel %vm810, %v818, %v826
      %v829 = vsel %vm531, %v827, 0
      %v832 = vsel %vm535, %v803, 0
      %834 = vmatprep.subr.bf16.mxu0 0
      %835 = vmatpush1.bf16.msra.mxu0 %v832
      %836 = vmatprep.subr.bf16.mxu0 0
      %837 = vmatpush1.bf16.msra.mxu0 0
      %838 = vmatprep.subr.bf16.mxu0 0
      %839 = vmatpush1.bf16.msra.mxu0 0
      %840 = vmatprep.subr.bf16.mxu0 0
      %841 = vmatpush1.bf16.msra.mxu0 0
      %842 = vmatprep.subr.bf16.mxu0 0
      %843 = vmatpush1.bf16.msra.mxu0 0
      %844 = vmatprep.subr.bf16.mxu0 0
      %845 = vmatpush1.bf16.msra.mxu0 0
      %846 = vmatprep.subr.bf16.mxu0 0
      %847 = vmatpush1.bf16.msra.mxu0 0
      %848 = vmatprep.subr.bf16.mxu0 0
      %849 = vmatpush1.bf16.msra.mxu0 0
      %850 = vmatprep.subr.bf16.mxu0 0
      %851 = vmatpush1.bf16.msra.mxu0 0
      %852 = vmatprep.subr.bf16.mxu0 0
      %853 = vmatpush1.bf16.msra.mxu0 0
      %854 = vmatprep.subr.bf16.mxu0 0
      %855 = vmatpush1.bf16.msra.mxu0 0
      %856 = vmatprep.subr.bf16.mxu0 0
      %857 = vmatpush1.bf16.msra.mxu0 0
      %858 = vmatprep.subr.bf16.mxu0 0
      %859 = vmatpush1.bf16.msra.mxu0 0
      %860 = vmatprep.subr.bf16.mxu0 0
      %861 = vmatpush1.bf16.msra.mxu0 0
      %862 = vmatprep.subr.bf16.mxu0 0
      %863 = vmatpush1.bf16.msra.mxu0 0
      %864 = vmatprep.subr.bf16.mxu0 0
      %865 = vmatpush1.bf16.msra.mxu0 0
      %866 = vmatprep.mubr.bf16.mxu0 0
      %867 = vmatmul.mubr.bf16.gmra.mrb[0].mxu0 %v829
      %v868 = vpop.f32.mrb[0].mxu0
      %v869 = vadd.f32 0.0, %v868
      %v870 = vpop.f32.mrb[0].mxu0
      %v871 = vpop.f32.mrb[0].mxu0
      %v872 = vadd.f32 0.0, %v871
      %v873 = vpop.f32.mrb[0].mxu0
      %874 = vdwg.mxu0
      %v875 = vadd.f32 %v799, %v869
      %v876 = vadd.f32 %v800, %v872
      %v877 = vld [vmem:[#allocation2] sm:$0x8]
      %vm878 = vcmask 1042432
      %vm879 = vcmask 1046532
      %vm880 = vmor %vm878, %vm879
      %v881 = vrot.slane %v641, 5
      %v882 = vrot.slane %v881, 4
      %v883 = vrot.slane %v642, 5
      %v884 = vsel %vm880, %v882, %v883
      %v885 = vrot.slane %v883, 4
      %vm886 = vcmp.ne.s16.totalorder %v881, 0
      %vm887 = vcmp.ne.s16.totalorder %v884, 0
      %vm888 = vcmp.ne.s16.totalorder %v885, 0
      %v889 = vsel %vm886, %v877, 0
      %v890 = vsel %vm887, %v495, 0
      %v891 = vsel %vm888, %v801, 0
      %s892 = scalar_lea.vmem %s5, 10
      %v893 = vld [vmem:[%s892] sm:$0x3]
      %v897 = vunpack.c.l.b16 %v889
      %v898 = vunpack.c.l.b16 %v890
      %v899 = vunpack.c.l.b16 %v891
      %v900 = vpack.c.b16 %v898, %v897
      %v901 = vpack.c.b16 %v899, %v899
      %vm902 = vcmask 1044480
      %v903 = vrot.slane %v900, 3
      %v904 = vrot.slane %v901, 3
      %v905 = vsel %vm902, %v903, %v904
      %v907 = vsel %vm531, %v905, 0
      %v910 = vsel %vm535, %v893, 0
      %912 = vmatprep.subr.bf16.mxu0 0
      %913 = vmatpush1.bf16.msra.mxu0 %v910
      %914 = vmatprep.subr.bf16.mxu0 0
      %915 = vmatpush1.bf16.msra.mxu0 0
      %916 = vmatprep.subr.bf16.mxu0 0
      %917 = vmatpush1.bf16.msra.mxu0 0
      %918 = vmatprep.subr.bf16.mxu0 0
      %919 = vmatpush1.bf16.msra.mxu0 0
      %920 = vmatprep.subr.bf16.mxu0 0
      %921 = vmatpush1.bf16.msra.mxu0 0
      %922 = vmatprep.subr.bf16.mxu0 0
      %923 = vmatpush1.bf16.msra.mxu0 0
      %924 = vmatprep.subr.bf16.mxu0 0
      %925 = vmatpush1.bf16.msra.mxu0 0
      %926 = vmatprep.subr.bf16.mxu0 0
      %927 = vmatpush1.bf16.msra.mxu0 0
      %928 = vmatprep.subr.bf16.mxu0 0
      %929 = vmatpush1.bf16.msra.mxu0 0
      %930 = vmatprep.subr.bf16.mxu0 0
      %931 = vmatpush1.bf16.msra.mxu0 0
      %932 = vmatprep.subr.bf16.mxu0 0
      %933 = vmatpush1.bf16.msra.mxu0 0
      %934 = vmatprep.subr.bf16.mxu0 0
      %935 = vmatpush1.bf16.msra.mxu0 0
      %936 = vmatprep.subr.bf16.mxu0 0
      %937 = vmatpush1.bf16.msra.mxu0 0
      %938 = vmatprep.subr.bf16.mxu0 0
      %939 = vmatpush1.bf16.msra.mxu0 0
      %940 = vmatprep.subr.bf16.mxu0 0
      %941 = vmatpush1.bf16.msra.mxu0 0
      %942 = vmatprep.subr.bf16.mxu0 0
      %943 = vmatpush1.bf16.msra.mxu0 0
      %944 = vmatprep.mubr.bf16.mxu0 0
      %945 = vmatmul.mubr.bf16.gmra.mrb[0].mxu0 %v907
      %v946 = vpop.f32.mrb[0].mxu0
      %v947 = vadd.f32 0.0, %v946
      %v948 = vpop.f32.mrb[0].mxu0
      %v949 = vpop.f32.mrb[0].mxu0
      %v950 = vadd.f32 0.0, %v949
      %v951 = vpop.f32.mrb[0].mxu0
      %952 = vdwg.mxu0
      %v953 = vadd.f32 %v875, %v947
      %v954 = vadd.f32 %v876, %v950
      %v955 = vld [vmem:[#allocation2 + $0x8] sm:$0xf]
      %v956 = vsel %vm502, %v495, 0
      %v957 = vsel %vm503, %v955, 0
      %s958 = scalar_lea.vmem %s5, 12
      %v959 = vld [vmem:[%s958] sm:$0x3]
      %v962 = vunpack.c.l.b16 %v956
      %v963 = vunpack.c.l.b16 %v957
      %v964 = vpack.c.b16 %v963, %v962
      %v966 = vsel %vm531, %v964, 0
      %v969 = vsel %vm535, %v959, 0
      %971 = vmatprep.subr.bf16.mxu0 0
      %972 = vmatpush1.bf16.msra.mxu0 %v969
      %973 = vmatprep.subr.bf16.mxu0 0
      %974 = vmatpush1.bf16.msra.mxu0 0
      %975 = vmatprep.subr.bf16.mxu0 0
      %976 = vmatpush1.bf16.msra.mxu0 0
      %977 = vmatprep.subr.bf16.mxu0 0
      %978 = vmatpush1.bf16.msra.mxu0 0
      %979 = vmatprep.subr.bf16.mxu0 0
      %980 = vmatpush1.bf16.msra.mxu0 0
      %981 = vmatprep.subr.bf16.mxu0 0
      %982 = vmatpush1.bf16.msra.mxu0 0
      %983 = vmatprep.subr.bf16.mxu0 0
      %984 = vmatpush1.bf16.msra.mxu0 0
      %985 = vmatprep.subr.bf16.mxu0 0
      %986 = vmatpush1.bf16.msra.mxu0 0
      %987 = vmatprep.subr.bf16.mxu0 0
      %988 = vmatpush1.bf16.msra.mxu0 0
      %989 = vmatprep.subr.bf16.mxu0 0
      %990 = vmatpush1.bf16.msra.mxu0 0
      %991 = vmatprep.subr.bf16.mxu0 0
      %992 = vmatpush1.bf16.msra.mxu0 0
      %993 = vmatprep.subr.bf16.mxu0 0
      %994 = vmatpush1.bf16.msra.mxu0 0
      %995 = vmatprep.subr.bf16.mxu0 0
      %996 = vmatpush1.bf16.msra.mxu0 0
      %997 = vmatprep.subr.bf16.mxu0 0
      %998 = vmatpush1.bf16.msra.mxu0 0
      %999 = vmatprep.subr.bf16.mxu0 0
      %1000 = vmatpush1.bf16.msra.mxu0 0
      %1001 = vmatprep.subr.bf16.mxu0 0
      %1002 = vmatpush1.bf16.msra.mxu0 0
      %1003 = vmatprep.mubr.bf16.mxu0 0
      %1004 = vmatmul.mubr.bf16.gmra.mrb[0].mxu0 %v966
      %v1005 = vpop.f32.mrb[0].mxu0
      %v1006 = vadd.f32 0.0, %v1005
      %v1007 = vpop.f32.mrb[0].mxu0
      %v1008 = vpop.f32.mrb[0].mxu0
      %v1009 = vadd.f32 0.0, %v1008
      %v1010 = vpop.f32.mrb[0].mxu0
      %1011 = vdwg.mxu0
      %v1012 = vadd.f32 %v953, %v1006
      %v1013 = vadd.f32 %v954, %v1009
      %v1014 = vld [vmem:[#allocation2 + $0x4] sm:$0xf]
      %v1015 = vld [vmem:[#allocation2 + $0x8] sm:$0xf]
      %v1016 = vld [vmem:[#allocation2 + $0xc] sm:$0x1]
      %s1017 = scalar_lea.vmem %s5, 14
      %v1018 = vld [vmem:[%s1017] sm:$0x3]
      %v1022 = vunpack.c.l.b16 %v1014
      %v1023 = vunpack.c.l.b16 %v1015
      %v1024 = vunpack.c.l.b16 %v1016
      %v1025 = vpack.c.b16 %v1023, %v1022
      %v1026 = vpack.c.b16 %v1024, %v1024
      %v1028 = vshrl.u32 %v1025, 16
      %v1030 = vshll.u32 %v1025, 16
      %v1032 = vrot.slane %v1030, 1
      %v1033 = vor.u32 %v1028, %v1032
      %v1035 = vshll.u32 %v1026, 16
      %v1037 = vrot.slane %v1035, 1
      %v1038 = vsel %vm518, %v1033, %v1037
      %v1040 = vsel %vm531, %v1038, 0
      %v1043 = vsel %vm535, %v1018, 0
      %1045 = vmatprep.subr.bf16.mxu0 0
      %1046 = vmatpush1.bf16.msra.mxu0 %v1043
      %1047 = vmatprep.subr.bf16.mxu0 0
      %1048 = vmatpush1.bf16.msra.mxu0 0
      %1049 = vmatprep.subr.bf16.mxu0 0
      %1050 = vmatpush1.bf16.msra.mxu0 0
      %1051 = vmatprep.subr.bf16.mxu0 0
      %1052 = vmatpush1.bf16.msra.mxu0 0
      %1053 = vmatprep.subr.bf16.mxu0 0
      %1054 = vmatpush1.bf16.msra.mxu0 0
      %1055 = vmatprep.subr.bf16.mxu0 0
      %1056 = vmatpush1.bf16.msra.mxu0 0
      %1057 = vmatprep.subr.bf16.mxu0 0
      %1058 = vmatpush1.bf16.msra.mxu0 0
      %1059 = vmatprep.subr.bf16.mxu0 0
      %1060 = vmatpush1.bf16.msra.mxu0 0
      %1061 = vmatprep.subr.bf16.mxu0 0
      %1062 = vmatpush1.bf16.msra.mxu0 0
      %1063 = vmatprep.subr.bf16.mxu0 0
      %1064 = vmatpush1.bf16.msra.mxu0 0
      %1065 = vmatprep.subr.bf16.mxu0 0
      %1066 = vmatpush1.bf16.msra.mxu0 0
      %1067 = vmatprep.subr.bf16.mxu0 0
      %1068 = vmatpush1.bf16.msra.mxu0 0
      %1069 = vmatprep.subr.bf16.mxu0 0
      %1070 = vmatpush1.bf16.msra.mxu0 0
      %1071 = vmatprep.subr.bf16.mxu0 0
      %1072 = vmatpush1.bf16.msra.mxu0 0
      %1073 = vmatprep.subr.bf16.mxu0 0
      %1074 = vmatpush1.bf16.msra.mxu0 0
      %1075 = vmatprep.subr.bf16.mxu0 0
      %1076 = vmatpush1.bf16.msra.mxu0 0
      %1077 = vmatprep.mubr.bf16.mxu0 0
      %1078 = vmatmul.mubr.bf16.gmra.mrb[0].mxu0 %v1040
      %v1079 = vpop.f32.mrb[0].mxu0
      %v1080 = vadd.f32 0.0, %v1079
      %v1081 = vpop.f32.mrb[0].mxu0
      %v1082 = vpop.f32.mrb[0].mxu0
      %v1083 = vadd.f32 0.0, %v1082
      %v1084 = vpop.f32.mrb[0].mxu0
      %1085 = vdwg.mxu0
      %v1086 = vadd.f32 %v1012, %v1080
      %v1087 = vadd.f32 %v1013, %v1083
      %v1088 = vld [vmem:[#allocation2 + $0x4] sm:$0xe]
      %v1089 = vsel %vm651, %v1088, 0
      %v1090 = vsel %vm652, %v1015, 0
      %v1091 = vsel %vm653, %v1016, 0
      %s1092 = scalar_lea.vmem %s5, 16
      %v1093 = vld [vmem:[%s1092] sm:$0x3]
      %v1097 = vunpack.c.l.b16 %v1089
      %v1098 = vunpack.c.l.b16 %v1090
      %v1099 = vunpack.c.l.b16 %v1091
      %v1100 = vpack.c.b16 %v1098, %v1097
      %v1101 = vpack.c.b16 %v1099, %v1099
      %v1102 = vrot.slane %v1100, 1
      %v1103 = vrot.slane %v1101, 1
      %v1104 = vsel %vm667, %v1102, %v1103
      %v1106 = vsel %vm531, %v1104, 0
      %v1109 = vsel %vm535, %v1093, 0
      %1111 = vmatprep.subr.bf16.mxu0 0
      %1112 = vmatpush1.bf16.msra.mxu0 %v1109
      %1113 = vmatprep.subr.bf16.mxu0 0
      %1114 = vmatpush1.bf16.msra.mxu0 0
      %1115 = vmatprep.subr.bf16.mxu0 0
      %1116 = vmatpush1.bf16.msra.mxu0 0
      %1117 = vmatprep.subr.bf16.mxu0 0
      %1118 = vmatpush1.bf16.msra.mxu0 0
      %1119 = vmatprep.subr.bf16.mxu0 0
      %1120 = vmatpush1.bf16.msra.mxu0 0
      %1121 = vmatprep.subr.bf16.mxu0 0
      %1122 = vmatpush1.bf16.msra.mxu0 0
      %1123 = vmatprep.subr.bf16.mxu0 0
      %1124 = vmatpush1.bf16.msra.mxu0 0
      %1125 = vmatprep.subr.bf16.mxu0 0
      %1126 = vmatpush1.bf16.msra.mxu0 0
      %1127 = vmatprep.subr.bf16.mxu0 0
      %1128 = vmatpush1.bf16.msra.mxu0 0
      %1129 = vmatprep.subr.bf16.mxu0 0
      %1130 = vmatpush1.bf16.msra.mxu0 0
      %1131 = vmatprep.subr.bf16.mxu0 0
      %1132 = vmatpush1.bf16.msra.mxu0 0
      %1133 = vmatprep.subr.bf16.mxu0 0
      %1134 = vmatpush1.bf16.msra.mxu0 0
      %1135 = vmatprep.subr.bf16.mxu0 0
      %1136 = vmatpush1.bf16.msra.mxu0 0
      %1137 = vmatprep.subr.bf16.mxu0 0
      %1138 = vmatpush1.bf16.msra.mxu0 0
      %1139 = vmatprep.subr.bf16.mxu0 0
      %1140 = vmatpush1.bf16.msra.mxu0 0
      %1141 = vmatprep.subr.bf16.mxu0 0
      %1142 = vmatpush1.bf16.msra.mxu0 0
      %1143 = vmatprep.mubr.bf16.mxu0 0
      %1144 = vmatmul.mubr.bf16.gmra.mrb[0].mxu0 %v1106
      %v1145 = vpop.f32.mrb[0].mxu0
      %v1146 = vadd.f32 0.0, %v1145
      %v1147 = vpop.f32.mrb[0].mxu0
      %v1148 = vpop.f32.mrb[0].mxu0
      %v1149 = vadd.f32 0.0, %v1148
      %v1150 = vpop.f32.mrb[0].mxu0
      %1151 = vdwg.mxu0
      %v1152 = vadd.f32 %v1086, %v1146
      %v1153 = vadd.f32 %v1087, %v1149
      %v1154 = vld [vmem:[%s6] sm:$0x1]
      %v1156 = vlaneseq
      %v1157 = vshrl.u32 %v1156, 7
      %v1158 = vsub.s32 0, %v1157
      %v1159 = vrot.slane %v1154, %v1158
      %v1161 = vadd.f32 %v1152, %v1159
      %v1162 = vadd.f32 %v1153, %v1159
      %v1163 = vmax.f32 %v1161, 0.0
      %v1164 = vmax.f32 %v1162, 0.0
      %v1165 = vpack.c.bf16 %v1164, %v1163
      %v1166 = vld [vmem:[%s7] sm:$0x3]
      %v1167 = vld [vmem:[%s8] sm:$0x1]
      %v1169 = vlaneseq
      %v1170 = vshrl.u32 %v1169, 7
      %v1171 = vsub.s32 0, %v1170
      %v1172 = vrot.slane %v1167, %v1171
      %v1175 = vsel %vm531, %v1165, 0
      %v1178 = vsel %vm535, %v1166, 0
      %1180 = vmatprep.subr.bf16.mxu0 0
      %1181 = vmatpush1.bf16.msra.mxu0 %v1178
      %1182 = vmatprep.subr.bf16.mxu0 0
      %1183 = vmatpush1.bf16.msra.mxu0 0
      %1184 = vmatprep.subr.bf16.mxu0 0
      %1185 = vmatpush1.bf16.msra.mxu0 0
      %1186 = vmatprep.subr.bf16.mxu0 0
      %1187 = vmatpush1.bf16.msra.mxu0 0
      %1188 = vmatprep.subr.bf16.mxu0 0
      %1189 = vmatpush1.bf16.msra.mxu0 0
      %1190 = vmatprep.subr.bf16.mxu0 0
      %1191 = vmatpush1.bf16.msra.mxu0 0
      %1192 = vmatprep.subr.bf16.mxu0 0
      %1193 = vmatpush1.bf16.msra.mxu0 0
      %1194 = vmatprep.subr.bf16.mxu0 0
      %1195 = vmatpush1.bf16.msra.mxu0 0
      %1196 = vmatprep.subr.bf16.mxu0 0
      %1197 = vmatpush1.bf16.msra.mxu0 0
      %1198 = vmatprep.subr.bf16.mxu0 0
      %1199 = vmatpush1.bf16.msra.mxu0 0
      %1200 = vmatprep.subr.bf16.mxu0 0
      %1201 = vmatpush1.bf16.msra.mxu0 0
      %1202 = vmatprep.subr.bf16.mxu0 0
      %1203 = vmatpush1.bf16.msra.mxu0 0
      %1204 = vmatprep.subr.bf16.mxu0 0
      %1205 = vmatpush1.bf16.msra.mxu0 0
      %1206 = vmatprep.subr.bf16.mxu0 0
      %1207 = vmatpush1.bf16.msra.mxu0 0
      %1208 = vmatprep.subr.bf16.mxu0 0
      %1209 = vmatpush1.bf16.msra.mxu0 0
      %1210 = vmatprep.subr.bf16.mxu0 0
      %1211 = vmatpush1.bf16.msra.mxu0 0
      %1212 = vmatprep.mubr.bf16.mxu0 0
      %1213 = vmatmul.mubr.bf16.gmra.mrb[0].mxu0 %v1175
      %v1214 = vpop.f32.mrb[0].mxu0
      %v1215 = vadd.f32 %v1172, %v1214
      %v1216 = vpop.f32.mrb[0].mxu0
      %v1217 = vpop.f32.mrb[0].mxu0
      %v1218 = vadd.f32 %v1172, %v1217
      %v1219 = vpop.f32.mrb[0].mxu0
      %1220 = vdwg.mxu0
      %v1221 = vadd.f32 %v1215, %v336
      %v1222 = vadd.f32 %v1218, %v337
      %1223 = vst.msk [vmem:[%s332] sm:$0xff] %vm367, %v1221
      %1224 = vst.msk [vmem:[%s332 + $0x8] sm:$0xff] %vm367, %v1222
      %p1225 = scmp.lt.s32.totalorder %s20, 1
      %s1226 = scalar_select %p1225, %s20, 1
      %s1227 = smul.addr %s1226, 2
      %s1228 = smul.addr %s1227, 8
      %s1229 = scalar_lea.vmem %s9, %s1228
      // Predicated region
      $region57: #{hourglass_forward.16} parent=55 // pred_check
        %p1230 = pneg %p232
      $region58: #{hourglass_forward.16} parent=55 // pred_check_branch
        %1232 = sbr.rel (%p1230) target = $region60
      $region59: #{hourglass_forward.16} parent=55 // pred_region
        _
      $region60: #{hourglass_forward.16} parent=55 // pred_fallthru
        _
    $region56: #{hourglass_forward.16} parent=5 // pred_fallthru
      _
    %p1233 = scmp.le.s32.totalorder 2, %s15
    // Predicated region
    $region61: #{hourglass_forward.16} parent=5 // pred_check
      %p1234 = pneg %p1233
    $region62: #{hourglass_forward.16} parent=5 // pred_check_branch
      %1236 = sbr.rel (%p1234) target = $region64
    $region63: #{hourglass_forward.16} parent=5 // pred_region
      %s1237 = ssub.s32 %s15, 2
      // Predicated region
      $region65: #{hourglass_forward.16} parent=63 // pred_check
        %p1238 = pneg %p238
      $region66: #{hourglass_forward.16} parent=63 // pred_check_branch
        %1240 = sbr.rel (%p1238) target = $region68
      $region67: #{hourglass_forward.16} parent=63 // pred_region
        %p1241 = scmp.lt.s32.totalorder %s21, 1
        %s1242 = scalar_select %p1241, %s21, 1
        %s1243 = smul.addr %s1242, 2
        %s1244 = smul.addr %s1243, 8
        %s1245 = scalar_lea.vmem %s9, %s1244
      $region68: #{hourglass_forward.16} parent=63 // pred_fallthru
        _
    $region64: #{hourglass_forward.16} parent=5 // pred_fallthru
      _
  $region6: #{hourglass_forward.16} parent=0 // loop_footer
    %s19 = sadd.s32 1, %s15
  $region7: #{hourglass_forward.16} parent=0 // loop_footer_branch
    %14 = sbr.rel target = $region3
  $region8: #{hourglass_forward.16} parent=0 // loop_exit
    _

// kernel: hourglass_forward.21
$region0: #{hourglass_forward.21}
  #allocation0 [shape = 'u32[]', space=smem, size = 0x4, offset = 0x4, fixed_abs, tag = 'smem constant byte address 0x4 - core index']
  #allocation1 [shape = 'u32[144,128]{1,0:T(1,128)}', space=vmem, size = 0x12000, scoped, tag = 'internal scratch']
  %s0 = inlined_call_operand.vmem [shape: f32[16,2,8,16], index: 0, kind: input, shape index: {}]
  %s1 = inlined_call_operand.vmem [shape: f32[16,8,8], index: 1, kind: input, shape index: {}]
  %s2 = inlined_call_operand.vmem [shape: f32[16,2,8,16], index: 2, kind: output, shape index: {}]
  %s3 = sld [smem:[#allocation0]]
  $region41: #{hourglass_forward.21} parent=0
    _
  %s5 = ssub.s32 1, %s3
  %s6 = scalar_select 0, %s5, %s3
  loop: start=0, step=1, limit=4
  $region2: #{hourglass_forward.21} parent=0 // loop_pre_header
    _
  $region3: #{hourglass_forward.21} parent=0 // loop_header
    %s8 = sphi 0, %s12
    %p9 = scmp.ge.s32.totalorder %s8, 4
    %s18 = sphi 0, %s20
    %s21 = sphi 0, %s18
    %s22 = sphi 0, %s21
    %s38 = sphi 0, %s22
    %s44 = sphi 0, %s46
    %s47 = sphi 0, %s44
    %s48 = sphi 0, %s47
    %s64 = sphi 0, %s48
    %s70 = sphi 0, %s72
    %s73 = sphi 0, %s70
    %s74 = sphi 0, %s73
    %s90 = sphi 0, %s74
  $region4: #{hourglass_forward.21} parent=0 // loop_header_branch
    %11 = sbr.rel (%p9) target = $region8
  $region5: #{hourglass_forward.21} parent=0 // loop_body
    %s13 = ssub.s32 %s8, 1
    %s14 = ssub.s32 %s8, 2
    %s15 = sadd.s32 %s8, 1
    %s16 = ssub.s32 %s8, %s15
    %p17 = scmp.eq.s32.totalorder %s16, 0
    %s19 = sadd.s32 %s18, 1
    %s20 = scalar_select %p17, %s18, %s19
    %p23 = pneg %p17
    %p24 = scmp.eq.s32.totalorder %s8, 1
    %p25 = por %p23, %p24
    %p26 = scmp.ne.s32.totalorder %s18, %s21
    %p27 = scmp.eq.s32.totalorder %s8, 0
    %p28 = por %p26, %p27
    %p29 = scmp.ne.s32.totalorder %s18, %s21
    %p30 = scmp.eq.s32.totalorder %s13, 1
    %p31 = por %p29, %p30
    %p32 = scmp.ne.s32.totalorder %s21, %s22
    %p33 = scmp.eq.s32.totalorder %s13, 0
    %p34 = por %p32, %p33
    %p35 = scmp.ne.s32.totalorder %s21, %s22
    %p36 = scmp.eq.s32.totalorder %s14, 1
    %p37 = por %p35, %p36
    %p39 = scmp.ne.s32.totalorder %s22, %s38
    %p40 = scmp.eq.s32.totalorder %s14, 0
    %p41 = por %p39, %p40
    %s42 = ssub.s32 %s8, %s15
    %p43 = scmp.eq.s32.totalorder %s42, 0
    %s45 = sadd.s32 %s44, 1
    %s46 = scalar_select %p43, %s44, %s45
    %p49 = pneg %p43
    %p50 = scmp.eq.s32.totalorder %s8, 1
    %p51 = por %p49, %p50
    %p52 = scmp.ne.s32.totalorder %s44, %s47
    %p53 = scmp.eq.s32.totalorder %s8, 0
    %p54 = por %p52, %p53
    %p55 = scmp.ne.s32.totalorder %s44, %s47
    %p56 = scmp.eq.s32.totalorder %s13, 1
    %p57 = por %p55, %p56
    %p58 = scmp.ne.s32.totalorder %s47, %s48
    %p59 = scmp.eq.s32.totalorder %s13, 0
    %p60 = por %p58, %p59
    %p61 = scmp.ne.s32.totalorder %s47, %s48
    %p62 = scmp.eq.s32.totalorder %s14, 1
    %p63 = por %p61, %p62
    %p65 = scmp.ne.s32.totalorder %s48, %s64
    %p66 = scmp.eq.s32.totalorder %s14, 0
    %p67 = por %p65, %p66
    %s68 = ssub.s32 %s8, %s15
    %p69 = scmp.eq.s32.totalorder %s68, 0
    %s71 = sadd.s32 %s70, 1
    %s72 = scalar_select %p69, %s70, %s71
    %p75 = pneg %p69
    %p76 = scmp.eq.s32.totalorder %s8, 1
    %p77 = por %p75, %p76
    %p78 = scmp.ne.s32.totalorder %s70, %s73
    %p79 = scmp.eq.s32.totalorder %s8, 0
    %p80 = por %p78, %p79
    %p81 = scmp.ne.s32.totalorder %s70, %s73
    %p82 = scmp.eq.s32.totalorder %s13, 1
    %p83 = por %p81, %p82
    %p84 = scmp.ne.s32.totalorder %s73, %s74
    %p85 = scmp.eq.s32.totalorder %s13, 0
    %p86 = por %p84, %p85
    %p87 = scmp.ne.s32.totalorder %s73, %s74
    %p88 = scmp.eq.s32.totalorder %s14, 1
    %p89 = por %p87, %p88
    %p91 = scmp.ne.s32.totalorder %s74, %s90
    %p92 = scmp.eq.s32.totalorder %s14, 0
    %p93 = por %p91, %p92
    %p94 = scmp.le.s32.totalorder 1, %s8
    %p95 = scmp.lt.s32.totalorder %s8, 3
    %p96 = pnand %p94, %p95
    %p97 = pneg %p96
    // Predicated region
    $region9: #{hourglass_forward.21} parent=5 // pred_check
      _
    $region10: #{hourglass_forward.21} parent=5 // pred_check_branch
      %99 = sbr.rel (%p96) target = $region12
    $region11: #{hourglass_forward.21} parent=5 // pred_region
      %s100 = ssub.s32 %s8, 1
    $region12: #{hourglass_forward.21} parent=5 // pred_fallthru
      _
    %p101 = scmp.lt.s32.totalorder %s8, 2
    // Predicated region
    $region13: #{hourglass_forward.21} parent=5 // pred_check
      %p102 = pneg %p101
    $region14: #{hourglass_forward.21} parent=5 // pred_check_branch
      %104 = sbr.rel (%p102) target = $region16
    $region15: #{hourglass_forward.21} parent=5 // pred_region
      // Predicated region
      $region17: #{hourglass_forward.21} parent=15 // pred_check
        %p105 = pneg %p28
      $region18: #{hourglass_forward.21} parent=15 // pred_check_branch
        %107 = sbr.rel (%p105) target = $region20
      $region19: #{hourglass_forward.21} parent=15 // pred_region
        %s108 = smul.u32 8, %s8
        %p109 = scmp.lt.s32.totalorder %s108, 15
        %s110 = scalar_select %p109, %s108, 15
        %s111 = smul.addr %s110, 2
        %s112 = smul.addr %s111, 8
        %s113 = scalar_lea.vmem %s0, %s112
        %s114 = smul.u32 8, %s8
      $region20: #{hourglass_forward.21} parent=15 // pred_fallthru
        _
      // Predicated region
      $region21: #{hourglass_forward.21} parent=15 // pred_check
        %p115 = pneg %p54
      $region22: #{hourglass_forward.21} parent=15 // pred_check_branch
        %117 = sbr.rel (%p115) target = $region24
      $region23: #{hourglass_forward.21} parent=15 // pred_region
        %s118 = smul.u32 8, %s8
        %p119 = scmp.lt.s32.totalorder %s118, 15
        %s120 = scalar_select %p119, %s118, 15
        %s121 = smul.addr %s120, 8
        %s122 = scalar_lea.vmem %s1, %s121
        %s123 = smul.u32 8, %s8
      $region24: #{hourglass_forward.21} parent=15 // pred_fallthru
        _
    $region16: #{hourglass_forward.21} parent=5 // pred_fallthru
      _
    %p124 = scmp.le.s32.totalorder 1, %s8
    %p125 = scmp.lt.s32.totalorder %s8, 3
    %p126 = pnand %p124, %p125
    %p127 = pneg %p126
    // Predicated region
    $region25: #{hourglass_forward.21} parent=5 // pred_check
      _
    $region26: #{hourglass_forward.21} parent=5 // pred_check_branch
      %129 = sbr.rel (%p126) target = $region28
    $region27: #{hourglass_forward.21} parent=5 // pred_region
      %s130 = ssub.s32 %s8, 1
      %s131 = smul.u32 8, %s13
      %p132 = scmp.lt.s32.totalorder %s131, 15
      %s133 = scalar_select %p132, %s131, 15
      %s134 = smul.addr %s133, 2
      %s135 = smul.addr %s134, 8
      %s136 = scalar_lea.vmem %s0, %s135
      %p137 = pneg %p34
      %p138 = pneg %p31
      %s139 = smul.u32 8, %s13
      %p140 = scmp.lt.s32.totalorder %s139, 15
      %s141 = scalar_select %p140, %s139, 15
      %s142 = smul.addr %s141, 8
      %s143 = scalar_lea.vmem %s1, %s142
      %p144 = pneg %p60
      %p145 = pneg %p57
      %p146 = pneg %p86
      %p147 = pneg %p83
      %s148 = smul.u32 8, %s13
      %p149 = scmp.lt.s32.totalorder %s148, 15
      %s150 = scalar_select %p149, %s148, 15
      %s151 = smul.addr %s150, 2
      %s152 = smul.addr %s151, 8
      %s153 = scalar_lea.vmem %s2, %s152
      %s154 = smul.u32 8, %s13
      %p155 = scmp.lt.s32.totalorder %s154, 15
      %s156 = scalar_select %p155, %s154, 15
      %s157 = smul.addr %s156, 2
      %s158 = smul.addr %s157, 8
      %s159 = scalar_lea.vmem %s0, %s158
      %s160 = smul.u32 8, %s13
      %s161 = smul.u32 8, %s13
      %p162 = scmp.lt.s32.totalorder %s161, 15
      %s163 = scalar_select %p162, %s161, 15
      %s164 = smul.addr %s163, 8
      %s165 = scalar_lea.vmem %s1, %s164
      %s166 = smul.u32 8, %s13
      %s167 = smul.u32 8, %s13
      %p168 = scmp.lt.s32.totalorder %s167, 15
      %s169 = scalar_select %p168, %s167, 15
      %s170 = smul.addr %s169, 2
      %s171 = smul.addr %s170, 8
      %s172 = scalar_lea.vmem %s2, %s171
      %s173 = smul.u32 8, %s13
      %v174 = vld [vmem:[%s165] sm:$0xff]
      %v175 = vld [vmem:[%s165 + $0x8] sm:$0xff]
      %v176 = vld [vmem:[%s165 + $0x10] sm:$0xff]
      %v177 = vld [vmem:[%s165 + $0x18] sm:$0xff]
      %v178 = vld [vmem:[%s165 + $0x20] sm:$0xff]
      %v179 = vld [vmem:[%s165 + $0x28] sm:$0xff]
      %v180 = vld [vmem:[%s165 + $0x30] sm:$0xff]
      %v181 = vld [vmem:[%s165 + $0x38] sm:$0xff]
      %190 = vrot.lane.b32.xlu0 %v174, 8
      %v191 = vpop.permute.xlu0 %190
      %192 = vrot.lane.b32.xlu0 %v175, 8
      %v193 = vpop.permute.xlu0 %192
      %194 = vrot.lane.b32.xlu0 %v176, 8
      %v195 = vpop.permute.xlu0 %194
      %196 = vrot.lane.b32.xlu0 %v177, 8
      %v197 = vpop.permute.xlu0 %196
      %198 = vrot.lane.b32.xlu0 %v178, 8
      %v199 = vpop.permute.xlu0 %198
      %200 = vrot.lane.b32.xlu0 %v179, 8
      %v201 = vpop.permute.xlu0 %200
      %202 = vrot.lane.b32.xlu0 %v180, 8
      %v203 = vpop.permute.xlu0 %202
      %204 = vrot.lane.b32.xlu0 %v181, 8
      %v205 = vpop.permute.xlu0 %204
      %vm214 = vcmask 64512
      %v215 = vsel %vm214, %v174, %v191
      %v216 = vsel %vm214, %v175, %v193
      %v217 = vsel %vm214, %v176, %v195
      %v218 = vsel %vm214, %v177, %v197
      %v219 = vsel %vm214, %v178, %v199
      %v220 = vsel %vm214, %v179, %v201
      %v221 = vsel %vm214, %v180, %v203
      %v222 = vsel %vm214, %v181, %v205
      %v223 = vld [vmem:[%s159] sm:$0xff]
      %v224 = vld [vmem:[%s159 + $0x8] sm:$0xff]
      %v225 = vld [vmem:[%s159 + $0x10] sm:$0xff]
      %v226 = vld [vmem:[%s159 + $0x18] sm:$0xff]
      %v227 = vld [vmem:[%s159 + $0x20] sm:$0xff]
      %v228 = vld [vmem:[%s159 + $0x28] sm:$0xff]
      %v229 = vld [vmem:[%s159 + $0x30] sm:$0xff]
      %v230 = vld [vmem:[%s159 + $0x38] sm:$0xff]
      %v231 = vld [vmem:[%s159 + $0x40] sm:$0xff]
      %v232 = vld [vmem:[%s159 + $0x48] sm:$0xff]
      %v233 = vld [vmem:[%s159 + $0x50] sm:$0xff]
      %v234 = vld [vmem:[%s159 + $0x58] sm:$0xff]
      %v235 = vld [vmem:[%s159 + $0x60] sm:$0xff]
      %v236 = vld [vmem:[%s159 + $0x68] sm:$0xff]
      %v237 = vld [vmem:[%s159 + $0x70] sm:$0xff]
      %v238 = vld [vmem:[%s159 + $0x78] sm:$0xff]
      %v239 = vadd.f32 %v223, %v215
      %v240 = vadd.f32 %v224, %v215
      %v241 = vadd.f32 %v225, %v216
      %v242 = vadd.f32 %v226, %v216
      %v243 = vadd.f32 %v227, %v217
      %v244 = vadd.f32 %v228, %v217
      %v245 = vadd.f32 %v229, %v218
      %v246 = vadd.f32 %v230, %v218
      %v247 = vadd.f32 %v231, %v219
      %v248 = vadd.f32 %v232, %v219
      %v249 = vadd.f32 %v233, %v220
      %v250 = vadd.f32 %v234, %v220
      %v251 = vadd.f32 %v235, %v221
      %v252 = vadd.f32 %v236, %v221
      %v253 = vadd.f32 %v237, %v222
      %v254 = vadd.f32 %v238, %v222
      %vm255 = vcmask 130048
      %256 = vst.msk [vmem:[%s172] sm:$0xff] %vm255, %v239
      %257 = vst.msk [vmem:[%s172 + $0x8] sm:$0xff] %vm255, %v240
      %258 = vst.msk [vmem:[%s172 + $0x10] sm:$0xff] %vm255, %v241
      %259 = vst.msk [vmem:[%s172 + $0x18] sm:$0xff] %vm255, %v242
      %260 = vst.msk [vmem:[%s172 + $0x20] sm:$0xff] %vm255, %v243
      %261 = vst.msk [vmem:[%s172 + $0x28] sm:$0xff] %vm255, %v244
      %262 = vst.msk [vmem:[%s172 + $0x30] sm:$0xff] %vm255, %v245
      %263 = vst.msk [vmem:[%s172 + $0x38] sm:$0xff] %vm255, %v246
      %264 = vst.msk [vmem:[%s172 + $0x40] sm:$0xff] %vm255, %v247
      %265 = vst.msk [vmem:[%s172 + $0x48] sm:$0xff] %vm255, %v248
      %266 = vst.msk [vmem:[%s172 + $0x50] sm:$0xff] %vm255, %v249
      %267 = vst.msk [vmem:[%s172 + $0x58] sm:$0xff] %vm255, %v250
      %268 = vst.msk [vmem:[%s172 + $0x60] sm:$0xff] %vm255, %v251
      %269 = vst.msk [vmem:[%s172 + $0x68] sm:$0xff] %vm255, %v252
      %270 = vst.msk [vmem:[%s172 + $0x70] sm:$0xff] %vm255, %v253
      %271 = vst.msk [vmem:[%s172 + $0x78] sm:$0xff] %vm255, %v254
      %s272 = smul.u32 8, %s13
      %p273 = scmp.lt.s32.totalorder %s272, 15
      %s274 = scalar_select %p273, %s272, 15
      %s275 = smul.addr %s274, 2
      %s276 = smul.addr %s275, 8
      %s277 = scalar_lea.vmem %s2, %s276
      // Predicated region
      $region29: #{hourglass_forward.21} parent=27 // pred_check
        %p278 = pneg %p83
      $region30: #{hourglass_forward.21} parent=27 // pred_check_branch
        %280 = sbr.rel (%p278) target = $region32
      $region31: #{hourglass_forward.21} parent=27 // pred_region
        %s281 = smul.u32 8, %s13
      $region32: #{hourglass_forward.21} parent=27 // pred_fallthru
        _
    $region28: #{hourglass_forward.21} parent=5 // pred_fallthru
      _
    %p282 = scmp.le.s32.totalorder 2, %s8
    // Predicated region
    $region33: #{hourglass_forward.21} parent=5 // pred_check
      %p283 = pneg %p282
    $region34: #{hourglass_forward.21} parent=5 // pred_check_branch
      %285 = sbr.rel (%p283) target = $region36
    $region35: #{hourglass_forward.21} parent=5 // pred_region
      %s286 = ssub.s32 %s8, 2
      // Predicated region
      $region37: #{hourglass_forward.21} parent=35 // pred_check
        %p287 = pneg %p89
      $region38: #{hourglass_forward.21} parent=35 // pred_check_branch
        %289 = sbr.rel (%p287) target = $region40
      $region39: #{hourglass_forward.21} parent=35 // pred_region
        %s290 = smul.u32 8, %s14
        %p291 = scmp.lt.s32.totalorder %s290, 15
        %s292 = scalar_select %p291, %s290, 15
        %s293 = smul.addr %s292, 2
        %s294 = smul.addr %s293, 8
        %s295 = scalar_lea.vmem %s2, %s294
      $region40: #{hourglass_forward.21} parent=35 // pred_fallthru
        _
    $region36: #{hourglass_forward.21} parent=5 // pred_fallthru
      _
  $region6: #{hourglass_forward.21} parent=0 // loop_footer
    %s12 = sadd.s32 1, %s8
  $region7: #{hourglass_forward.21} parent=0 // loop_footer_branch
    %7 = sbr.rel target = $region3
  $region8: #{hourglass_forward.21} parent=0 // loop_exit
    _

// kernel: hourglass_forward.11
$region0: #{hourglass_forward.11}
  #allocation0 [shape = 'u32[]', space=smem, size = 0x4, offset = 0x4, fixed_abs, tag = 'smem constant byte address 0x4 - core index']
  #allocation1 [shape = 'u32[144,128]{1,0:T(1,128)}', space=vmem, size = 0x12000, scoped, tag = 'internal scratch']
  #allocation2 [shape = 'bf16[290,4]{1,0:T(8,128)(2,1)}', space=vmem, size = 0x12800, scoped, tag = 'scratch operand']
  %s0 = inlined_call_operand.vmem [shape: f32[2,256,8], index: 0, kind: input, shape index: {}]
  %s1 = inlined_call_operand.vmem [shape: f32[1,8], index: 1, kind: input, shape index: {}]
  %s2 = inlined_call_operand.vmem [shape: f32[1,8], index: 2, kind: input, shape index: {}]
  %s3 = inlined_call_operand.vmem [shape: bf16[8,4], index: 3, kind: input, shape index: {}]
  %s4 = inlined_call_operand.vmem [shape: f32[1,4], index: 4, kind: input, shape index: {}]
  %s5 = inlined_call_operand.vmem [shape: bf16[9,4,4], index: 5, kind: input, shape index: {}]
  %s6 = inlined_call_operand.vmem [shape: f32[1,4], index: 6, kind: input, shape index: {}]
  %s7 = inlined_call_operand.vmem [shape: bf16[4,8], index: 7, kind: input, shape index: {}]
  %s8 = inlined_call_operand.vmem [shape: f32[1,8], index: 8, kind: input, shape index: {}]
  %s9 = inlined_call_operand.vmem [shape: f32[2,256,8], index: 9, kind: output, shape index: {}]
  %s10 = sld [smem:[#allocation0]]
  $region69: #{hourglass_forward.11} parent=0
    _
  %s12 = ssub.s32 1, %s10
  %s13 = scalar_select 0, %s12, %s10
  loop: start=0, step=1, limit=4
  $region2: #{hourglass_forward.11} parent=0 // loop_pre_header
    _
  $region3: #{hourglass_forward.11} parent=0 // loop_header
    %s15 = sphi 0, %s19
    %p16 = scmp.ge.s32.totalorder %s15, 4
    %s25 = sphi 0, %s27
    %s28 = sphi 0, %s25
    %s29 = sphi 0, %s28
    %s45 = sphi 0, %s29
    %s49 = sphi 0, %s49
    %s51 = sphi 0, %s49
    %s52 = sphi 0, %s51
    %s66 = sphi 0, %s52
    %s70 = sphi 0, %s70
    %s72 = sphi 0, %s70
    %s73 = sphi 0, %s72
    %s87 = sphi 0, %s73
    %s91 = sphi 0, %s91
    %s93 = sphi 0, %s91
    %s94 = sphi 0, %s93
    %s108 = sphi 0, %s94
    %s112 = sphi 0, %s112
    %s114 = sphi 0, %s112
    %s115 = sphi 0, %s114
    %s129 = sphi 0, %s115
    %s133 = sphi 0, %s133
    %s135 = sphi 0, %s133
    %s136 = sphi 0, %s135
    %s150 = sphi 0, %s136
    %s154 = sphi 0, %s154
    %s156 = sphi 0, %s154
    %s157 = sphi 0, %s156
    %s171 = sphi 0, %s157
    %s175 = sphi 0, %s175
    %s177 = sphi 0, %s175
    %s178 = sphi 0, %s177
    %s192 = sphi 0, %s178
    %s196 = sphi 0, %s196
    %s198 = sphi 0, %s196
    %s199 = sphi 0, %s198
    %s213 = sphi 0, %s199
    %s219 = sphi 0, %s221
    %s222 = sphi 0, %s219
    %s223 = sphi 0, %s222
    %s239 = sphi 0, %s223
  $region4: #{hourglass_forward.11} parent=0 // loop_header_branch
    %18 = sbr.rel (%p16) target = $region8
  $region5: #{hourglass_forward.11} parent=0 // loop_body
    %s20 = ssub.s32 %s15, 1
    %s21 = ssub.s32 %s15, 2
    %s22 = sadd.s32 %s15, 1
    %s23 = ssub.s32 %s15, %s22
    %p24 = scmp.eq.s32.totalorder %s23, 0
    %s26 = sadd.s32 %s25, 1
    %s27 = scalar_select %p24, %s25, %s26
    %p30 = pneg %p24
    %p31 = scmp.eq.s32.totalorder %s15, 1
    %p32 = por %p30, %p31
    %p33 = scmp.ne.s32.totalorder %s25, %s28
    %p34 = scmp.eq.s32.totalorder %s15, 0
    %p35 = por %p33, %p34
    %p36 = scmp.ne.s32.totalorder %s25, %s28
    %p37 = scmp.eq.s32.totalorder %s20, 1
    %p38 = por %p36, %p37
    %p39 = scmp.ne.s32.totalorder %s28, %s29
    %p40 = scmp.eq.s32.totalorder %s20, 0
    %p41 = por %p39, %p40
    %p42 = scmp.ne.s32.totalorder %s28, %s29
    %p43 = scmp.eq.s32.totalorder %s21, 1
    %p44 = por %p42, %p43
    %p46 = scmp.ne.s32.totalorder %s29, %s45
    %p47 = scmp.eq.s32.totalorder %s21, 0
    %p48 = por %p46, %p47
    %s50 = sadd.s32 %s49, 1
    %p53 = scmp.eq.s32.totalorder %s15, 1
    %p54 = scmp.ne.s32.totalorder %s49, %s51
    %p55 = scmp.eq.s32.totalorder %s15, 0
    %p56 = por %p54, %p55
    %p57 = scmp.ne.s32.totalorder %s49, %s51
    %p58 = scmp.eq.s32.totalorder %s20, 1
    %p59 = por %p57, %p58
    %p60 = scmp.ne.s32.totalorder %s51, %s52
    %p61 = scmp.eq.s32.totalorder %s20, 0
    %p62 = por %p60, %p61
    %p63 = scmp.ne.s32.totalorder %s51, %s52
    %p64 = scmp.eq.s32.totalorder %s21, 1
    %p65 = por %p63, %p64
    %p67 = scmp.ne.s32.totalorder %s52, %s66
    %p68 = scmp.eq.s32.totalorder %s21, 0
    %p69 = por %p67, %p68
    %s71 = sadd.s32 %s70, 1
    %p74 = scmp.eq.s32.totalorder %s15, 1
    %p75 = scmp.ne.s32.totalorder %s70, %s72
    %p76 = scmp.eq.s32.totalorder %s15, 0
    %p77 = por %p75, %p76
    %p78 = scmp.ne.s32.totalorder %s70, %s72
    %p79 = scmp.eq.s32.totalorder %s20, 1
    %p80 = por %p78, %p79
    %p81 = scmp.ne.s32.totalorder %s72, %s73
    %p82 = scmp.eq.s32.totalorder %s20, 0
    %p83 = por %p81, %p82
    %p84 = scmp.ne.s32.totalorder %s72, %s73
    %p85 = scmp.eq.s32.totalorder %s21, 1
    %p86 = por %p84, %p85
    %p88 = scmp.ne.s32.totalorder %s73, %s87
    %p89 = scmp.eq.s32.totalorder %s21, 0
    %p90 = por %p88, %p89
    %s92 = sadd.s32 %s91, 1
    %p95 = scmp.eq.s32.totalorder %s15, 1
    %p96 = scmp.ne.s32.totalorder %s91, %s93
    %p97 = scmp.eq.s32.totalorder %s15, 0
    %p98 = por %p96, %p97
    %p99 = scmp.ne.s32.totalorder %s91, %s93
    %p100 = scmp.eq.s32.totalorder %s20, 1
    %p101 = por %p99, %p100
    %p102 = scmp.ne.s32.totalorder %s93, %s94
    %p103 = scmp.eq.s32.totalorder %s20, 0
    %p104 = por %p102, %p103
    %p105 = scmp.ne.s32.totalorder %s93, %s94
    %p106 = scmp.eq.s32.totalorder %s21, 1
    %p107 = por %p105, %p106
    %p109 = scmp.ne.s32.totalorder %s94, %s108
    %p110 = scmp.eq.s32.totalorder %s21, 0
    %p111 = por %p109, %p110
    %s113 = sadd.s32 %s112, 1
    %p116 = scmp.eq.s32.totalorder %s15, 1
    %p117 = scmp.ne.s32.totalorder %s112, %s114
    %p118 = scmp.eq.s32.totalorder %s15, 0
    %p119 = por %p117, %p118
    %p120 = scmp.ne.s32.totalorder %s112, %s114
    %p121 = scmp.eq.s32.totalorder %s20, 1
    %p122 = por %p120, %p121
    %p123 = scmp.ne.s32.totalorder %s114, %s115
    %p124 = scmp.eq.s32.totalorder %s20, 0
    %p125 = por %p123, %p124
    %p126 = scmp.ne.s32.totalorder %s114, %s115
    %p127 = scmp.eq.s32.totalorder %s21, 1
    %p128 = por %p126, %p127
    %p130 = scmp.ne.s32.totalorder %s115, %s129
    %p131 = scmp.eq.s32.totalorder %s21, 0
    %p132 = por %p130, %p131
    %s134 = sadd.s32 %s133, 1
    %p137 = scmp.eq.s32.totalorder %s15, 1
    %p138 = scmp.ne.s32.totalorder %s133, %s135
    %p139 = scmp.eq.s32.totalorder %s15, 0
    %p140 = por %p138, %p139
    %p141 = scmp.ne.s32.totalorder %s133, %s135
    %p142 = scmp.eq.s32.totalorder %s20, 1
    %p143 = por %p141, %p142
    %p144 = scmp.ne.s32.totalorder %s135, %s136
    %p145 = scmp.eq.s32.totalorder %s20, 0
    %p146 = por %p144, %p145
    %p147 = scmp.ne.s32.totalorder %s135, %s136
    %p148 = scmp.eq.s32.totalorder %s21, 1
    %p149 = por %p147, %p148
    %p151 = scmp.ne.s32.totalorder %s136, %s150
    %p152 = scmp.eq.s32.totalorder %s21, 0
    %p153 = por %p151, %p152
    %s155 = sadd.s32 %s154, 1
    %p158 = scmp.eq.s32.totalorder %s15, 1
    %p159 = scmp.ne.s32.totalorder %s154, %s156
    %p160 = scmp.eq.s32.totalorder %s15, 0
    %p161 = por %p159, %p160
    %p162 = scmp.ne.s32.totalorder %s154, %s156
    %p163 = scmp.eq.s32.totalorder %s20, 1
    %p164 = por %p162, %p163
    %p165 = scmp.ne.s32.totalorder %s156, %s157
    %p166 = scmp.eq.s32.totalorder %s20, 0
    %p167 = por %p165, %p166
    %p168 = scmp.ne.s32.totalorder %s156, %s157
    %p169 = scmp.eq.s32.totalorder %s21, 1
    %p170 = por %p168, %p169
    %p172 = scmp.ne.s32.totalorder %s157, %s171
    %p173 = scmp.eq.s32.totalorder %s21, 0
    %p174 = por %p172, %p173
    %s176 = sadd.s32 %s175, 1
    %p179 = scmp.eq.s32.totalorder %s15, 1
    %p180 = scmp.ne.s32.totalorder %s175, %s177
    %p181 = scmp.eq.s32.totalorder %s15, 0
    %p182 = por %p180, %p181
    %p183 = scmp.ne.s32.totalorder %s175, %s177
    %p184 = scmp.eq.s32.totalorder %s20, 1
    %p185 = por %p183, %p184
    %p186 = scmp.ne.s32.totalorder %s177, %s178
    %p187 = scmp.eq.s32.totalorder %s20, 0
    %p188 = por %p186, %p187
    %p189 = scmp.ne.s32.totalorder %s177, %s178
    %p190 = scmp.eq.s32.totalorder %s21, 1
    %p191 = por %p189, %p190
    %p193 = scmp.ne.s32.totalorder %s178, %s192
    %p194 = scmp.eq.s32.totalorder %s21, 0
    %p195 = por %p193, %p194
    %s197 = sadd.s32 %s196, 1
    %p200 = scmp.eq.s32.totalorder %s15, 1
    %p201 = scmp.ne.s32.totalorder %s196, %s198
    %p202 = scmp.eq.s32.totalorder %s15, 0
    %p203 = por %p201, %p202
    %p204 = scmp.ne.s32.totalorder %s196, %s198
    %p205 = scmp.eq.s32.totalorder %s20, 1
    %p206 = por %p204, %p205
    %p207 = scmp.ne.s32.totalorder %s198, %s199
    %p208 = scmp.eq.s32.totalorder %s20, 0
    %p209 = por %p207, %p208
    %p210 = scmp.ne.s32.totalorder %s198, %s199
    %p211 = scmp.eq.s32.totalorder %s21, 1
    %p212 = por %p210, %p211
    %p214 = scmp.ne.s32.totalorder %s199, %s213
    %p215 = scmp.eq.s32.totalorder %s21, 0
    %p216 = por %p214, %p215
    %s217 = ssub.s32 %s15, %s22
    %p218 = scmp.eq.s32.totalorder %s217, 0
    %s220 = sadd.s32 %s219, 1
    %s221 = scalar_select %p218, %s219, %s220
    %p224 = pneg %p218
    %p225 = scmp.eq.s32.totalorder %s15, 1
    %p226 = por %p224, %p225
    %p227 = scmp.ne.s32.totalorder %s219, %s222
    %p228 = scmp.eq.s32.totalorder %s15, 0
    %p229 = por %p227, %p228
    %p230 = scmp.ne.s32.totalorder %s219, %s222
    %p231 = scmp.eq.s32.totalorder %s20, 1
    %p232 = por %p230, %p231
    %p233 = scmp.ne.s32.totalorder %s222, %s223
    %p234 = scmp.eq.s32.totalorder %s20, 0
    %p235 = por %p233, %p234
    %p236 = scmp.ne.s32.totalorder %s222, %s223
    %p237 = scmp.eq.s32.totalorder %s21, 1
    %p238 = por %p236, %p237
    %p240 = scmp.ne.s32.totalorder %s223, %s239
    %p241 = scmp.eq.s32.totalorder %s21, 0
    %p242 = por %p240, %p241
    %p243 = scmp.le.s32.totalorder 1, %s15
    %p244 = scmp.lt.s32.totalorder %s15, 3
    %p245 = pnand %p243, %p244
    %p246 = pneg %p245
    // Predicated region
    $region9: #{hourglass_forward.11} parent=5 // pred_check
      _
    $region10: #{hourglass_forward.11} parent=5 // pred_check_branch
      %248 = sbr.rel (%p245) target = $region12
    $region11: #{hourglass_forward.11} parent=5 // pred_region
      %s249 = ssub.s32 %s15, 1
      // Predicated region
      $region13: #{hourglass_forward.11} parent=11 // pred_check
        %p250 = pneg %p62
      $region14: #{hourglass_forward.11} parent=11 // pred_check_branch
        %252 = sbr.rel (%p250) target = $region16
      $region15: #{hourglass_forward.11} parent=11 // pred_region
        _
      $region16: #{hourglass_forward.11} parent=11 // pred_fallthru
        _
      // Predicated region
      $region17: #{hourglass_forward.11} parent=11 // pred_check
        %p253 = pneg %p83
      $region18: #{hourglass_forward.11} parent=11 // pred_check_branch
        %255 = sbr.rel (%p253) target = $region20
      $region19: #{hourglass_forward.11} parent=11 // pred_region
        _
      $region20: #{hourglass_forward.11} parent=11 // pred_fallthru
        _
      // Predicated region
      $region21: #{hourglass_forward.11} parent=11 // pred_check
        %p256 = pneg %p104
      $region22: #{hourglass_forward.11} parent=11 // pred_check_branch
        %258 = sbr.rel (%p256) target = $region24
      $region23: #{hourglass_forward.11} parent=11 // pred_region
        _
      $region24: #{hourglass_forward.11} parent=11 // pred_fallthru
        _
      // Predicated region
      $region25: #{hourglass_forward.11} parent=11 // pred_check
        %p259 = pneg %p125
      $region26: #{hourglass_forward.11} parent=11 // pred_check_branch
        %261 = sbr.rel (%p259) target = $region28
      $region27: #{hourglass_forward.11} parent=11 // pred_region
        _
      $region28: #{hourglass_forward.11} parent=11 // pred_fallthru
        _
      // Predicated region
      $region29: #{hourglass_forward.11} parent=11 // pred_check
        %p262 = pneg %p146
      $region30: #{hourglass_forward.11} parent=11 // pred_check_branch
        %264 = sbr.rel (%p262) target = $region32
      $region31: #{hourglass_forward.11} parent=11 // pred_region
        _
      $region32: #{hourglass_forward.11} parent=11 // pred_fallthru
        _
      // Predicated region
      $region33: #{hourglass_forward.11} parent=11 // pred_check
        %p265 = pneg %p167
      $region34: #{hourglass_forward.11} parent=11 // pred_check_branch
        %267 = sbr.rel (%p265) target = $region36
      $region35: #{hourglass_forward.11} parent=11 // pred_region
        _
      $region36: #{hourglass_forward.11} parent=11 // pred_fallthru
        _
      // Predicated region
      $region37: #{hourglass_forward.11} parent=11 // pred_check
        %p268 = pneg %p188
      $region38: #{hourglass_forward.11} parent=11 // pred_check_branch
        %270 = sbr.rel (%p268) target = $region40
      $region39: #{hourglass_forward.11} parent=11 // pred_region
        _
      $region40: #{hourglass_forward.11} parent=11 // pred_fallthru
        _
      // Predicated region
      $region41: #{hourglass_forward.11} parent=11 // pred_check
        %p271 = pneg %p209
      $region42: #{hourglass_forward.11} parent=11 // pred_check_branch
        %273 = sbr.rel (%p271) target = $region44
      $region43: #{hourglass_forward.11} parent=11 // pred_region
        _
      $region44: #{hourglass_forward.11} parent=11 // pred_fallthru
        _
    $region12: #{hourglass_forward.11} parent=5 // pred_fallthru
      _
    %p274 = scmp.lt.s32.totalorder %s15, 2
    // Predicated region
    $region45: #{hourglass_forward.11} parent=5 // pred_check
      %p275 = pneg %p274
    $region46: #{hourglass_forward.11} parent=5 // pred_check_branch
      %277 = sbr.rel (%p275) target = $region48
    $region47: #{hourglass_forward.11} parent=5 // pred_region
      // Predicated region
      $region49: #{hourglass_forward.11} parent=47 // pred_check
        %p278 = pneg %p35
      $region50: #{hourglass_forward.11} parent=47 // pred_check_branch
        %280 = sbr.rel (%p278) target = $region52
      $region51: #{hourglass_forward.11} parent=47 // pred_region
        %p281 = scmp.lt.s32.totalorder %s15, 1
        %s282 = scalar_select %p281, %s15, 1
        %s283 = smul.addr %s282, 32
        %s284 = smul.addr %s283, 8
        %s285 = scalar_lea.vmem %s0, %s284
      $region52: #{hourglass_forward.11} parent=47 // pred_fallthru
        _
    $region48: #{hourglass_forward.11} parent=5 // pred_fallthru
      _
    %p286 = scmp.le.s32.totalorder 1, %s15
    %p287 = scmp.lt.s32.totalorder %s15, 3
    %p288 = pnand %p286, %p287
    %p289 = pneg %p288
    // Predicated region
    $region53: #{hourglass_forward.11} parent=5 // pred_check
      _
    $region54: #{hourglass_forward.11} parent=5 // pred_check_branch
      %291 = sbr.rel (%p288) target = $region56
    $region55: #{hourglass_forward.11} parent=5 // pred_region
      %s292 = ssub.s32 %s15, 1
      %p293 = scmp.lt.s32.totalorder %s20, 1
      %s294 = scalar_select %p293, %s20, 1
      %s295 = smul.addr %s294, 32
      %s296 = smul.addr %s295, 8
      %s297 = scalar_lea.vmem %s0, %s296
      %p298 = pneg %p41
      %p299 = pneg %p38
      %p300 = pneg %p62
      %p301 = pneg %p59
      %p302 = pneg %p83
      %p303 = pneg %p80
      %p304 = pneg %p104
      %p305 = pneg %p101
      %p306 = pneg %p125
      %p307 = pneg %p122
      %p308 = pneg %p146
      %p309 = pneg %p143
      %p310 = pneg %p167
      %p311 = pneg %p164
      %p312 = pneg %p188
      %p313 = pneg %p185
      %p314 = pneg %p209
      %p315 = pneg %p206
      %p316 = pneg %p235
      %p317 = pneg %p232
      %p318 = scmp.lt.s32.totalorder %s20, 1
      %s319 = scalar_select %p318, %s20, 1
      %s320 = smul.addr %s319, 32
      %s321 = smul.addr %s320, 8
      %s322 = scalar_lea.vmem %s9, %s321
      %p323 = scmp.lt.s32.totalorder %s20, 1
      %s324 = scalar_select %p323, %s20, 1
      %s325 = smul.addr %s324, 32
      %s326 = smul.addr %s325, 8
      %s327 = scalar_lea.vmem %s0, %s326
      %p328 = scmp.lt.s32.totalorder %s20, 1
      %s329 = scalar_select %p328, %s20, 1
      %s330 = smul.addr %s329, 32
      %s331 = smul.addr %s330, 8
      %s332 = scalar_lea.vmem %s9, %s331
      %v336 = vld [vmem:[%s327] sm:$0xff]
      %v337 = vld [vmem:[%s327 + $0x8] sm:$0xff]
      %v338 = vld [vmem:[%s327 + $0x10] sm:$0xff]
      %v339 = vld [vmem:[%s327 + $0x18] sm:$0xff]
      %v340 = vld [vmem:[%s327 + $0x20] sm:$0xff]
      %v341 = vld [vmem:[%s327 + $0x28] sm:$0xff]
      %v342 = vld [vmem:[%s327 + $0x30] sm:$0xff]
      %v343 = vld [vmem:[%s327 + $0x38] sm:$0xff]
      %v344 = vld [vmem:[%s327 + $0x40] sm:$0xff]
      %v345 = vld [vmem:[%s327 + $0x48] sm:$0xff]
      %v346 = vld [vmem:[%s327 + $0x50] sm:$0xff]
      %v347 = vld [vmem:[%s327 + $0x58] sm:$0xff]
      %v348 = vld [vmem:[%s327 + $0x60] sm:$0xff]
      %v349 = vld [vmem:[%s327 + $0x68] sm:$0xff]
      %v350 = vld [vmem:[%s327 + $0x70] sm:$0xff]
      %v351 = vld [vmem:[%s327 + $0x78] sm:$0xff]
      %v352 = vld [vmem:[%s327 + $0x80] sm:$0xff]
      %v353 = vld [vmem:[%s327 + $0x88] sm:$0xff]
      %v354 = vld [vmem:[%s327 + $0x90] sm:$0xff]
      %v355 = vld [vmem:[%s327 + $0x98] sm:$0xff]
      %v356 = vld [vmem:[%s327 + $0xa0] sm:$0xff]
      %v357 = vld [vmem:[%s327 + $0xa8] sm:$0xff]
      %v358 = vld [vmem:[%s327 + $0xb0] sm:$0xff]
      %v359 = vld [vmem:[%s327 + $0xb8] sm:$0xff]
      %v360 = vld [vmem:[%s327 + $0xc0] sm:$0xff]
      %v361 = vld [vmem:[%s327 + $0xc8] sm:$0xff]
      %v362 = vld [vmem:[%s327 + $0xd0] sm:$0xff]
      %v363 = vld [vmem:[%s327 + $0xd8] sm:$0xff]
      %v364 = vld [vmem:[%s327 + $0xe0] sm:$0xff]
      %v365 = vld [vmem:[%s327 + $0xe8] sm:$0xff]
      %v366 = vld [vmem:[%s327 + $0xf0] sm:$0xff]
      %v367 = vld [vmem:[%s327 + $0xf8] sm:$0xff]
      %v368 = vld [vmem:[%s1] sm:$0x1]
      %v370 = vlaneseq
      %v371 = vshrl.u32 %v370, 7
      %v372 = vsub.s32 0, %v371
      %v373 = vrot.slane %v368, %v372
      %v375 = vmul.f32 %v336, %v373
      %v376 = vmul.f32 %v337, %v373
      %v377 = vmul.f32 %v338, %v373
      %v378 = vmul.f32 %v339, %v373
      %v379 = vmul.f32 %v340, %v373
      %v380 = vmul.f32 %v341, %v373
      %v381 = vmul.f32 %v342, %v373
      %v382 = vmul.f32 %v343, %v373
      %v383 = vmul.f32 %v344, %v373
      %v384 = vmul.f32 %v345, %v373
      %v385 = vmul.f32 %v346, %v373
      %v386 = vmul.f32 %v347, %v373
      %v387 = vmul.f32 %v348, %v373
      %v388 = vmul.f32 %v349, %v373
      %v389 = vmul.f32 %v350, %v373
      %v390 = vmul.f32 %v351, %v373
      %v391 = vmul.f32 %v352, %v373
      %v392 = vmul.f32 %v353, %v373
      %v393 = vmul.f32 %v354, %v373
      %v394 = vmul.f32 %v355, %v373
      %v395 = vmul.f32 %v356, %v373
      %v396 = vmul.f32 %v357, %v373
      %v397 = vmul.f32 %v358, %v373
      %v398 = vmul.f32 %v359, %v373
      %v399 = vmul.f32 %v360, %v373
      %v400 = vmul.f32 %v361, %v373
      %v401 = vmul.f32 %v362, %v373
      %v402 = vmul.f32 %v363, %v373
      %v403 = vmul.f32 %v364, %v373
      %v404 = vmul.f32 %v365, %v373
      %v405 = vmul.f32 %v366, %v373
      %v406 = vmul.f32 %v367, %v373
      %v407 = vld [vmem:[%s2] sm:$0x1]
      %v409 = vlaneseq
      %v410 = vshrl.u32 %v409, 7
      %v411 = vsub.s32 0, %v410
      %v412 = vrot.slane %v407, %v411
      %v414 = vadd.f32 %v375, %v412
      %v415 = vadd.f32 %v376, %v412
      %v416 = vadd.f32 %v377, %v412
      %v417 = vadd.f32 %v378, %v412
      %v418 = vadd.f32 %v379, %v412
      %v419 = vadd.f32 %v380, %v412
      %v420 = vadd.f32 %v381, %v412
      %v421 = vadd.f32 %v382, %v412
      %v422 = vadd.f32 %v383, %v412
      %v423 = vadd.f32 %v384, %v412
      %v424 = vadd.f32 %v385, %v412
      %v425 = vadd.f32 %v386, %v412
      %v426 = vadd.f32 %v387, %v412
      %v427 = vadd.f32 %v388, %v412
      %v428 = vadd.f32 %v389, %v412
      %v429 = vadd.f32 %v390, %v412
      %v430 = vadd.f32 %v391, %v412
      %v431 = vadd.f32 %v392, %v412
      %v432 = vadd.f32 %v393, %v412
      %v433 = vadd.f32 %v394, %v412
      %v434 = vadd.f32 %v395, %v412
      %v435 = vadd.f32 %v396, %v412
      %v436 = vadd.f32 %v397, %v412
      %v437 = vadd.f32 %v398, %v412
      %v438 = vadd.f32 %v399, %v412
      %v439 = vadd.f32 %v400, %v412
      %v440 = vadd.f32 %v401, %v412
      %v441 = vadd.f32 %v402, %v412
      %v442 = vadd.f32 %v403, %v412
      %v443 = vadd.f32 %v404, %v412
      %v444 = vadd.f32 %v405, %v412
      %v445 = vadd.f32 %v406, %v412
      %v446 = vmax.f32 %v414, 0.0
      %v447 = vmax.f32 %v415, 0.0
      %v448 = vmax.f32 %v416, 0.0
      %v449 = vmax.f32 %v417, 0.0
      %v450 = vmax.f32 %v418, 0.0
      %v451 = vmax.f32 %v419, 0.0
      %v452 = vmax.f32 %v420, 0.0
      %v453 = vmax.f32 %v421, 0.0
      %v454 = vmax.f32 %v422, 0.0
      %v455 = vmax.f32 %v423, 0.0
      %v456 = vmax.f32 %v424, 0.0
      %v457 = vmax.f32 %v425, 0.0
      %v458 = vmax.f32 %v426, 0.0
      %v459 = vmax.f32 %v427, 0.0
      %v460 = vmax.f32 %v428, 0.0
      %v461 = vmax.f32 %v429, 0.0
      %v462 = vmax.f32 %v430, 0.0
      %v463 = vmax.f32 %v431, 0.0
      %v464 = vmax.f32 %v432, 0.0
      %v465 = vmax.f32 %v433, 0.0
      %v466 = vmax.f32 %v434, 0.0
      %v467 = vmax.f32 %v435, 0.0
      %v468 = vmax.f32 %v436, 0.0
      %v469 = vmax.f32 %v437, 0.0
      %v470 = vmax.f32 %v438, 0.0
      %v471 = vmax.f32 %v439, 0.0
      %v472 = vmax.f32 %v440, 0.0
      %v473 = vmax.f32 %v441, 0.0
      %v474 = vmax.f32 %v442, 0.0
      %v475 = vmax.f32 %v443, 0.0
      %v476 = vmax.f32 %v444, 0.0
      %v477 = vmax.f32 %v445, 0.0
      %v478 = vpack.c.bf16 %v447, %v446
      %v479 = vpack.c.bf16 %v449, %v448
      %v480 = vpack.c.bf16 %v451, %v450
      %v481 = vpack.c.bf16 %v453, %v452
      %v482 = vpack.c.bf16 %v455, %v454
      %v483 = vpack.c.bf16 %v457, %v456
      %v484 = vpack.c.bf16 %v459, %v458
      %v485 = vpack.c.bf16 %v461, %v460
      %v486 = vpack.c.bf16 %v463, %v462
      %v487 = vpack.c.bf16 %v465, %v464
      %v488 = vpack.c.bf16 %v467, %v466
      %v489 = vpack.c.bf16 %v469, %v468
      %v490 = vpack.c.bf16 %v471, %v470
      %v491 = vpack.c.bf16 %v473, %v472
      %v492 = vpack.c.bf16 %v475, %v474
      %v493 = vpack.c.bf16 %v477, %v476
      %v494 = vld [vmem:[%s3] sm:$0xf]
      %v495 = vld [vmem:[%s4] sm:$0x1]
      %v497 = vlaneseq
      %v498 = vshrl.u32 %v497, 7
      %v499 = vsub.s32 0, %v498
      %v500 = vrot.slane %v495, %v499
      %vm502 = vcmask 64512
      %v504 = vsel %vm502, %v478, 0
      %v507 = vsel %vm502, %v479, 0
      %v510 = vsel %vm502, %v480, 0
      %v513 = vsel %vm502, %v481, 0
      %v516 = vsel %vm502, %v482, 0
      %v519 = vsel %vm502, %v483, 0
      %v522 = vsel %vm502, %v484, 0
      %v525 = vsel %vm502, %v485, 0
      %v528 = vsel %vm502, %v486, 0
      %v531 = vsel %vm502, %v487, 0
      %v534 = vsel %vm502, %v488, 0
      %v537 = vsel %vm502, %v489, 0
      %v540 = vsel %vm502, %v490, 0
      %v543 = vsel %vm502, %v491, 0
      %v546 = vsel %vm502, %v492, 0
      %v549 = vsel %vm502, %v493, 0
      %vm551 = vcmask 1043456
      %v553 = vsel %vm551, %v494, 0
      %555 = vmatprep.subr.bf16.mxu0 0
      %556 = vmatpush1.bf16.msra.mxu0 %v553
      %557 = vmatprep.subr.bf16.mxu0 0
      %558 = vmatpush1.bf16.msra.mxu0 0
      %559 = vmatprep.subr.bf16.mxu0 0
      %560 = vmatpush1.bf16.msra.mxu0 0
      %561 = vmatprep.subr.bf16.mxu0 0
      %562 = vmatpush1.bf16.msra.mxu0 0
      %563 = vmatprep.subr.bf16.mxu0 0
      %564 = vmatpush1.bf16.msra.mxu0 0
      %565 = vmatprep.subr.bf16.mxu0 0
      %566 = vmatpush1.bf16.msra.mxu0 0
      %567 = vmatprep.subr.bf16.mxu0 0
      %568 = vmatpush1.bf16.msra.mxu0 0
      %569 = vmatprep.subr.bf16.mxu0 0
      %570 = vmatpush1.bf16.msra.mxu0 0
      %571 = vmatprep.subr.bf16.mxu0 0
      %572 = vmatpush1.bf16.msra.mxu0 0
      %573 = vmatprep.subr.bf16.mxu0 0
      %574 = vmatpush1.bf16.msra.mxu0 0
      %575 = vmatprep.subr.bf16.mxu0 0
      %576 = vmatpush1.bf16.msra.mxu0 0
      %577 = vmatprep.subr.bf16.mxu0 0
      %578 = vmatpush1.bf16.msra.mxu0 0
      %579 = vmatprep.subr.bf16.mxu0 0
      %580 = vmatpush1.bf16.msra.mxu0 0
      %581 = vmatprep.subr.bf16.mxu0 0
      %582 = vmatpush1.bf16.msra.mxu0 0
      %583 = vmatprep.subr.bf16.mxu0 0
      %584 = vmatpush1.bf16.msra.mxu0 0
      %585 = vmatprep.subr.bf16.mxu0 0
      %586 = vmatpush1.bf16.msra.mxu0 0
      %587 = vmatprep.mubr.bf16.mxu0 0
      %588 = vmatmul.mubr.bf16.gmra.mrb[0].mxu0 %v504
      %v589 = vpop.f32.mrb[0].mxu0
      %v590 = vadd.f32 %v500, %v589
      %v591 = vpop.f32.mrb[0].mxu0
      %v592 = vpop.f32.mrb[0].mxu0
      %v593 = vadd.f32 %v500, %v592
      %v594 = vpop.f32.mrb[0].mxu0
      %595 = vmatprep.mubr.bf16.mxu0 0
      %596 = vmatmul.mubr.bf16.gmra.mrb[0].mxu0 %v507
      %v597 = vpop.f32.mrb[0].mxu0
      %v598 = vadd.f32 %v500, %v597
      %v599 = vpop.f32.mrb[0].mxu0
      %v600 = vpop.f32.mrb[0].mxu0
      %v601 = vadd.f32 %v500, %v600
      %v602 = vpop.f32.mrb[0].mxu0
      %603 = vmatprep.mubr.bf16.mxu0 0
      %604 = vmatmul.mubr.bf16.gmra.mrb[0].mxu0 %v510
      %v605 = vpop.f32.mrb[0].mxu0
      %v606 = vadd.f32 %v500, %v605
      %v607 = vpop.f32.mrb[0].mxu0
      %v608 = vpop.f32.mrb[0].mxu0
      %v609 = vadd.f32 %v500, %v608
      %v610 = vpop.f32.mrb[0].mxu0
      %611 = vmatprep.mubr.bf16.mxu0 0
      %612 = vmatmul.mubr.bf16.gmra.mrb[0].mxu0 %v513
      %v613 = vpop.f32.mrb[0].mxu0
      %v614 = vadd.f32 %v500, %v613
      %v615 = vpop.f32.mrb[0].mxu0
      %v616 = vpop.f32.mrb[0].mxu0
      %v617 = vadd.f32 %v500, %v616
      %v618 = vpop.f32.mrb[0].mxu0
      %619 = vmatprep.mubr.bf16.mxu0 0
      %620 = vmatmul.mubr.bf16.gmra.mrb[0].mxu0 %v516
      %v621 = vpop.f32.mrb[0].mxu0
      %v622 = vadd.f32 %v500, %v621
      %v623 = vpop.f32.mrb[0].mxu0
      %v624 = vpop.f32.mrb[0].mxu0
      %v625 = vadd.f32 %v500, %v624
      %v626 = vpop.f32.mrb[0].mxu0
      %627 = vmatprep.mubr.bf16.mxu0 0
      %628 = vmatmul.mubr.bf16.gmra.mrb[0].mxu0 %v519
      %v629 = vpop.f32.mrb[0].mxu0
      %v630 = vadd.f32 %v500, %v629
      %v631 = vpop.f32.mrb[0].mxu0
      %v632 = vpop.f32.mrb[0].mxu0
      %v633 = vadd.f32 %v500, %v632
      %v634 = vpop.f32.mrb[0].mxu0
      %635 = vmatprep.mubr.bf16.mxu0 0
      %636 = vmatmul.mubr.bf16.gmra.mrb[0].mxu0 %v522
      %v637 = vpop.f32.mrb[0].mxu0
      %v638 = vadd.f32 %v500, %v637
      %v639 = vpop.f32.mrb[0].mxu0
      %v640 = vpop.f32.mrb[0].mxu0
      %v641 = vadd.f32 %v500, %v640
      %v642 = vpop.f32.mrb[0].mxu0
      %643 = vmatprep.mubr.bf16.mxu0 0
      %644 = vmatmul.mubr.bf16.gmra.mrb[0].mxu0 %v525
      %v645 = vpop.f32.mrb[0].mxu0
      %v646 = vadd.f32 %v500, %v645
      %v647 = vpop.f32.mrb[0].mxu0
      %v648 = vpop.f32.mrb[0].mxu0
      %v649 = vadd.f32 %v500, %v648
      %v650 = vpop.f32.mrb[0].mxu0
      %651 = vmatprep.mubr.bf16.mxu0 0
      %652 = vmatmul.mubr.bf16.gmra.mrb[0].mxu0 %v528
      %v653 = vpop.f32.mrb[0].mxu0
      %v654 = vadd.f32 %v500, %v653
      %v655 = vpop.f32.mrb[0].mxu0
      %v656 = vpop.f32.mrb[0].mxu0
      %v657 = vadd.f32 %v500, %v656
      %v658 = vpop.f32.mrb[0].mxu0
      %659 = vmatprep.mubr.bf16.mxu0 0
      %660 = vmatmul.mubr.bf16.gmra.mrb[0].mxu0 %v531
      %v661 = vpop.f32.mrb[0].mxu0
      %v662 = vadd.f32 %v500, %v661
      %v663 = vpop.f32.mrb[0].mxu0
      %v664 = vpop.f32.mrb[0].mxu0
      %v665 = vadd.f32 %v500, %v664
      %v666 = vpop.f32.mrb[0].mxu0
      %667 = vmatprep.mubr.bf16.mxu0 0
      %668 = vmatmul.mubr.bf16.gmra.mrb[0].mxu0 %v534
      %v669 = vpop.f32.mrb[0].mxu0
      %v670 = vadd.f32 %v500, %v669
      %v671 = vpop.f32.mrb[0].mxu0
      %v672 = vpop.f32.mrb[0].mxu0
      %v673 = vadd.f32 %v500, %v672
      %v674 = vpop.f32.mrb[0].mxu0
      %675 = vmatprep.mubr.bf16.mxu0 0
      %676 = vmatmul.mubr.bf16.gmra.mrb[0].mxu0 %v537
      %v677 = vpop.f32.mrb[0].mxu0
      %v678 = vadd.f32 %v500, %v677
      %v679 = vpop.f32.mrb[0].mxu0
      %v680 = vpop.f32.mrb[0].mxu0
      %v681 = vadd.f32 %v500, %v680
      %v682 = vpop.f32.mrb[0].mxu0
      %683 = vmatprep.mubr.bf16.mxu0 0
      %684 = vmatmul.mubr.bf16.gmra.mrb[0].mxu0 %v540
      %v685 = vpop.f32.mrb[0].mxu0
      %v686 = vadd.f32 %v500, %v685
      %v687 = vpop.f32.mrb[0].mxu0
      %v688 = vpop.f32.mrb[0].mxu0
      %v689 = vadd.f32 %v500, %v688
      %v690 = vpop.f32.mrb[0].mxu0
      %691 = vmatprep.mubr.bf16.mxu0 0
      %692 = vmatmul.mubr.bf16.gmra.mrb[0].mxu0 %v543
      %v693 = vpop.f32.mrb[0].mxu0
      %v694 = vadd.f32 %v500, %v693
      %v695 = vpop.f32.mrb[0].mxu0
      %v696 = vpop.f32.mrb[0].mxu0
      %v697 = vadd.f32 %v500, %v696
      %v698 = vpop.f32.mrb[0].mxu0
      %699 = vmatprep.mubr.bf16.mxu0 0
      %700 = vmatmul.mubr.bf16.gmra.mrb[0].mxu0 %v546
      %v701 = vpop.f32.mrb[0].mxu0
      %v702 = vadd.f32 %v500, %v701
      %v703 = vpop.f32.mrb[0].mxu0
      %v704 = vpop.f32.mrb[0].mxu0
      %v705 = vadd.f32 %v500, %v704
      %v706 = vpop.f32.mrb[0].mxu0
      %707 = vmatprep.mubr.bf16.mxu0 0
      %708 = vmatmul.mubr.bf16.gmra.mrb[0].mxu0 %v549
      %v709 = vpop.f32.mrb[0].mxu0
      %v710 = vadd.f32 %v500, %v709
      %v711 = vpop.f32.mrb[0].mxu0
      %v712 = vpop.f32.mrb[0].mxu0
      %v713 = vadd.f32 %v500, %v712
      %v714 = vpop.f32.mrb[0].mxu0
      %715 = vdwg.mxu0
      %v716 = vmax.f32 %v590, 0.0
      %v717 = vmax.f32 %v593, 0.0
      %v718 = vmax.f32 %v598, 0.0
      %v719 = vmax.f32 %v601, 0.0
      %v720 = vmax.f32 %v606, 0.0
      %v721 = vmax.f32 %v609, 0.0
      %v722 = vmax.f32 %v614, 0.0
      %v723 = vmax.f32 %v617, 0.0
      %v724 = vmax.f32 %v622, 0.0
      %v725 = vmax.f32 %v625, 0.0
      %v726 = vmax.f32 %v630, 0.0
      %v727 = vmax.f32 %v633, 0.0
      %v728 = vmax.f32 %v638, 0.0
      %v729 = vmax.f32 %v641, 0.0
      %v730 = vmax.f32 %v646, 0.0
      %v731 = vmax.f32 %v649, 0.0
      %v732 = vmax.f32 %v654, 0.0
      %v733 = vmax.f32 %v657, 0.0
      %v734 = vmax.f32 %v662, 0.0
      %v735 = vmax.f32 %v665, 0.0
      %v736 = vmax.f32 %v670, 0.0
      %v737 = vmax.f32 %v673, 0.0
      %v738 = vmax.f32 %v678, 0.0
      %v739 = vmax.f32 %v681, 0.0
      %v740 = vmax.f32 %v686, 0.0
      %v741 = vmax.f32 %v689, 0.0
      %v742 = vmax.f32 %v694, 0.0
      %v743 = vmax.f32 %v697, 0.0
      %v744 = vmax.f32 %v702, 0.0
      %v745 = vmax.f32 %v705, 0.0
      %v746 = vmax.f32 %v710, 0.0
      %v747 = vmax.f32 %v713, 0.0
      %vm748 = vcmask 27648
      %749 = vst.msk [vmem:[#allocation2] sm:$0xf] %vm748, 0
      %750 = vst.msk [vmem:[#allocation2 + $0x4] sm:$0xf] %vm748, 0
      %751 = vst.msk [vmem:[#allocation2 + $0x8] sm:$0xf] %vm748, 0
      %752 = vst.msk [vmem:[#allocation2 + $0xc] sm:$0xf] %vm748, 0
      %753 = vst.msk [vmem:[#allocation2 + $0x10] sm:$0xf] %vm748, 0
      %754 = vst.msk [vmem:[#allocation2 + $0x14] sm:$0xf] %vm748, 0
      %755 = vst.msk [vmem:[#allocation2 + $0x18] sm:$0xf] %vm748, 0
      %756 = vst.msk [vmem:[#allocation2 + $0x1c] sm:$0xf] %vm748, 0
      %757 = vst.msk [vmem:[#allocation2 + $0x20] sm:$0xf] %vm748, 0
      %758 = vst.msk [vmem:[#allocation2 + $0x24] sm:$0xf] %vm748, 0
      %759 = vst.msk [vmem:[#allocation2 + $0x28] sm:$0xf] %vm748, 0
      %760 = vst.msk [vmem:[#allocation2 + $0x2c] sm:$0xf] %vm748, 0
      %761 = vst.msk [vmem:[#allocation2 + $0x30] sm:$0xf] %vm748, 0
      %762 = vst.msk [vmem:[#allocation2 + $0x34] sm:$0xf] %vm748, 0
      %763 = vst.msk [vmem:[#allocation2 + $0x38] sm:$0xf] %vm748, 0
      %764 = vst.msk [vmem:[#allocation2 + $0x3c] sm:$0xf] %vm748, 0
      %765 = vst.msk [vmem:[#allocation2 + $0x40] sm:$0xf] %vm748, 0
      %766 = vst.msk [vmem:[#allocation2 + $0x44] sm:$0xf] %vm748, 0
      %767 = vst.msk [vmem:[#allocation2 + $0x48] sm:$0xf] %vm748, 0
      %768 = vst.msk [vmem:[#allocation2 + $0x4c] sm:$0xf] %vm748, 0
      %769 = vst.msk [vmem:[#allocation2 + $0x50] sm:$0xf] %vm748, 0
      %770 = vst.msk [vmem:[#allocation2 + $0x54] sm:$0xf] %vm748, 0
      %771 = vst.msk [vmem:[#allocation2 + $0x58] sm:$0xf] %vm748, 0
      %772 = vst.msk [vmem:[#allocation2 + $0x5c] sm:$0xf] %vm748, 0
      %773 = vst.msk [vmem:[#allocation2 + $0x60] sm:$0xf] %vm748, 0
      %774 = vst.msk [vmem:[#allocation2 + $0x64] sm:$0xf] %vm748, 0
      %775 = vst.msk [vmem:[#allocation2 + $0x68] sm:$0xf] %vm748, 0
      %776 = vst.msk [vmem:[#allocation2 + $0x6c] sm:$0xf] %vm748, 0
      %777 = vst.msk [vmem:[#allocation2 + $0x70] sm:$0xf] %vm748, 0
      %778 = vst.msk [vmem:[#allocation2 + $0x74] sm:$0xf] %vm748, 0
      %779 = vst.msk [vmem:[#allocation2 + $0x78] sm:$0xf] %vm748, 0
      %780 = vst.msk [vmem:[#allocation2 + $0x7c] sm:$0xf] %vm748, 0
      %781 = vst.msk [vmem:[#allocation2 + $0x80] sm:$0xf] %vm748, 0
      %782 = vst.msk [vmem:[#allocation2 + $0x84] sm:$0xf] %vm748, 0
      %783 = vst.msk [vmem:[#allocation2 + $0x88] sm:$0xf] %vm748, 0
      %784 = vst.msk [vmem:[#allocation2 + $0x8c] sm:$0xf] %vm748, 0
      %vm785 = vcmask 24576
      %786 = vst.msk [vmem:[#allocation2 + $0x90] sm:$0x1] %vm785, 0
      %v787 = vpack.c.bf16 %v717, %v716
      %v788 = vpack.c.bf16 %v719, %v718
      %v789 = vpack.c.bf16 %v721, %v720
      %v790 = vpack.c.bf16 %v723, %v722
      %v791 = vpack.c.bf16 %v725, %v724
      %v792 = vpack.c.bf16 %v727, %v726
      %v793 = vpack.c.bf16 %v729, %v728
      %v794 = vpack.c.bf16 %v731, %v730
      %v795 = vpack.c.bf16 %v733, %v732
      %v796 = vpack.c.bf16 %v735, %v734
      %v797 = vpack.c.bf16 %v737, %v736
      %v798 = vpack.c.bf16 %v739, %v738
      %v799 = vpack.c.bf16 %v741, %v740
      %v800 = vpack.c.bf16 %v743, %v742
      %v801 = vpack.c.bf16 %v745, %v744
      %v802 = vpack.c.bf16 %v747, %v746
      %v819 = vunpack.c.l.b16 %v787
      %v820 = vunpack.c.h.b16 %v787
      %v821 = vunpack.c.l.b16 %v788
      %v822 = vunpack.c.h.b16 %v788
      %v823 = vunpack.c.l.b16 %v789
      %v824 = vunpack.c.h.b16 %v789
      %v825 = vunpack.c.l.b16 %v790
      %v826 = vunpack.c.h.b16 %v790
      %v827 = vunpack.c.l.b16 %v791
      %v828 = vunpack.c.h.b16 %v791
      %v829 = vunpack.c.l.b16 %v792
      %v830 = vunpack.c.h.b16 %v792
      %v831 = vunpack.c.l.b16 %v793
      %v832 = vunpack.c.h.b16 %v793
      %v833 = vunpack.c.l.b16 %v794
      %v834 = vunpack.c.h.b16 %v794
      %v835 = vunpack.c.l.b16 %v795
      %v836 = vunpack.c.h.b16 %v795
      %v837 = vunpack.c.l.b16 %v796
      %v838 = vunpack.c.h.b16 %v796
      %v839 = vunpack.c.l.b16 %v797
      %v840 = vunpack.c.h.b16 %v797
      %v841 = vunpack.c.l.b16 %v798
      %v842 = vunpack.c.h.b16 %v798
      %v843 = vunpack.c.l.b16 %v799
      %v844 = vunpack.c.h.b16 %v799
      %v845 = vunpack.c.l.b16 %v800
      %v846 = vunpack.c.h.b16 %v800
      %v847 = vunpack.c.l.b16 %v801
      %v848 = vunpack.c.h.b16 %v801
      %v849 = vunpack.c.l.b16 %v802
      %v850 = vunpack.c.h.b16 %v802
      %v851 = vpack.c.b16 %v819, %v819
      %v852 = vpack.c.b16 %v820, %v820
      %v853 = vpack.c.b16 %v821, %v821
      %v854 = vpack.c.b16 %v822, %v822
      %v855 = vpack.c.b16 %v823, %v823
      %v856 = vpack.c.b16 %v824, %v824
      %v857 = vpack.c.b16 %v825, %v825
      %v858 = vpack.c.b16 %v826, %v826
      %v859 = vpack.c.b16 %v827, %v827
      %v860 = vpack.c.b16 %v828, %v828
      %v861 = vpack.c.b16 %v829, %v829
      %v862 = vpack.c.b16 %v830, %v830
      %v863 = vpack.c.b16 %v831, %v831
      %v864 = vpack.c.b16 %v832, %v832
      %v865 = vpack.c.b16 %v833, %v833
      %v866 = vpack.c.b16 %v834, %v834
      %v867 = vpack.c.b16 %v835, %v835
      %v868 = vpack.c.b16 %v836, %v836
      %v869 = vpack.c.b16 %v837, %v837
      %v870 = vpack.c.b16 %v838, %v838
      %v871 = vpack.c.b16 %v839, %v839
      %v872 = vpack.c.b16 %v840, %v840
      %v873 = vpack.c.b16 %v841, %v841
      %v874 = vpack.c.b16 %v842, %v842
      %v875 = vpack.c.b16 %v843, %v843
      %v876 = vpack.c.b16 %v844, %v844
      %v877 = vpack.c.b16 %v845, %v845
      %v878 = vpack.c.b16 %v846, %v846
      %v879 = vpack.c.b16 %v847, %v847
      %v880 = vpack.c.b16 %v848, %v848
      %v881 = vpack.c.b16 %v849, %v849
      %v882 = vpack.c.b16 %v850, %v850
      %vm883 = vsmask.f32 256
      %vm884 = vsmask.f32 4368
      %vm885 = vmor %vm883, %vm884
      %v887 = vshrl.u32 %v851, 16
      %v889 = vrot.slane %v887, 7
      %v890 = vshll.u32 %v851, 16
      %v892 = vor.u32 %v889, %v890
      %v893 = vrot.slane %v889, 4
      %v895 = vshrl.u32 %v852, 16
      %v897 = vrot.slane %v895, 7
      %v898 = vshll.u32 %v852, 16
      %v900 = vor.u32 %v897, %v898
      %v901 = vsel %vm885, %v893, %v900
      %v902 = vrot.slane %v897, 4
      %v904 = vshrl.u32 %v853, 16
      %v906 = vrot.slane %v904, 7
      %v907 = vshll.u32 %v853, 16
      %v909 = vor.u32 %v906, %v907
      %v910 = vsel %vm885, %v902, %v909
      %v911 = vrot.slane %v906, 4
      %v913 = vshrl.u32 %v854, 16
      %v915 = vrot.slane %v913, 7
      %v916 = vshll.u32 %v854, 16
      %v918 = vor.u32 %v915, %v916
      %v919 = vsel %vm885, %v911, %v918
      %v920 = vrot.slane %v915, 4
      %v922 = vshrl.u32 %v855, 16
      %v924 = vrot.slane %v922, 7
      %v925 = vshll.u32 %v855, 16
      %v927 = vor.u32 %v924, %v925
      %v928 = vsel %vm885, %v920, %v927
      %v929 = vrot.slane %v924, 4
      %v931 = vshrl.u32 %v856, 16
      %v933 = vrot.slane %v931, 7
      %v934 = vshll.u32 %v856, 16
      %v936 = vor.u32 %v933, %v934
      %v937 = vsel %vm885, %v929, %v936
      %v938 = vrot.slane %v933, 4
      %v940 = vshrl.u32 %v857, 16
      %v942 = vrot.slane %v940, 7
      %v943 = vshll.u32 %v857, 16
      %v945 = vor.u32 %v942, %v943
      %v946 = vsel %vm885, %v938, %v945
      %v947 = vrot.slane %v942, 4
      %v949 = vshrl.u32 %v858, 16
      %v951 = vrot.slane %v949, 7
      %v952 = vshll.u32 %v858, 16
      %v954 = vor.u32 %v951, %v952
      %v955 = vsel %vm885, %v947, %v954
      %v956 = vrot.slane %v951, 4
      %v958 = vshrl.u32 %v859, 16
      %v960 = vrot.slane %v958, 7
      %v961 = vshll.u32 %v859, 16
      %v963 = vor.u32 %v960, %v961
      %v964 = vsel %vm885, %v956, %v963
      %v965 = vrot.slane %v960, 4
      %v967 = vshrl.u32 %v860, 16
      %v969 = vrot.slane %v967, 7
      %v970 = vshll.u32 %v860, 16
      %v972 = vor.u32 %v969, %v970
      %v973 = vsel %vm885, %v965, %v972
      %v974 = vrot.slane %v969, 4
      %v976 = vshrl.u32 %v861, 16
      %v978 = vrot.slane %v976, 7
      %v979 = vshll.u32 %v861, 16
      %v981 = vor.u32 %v978, %v979
      %v982 = vsel %vm885, %v974, %v981
      %v983 = vrot.slane %v978, 4
      %v985 = vshrl.u32 %v862, 16
      %v987 = vrot.slane %v985, 7
      %v988 = vshll.u32 %v862, 16
      %v990 = vor.u32 %v987, %v988
      %v991 = vsel %vm885, %v983, %v990
      %v992 = vrot.slane %v987, 4
      %v994 = vshrl.u32 %v863, 16
      %v996 = vrot.slane %v994, 7
      %v997 = vshll.u32 %v863, 16
      %v999 = vor.u32 %v996, %v997
      %v1000 = vsel %vm885, %v992, %v999
      %v1001 = vrot.slane %v996, 4
      %v1003 = vshrl.u32 %v864, 16
      %v1005 = vrot.slane %v1003, 7
      %v1006 = vshll.u32 %v864, 16
      %v1008 = vor.u32 %v1005, %v1006
      %v1009 = vsel %vm885, %v1001, %v1008
      %v1010 = vrot.slane %v1005, 4
      %v1012 = vshrl.u32 %v865, 16
      %v1014 = vrot.slane %v1012, 7
      %v1015 = vshll.u32 %v865, 16
      %v1017 = vor.u32 %v1014, %v1015
      %v1018 = vsel %vm885, %v1010, %v1017
      %v1019 = vrot.slane %v1014, 4
      %v1021 = vshrl.u32 %v866, 16
      %v1023 = vrot.slane %v1021, 7
      %v1024 = vshll.u32 %v866, 16
      %v1026 = vor.u32 %v1023, %v1024
      %v1027 = vsel %vm885, %v1019, %v1026
      %v1028 = vrot.slane %v1023, 4
      %v1030 = vshrl.u32 %v867, 16
      %v1032 = vrot.slane %v1030, 7
      %v1033 = vshll.u32 %v867, 16
      %v1035 = vor.u32 %v1032, %v1033
      %v1036 = vsel %vm885, %v1028, %v1035
      %v1037 = vrot.slane %v1032, 4
      %v1039 = vshrl.u32 %v868, 16
      %v1041 = vrot.slane %v1039, 7
      %v1042 = vshll.u32 %v868, 16
      %v1044 = vor.u32 %v1041, %v1042
      %v1045 = vsel %vm885, %v1037, %v1044
      %v1046 = vrot.slane %v1041, 4
      %v1048 = vshrl.u32 %v869, 16
      %v1050 = vrot.slane %v1048, 7
      %v1051 = vshll.u32 %v869, 16
      %v1053 = vor.u32 %v1050, %v1051
      %v1054 = vsel %vm885, %v1046, %v1053
      %v1055 = vrot.slane %v1050, 4
      %v1057 = vshrl.u32 %v870, 16
      %v1059 = vrot.slane %v1057, 7
      %v1060 = vshll.u32 %v870, 16
      %v1062 = vor.u32 %v1059, %v1060
      %v1063 = vsel %vm885, %v1055, %v1062
      %v1064 = vrot.slane %v1059, 4
      %v1066 = vshrl.u32 %v871, 16
      %v1068 = vrot.slane %v1066, 7
      %v1069 = vshll.u32 %v871, 16
      %v1071 = vor.u32 %v1068, %v1069
      %v1072 = vsel %vm885, %v1064, %v1071
      %v1073 = vrot.slane %v1068, 4
      %v1075 = vshrl.u32 %v872, 16
      %v1077 = vrot.slane %v1075, 7
      %v1078 = vshll.u32 %v872, 16
      %v1080 = vor.u32 %v1077, %v1078
      %v1081 = vsel %vm885, %v1073, %v1080
      %v1082 = vrot.slane %v1077, 4
      %v1084 = vshrl.u32 %v873, 16
      %v1086 = vrot.slane %v1084, 7
      %v1087 = vshll.u32 %v873, 16
      %v1089 = vor.u32 %v1086, %v1087
      %v1090 = vsel %vm885, %v1082, %v1089
      %v1091 = vrot.slane %v1086, 4
      %v1093 = vshrl.u32 %v874, 16
      %v1095 = vrot.slane %v1093, 7
      %v1096 = vshll.u32 %v874, 16
      %v1098 = vor.u32 %v1095, %v1096
      %v1099 = vsel %vm885, %v1091, %v1098
      %v1100 = vrot.slane %v1095, 4
      %v1102 = vshrl.u32 %v875, 16
      %v1104 = vrot.slane %v1102, 7
      %v1105 = vshll.u32 %v875, 16
      %v1107 = vor.u32 %v1104, %v1105
      %v1108 = vsel %vm885, %v1100, %v1107
      %v1109 = vrot.slane %v1104, 4
      %v1111 = vshrl.u32 %v876, 16
      %v1113 = vrot.slane %v1111, 7
      %v1114 = vshll.u32 %v876, 16
      %v1116 = vor.u32 %v1113, %v1114
      %v1117 = vsel %vm885, %v1109, %v1116
      %v1118 = vrot.slane %v1113, 4
      %v1120 = vshrl.u32 %v877, 16
      %v1122 = vrot.slane %v1120, 7
      %v1123 = vshll.u32 %v877, 16
      %v1125 = vor.u32 %v1122, %v1123
      %v1126 = vsel %vm885, %v1118, %v1125
      %v1127 = vrot.slane %v1122, 4
      %v1129 = vshrl.u32 %v878, 16
      %v1131 = vrot.slane %v1129, 7
      %v1132 = vshll.u32 %v878, 16
      %v1134 = vor.u32 %v1131, %v1132
      %v1135 = vsel %vm885, %v1127, %v1134
      %v1136 = vrot.slane %v1131, 4
      %v1138 = vshrl.u32 %v879, 16
      %v1140 = vrot.slane %v1138, 7
      %v1141 = vshll.u32 %v879, 16
      %v1143 = vor.u32 %v1140, %v1141
      %v1144 = vsel %vm885, %v1136, %v1143
      %v1145 = vrot.slane %v1140, 4
      %v1147 = vshrl.u32 %v880, 16
      %v1149 = vrot.slane %v1147, 7
      %v1150 = vshll.u32 %v880, 16
      %v1152 = vor.u32 %v1149, %v1150
      %v1153 = vsel %vm885, %v1145, %v1152
      %v1154 = vrot.slane %v1149, 4
      %v1156 = vshrl.u32 %v881, 16
      %v1158 = vrot.slane %v1156, 7
      %v1159 = vshll.u32 %v881, 16
      %v1161 = vor.u32 %v1158, %v1159
      %v1162 = vsel %vm885, %v1154, %v1161
      %v1163 = vrot.slane %v1158, 4
      %v1165 = vshrl.u32 %v882, 16
      %v1167 = vrot.slane %v1165, 7
      %v1168 = vshll.u32 %v882, 16
      %v1170 = vor.u32 %v1167, %v1168
      %v1171 = vsel %vm885, %v1163, %v1170
      %v1172 = vrot.slane %v1167, 4
      %vm1206 = vcmask 27648
      %vm1207 = vsmask.f32 7938
      %vm1208 = vmand %vm1206, %vm1207
      %v1209 = vld [vmem:[#allocation2 + $0x8] sm:$0xf]
      %v1210 = vsel %vm1208, %v892, %v1209
      %1211 = vst [vmem:[#allocation2 + $0x8] sm:$0xf] %v1210
      %1212 = vst.msk [vmem:[#allocation2 + $0xc] sm:$0xf] %vm748, %v901
      %1213 = vst.msk [vmem:[#allocation2 + $0x10] sm:$0xf] %vm748, %v910
      %1214 = vst.msk [vmem:[#allocation2 + $0x14] sm:$0xf] %vm748, %v919
      %1215 = vst.msk [vmem:[#allocation2 + $0x18] sm:$0xf] %vm748, %v928
      %1216 = vst.msk [vmem:[#allocation2 + $0x1c] sm:$0xf] %vm748, %v937
      %1217 = vst.msk [vmem:[#allocation2 + $0x20] sm:$0xf] %vm748, %v946
      %1218 = vst.msk [vmem:[#allocation2 + $0x24] sm:$0xf] %vm748, %v955
      %1219 = vst.msk [vmem:[#allocation2 + $0x28] sm:$0xf] %vm748, %v964
      %1220 = vst.msk [vmem:[#allocation2 + $0x2c] sm:$0xf] %vm748, %v973
      %1221 = vst.msk [vmem:[#allocation2 + $0x30] sm:$0xf] %vm748, %v982
      %1222 = vst.msk [vmem:[#allocation2 + $0x34] sm:$0xf] %vm748, %v991
      %1223 = vst.msk [vmem:[#allocation2 + $0x38] sm:$0xf] %vm748, %v1000
      %1224 = vst.msk [vmem:[#allocation2 + $0x3c] sm:$0xf] %vm748, %v1009
      %1225 = vst.msk [vmem:[#allocation2 + $0x40] sm:$0xf] %vm748, %v1018
      %1226 = vst.msk [vmem:[#allocation2 + $0x44] sm:$0xf] %vm748, %v1027
      %1227 = vst.msk [vmem:[#allocation2 + $0x48] sm:$0xf] %vm748, %v1036
      %1228 = vst.msk [vmem:[#allocation2 + $0x4c] sm:$0xf] %vm748, %v1045
      %1229 = vst.msk [vmem:[#allocation2 + $0x50] sm:$0xf] %vm748, %v1054
      %1230 = vst.msk [vmem:[#allocation2 + $0x54] sm:$0xf] %vm748, %v1063
      %1231 = vst.msk [vmem:[#allocation2 + $0x58] sm:$0xf] %vm748, %v1072
      %1232 = vst.msk [vmem:[#allocation2 + $0x5c] sm:$0xf] %vm748, %v1081
      %1233 = vst.msk [vmem:[#allocation2 + $0x60] sm:$0xf] %vm748, %v1090
      %1234 = vst.msk [vmem:[#allocation2 + $0x64] sm:$0xf] %vm748, %v1099
      %1235 = vst.msk [vmem:[#allocation2 + $0x68] sm:$0xf] %vm748, %v1108
      %1236 = vst.msk [vmem:[#allocation2 + $0x6c] sm:$0xf] %vm748, %v1117
      %1237 = vst.msk [vmem:[#allocation2 + $0x70] sm:$0xf] %vm748, %v1126
      %1238 = vst.msk [vmem:[#allocation2 + $0x74] sm:$0xf] %vm748, %v1135
      %1239 = vst.msk [vmem:[#allocation2 + $0x78] sm:$0xf] %vm748, %v1144
      %1240 = vst.msk [vmem:[#allocation2 + $0x7c] sm:$0xf] %vm748, %v1153
      %1241 = vst.msk [vmem:[#allocation2 + $0x80] sm:$0xf] %vm748, %v1162
      %1242 = vst.msk [vmem:[#allocation2 + $0x84] sm:$0xf] %vm748, %v1171
      %vm1243 = vcmask 24576
      %vm1244 = vmand %vm1243, %vm883
      %v1245 = vld [vmem:[#allocation2 + $0x88] sm:$0x1]
      %v1246 = vsel %vm1244, %v1172, %v1245
      %1247 = vst [vmem:[#allocation2 + $0x88] sm:$0x1] %v1246
      %v1248 = vlaneseq
      %v1249 = vshrl.u32 %v1248, 7
      %v1250 = vadd.s32 %v1249, 8
      %v1251 = vadd.s32 %v1249, 16
      %v1252 = vadd.s32 %v1249, 24
      %v1253 = vadd.s32 %v1249, 32
      %v1254 = vadd.s32 %v1249, 40
      %v1255 = vadd.s32 %v1249, 48
      %v1256 = vadd.s32 %v1249, 56
      %v1257 = vadd.s32 %v1249, 64
      %v1258 = vadd.s32 %v1249, 72
      %v1259 = vadd.s32 %v1249, 80
      %v1260 = vadd.s32 %v1249, 88
      %v1261 = vadd.s32 %v1249, 96
      %v1262 = vadd.s32 %v1249, 104
      %v1263 = vadd.s32 %v1249, 112
      %v1264 = vadd.s32 %v1249, 120
      %v1265 = vadd.s32 %v1249, 128
      %v1266 = vadd.s32 %v1249, 136
      %v1267 = vadd.s32 %v1249, 144
      %v1268 = vadd.s32 %v1249, 152
      %v1269 = vadd.s32 %v1249, 160
      %v1270 = vadd.s32 %v1249, 168
      %v1271 = vadd.s32 %v1249, 176
      %v1272 = vadd.s32 %v1249, 184
      %v1273 = vadd.s32 %v1249, 192
      %v1274 = vadd.s32 %v1249, 200
      %v1275 = vadd.s32 %v1249, 208
      %v1276 = vadd.s32 %v1249, 216
      %v1277 = vadd.s32 %v1249, 224
      %v1278 = vadd.s32 %v1249, 232
      %v1279 = vadd.s32 %v1249, 240
      %v1280 = vadd.s32 %v1249, 248
      %vm1281 = vcmp.lt.s32.totalorder %v1249, 0
      %v1282 = vsub.s32 0, %v1249
      %v1283 = vsel %vm1281, %v1282, %v1249
      %v1284 = vshrl.u32 %v1283, 4
      %v1285 = vand.u32 %v1283, 15
      %v1286 = vsub.s32 0, %v1285
      %v1287 = vsel %vm1281, %v1286, %v1285
      %vm1288 = vcmp.lt.s32.totalorder %v1250, 0
      %v1289 = vsub.s32 0, %v1250
      %v1290 = vsel %vm1288, %v1289, %v1250
      %v1291 = vshrl.u32 %v1290, 4
      %v1292 = vand.u32 %v1290, 15
      %v1293 = vsub.s32 0, %v1292
      %v1294 = vsel %vm1288, %v1293, %v1292
      %vm1295 = vcmp.lt.s32.totalorder %v1251, 0
      %v1296 = vsub.s32 0, %v1251
      %v1297 = vsel %vm1295, %v1296, %v1251
      %v1298 = vshrl.u32 %v1297, 4
      %v1299 = vand.u32 %v1297, 15
      %v1300 = vsub.s32 0, %v1299
      %v1301 = vsel %vm1295, %v1300, %v1299
      %vm1302 = vcmp.lt.s32.totalorder %v1252, 0
      %v1303 = vsub.s32 0, %v1252
      %v1304 = vsel %vm1302, %v1303, %v1252
      %v1305 = vshrl.u32 %v1304, 4
      %v1306 = vand.u32 %v1304, 15
      %v1307 = vsub.s32 0, %v1306
      %v1308 = vsel %vm1302, %v1307, %v1306
      %vm1309 = vcmp.lt.s32.totalorder %v1253, 0
      %v1310 = vsub.s32 0, %v1253
      %v1311 = vsel %vm1309, %v1310, %v1253
      %v1312 = vshrl.u32 %v1311, 4
      %v1313 = vand.u32 %v1311, 15
      %v1314 = vsub.s32 0, %v1313
      %v1315 = vsel %vm1309, %v1314, %v1313
      %vm1316 = vcmp.lt.s32.totalorder %v1254, 0
      %v1317 = vsub.s32 0, %v1254
      %v1318 = vsel %vm1316, %v1317, %v1254
      %v1319 = vshrl.u32 %v1318, 4
      %v1320 = vand.u32 %v1318, 15
      %v1321 = vsub.s32 0, %v1320
      %v1322 = vsel %vm1316, %v1321, %v1320
      %vm1323 = vcmp.lt.s32.totalorder %v1255, 0
      %v1324 = vsub.s32 0, %v1255
      %v1325 = vsel %vm1323, %v1324, %v1255
      %v1326 = vshrl.u32 %v1325, 4
      %v1327 = vand.u32 %v1325, 15
      %v1328 = vsub.s32 0, %v1327
      %v1329 = vsel %vm1323, %v1328, %v1327
      %vm1330 = vcmp.lt.s32.totalorder %v1256, 0
      %v1331 = vsub.s32 0, %v1256
      %v1332 = vsel %vm1330, %v1331, %v1256
      %v1333 = vshrl.u32 %v1332, 4
      %v1334 = vand.u32 %v1332, 15
      %v1335 = vsub.s32 0, %v1334
      %v1336 = vsel %vm1330, %v1335, %v1334
      %vm1337 = vcmp.lt.s32.totalorder %v1257, 0
      %v1338 = vsub.s32 0, %v1257
      %v1339 = vsel %vm1337, %v1338, %v1257
      %v1340 = vshrl.u32 %v1339, 4
      %v1341 = vand.u32 %v1339, 15
      %v1342 = vsub.s32 0, %v1341
      %v1343 = vsel %vm1337, %v1342, %v1341
      %vm1344 = vcmp.lt.s32.totalorder %v1258, 0
      %v1345 = vsub.s32 0, %v1258
      %v1346 = vsel %vm1344, %v1345, %v1258
      %v1347 = vshrl.u32 %v1346, 4
      %v1348 = vand.u32 %v1346, 15
      %v1349 = vsub.s32 0, %v1348
      %v1350 = vsel %vm1344, %v1349, %v1348
      %vm1351 = vcmp.lt.s32.totalorder %v1259, 0
      %v1352 = vsub.s32 0, %v1259
      %v1353 = vsel %vm1351, %v1352, %v1259
      %v1354 = vshrl.u32 %v1353, 4
      %v1355 = vand.u32 %v1353, 15
      %v1356 = vsub.s32 0, %v1355
      %v1357 = vsel %vm1351, %v1356, %v1355
      %vm1358 = vcmp.lt.s32.totalorder %v1260, 0
      %v1359 = vsub.s32 0, %v1260
      %v1360 = vsel %vm1358, %v1359, %v1260
      %v1361 = vshrl.u32 %v1360, 4
      %v1362 = vand.u32 %v1360, 15
      %v1363 = vsub.s32 0, %v1362
      %v1364 = vsel %vm1358, %v1363, %v1362
      %vm1365 = vcmp.lt.s32.totalorder %v1261, 0
      %v1366 = vsub.s32 0, %v1261
      %v1367 = vsel %vm1365, %v1366, %v1261
      %v1368 = vshrl.u32 %v1367, 4
      %v1369 = vand.u32 %v1367, 15
      %v1370 = vsub.s32 0, %v1369
      %v1371 = vsel %vm1365, %v1370, %v1369
      %vm1372 = vcmp.lt.s32.totalorder %v1262, 0
      %v1373 = vsub.s32 0, %v1262
      %v1374 = vsel %vm1372, %v1373, %v1262
      %v1375 = vshrl.u32 %v1374, 4
      %v1376 = vand.u32 %v1374, 15
      %v1377 = vsub.s32 0, %v1376
      %v1378 = vsel %vm1372, %v1377, %v1376
      %vm1379 = vcmp.lt.s32.totalorder %v1263, 0
      %v1380 = vsub.s32 0, %v1263
      %v1381 = vsel %vm1379, %v1380, %v1263
      %v1382 = vshrl.u32 %v1381, 4
      %v1383 = vand.u32 %v1381, 15
      %v1384 = vsub.s32 0, %v1383
      %v1385 = vsel %vm1379, %v1384, %v1383
      %vm1386 = vcmp.lt.s32.totalorder %v1264, 0
      %v1387 = vsub.s32 0, %v1264
      %v1388 = vsel %vm1386, %v1387, %v1264
      %v1389 = vshrl.u32 %v1388, 4
      %v1390 = vand.u32 %v1388, 15
      %v1391 = vsub.s32 0, %v1390
      %v1392 = vsel %vm1386, %v1391, %v1390
      %vm1393 = vcmp.lt.s32.totalorder %v1265, 0
      %v1394 = vsub.s32 0, %v1265
      %v1395 = vsel %vm1393, %v1394, %v1265
      %v1396 = vshrl.u32 %v1395, 4
      %v1397 = vand.u32 %v1395, 15
      %v1398 = vsub.s32 0, %v1397
      %v1399 = vsel %vm1393, %v1398, %v1397
      %vm1400 = vcmp.lt.s32.totalorder %v1266, 0
      %v1401 = vsub.s32 0, %v1266
      %v1402 = vsel %vm1400, %v1401, %v1266
      %v1403 = vshrl.u32 %v1402, 4
      %v1404 = vand.u32 %v1402, 15
      %v1405 = vsub.s32 0, %v1404
      %v1406 = vsel %vm1400, %v1405, %v1404
      %vm1407 = vcmp.lt.s32.totalorder %v1267, 0
      %v1408 = vsub.s32 0, %v1267
      %v1409 = vsel %vm1407, %v1408, %v1267
      %v1410 = vshrl.u32 %v1409, 4
      %v1411 = vand.u32 %v1409, 15
      %v1412 = vsub.s32 0, %v1411
      %v1413 = vsel %vm1407, %v1412, %v1411
      %vm1414 = vcmp.lt.s32.totalorder %v1268, 0
      %v1415 = vsub.s32 0, %v1268
      %v1416 = vsel %vm1414, %v1415, %v1268
      %v1417 = vshrl.u32 %v1416, 4
      %v1418 = vand.u32 %v1416, 15
      %v1419 = vsub.s32 0, %v1418
      %v1420 = vsel %vm1414, %v1419, %v1418
      %vm1421 = vcmp.lt.s32.totalorder %v1269, 0
      %v1422 = vsub.s32 0, %v1269
      %v1423 = vsel %vm1421, %v1422, %v1269
      %v1424 = vshrl.u32 %v1423, 4
      %v1425 = vand.u32 %v1423, 15
      %v1426 = vsub.s32 0, %v1425
      %v1427 = vsel %vm1421, %v1426, %v1425
      %vm1428 = vcmp.lt.s32.totalorder %v1270, 0
      %v1429 = vsub.s32 0, %v1270
      %v1430 = vsel %vm1428, %v1429, %v1270
      %v1431 = vshrl.u32 %v1430, 4
      %v1432 = vand.u32 %v1430, 15
      %v1433 = vsub.s32 0, %v1432
      %v1434 = vsel %vm1428, %v1433, %v1432
      %vm1435 = vcmp.lt.s32.totalorder %v1271, 0
      %v1436 = vsub.s32 0, %v1271
      %v1437 = vsel %vm1435, %v1436, %v1271
      %v1438 = vshrl.u32 %v1437, 4
      %v1439 = vand.u32 %v1437, 15
      %v1440 = vsub.s32 0, %v1439
      %v1441 = vsel %vm1435, %v1440, %v1439
      %vm1442 = vcmp.lt.s32.totalorder %v1272, 0
      %v1443 = vsub.s32 0, %v1272
      %v1444 = vsel %vm1442, %v1443, %v1272
      %v1445 = vshrl.u32 %v1444, 4
      %v1446 = vand.u32 %v1444, 15
      %v1447 = vsub.s32 0, %v1446
      %v1448 = vsel %vm1442, %v1447, %v1446
      %vm1449 = vcmp.lt.s32.totalorder %v1273, 0
      %v1450 = vsub.s32 0, %v1273
      %v1451 = vsel %vm1449, %v1450, %v1273
      %v1452 = vshrl.u32 %v1451, 4
      %v1453 = vand.u32 %v1451, 15
      %v1454 = vsub.s32 0, %v1453
      %v1455 = vsel %vm1449, %v1454, %v1453
      %vm1456 = vcmp.lt.s32.totalorder %v1274, 0
      %v1457 = vsub.s32 0, %v1274
      %v1458 = vsel %vm1456, %v1457, %v1274
      %v1459 = vshrl.u32 %v1458, 4
      %v1460 = vand.u32 %v1458, 15
      %v1461 = vsub.s32 0, %v1460
      %v1462 = vsel %vm1456, %v1461, %v1460
      %vm1463 = vcmp.lt.s32.totalorder %v1275, 0
      %v1464 = vsub.s32 0, %v1275
      %v1465 = vsel %vm1463, %v1464, %v1275
      %v1466 = vshrl.u32 %v1465, 4
      %v1467 = vand.u32 %v1465, 15
      %v1468 = vsub.s32 0, %v1467
      %v1469 = vsel %vm1463, %v1468, %v1467
      %vm1470 = vcmp.lt.s32.totalorder %v1276, 0
      %v1471 = vsub.s32 0, %v1276
      %v1472 = vsel %vm1470, %v1471, %v1276
      %v1473 = vshrl.u32 %v1472, 4
      %v1474 = vand.u32 %v1472, 15
      %v1475 = vsub.s32 0, %v1474
      %v1476 = vsel %vm1470, %v1475, %v1474
      %vm1477 = vcmp.lt.s32.totalorder %v1277, 0
      %v1478 = vsub.s32 0, %v1277
      %v1479 = vsel %vm1477, %v1478, %v1277
      %v1480 = vshrl.u32 %v1479, 4
      %v1481 = vand.u32 %v1479, 15
      %v1482 = vsub.s32 0, %v1481
      %v1483 = vsel %vm1477, %v1482, %v1481
      %vm1484 = vcmp.lt.s32.totalorder %v1278, 0
      %v1485 = vsub.s32 0, %v1278
      %v1486 = vsel %vm1484, %v1485, %v1278
      %v1487 = vshrl.u32 %v1486, 4
      %v1488 = vand.u32 %v1486, 15
      %v1489 = vsub.s32 0, %v1488
      %v1490 = vsel %vm1484, %v1489, %v1488
      %vm1491 = vcmp.lt.s32.totalorder %v1279, 0
      %v1492 = vsub.s32 0, %v1279
      %v1493 = vsel %vm1491, %v1492, %v1279
      %v1494 = vshrl.u32 %v1493, 4
      %v1495 = vand.u32 %v1493, 15
      %v1496 = vsub.s32 0, %v1495
      %v1497 = vsel %vm1491, %v1496, %v1495
      %vm1498 = vcmp.lt.s32.totalorder %v1280, 0
      %v1499 = vsub.s32 0, %v1280
      %v1500 = vsel %vm1498, %v1499, %v1280
      %v1501 = vshrl.u32 %v1500, 4
      %v1502 = vand.u32 %v1500, 15
      %v1503 = vsub.s32 0, %v1502
      %v1504 = vsel %vm1498, %v1503, %v1502
      %vm1505 = vcmp.ne.s32.totalorder %v1287, 0
      %vm1506 = vcmp.ne.s32.totalorder %v1294, 0
      %vm1507 = vcmp.ne.s32.totalorder %v1301, 0
      %vm1508 = vcmp.ne.s32.totalorder %v1308, 0
      %vm1509 = vcmp.ne.s32.totalorder %v1315, 0
      %vm1510 = vcmp.ne.s32.totalorder %v1322, 0
      %vm1511 = vcmp.ne.s32.totalorder %v1329, 0
      %vm1512 = vcmp.ne.s32.totalorder %v1336, 0
      %vm1513 = vcmp.ne.s32.totalorder %v1343, 0
      %vm1514 = vcmp.ne.s32.totalorder %v1350, 0
      %vm1515 = vcmp.ne.s32.totalorder %v1357, 0
      %vm1516 = vcmp.ne.s32.totalorder %v1364, 0
      %vm1517 = vcmp.ne.s32.totalorder %v1371, 0
      %vm1518 = vcmp.ne.s32.totalorder %v1378, 0
      %vm1519 = vcmp.ne.s32.totalorder %v1385, 0
      %vm1520 = vcmp.ne.s32.totalorder %v1392, 0
      %vm1521 = vcmp.ne.s32.totalorder %v1399, 0
      %vm1522 = vcmp.ne.s32.totalorder %v1406, 0
      %vm1523 = vcmp.ne.s32.totalorder %v1413, 0
      %vm1524 = vcmp.ne.s32.totalorder %v1420, 0
      %vm1525 = vcmp.ne.s32.totalorder %v1427, 0
      %vm1526 = vcmp.ne.s32.totalorder %v1434, 0
      %vm1527 = vcmp.ne.s32.totalorder %v1441, 0
      %vm1528 = vcmp.ne.s32.totalorder %v1448, 0
      %vm1529 = vcmp.ne.s32.totalorder %v1455, 0
      %vm1530 = vcmp.ne.s32.totalorder %v1462, 0
      %vm1531 = vcmp.ne.s32.totalorder %v1469, 0
      %vm1532 = vcmp.ne.s32.totalorder %v1476, 0
      %vm1533 = vcmp.ne.s32.totalorder %v1483, 0
      %vm1534 = vcmp.ne.s32.totalorder %v1490, 0
      %vm1535 = vcmp.ne.s32.totalorder %v1497, 0
      %vm1536 = vcmp.ne.s32.totalorder %v1504, 0
      %vm1537 = vcmp.lt.s32.totalorder %v1287, 0
      %vm1538 = vcmp.lt.s32.totalorder %v1294, 0
      %vm1539 = vcmp.lt.s32.totalorder %v1301, 0
      %vm1540 = vcmp.lt.s32.totalorder %v1308, 0
      %vm1541 = vcmp.lt.s32.totalorder %v1315, 0
      %vm1542 = vcmp.lt.s32.totalorder %v1322, 0
      %vm1543 = vcmp.lt.s32.totalorder %v1329, 0
      %vm1544 = vcmp.lt.s32.totalorder %v1336, 0
      %vm1545 = vcmp.lt.s32.totalorder %v1343, 0
      %vm1546 = vcmp.lt.s32.totalorder %v1350, 0
      %vm1547 = vcmp.lt.s32.totalorder %v1357, 0
      %vm1548 = vcmp.lt.s32.totalorder %v1364, 0
      %vm1549 = vcmp.lt.s32.totalorder %v1371, 0
      %vm1550 = vcmp.lt.s32.totalorder %v1378, 0
      %vm1551 = vcmp.lt.s32.totalorder %v1385, 0
      %vm1552 = vcmp.lt.s32.totalorder %v1392, 0
      %vm1553 = vcmp.lt.s32.totalorder %v1399, 0
      %vm1554 = vcmp.lt.s32.totalorder %v1406, 0
      %vm1555 = vcmp.lt.s32.totalorder %v1413, 0
      %vm1556 = vcmp.lt.s32.totalorder %v1420, 0
      %vm1557 = vcmp.lt.s32.totalorder %v1427, 0
      %vm1558 = vcmp.lt.s32.totalorder %v1434, 0
      %vm1559 = vcmp.lt.s32.totalorder %v1441, 0
      %vm1560 = vcmp.lt.s32.totalorder %v1448, 0
      %vm1561 = vcmp.lt.s32.totalorder %v1455, 0
      %vm1562 = vcmp.lt.s32.totalorder %v1462, 0
      %vm1563 = vcmp.lt.s32.totalorder %v1469, 0
      %vm1564 = vcmp.lt.s32.totalorder %v1476, 0
      %vm1565 = vcmp.lt.s32.totalorder %v1483, 0
      %vm1566 = vcmp.lt.s32.totalorder %v1490, 0
      %vm1567 = vcmp.lt.s32.totalorder %v1497, 0
      %vm1568 = vcmp.lt.s32.totalorder %v1504, 0
      %vm1569 = vmand %vm1537, %vm1505
      %vm1570 = vmand %vm1538, %vm1506
      %vm1571 = vmand %vm1539, %vm1507
      %vm1572 = vmand %vm1540, %vm1508
      %vm1573 = vmand %vm1541, %vm1509
      %vm1574 = vmand %vm1542, %vm1510
      %vm1575 = vmand %vm1543, %vm1511
      %vm1576 = vmand %vm1544, %vm1512
      %vm1577 = vmand %vm1545, %vm1513
      %vm1578 = vmand %vm1546, %vm1514
      %vm1579 = vmand %vm1547, %vm1515
      %vm1580 = vmand %vm1548, %vm1516
      %vm1581 = vmand %vm1549, %vm1517
      %vm1582 = vmand %vm1550, %vm1518
      %vm1583 = vmand %vm1551, %vm1519
      %vm1584 = vmand %vm1552, %vm1520
      %vm1585 = vmand %vm1553, %vm1521
      %vm1586 = vmand %vm1554, %vm1522
      %vm1587 = vmand %vm1555, %vm1523
      %vm1588 = vmand %vm1556, %vm1524
      %vm1589 = vmand %vm1557, %vm1525
      %vm1590 = vmand %vm1558, %vm1526
      %vm1591 = vmand %vm1559, %vm1527
      %vm1592 = vmand %vm1560, %vm1528
      %vm1593 = vmand %vm1561, %vm1529
      %vm1594 = vmand %vm1562, %vm1530
      %vm1595 = vmand %vm1563, %vm1531
      %vm1596 = vmand %vm1564, %vm1532
      %vm1597 = vmand %vm1565, %vm1533
      %vm1598 = vmand %vm1566, %vm1534
      %vm1599 = vmand %vm1567, %vm1535
      %vm1600 = vmand %vm1568, %vm1536
      %v1601 = vadd.s32 %v1287, 16
      %v1602 = vadd.s32 %v1294, 16
      %v1603 = vadd.s32 %v1301, 16
      %v1604 = vadd.s32 %v1308, 16
      %v1605 = vadd.s32 %v1315, 16
      %v1606 = vadd.s32 %v1322, 16
      %v1607 = vadd.s32 %v1329, 16
      %v1608 = vadd.s32 %v1336, 16
      %v1609 = vadd.s32 %v1343, 16
      %v1610 = vadd.s32 %v1350, 16
      %v1611 = vadd.s32 %v1357, 16
      %v1612 = vadd.s32 %v1364, 16
      %v1613 = vadd.s32 %v1371, 16
      %v1614 = vadd.s32 %v1378, 16
      %v1615 = vadd.s32 %v1385, 16
      %v1616 = vadd.s32 %v1392, 16
      %v1617 = vadd.s32 %v1399, 16
      %v1618 = vadd.s32 %v1406, 16
      %v1619 = vadd.s32 %v1413, 16
      %v1620 = vadd.s32 %v1420, 16
      %v1621 = vadd.s32 %v1427, 16
      %v1622 = vadd.s32 %v1434, 16
      %v1623 = vadd.s32 %v1441, 16
      %v1624 = vadd.s32 %v1448, 16
      %v1625 = vadd.s32 %v1455, 16
      %v1626 = vadd.s32 %v1462, 16
      %v1627 = vadd.s32 %v1469, 16
      %v1628 = vadd.s32 %v1476, 16
      %v1629 = vadd.s32 %v1483, 16
      %v1630 = vadd.s32 %v1490, 16
      %v1631 = vadd.s32 %v1497, 16
      %v1632 = vadd.s32 %v1504, 16
      %v1633 = vsel %vm1569, %v1601, %v1287
      %v1634 = vsel %vm1570, %v1602, %v1294
      %v1635 = vsel %vm1571, %v1603, %v1301
      %v1636 = vsel %vm1572, %v1604, %v1308
      %v1637 = vsel %vm1573, %v1605, %v1315
      %v1638 = vsel %vm1574, %v1606, %v1322
      %v1639 = vsel %vm1575, %v1607, %v1329
      %v1640 = vsel %vm1576, %v1608, %v1336
      %v1641 = vsel %vm1577, %v1609, %v1343
      %v1642 = vsel %vm1578, %v1610, %v1350
      %v1643 = vsel %vm1579, %v1611, %v1357
      %v1644 = vsel %vm1580, %v1612, %v1364
      %v1645 = vsel %vm1581, %v1613, %v1371
      %v1646 = vsel %vm1582, %v1614, %v1378
      %v1647 = vsel %vm1583, %v1615, %v1385
      %v1648 = vsel %vm1584, %v1616, %v1392
      %v1649 = vsel %vm1585, %v1617, %v1399
      %v1650 = vsel %vm1586, %v1618, %v1406
      %v1651 = vsel %vm1587, %v1619, %v1413
      %v1652 = vsel %vm1588, %v1620, %v1420
      %v1653 = vsel %vm1589, %v1621, %v1427
      %v1654 = vsel %vm1590, %v1622, %v1434
      %v1655 = vsel %vm1591, %v1623, %v1441
      %v1656 = vsel %vm1592, %v1624, %v1448
      %v1657 = vsel %vm1593, %v1625, %v1455
      %v1658 = vsel %vm1594, %v1626, %v1462
      %v1659 = vsel %vm1595, %v1627, %v1469
      %v1660 = vsel %vm1596, %v1628, %v1476
      %v1661 = vsel %vm1597, %v1629, %v1483
      %v1662 = vsel %vm1598, %v1630, %v1490
      %v1663 = vsel %vm1599, %v1631, %v1497
      %v1664 = vsel %vm1600, %v1632, %v1504
      %v1665 = vld [vmem:[#allocation2] sm:$0xf]
      %v1666 = vld [vmem:[#allocation2 + $0x4] sm:$0xf]
      %v1667 = vld [vmem:[#allocation2 + $0x8] sm:$0xf]
      %v1668 = vld [vmem:[#allocation2 + $0xc] sm:$0xf]
      %v1669 = vld [vmem:[#allocation2 + $0x10] sm:$0xf]
      %v1670 = vld [vmem:[#allocation2 + $0x14] sm:$0xf]
      %v1671 = vld [vmem:[#allocation2 + $0x18] sm:$0xf]
      %v1672 = vld [vmem:[#allocation2 + $0x1c] sm:$0xf]
      %v1673 = vld [vmem:[#allocation2 + $0x20] sm:$0xf]
      %v1674 = vld [vmem:[#allocation2 + $0x24] sm:$0xf]
      %v1675 = vld [vmem:[#allocation2 + $0x28] sm:$0xf]
      %v1676 = vld [vmem:[#allocation2 + $0x2c] sm:$0xf]
      %v1677 = vld [vmem:[#allocation2 + $0x30] sm:$0xf]
      %v1678 = vld [vmem:[#allocation2 + $0x34] sm:$0xf]
      %v1679 = vld [vmem:[#allocation2 + $0x38] sm:$0xf]
      %v1680 = vld [vmem:[#allocation2 + $0x3c] sm:$0xf]
      %v1681 = vld [vmem:[#allocation2 + $0x40] sm:$0xf]
      %v1682 = vld [vmem:[#allocation2 + $0x44] sm:$0xf]
      %v1683 = vld [vmem:[#allocation2 + $0x48] sm:$0xf]
      %v1684 = vld [vmem:[#allocation2 + $0x4c] sm:$0xf]
      %v1685 = vld [vmem:[#allocation2 + $0x50] sm:$0xf]
      %v1686 = vld [vmem:[#allocation2 + $0x54] sm:$0xf]
      %v1687 = vld [vmem:[#allocation2 + $0x58] sm:$0xf]
      %v1688 = vld [vmem:[#allocation2 + $0x5c] sm:$0xf]
      %v1689 = vld [vmem:[#allocation2 + $0x60] sm:$0xf]
      %v1690 = vld [vmem:[#allocation2 + $0x64] sm:$0xf]
      %v1691 = vld [vmem:[#allocation2 + $0x68] sm:$0xf]
      %v1692 = vld [vmem:[#allocation2 + $0x6c] sm:$0xf]
      %v1693 = vld [vmem:[#allocation2 + $0x70] sm:$0xf]
      %v1694 = vld [vmem:[#allocation2 + $0x74] sm:$0xf]
      %v1695 = vld [vmem:[#allocation2 + $0x78] sm:$0xf]
      %v1696 = vld [vmem:[#allocation2 + $0x7c] sm:$0xf]
      %vm1697 = vcmp.ge.s32.totalorder %v1633, 1
      %vm1698 = vcmp.ge.s32.totalorder %v1634, 1
      %vm1699 = vcmp.ge.s32.totalorder %v1635, 1
      %vm1700 = vcmp.ge.s32.totalorder %v1636, 1
      %vm1701 = vcmp.ge.s32.totalorder %v1637, 1
      %vm1702 = vcmp.ge.s32.totalorder %v1638, 1
      %vm1703 = vcmp.ge.s32.totalorder %v1639, 1
      %vm1704 = vcmp.ge.s32.totalorder %v1640, 1
      %vm1705 = vcmp.ge.s32.totalorder %v1641, 1
      %vm1706 = vcmp.ge.s32.totalorder %v1642, 1
      %vm1707 = vcmp.ge.s32.totalorder %v1643, 1
      %vm1708 = vcmp.ge.s32.totalorder %v1644, 1
      %vm1709 = vcmp.ge.s32.totalorder %v1645, 1
      %vm1710 = vcmp.ge.s32.totalorder %v1646, 1
      %vm1711 = vcmp.ge.s32.totalorder %v1647, 1
      %vm1712 = vcmp.ge.s32.totalorder %v1648, 1
      %vm1713 = vcmp.ge.s32.totalorder %v1649, 1
      %vm1714 = vcmp.ge.s32.totalorder %v1650, 1
      %vm1715 = vcmp.ge.s32.totalorder %v1651, 1
      %vm1716 = vcmp.ge.s32.totalorder %v1652, 1
      %vm1717 = vcmp.ge.s32.totalorder %v1653, 1
      %vm1718 = vcmp.ge.s32.totalorder %v1654, 1
      %vm1719 = vcmp.ge.s32.totalorder %v1655, 1
      %vm1720 = vcmp.ge.s32.totalorder %v1656, 1
      %vm1721 = vcmp.ge.s32.totalorder %v1657, 1
      %vm1722 = vcmp.ge.s32.totalorder %v1658, 1
      %vm1723 = vcmp.ge.s32.totalorder %v1659, 1
      %vm1724 = vcmp.ge.s32.totalorder %v1660, 1
      %vm1725 = vcmp.ge.s32.totalorder %v1661, 1
      %vm1726 = vcmp.ge.s32.totalorder %v1662, 1
      %vm1727 = vcmp.ge.s32.totalorder %v1663, 1
      %vm1728 = vcmp.ge.s32.totalorder %v1664, 1
      %v1729 = vsel %vm1697, 1, 0
      %v1730 = vsel %vm1698, 1, 0
      %v1731 = vsel %vm1699, 1, 0
      %v1732 = vsel %vm1700, 1, 0
      %v1733 = vsel %vm1701, 1, 0
      %v1734 = vsel %vm1702, 1, 0
      %v1735 = vsel %vm1703, 1, 0
      %v1736 = vsel %vm1704, 1, 0
      %v1737 = vsel %vm1705, 1, 0
      %v1738 = vsel %vm1706, 1, 0
      %v1739 = vsel %vm1707, 1, 0
      %v1740 = vsel %vm1708, 1, 0
      %v1741 = vsel %vm1709, 1, 0
      %v1742 = vsel %vm1710, 1, 0
      %v1743 = vsel %vm1711, 1, 0
      %v1744 = vsel %vm1712, 1, 0
      %v1745 = vsel %vm1713, 1, 0
      %v1746 = vsel %vm1714, 1, 0
      %v1747 = vsel %vm1715, 1, 0
      %v1748 = vsel %vm1716, 1, 0
      %v1749 = vsel %vm1717, 1, 0
      %v1750 = vsel %vm1718, 1, 0
      %v1751 = vsel %vm1719, 1, 0
      %v1752 = vsel %vm1720, 1, 0
      %v1753 = vsel %vm1721, 1, 0
      %v1754 = vsel %vm1722, 1, 0
      %v1755 = vsel %vm1723, 1, 0
      %v1756 = vsel %vm1724, 1, 0
      %v1757 = vsel %vm1725, 1, 0
      %v1758 = vsel %vm1726, 1, 0
      %v1759 = vsel %vm1727, 1, 0
      %v1760 = vsel %vm1728, 1, 0
      %vm1761 = vcmp.eq.s32.totalorder %v1729, 1
      %vm1762 = vcmp.eq.s32.totalorder %v1730, 1
      %vm1763 = vcmp.eq.s32.totalorder %v1731, 1
      %vm1764 = vcmp.eq.s32.totalorder %v1732, 1
      %vm1765 = vcmp.eq.s32.totalorder %v1733, 1
      %vm1766 = vcmp.eq.s32.totalorder %v1734, 1
      %vm1767 = vcmp.eq.s32.totalorder %v1735, 1
      %vm1768 = vcmp.eq.s32.totalorder %v1736, 1
      %vm1769 = vcmp.eq.s32.totalorder %v1737, 1
      %vm1770 = vcmp.eq.s32.totalorder %v1738, 1
      %vm1771 = vcmp.eq.s32.totalorder %v1739, 1
      %vm1772 = vcmp.eq.s32.totalorder %v1740, 1
      %vm1773 = vcmp.eq.s32.totalorder %v1741, 1
      %vm1774 = vcmp.eq.s32.totalorder %v1742, 1
      %vm1775 = vcmp.eq.s32.totalorder %v1743, 1
      %vm1776 = vcmp.eq.s32.totalorder %v1744, 1
      %vm1777 = vcmp.eq.s32.totalorder %v1745, 1
      %vm1778 = vcmp.eq.s32.totalorder %v1746, 1
      %vm1779 = vcmp.eq.s32.totalorder %v1747, 1
      %vm1780 = vcmp.eq.s32.totalorder %v1748, 1
      %vm1781 = vcmp.eq.s32.totalorder %v1749, 1
      %vm1782 = vcmp.eq.s32.totalorder %v1750, 1
      %vm1783 = vcmp.eq.s32.totalorder %v1751, 1
      %vm1784 = vcmp.eq.s32.totalorder %v1752, 1
      %vm1785 = vcmp.eq.s32.totalorder %v1753, 1
      %vm1786 = vcmp.eq.s32.totalorder %v1754, 1
      %vm1787 = vcmp.eq.s32.totalorder %v1755, 1
      %vm1788 = vcmp.eq.s32.totalorder %v1756, 1
      %vm1789 = vcmp.eq.s32.totalorder %v1757, 1
      %vm1790 = vcmp.eq.s32.totalorder %v1758, 1
      %vm1791 = vcmp.eq.s32.totalorder %v1759, 1
      %vm1792 = vcmp.eq.s32.totalorder %v1760, 1
      %vm1793 = vmpackc.low %vm1761, %vm1761
      %vm1794 = vmpackc.low %vm1762, %vm1762
      %vm1795 = vmpackc.low %vm1763, %vm1763
      %vm1796 = vmpackc.low %vm1764, %vm1764
      %vm1797 = vmpackc.low %vm1765, %vm1765
      %vm1798 = vmpackc.low %vm1766, %vm1766
      %vm1799 = vmpackc.low %vm1767, %vm1767
      %vm1800 = vmpackc.low %vm1768, %vm1768
      %vm1801 = vmpackc.low %vm1769, %vm1769
      %vm1802 = vmpackc.low %vm1770, %vm1770
      %vm1803 = vmpackc.low %vm1771, %vm1771
      %vm1804 = vmpackc.low %vm1772, %vm1772
      %vm1805 = vmpackc.low %vm1773, %vm1773
      %vm1806 = vmpackc.low %vm1774, %vm1774
      %vm1807 = vmpackc.low %vm1775, %vm1775
      %vm1808 = vmpackc.low %vm1776, %vm1776
      %vm1809 = vmpackc.low %vm1777, %vm1777
      %vm1810 = vmpackc.low %vm1778, %vm1778
      %vm1811 = vmpackc.low %vm1779, %vm1779
      %vm1812 = vmpackc.low %vm1780, %vm1780
      %vm1813 = vmpackc.low %vm1781, %vm1781
      %vm1814 = vmpackc.low %vm1782, %vm1782
      %vm1815 = vmpackc.low %vm1783, %vm1783
      %vm1816 = vmpackc.low %vm1784, %vm1784
      %vm1817 = vmpackc.low %vm1785, %vm1785
      %vm1818 = vmpackc.low %vm1786, %vm1786
      %vm1819 = vmpackc.low %vm1787, %vm1787
      %vm1820 = vmpackc.low %vm1788, %vm1788
      %vm1821 = vmpackc.low %vm1789, %vm1789
      %vm1822 = vmpackc.low %vm1790, %vm1790
      %vm1823 = vmpackc.low %vm1791, %vm1791
      %vm1824 = vmpackc.low %vm1792, %vm1792
      %v1825 = vsel %vm1793, %v1665, 0
      %v1826 = vsel %vm1794, %v1666, 0
      %v1827 = vsel %vm1795, %v1667, 0
      %v1828 = vsel %vm1796, %v1668, 0
      %v1829 = vsel %vm1797, %v1669, 0
      %v1830 = vsel %vm1798, %v1670, 0
      %v1831 = vsel %vm1799, %v1671, 0
      %v1832 = vsel %vm1800, %v1672, 0
      %v1833 = vsel %vm1801, %v1673, 0
      %v1834 = vsel %vm1802, %v1674, 0
      %v1835 = vsel %vm1803, %v1675, 0
      %v1836 = vsel %vm1804, %v1676, 0
      %v1837 = vsel %vm1805, %v1677, 0
      %v1838 = vsel %vm1806, %v1678, 0
      %v1839 = vsel %vm1807, %v1679, 0
      %v1840 = vsel %vm1808, %v1680, 0
      %v1841 = vsel %vm1809, %v1681, 0
      %v1842 = vsel %vm1810, %v1682, 0
      %v1843 = vsel %vm1811, %v1683, 0
      %v1844 = vsel %vm1812, %v1684, 0
      %v1845 = vsel %vm1813, %v1685, 0
      %v1846 = vsel %vm1814, %v1686, 0
      %v1847 = vsel %vm1815, %v1687, 0
      %v1848 = vsel %vm1816, %v1688, 0
      %v1849 = vsel %vm1817, %v1689, 0
      %v1850 = vsel %vm1818, %v1690, 0
      %v1851 = vsel %vm1819, %v1691, 0
      %v1852 = vsel %vm1820, %v1692, 0
      %v1853 = vsel %vm1821, %v1693, 0
      %v1854 = vsel %vm1822, %v1694, 0
      %v1855 = vsel %vm1823, %v1695, 0
      %v1856 = vsel %vm1824, %v1696, 0
      %v1857 = vld [vmem:[%s5] sm:$0x3]
      %v1858 = vld [vmem:[#allocation2 + $0x80] sm:$0x1]
      %s1859 = scalar_lea.vmem %s5, 2
      %v1860 = vld [vmem:[%s1859] sm:$0x3]
      %v1894 = vunpack.c.l.b16 %v1665
      %v1895 = vunpack.c.l.b16 %v1666
      %v1896 = vunpack.c.l.b16 %v1667
      %v1897 = vunpack.c.l.b16 %v1668
      %v1898 = vunpack.c.l.b16 %v1669
      %v1899 = vunpack.c.l.b16 %v1670
      %v1900 = vunpack.c.l.b16 %v1671
      %v1901 = vunpack.c.l.b16 %v1672
      %v1902 = vunpack.c.l.b16 %v1673
      %v1903 = vunpack.c.l.b16 %v1674
      %v1904 = vunpack.c.l.b16 %v1675
      %v1905 = vunpack.c.l.b16 %v1676
      %v1906 = vunpack.c.l.b16 %v1677
      %v1907 = vunpack.c.l.b16 %v1678
      %v1908 = vunpack.c.l.b16 %v1679
      %v1909 = vunpack.c.l.b16 %v1680
      %v1910 = vunpack.c.l.b16 %v1681
      %v1911 = vunpack.c.l.b16 %v1682
      %v1912 = vunpack.c.l.b16 %v1683
      %v1913 = vunpack.c.l.b16 %v1684
      %v1914 = vunpack.c.l.b16 %v1685
      %v1915 = vunpack.c.l.b16 %v1686
      %v1916 = vunpack.c.l.b16 %v1687
      %v1917 = vunpack.c.l.b16 %v1688
      %v1918 = vunpack.c.l.b16 %v1689
      %v1919 = vunpack.c.l.b16 %v1690
      %v1920 = vunpack.c.l.b16 %v1691
      %v1921 = vunpack.c.l.b16 %v1692
      %v1922 = vunpack.c.l.b16 %v1693
      %v1923 = vunpack.c.l.b16 %v1694
      %v1924 = vunpack.c.l.b16 %v1695
      %v1925 = vunpack.c.l.b16 %v1696
      %v1926 = vunpack.c.l.b16 %v1858
      %v1927 = vpack.c.b16 %v1895, %v1894
      %v1928 = vpack.c.b16 %v1897, %v1896
      %v1929 = vpack.c.b16 %v1899, %v1898
      %v1930 = vpack.c.b16 %v1901, %v1900
      %v1931 = vpack.c.b16 %v1903, %v1902
      %v1932 = vpack.c.b16 %v1905, %v1904
      %v1933 = vpack.c.b16 %v1907, %v1906
      %v1934 = vpack.c.b16 %v1909, %v1908
      %v1935 = vpack.c.b16 %v1911, %v1910
      %v1936 = vpack.c.b16 %v1913, %v1912
      %v1937 = vpack.c.b16 %v1915, %v1914
      %v1938 = vpack.c.b16 %v1917, %v1916
      %v1939 = vpack.c.b16 %v1919, %v1918
      %v1940 = vpack.c.b16 %v1921, %v1920
      %v1941 = vpack.c.b16 %v1923, %v1922
      %v1942 = vpack.c.b16 %v1925, %v1924
      %v1943 = vpack.c.b16 %v1926, %v1926
      %vm1944 = vsmask.f32 7424
      %v1946 = vshrl.u32 %v1927, 16
      %v1948 = vshll.u32 %v1927, 16
      %v1950 = vrot.slane %v1948, 1
      %v1951 = vor.u32 %v1946, %v1950
      %v1953 = vshll.u32 %v1928, 16
      %v1955 = vrot.slane %v1953, 1
      %v1956 = vsel %vm1944, %v1951, %v1955
      %v1957 = vshrl.u32 %v1928, 16
      %v1959 = vor.u32 %v1957, %v1955
      %v1961 = vshll.u32 %v1929, 16
      %v1963 = vrot.slane %v1961, 1
      %v1964 = vsel %vm1944, %v1959, %v1963
      %v1965 = vshrl.u32 %v1929, 16
      %v1967 = vor.u32 %v1965, %v1963
      %v1969 = vshll.u32 %v1930, 16
      %v1971 = vrot.slane %v1969, 1
      %v1972 = vsel %vm1944, %v1967, %v1971
      %v1973 = vshrl.u32 %v1930, 16
      %v1975 = vor.u32 %v1973, %v1971
      %v1977 = vshll.u32 %v1931, 16
      %v1979 = vrot.slane %v1977, 1
      %v1980 = vsel %vm1944, %v1975, %v1979
      %v1981 = vshrl.u32 %v1931, 16
      %v1983 = vor.u32 %v1981, %v1979
      %v1985 = vshll.u32 %v1932, 16
      %v1987 = vrot.slane %v1985, 1
      %v1988 = vsel %vm1944, %v1983, %v1987
      %v1989 = vshrl.u32 %v1932, 16
      %v1991 = vor.u32 %v1989, %v1987
      %v1993 = vshll.u32 %v1933, 16
      %v1995 = vrot.slane %v1993, 1
      %v1996 = vsel %vm1944, %v1991, %v1995
      %v1997 = vshrl.u32 %v1933, 16
      %v1999 = vor.u32 %v1997, %v1995
      %v2001 = vshll.u32 %v1934, 16
      %v2003 = vrot.slane %v2001, 1
      %v2004 = vsel %vm1944, %v1999, %v2003
      %v2005 = vshrl.u32 %v1934, 16
      %v2007 = vor.u32 %v2005, %v2003
      %v2009 = vshll.u32 %v1935, 16
      %v2011 = vrot.slane %v2009, 1
      %v2012 = vsel %vm1944, %v2007, %v2011
      %v2013 = vshrl.u32 %v1935, 16
      %v2015 = vor.u32 %v2013, %v2011
      %v2017 = vshll.u32 %v1936, 16
      %v2019 = vrot.slane %v2017, 1
      %v2020 = vsel %vm1944, %v2015, %v2019
      %v2021 = vshrl.u32 %v1936, 16
      %v2023 = vor.u32 %v2021, %v2019
      %v2025 = vshll.u32 %v1937, 16
      %v2027 = vrot.slane %v2025, 1
      %v2028 = vsel %vm1944, %v2023, %v2027
      %v2029 = vshrl.u32 %v1937, 16
      %v2031 = vor.u32 %v2029, %v2027
      %v2033 = vshll.u32 %v1938, 16
      %v2035 = vrot.slane %v2033, 1
      %v2036 = vsel %vm1944, %v2031, %v2035
      %v2037 = vshrl.u32 %v1938, 16
      %v2039 = vor.u32 %v2037, %v2035
      %v2041 = vshll.u32 %v1939, 16
      %v2043 = vrot.slane %v2041, 1
      %v2044 = vsel %vm1944, %v2039, %v2043
      %v2045 = vshrl.u32 %v1939, 16
      %v2047 = vor.u32 %v2045, %v2043
      %v2049 = vshll.u32 %v1940, 16
      %v2051 = vrot.slane %v2049, 1
      %v2052 = vsel %vm1944, %v2047, %v2051
      %v2053 = vshrl.u32 %v1940, 16
      %v2055 = vor.u32 %v2053, %v2051
      %v2057 = vshll.u32 %v1941, 16
      %v2059 = vrot.slane %v2057, 1
      %v2060 = vsel %vm1944, %v2055, %v2059
      %v2061 = vshrl.u32 %v1941, 16
      %v2063 = vor.u32 %v2061, %v2059
      %v2065 = vshll.u32 %v1942, 16
      %v2067 = vrot.slane %v2065, 1
      %v2068 = vsel %vm1944, %v2063, %v2067
      %v2069 = vshrl.u32 %v1942, 16
      %v2071 = vor.u32 %v2069, %v2067
      %v2073 = vshll.u32 %v1943, 16
      %v2075 = vrot.slane %v2073, 1
      %v2076 = vsel %vm1944, %v2071, %v2075
      %vm2077 = vcmask 31744
      %v2079 = vsel %vm2077, %v1956, 0
      %v2082 = vsel %vm2077, %v1964, 0
      %v2085 = vsel %vm2077, %v1972, 0
      %v2088 = vsel %vm2077, %v1980, 0
      %v2091 = vsel %vm2077, %v1988, 0
      %v2094 = vsel %vm2077, %v1996, 0
      %v2097 = vsel %vm2077, %v2004, 0
      %v2100 = vsel %vm2077, %v2012, 0
      %v2103 = vsel %vm2077, %v2020, 0
      %v2106 = vsel %vm2077, %v2028, 0
      %v2109 = vsel %vm2077, %v2036, 0
      %v2112 = vsel %vm2077, %v2044, 0
      %v2115 = vsel %vm2077, %v2052, 0
      %v2118 = vsel %vm2077, %v2060, 0
      %v2121 = vsel %vm2077, %v2068, 0
      %v2124 = vsel %vm2077, %v2076, 0
      %vm2126 = vcmask 1041408
      %v2128 = vsel %vm2126, %v1860, 0
      %2130 = vmatprep.subr.bf16.mxu0 0
      %2131 = vmatpush1.bf16.msra.mxu0 %v2128
      %2132 = vmatprep.subr.bf16.mxu0 0
      %2133 = vmatpush1.bf16.msra.mxu0 0
      %2134 = vmatprep.subr.bf16.mxu0 0
      %2135 = vmatpush1.bf16.msra.mxu0 0
      %2136 = vmatprep.subr.bf16.mxu0 0
      %2137 = vmatpush1.bf16.msra.mxu0 0
      %2138 = vmatprep.subr.bf16.mxu0 0
      %2139 = vmatpush1.bf16.msra.mxu0 0
      %2140 = vmatprep.subr.bf16.mxu0 0
      %2141 = vmatpush1.bf16.msra.mxu0 0
      %2142 = vmatprep.subr.bf16.mxu0 0
      %2143 = vmatpush1.bf16.msra.mxu0 0
      %2144 = vmatprep.subr.bf16.mxu0 0
      %2145 = vmatpush1.bf16.msra.mxu0 0
      %2146 = vmatprep.subr.bf16.mxu0 0
      %2147 = vmatpush1.bf16.msra.mxu0 0
      %2148 = vmatprep.subr.bf16.mxu0 0
      %2149 = vmatpush1.bf16.msra.mxu0 0
      %2150 = vmatprep.subr.bf16.mxu0 0
      %2151 = vmatpush1.bf16.msra.mxu0 0
      %2152 = vmatprep.subr.bf16.mxu0 0
      %2153 = vmatpush1.bf16.msra.mxu0 0
      %2154 = vmatprep.subr.bf16.mxu0 0
      %2155 = vmatpush1.bf16.msra.mxu0 0
      %2156 = vmatprep.subr.bf16.mxu0 0
      %2157 = vmatpush1.bf16.msra.mxu0 0
      %2158 = vmatprep.subr.bf16.mxu0 0
      %2159 = vmatpush1.bf16.msra.mxu0 0
      %2160 = vmatprep.subr.bf16.mxu0 0
      %2161 = vmatpush1.bf16.msra.mxu0 0
      %2162 = vmatprep.mubr.bf16.mxu0 0
      %2163 = vmatmul.mubr.bf16.gmra.mrb[0].mxu0 %v2079
      %v2164 = vpop.f32.mrb[0].mxu0
      %v2165 = vadd.f32 0.0, %v2164
      %v2166 = vpop.f32.mrb[0].mxu0
      %v2167 = vpop.f32.mrb[0].mxu0
      %v2168 = vadd.f32 0.0, %v2167
      %v2169 = vpop.f32.mrb[0].mxu0
      %2170 = vmatprep.mubr.bf16.mxu0 0
      %2171 = vmatmul.mubr.bf16.gmra.mrb[0].mxu0 %v2082
      %v2172 = vpop.f32.mrb[0].mxu0
      %v2173 = vadd.f32 0.0, %v2172
      %v2174 = vpop.f32.mrb[0].mxu0
      %v2175 = vpop.f32.mrb[0].mxu0
      %v2176 = vadd.f32 0.0, %v2175
      %v2177 = vpop.f32.mrb[0].mxu0
      %2178 = vmatprep.mubr.bf16.mxu0 0
      %2179 = vmatmul.mubr.bf16.gmra.mrb[0].mxu0 %v2085
      %v2180 = vpop.f32.mrb[0].mxu0
      %v2181 = vadd.f32 0.0, %v2180
      %v2182 = vpop.f32.mrb[0].mxu0
      %v2183 = vpop.f32.mrb[0].mxu0
      %v2184 = vadd.f32 0.0, %v2183
      %v2185 = vpop.f32.mrb[0].mxu0
      %2186 = vmatprep.mubr.bf16.mxu0 0
      %2187 = vmatmul.mubr.bf16.gmra.mrb[0].mxu0 %v2088
      %v2188 = vpop.f32.mrb[0].mxu0
      %v2189 = vadd.f32 0.0, %v2188
      %v2190 = vpop.f32.mrb[0].mxu0
      %v2191 = vpop.f32.mrb[0].mxu0
      %v2192 = vadd.f32 0.0, %v2191
      %v2193 = vpop.f32.mrb[0].mxu0
      %2194 = vmatprep.mubr.bf16.mxu0 0
      %2195 = vmatmul.mubr.bf16.gmra.mrb[0].mxu0 %v2091
      %v2196 = vpop.f32.mrb[0].mxu0
      %v2197 = vadd.f32 0.0, %v2196
      %v2198 = vpop.f32.mrb[0].mxu0
      %v2199 = vpop.f32.mrb[0].mxu0
      %v2200 = vadd.f32 0.0, %v2199
      %v2201 = vpop.f32.mrb[0].mxu0
      %2202 = vmatprep.mubr.bf16.mxu0 0
      %2203 = vmatmul.mubr.bf16.gmra.mrb[0].mxu0 %v2094
      %v2204 = vpop.f32.mrb[0].mxu0
      %v2205 = vadd.f32 0.0, %v2204
      %v2206 = vpop.f32.mrb[0].mxu0
      %v2207 = vpop.f32.mrb[0].mxu0
      %v2208 = vadd.f32 0.0, %v2207
      %v2209 = vpop.f32.mrb[0].mxu0
      %2210 = vmatprep.mubr.bf16.mxu0 0
      %2211 = vmatmul.mubr.bf16.gmra.mrb[0].mxu0 %v2097
      %v2212 = vpop.f32.mrb[0].mxu0
      %v2213 = vadd.f32 0.0, %v2212
      %v2214 = vpop.f32.mrb[0].mxu0
      %v2215 = vpop.f32.mrb[0].mxu0
      %v2216 = vadd.f32 0.0, %v2215
      %v2217 = vpop.f32.mrb[0].mxu0
      %2218 = vmatprep.mubr.bf16.mxu0 0
      %2219 = vmatmul.mubr.bf16.gmra.mrb[0].mxu0 %v2100
      %v2220 = vpop.f32.mrb[0].mxu0
      %v2221 = vadd.f32 0.0, %v2220
      %v2222 = vpop.f32.mrb[0].mxu0
      %v2223 = vpop.f32.mrb[0].mxu0
      %v2224 = vadd.f32 0.0, %v2223
      %v2225 = vpop.f32.mrb[0].mxu0
      %2226 = vmatprep.mubr.bf16.mxu0 0
      %2227 = vmatmul.mubr.bf16.gmra.mrb[0].mxu0 %v2103
      %v2228 = vpop.f32.mrb[0].mxu0
      %v2229 = vadd.f32 0.0, %v2228
      %v2230 = vpop.f32.mrb[0].mxu0
      %v2231 = vpop.f32.mrb[0].mxu0
      %v2232 = vadd.f32 0.0, %v2231
      %v2233 = vpop.f32.mrb[0].mxu0
      %2234 = vmatprep.mubr.bf16.mxu0 0
      %2235 = vmatmul.mubr.bf16.gmra.mrb[0].mxu0 %v2106
      %v2236 = vpop.f32.mrb[0].mxu0
      %v2237 = vadd.f32 0.0, %v2236
      %v2238 = vpop.f32.mrb[0].mxu0
      %v2239 = vpop.f32.mrb[0].mxu0
      %v2240 = vadd.f32 0.0, %v2239
      %v2241 = vpop.f32.mrb[0].mxu0
      %2242 = vmatprep.mubr.bf16.mxu0 0
      %2243 = vmatmul.mubr.bf16.gmra.mrb[0].mxu0 %v2109
      %v2244 = vpop.f32.mrb[0].mxu0
      %v2245 = vadd.f32 0.0, %v2244
      %v2246 = vpop.f32.mrb[0].mxu0
      %v2247 = vpop.f32.mrb[0].mxu0
      %v2248 = vadd.f32 0.0, %v2247
      %v2249 = vpop.f32.mrb[0].mxu0
      %2250 = vmatprep.mubr.bf16.mxu0 0
      %2251 = vmatmul.mubr.bf16.gmra.mrb[0].mxu0 %v2112
      %v2252 = vpop.f32.mrb[0].mxu0
      %v2253 = vadd.f32 0.0, %v2252
      %v2254 = vpop.f32.mrb[0].mxu0
      %v2255 = vpop.f32.mrb[0].mxu0
      %v2256 = vadd.f32 0.0, %v2255
      %v2257 = vpop.f32.mrb[0].mxu0
      %2258 = vmatprep.mubr.bf16.mxu0 0
      %2259 = vmatmul.mubr.bf16.gmra.mrb[0].mxu0 %v2115
      %v2260 = vpop.f32.mrb[0].mxu0
      %v2261 = vadd.f32 0.0, %v2260
      %v2262 = vpop.f32.mrb[0].mxu0
      %v2263 = vpop.f32.mrb[0].mxu0
      %v2264 = vadd.f32 0.0, %v2263
      %v2265 = vpop.f32.mrb[0].mxu0
      %2266 = vmatprep.mubr.bf16.mxu0 0
      %2267 = vmatmul.mubr.bf16.gmra.mrb[0].mxu0 %v2118
      %v2268 = vpop.f32.mrb[0].mxu0
      %v2269 = vadd.f32 0.0, %v2268
      %v2270 = vpop.f32.mrb[0].mxu0
      %v2271 = vpop.f32.mrb[0].mxu0
      %v2272 = vadd.f32 0.0, %v2271
      %v2273 = vpop.f32.mrb[0].mxu0
      %2274 = vmatprep.mubr.bf16.mxu0 0
      %2275 = vmatmul.mubr.bf16.gmra.mrb[0].mxu0 %v2121
      %v2276 = vpop.f32.mrb[0].mxu0
      %v2277 = vadd.f32 0.0, %v2276
      %v2278 = vpop.f32.mrb[0].mxu0
      %v2279 = vpop.f32.mrb[0].mxu0
      %v2280 = vadd.f32 0.0, %v2279
      %v2281 = vpop.f32.mrb[0].mxu0
      %2282 = vmatprep.mubr.bf16.mxu0 0
      %2283 = vmatmul.mubr.bf16.gmra.mrb[0].mxu0 %v2124
      %v2284 = vpop.f32.mrb[0].mxu0
      %v2285 = vadd.f32 0.0, %v2284
      %v2286 = vpop.f32.mrb[0].mxu0
      %v2287 = vpop.f32.mrb[0].mxu0
      %v2288 = vadd.f32 0.0, %v2287
      %v2289 = vpop.f32.mrb[0].mxu0
      %2290 = vdwg.mxu0
      %v2323 = vunpack.c.l.b16 %v1825
      %v2324 = vunpack.c.l.b16 %v1826
      %v2325 = vunpack.c.l.b16 %v1827
      %v2326 = vunpack.c.l.b16 %v1828
      %v2327 = vunpack.c.l.b16 %v1829
      %v2328 = vunpack.c.l.b16 %v1830
      %v2329 = vunpack.c.l.b16 %v1831
      %v2330 = vunpack.c.l.b16 %v1832
      %v2331 = vunpack.c.l.b16 %v1833
      %v2332 = vunpack.c.l.b16 %v1834
      %v2333 = vunpack.c.l.b16 %v1835
      %v2334 = vunpack.c.l.b16 %v1836
      %v2335 = vunpack.c.l.b16 %v1837
      %v2336 = vunpack.c.l.b16 %v1838
      %v2337 = vunpack.c.l.b16 %v1839
      %v2338 = vunpack.c.l.b16 %v1840
      %v2339 = vunpack.c.l.b16 %v1841
      %v2340 = vunpack.c.l.b16 %v1842
      %v2341 = vunpack.c.l.b16 %v1843
      %v2342 = vunpack.c.l.b16 %v1844
      %v2343 = vunpack.c.l.b16 %v1845
      %v2344 = vunpack.c.l.b16 %v1846
      %v2345 = vunpack.c.l.b16 %v1847
      %v2346 = vunpack.c.l.b16 %v1848
      %v2347 = vunpack.c.l.b16 %v1849
      %v2348 = vunpack.c.l.b16 %v1850
      %v2349 = vunpack.c.l.b16 %v1851
      %v2350 = vunpack.c.l.b16 %v1852
      %v2351 = vunpack.c.l.b16 %v1853
      %v2352 = vunpack.c.l.b16 %v1854
      %v2353 = vunpack.c.l.b16 %v1855
      %v2354 = vunpack.c.l.b16 %v1856
      %v2355 = vpack.c.b16 %v2324, %v2323
      %v2356 = vpack.c.b16 %v2326, %v2325
      %v2357 = vpack.c.b16 %v2328, %v2327
      %v2358 = vpack.c.b16 %v2330, %v2329
      %v2359 = vpack.c.b16 %v2332, %v2331
      %v2360 = vpack.c.b16 %v2334, %v2333
      %v2361 = vpack.c.b16 %v2336, %v2335
      %v2362 = vpack.c.b16 %v2338, %v2337
      %v2363 = vpack.c.b16 %v2340, %v2339
      %v2364 = vpack.c.b16 %v2342, %v2341
      %v2365 = vpack.c.b16 %v2344, %v2343
      %v2366 = vpack.c.b16 %v2346, %v2345
      %v2367 = vpack.c.b16 %v2348, %v2347
      %v2368 = vpack.c.b16 %v2350, %v2349
      %v2369 = vpack.c.b16 %v2352, %v2351
      %v2370 = vpack.c.b16 %v2354, %v2353
      %v2372 = vsel %vm2077, %v2355, 0
      %v2375 = vsel %vm2077, %v2356, 0
      %v2378 = vsel %vm2077, %v2357, 0
      %v2381 = vsel %vm2077, %v2358, 0
      %v2384 = vsel %vm2077, %v2359, 0
      %v2387 = vsel %vm2077, %v2360, 0
      %v2390 = vsel %vm2077, %v2361, 0
      %v2393 = vsel %vm2077, %v2362, 0
      %v2396 = vsel %vm2077, %v2363, 0
      %v2399 = vsel %vm2077, %v2364, 0
      %v2402 = vsel %vm2077, %v2365, 0
      %v2405 = vsel %vm2077, %v2366, 0
      %v2408 = vsel %vm2077, %v2367, 0
      %v2411 = vsel %vm2077, %v2368, 0
      %v2414 = vsel %vm2077, %v2369, 0
      %v2417 = vsel %vm2077, %v2370, 0
      %v2420 = vsel %vm2126, %v1857, 0
      %2422 = vmatprep.subr.bf16.mxu0 0
      %2423 = vmatpush1.bf16.msra.mxu0 %v2420
      %2424 = vmatprep.subr.bf16.mxu0 0
      %2425 = vmatpush1.bf16.msra.mxu0 0
      %2426 = vmatprep.subr.bf16.mxu0 0
      %2427 = vmatpush1.bf16.msra.mxu0 0
      %2428 = vmatprep.subr.bf16.mxu0 0
      %2429 = vmatpush1.bf16.msra.mxu0 0
      %2430 = vmatprep.subr.bf16.mxu0 0
      %2431 = vmatpush1.bf16.msra.mxu0 0
      %2432 = vmatprep.subr.bf16.mxu0 0
      %2433 = vmatpush1.bf16.msra.mxu0 0
      %2434 = vmatprep.subr.bf16.mxu0 0
      %2435 = vmatpush1.bf16.msra.mxu0 0
      %2436 = vmatprep.subr.bf16.mxu0 0
      %2437 = vmatpush1.bf16.msra.mxu0 0
      %2438 = vmatprep.subr.bf16.mxu0 0
      %2439 = vmatpush1.bf16.msra.mxu0 0
      %2440 = vmatprep.subr.bf16.mxu0 0
      %2441 = vmatpush1.bf16.msra.mxu0 0
      %2442 = vmatprep.subr.bf16.mxu0 0
      %2443 = vmatpush1.bf16.msra.mxu0 0
      %2444 = vmatprep.subr.bf16.mxu0 0
      %2445 = vmatpush1.bf16.msra.mxu0 0
      %2446 = vmatprep.subr.bf16.mxu0 0
      %2447 = vmatpush1.bf16.msra.mxu0 0
      %2448 = vmatprep.subr.bf16.mxu0 0
      %2449 = vmatpush1.bf16.msra.mxu0 0
      %2450 = vmatprep.subr.bf16.mxu0 0
      %2451 = vmatpush1.bf16.msra.mxu0 0
      %2452 = vmatprep.subr.bf16.mxu0 0
      %2453 = vmatpush1.bf16.msra.mxu0 0
      %2454 = vmatprep.mubr.bf16.mxu0 0
      %2455 = vmatmul.mubr.bf16.gmra.mrb[0].mxu0 %v2372
      %v2456 = vpop.f32.mrb[0].mxu0
      %v2457 = vadd.f32 %v2165, %v2456
      %v2458 = vpop.f32.mrb[0].mxu0
      %v2459 = vpop.f32.mrb[0].mxu0
      %v2460 = vadd.f32 %v2168, %v2459
      %v2461 = vpop.f32.mrb[0].mxu0
      %2462 = vmatprep.mubr.bf16.mxu0 0
      %2463 = vmatmul.mubr.bf16.gmra.mrb[0].mxu0 %v2375
      %v2464 = vpop.f32.mrb[0].mxu0
      %v2465 = vadd.f32 %v2173, %v2464
      %v2466 = vpop.f32.mrb[0].mxu0
      %v2467 = vpop.f32.mrb[0].mxu0
      %v2468 = vadd.f32 %v2176, %v2467
      %v2469 = vpop.f32.mrb[0].mxu0
      %2470 = vmatprep.mubr.bf16.mxu0 0
      %2471 = vmatmul.mubr.bf16.gmra.mrb[0].mxu0 %v2378
      %v2472 = vpop.f32.mrb[0].mxu0
      %v2473 = vadd.f32 %v2181, %v2472
      %v2474 = vpop.f32.mrb[0].mxu0
      %v2475 = vpop.f32.mrb[0].mxu0
      %v2476 = vadd.f32 %v2184, %v2475
      %v2477 = vpop.f32.mrb[0].mxu0
      %2478 = vmatprep.mubr.bf16.mxu0 0
      %2479 = vmatmul.mubr.bf16.gmra.mrb[0].mxu0 %v2381
      %v2480 = vpop.f32.mrb[0].mxu0
      %v2481 = vadd.f32 %v2189, %v2480
      %v2482 = vpop.f32.mrb[0].mxu0
      %v2483 = vpop.f32.mrb[0].mxu0
      %v2484 = vadd.f32 %v2192, %v2483
      %v2485 = vpop.f32.mrb[0].mxu0
      %2486 = vmatprep.mubr.bf16.mxu0 0
      %2487 = vmatmul.mubr.bf16.gmra.mrb[0].mxu0 %v2384
      %v2488 = vpop.f32.mrb[0].mxu0
      %v2489 = vadd.f32 %v2197, %v2488
      %v2490 = vpop.f32.mrb[0].mxu0
      %v2491 = vpop.f32.mrb[0].mxu0
      %v2492 = vadd.f32 %v2200, %v2491
      %v2493 = vpop.f32.mrb[0].mxu0
      %2494 = vmatprep.mubr.bf16.mxu0 0
      %2495 = vmatmul.mubr.bf16.gmra.mrb[0].mxu0 %v2387
      %v2496 = vpop.f32.mrb[0].mxu0
      %v2497 = vadd.f32 %v2205, %v2496
      %v2498 = vpop.f32.mrb[0].mxu0
      %v2499 = vpop.f32.mrb[0].mxu0
      %v2500 = vadd.f32 %v2208, %v2499
      %v2501 = vpop.f32.mrb[0].mxu0
      %2502 = vmatprep.mubr.bf16.mxu0 0
      %2503 = vmatmul.mubr.bf16.gmra.mrb[0].mxu0 %v2390
      %v2504 = vpop.f32.mrb[0].mxu0
      %v2505 = vadd.f32 %v2213, %v2504
      %v2506 = vpop.f32.mrb[0].mxu0
      %v2507 = vpop.f32.mrb[0].mxu0
      %v2508 = vadd.f32 %v2216, %v2507
      %v2509 = vpop.f32.mrb[0].mxu0
      %2510 = vmatprep.mubr.bf16.mxu0 0
      %2511 = vmatmul.mubr.bf16.gmra.mrb[0].mxu0 %v2393
      %v2512 = vpop.f32.mrb[0].mxu0
      %v2513 = vadd.f32 %v2221, %v2512
      %v2514 = vpop.f32.mrb[0].mxu0
      %v2515 = vpop.f32.mrb[0].mxu0
      %v2516 = vadd.f32 %v2224, %v2515
      %v2517 = vpop.f32.mrb[0].mxu0
      %2518 = vmatprep.mubr.bf16.mxu0 0
      %2519 = vmatmul.mubr.bf16.gmra.mrb[0].mxu0 %v2396
      %v2520 = vpop.f32.mrb[0].mxu0
      %v2521 = vadd.f32 %v2229, %v2520
      %v2522 = vpop.f32.mrb[0].mxu0
      %v2523 = vpop.f32.mrb[0].mxu0
      %v2524 = vadd.f32 %v2232, %v2523
      %v2525 = vpop.f32.mrb[0].mxu0
      %2526 = vmatprep.mubr.bf16.mxu0 0
      %2527 = vmatmul.mubr.bf16.gmra.mrb[0].mxu0 %v2399
      %v2528 = vpop.f32.mrb[0].mxu0
      %v2529 = vadd.f32 %v2237, %v2528
      %v2530 = vpop.f32.mrb[0].mxu0
      %v2531 = vpop.f32.mrb[0].mxu0
      %v2532 = vadd.f32 %v2240, %v2531
      %v2533 = vpop.f32.mrb[0].mxu0
      %2534 = vmatprep.mubr.bf16.mxu0 0
      %2535 = vmatmul.mubr.bf16.gmra.mrb[0].mxu0 %v2402
      %v2536 = vpop.f32.mrb[0].mxu0
      %v2537 = vadd.f32 %v2245, %v2536
      %v2538 = vpop.f32.mrb[0].mxu0
      %v2539 = vpop.f32.mrb[0].mxu0
      %v2540 = vadd.f32 %v2248, %v2539
      %v2541 = vpop.f32.mrb[0].mxu0
      %2542 = vmatprep.mubr.bf16.mxu0 0
      %2543 = vmatmul.mubr.bf16.gmra.mrb[0].mxu0 %v2405
      %v2544 = vpop.f32.mrb[0].mxu0
      %v2545 = vadd.f32 %v2253, %v2544
      %v2546 = vpop.f32.mrb[0].mxu0
      %v2547 = vpop.f32.mrb[0].mxu0
      %v2548 = vadd.f32 %v2256, %v2547
      %v2549 = vpop.f32.mrb[0].mxu0
      %2550 = vmatprep.mubr.bf16.mxu0 0
      %2551 = vmatmul.mubr.bf16.gmra.mrb[0].mxu0 %v2408
      %v2552 = vpop.f32.mrb[0].mxu0
      %v2553 = vadd.f32 %v2261, %v2552
      %v2554 = vpop.f32.mrb[0].mxu0
      %v2555 = vpop.f32.mrb[0].mxu0
      %v2556 = vadd.f32 %v2264, %v2555
      %v2557 = vpop.f32.mrb[0].mxu0
      %2558 = vmatprep.mubr.bf16.mxu0 0
      %2559 = vmatmul.mubr.bf16.gmra.mrb[0].mxu0 %v2411
      %v2560 = vpop.f32.mrb[0].mxu0
      %v2561 = vadd.f32 %v2269, %v2560
      %v2562 = vpop.f32.mrb[0].mxu0
      %v2563 = vpop.f32.mrb[0].mxu0
      %v2564 = vadd.f32 %v2272, %v2563
      %v2565 = vpop.f32.mrb[0].mxu0
      %2566 = vmatprep.mubr.bf16.mxu0 0
      %2567 = vmatmul.mubr.bf16.gmra.mrb[0].mxu0 %v2414
      %v2568 = vpop.f32.mrb[0].mxu0
      %v2569 = vadd.f32 %v2277, %v2568
      %v2570 = vpop.f32.mrb[0].mxu0
      %v2571 = vpop.f32.mrb[0].mxu0
      %v2572 = vadd.f32 %v2280, %v2571
      %v2573 = vpop.f32.mrb[0].mxu0
      %2574 = vmatprep.mubr.bf16.mxu0 0
      %2575 = vmatmul.mubr.bf16.gmra.mrb[0].mxu0 %v2417
      %v2576 = vpop.f32.mrb[0].mxu0
      %v2577 = vadd.f32 %v2285, %v2576
      %v2578 = vpop.f32.mrb[0].mxu0
      %v2579 = vpop.f32.mrb[0].mxu0
      %v2580 = vadd.f32 %v2288, %v2579
      %v2581 = vpop.f32.mrb[0].mxu0
      %2582 = vdwg.mxu0
      %v2583 = vld [vmem:[#allocation2] sm:$0xe]
      %vm2584 = vcmp.le.s32.totalorder %v1633, 14
      %vm2585 = vcmp.le.s32.totalorder %v1634, 14
      %vm2586 = vcmp.le.s32.totalorder %v1635, 14
      %vm2587 = vcmp.le.s32.totalorder %v1636, 14
      %vm2588 = vcmp.le.s32.totalorder %v1637, 14
      %vm2589 = vcmp.le.s32.totalorder %v1638, 14
      %vm2590 = vcmp.le.s32.totalorder %v1639, 14
      %vm2591 = vcmp.le.s32.totalorder %v1640, 14
      %vm2592 = vcmp.le.s32.totalorder %v1641, 14
      %vm2593 = vcmp.le.s32.totalorder %v1642, 14
      %vm2594 = vcmp.le.s32.totalorder %v1643, 14
      %vm2595 = vcmp.le.s32.totalorder %v1644, 14
      %vm2596 = vcmp.le.s32.totalorder %v1645, 14
      %vm2597 = vcmp.le.s32.totalorder %v1646, 14
      %vm2598 = vcmp.le.s32.totalorder %v1647, 14
      %vm2599 = vcmp.le.s32.totalorder %v1648, 14
      %vm2600 = vcmp.le.s32.totalorder %v1649, 14
      %vm2601 = vcmp.le.s32.totalorder %v1650, 14
      %vm2602 = vcmp.le.s32.totalorder %v1651, 14
      %vm2603 = vcmp.le.s32.totalorder %v1652, 14
      %vm2604 = vcmp.le.s32.totalorder %v1653, 14
      %vm2605 = vcmp.le.s32.totalorder %v1654, 14
      %vm2606 = vcmp.le.s32.totalorder %v1655, 14
      %vm2607 = vcmp.le.s32.totalorder %v1656, 14
      %vm2608 = vcmp.le.s32.totalorder %v1657, 14
      %vm2609 = vcmp.le.s32.totalorder %v1658, 14
      %vm2610 = vcmp.le.s32.totalorder %v1659, 14
      %vm2611 = vcmp.le.s32.totalorder %v1660, 14
      %vm2612 = vcmp.le.s32.totalorder %v1661, 14
      %vm2613 = vcmp.le.s32.totalorder %v1662, 14
      %vm2614 = vcmp.le.s32.totalorder %v1663, 14
      %vm2615 = vcmp.le.s32.totalorder %v1664, 14
      %v2616 = vsel %vm2584, 1, 0
      %v2617 = vsel %vm2585, 1, 0
      %v2618 = vsel %vm2586, 1, 0
      %v2619 = vsel %vm2587, 1, 0
      %v2620 = vsel %vm2588, 1, 0
      %v2621 = vsel %vm2589, 1, 0
      %v2622 = vsel %vm2590, 1, 0
      %v2623 = vsel %vm2591, 1, 0
      %v2624 = vsel %vm2592, 1, 0
      %v2625 = vsel %vm2593, 1, 0
      %v2626 = vsel %vm2594, 1, 0
      %v2627 = vsel %vm2595, 1, 0
      %v2628 = vsel %vm2596, 1, 0
      %v2629 = vsel %vm2597, 1, 0
      %v2630 = vsel %vm2598, 1, 0
      %v2631 = vsel %vm2599, 1, 0
      %v2632 = vsel %vm2600, 1, 0
      %v2633 = vsel %vm2601, 1, 0
      %v2634 = vsel %vm2602, 1, 0
      %v2635 = vsel %vm2603, 1, 0
      %v2636 = vsel %vm2604, 1, 0
      %v2637 = vsel %vm2605, 1, 0
      %v2638 = vsel %vm2606, 1, 0
      %v2639 = vsel %vm2607, 1, 0
      %v2640 = vsel %vm2608, 1, 0
      %v2641 = vsel %vm2609, 1, 0
      %v2642 = vsel %vm2610, 1, 0
      %v2643 = vsel %vm2611, 1, 0
      %v2644 = vsel %vm2612, 1, 0
      %v2645 = vsel %vm2613, 1, 0
      %v2646 = vsel %vm2614, 1, 0
      %v2647 = vsel %vm2615, 1, 0
      %vm2648 = vcmp.eq.s32.totalorder %v2616, 1
      %vm2649 = vcmp.eq.s32.totalorder %v2617, 1
      %vm2650 = vcmp.eq.s32.totalorder %v2618, 1
      %vm2651 = vcmp.eq.s32.totalorder %v2619, 1
      %vm2652 = vcmp.eq.s32.totalorder %v2620, 1
      %vm2653 = vcmp.eq.s32.totalorder %v2621, 1
      %vm2654 = vcmp.eq.s32.totalorder %v2622, 1
      %vm2655 = vcmp.eq.s32.totalorder %v2623, 1
      %vm2656 = vcmp.eq.s32.totalorder %v2624, 1
      %vm2657 = vcmp.eq.s32.totalorder %v2625, 1
      %vm2658 = vcmp.eq.s32.totalorder %v2626, 1
      %vm2659 = vcmp.eq.s32.totalorder %v2627, 1
      %vm2660 = vcmp.eq.s32.totalorder %v2628, 1
      %vm2661 = vcmp.eq.s32.totalorder %v2629, 1
      %vm2662 = vcmp.eq.s32.totalorder %v2630, 1
      %vm2663 = vcmp.eq.s32.totalorder %v2631, 1
      %vm2664 = vcmp.eq.s32.totalorder %v2632, 1
      %vm2665 = vcmp.eq.s32.totalorder %v2633, 1
      %vm2666 = vcmp.eq.s32.totalorder %v2634, 1
      %vm2667 = vcmp.eq.s32.totalorder %v2635, 1
      %vm2668 = vcmp.eq.s32.totalorder %v2636, 1
      %vm2669 = vcmp.eq.s32.totalorder %v2637, 1
      %vm2670 = vcmp.eq.s32.totalorder %v2638, 1
      %vm2671 = vcmp.eq.s32.totalorder %v2639, 1
      %vm2672 = vcmp.eq.s32.totalorder %v2640, 1
      %vm2673 = vcmp.eq.s32.totalorder %v2641, 1
      %vm2674 = vcmp.eq.s32.totalorder %v2642, 1
      %vm2675 = vcmp.eq.s32.totalorder %v2643, 1
      %vm2676 = vcmp.eq.s32.totalorder %v2644, 1
      %vm2677 = vcmp.eq.s32.totalorder %v2645, 1
      %vm2678 = vcmp.eq.s32.totalorder %v2646, 1
      %vm2679 = vcmp.eq.s32.totalorder %v2647, 1
      %vm2680 = vmpackc.low %vm2648, %vm2648
      %vm2681 = vmpackc.low %vm2649, %vm2649
      %vm2682 = vmpackc.low %vm2650, %vm2650
      %vm2683 = vmpackc.low %vm2651, %vm2651
      %vm2684 = vmpackc.low %vm2652, %vm2652
      %vm2685 = vmpackc.low %vm2653, %vm2653
      %vm2686 = vmpackc.low %vm2654, %vm2654
      %vm2687 = vmpackc.low %vm2655, %vm2655
      %vm2688 = vmpackc.low %vm2656, %vm2656
      %vm2689 = vmpackc.low %vm2657, %vm2657
      %vm2690 = vmpackc.low %vm2658, %vm2658
      %vm2691 = vmpackc.low %vm2659, %vm2659
      %vm2692 = vmpackc.low %vm2660, %vm2660
      %vm2693 = vmpackc.low %vm2661, %vm2661
      %vm2694 = vmpackc.low %vm2662, %vm2662
      %vm2695 = vmpackc.low %vm2663, %vm2663
      %vm2696 = vmpackc.low %vm2664, %vm2664
      %vm2697 = vmpackc.low %vm2665, %vm2665
      %vm2698 = vmpackc.low %vm2666, %vm2666
      %vm2699 = vmpackc.low %vm2667, %vm2667
      %vm2700 = vmpackc.low %vm2668, %vm2668
      %vm2701 = vmpackc.low %vm2669, %vm2669
      %vm2702 = vmpackc.low %vm2670, %vm2670
      %vm2703 = vmpackc.low %vm2671, %vm2671
      %vm2704 = vmpackc.low %vm2672, %vm2672
      %vm2705 = vmpackc.low %vm2673, %vm2673
      %vm2706 = vmpackc.low %vm2674, %vm2674
      %vm2707 = vmpackc.low %vm2675, %vm2675
      %vm2708 = vmpackc.low %vm2676, %vm2676
      %vm2709 = vmpackc.low %vm2677, %vm2677
      %vm2710 = vmpackc.low %vm2678, %vm2678
      %vm2711 = vmpackc.low %vm2679, %vm2679
      %v2712 = vsel %vm2680, 65537, 0
      %v2713 = vsel %vm2681, 65537, 0
      %v2714 = vsel %vm2682, 65537, 0
      %v2715 = vsel %vm2683, 65537, 0
      %v2716 = vsel %vm2684, 65537, 0
      %v2717 = vsel %vm2685, 65537, 0
      %v2718 = vsel %vm2686, 65537, 0
      %v2719 = vsel %vm2687, 65537, 0
      %v2720 = vsel %vm2688, 65537, 0
      %v2721 = vsel %vm2689, 65537, 0
      %v2722 = vsel %vm2690, 65537, 0
      %v2723 = vsel %vm2691, 65537, 0
      %v2724 = vsel %vm2692, 65537, 0
      %v2725 = vsel %vm2693, 65537, 0
      %v2726 = vsel %vm2694, 65537, 0
      %v2727 = vsel %vm2695, 65537, 0
      %v2728 = vsel %vm2696, 65537, 0
      %v2729 = vsel %vm2697, 65537, 0
      %v2730 = vsel %vm2698, 65537, 0
      %v2731 = vsel %vm2699, 65537, 0
      %v2732 = vsel %vm2700, 65537, 0
      %v2733 = vsel %vm2701, 65537, 0
      %v2734 = vsel %vm2702, 65537, 0
      %v2735 = vsel %vm2703, 65537, 0
      %v2736 = vsel %vm2704, 65537, 0
      %v2737 = vsel %vm2705, 65537, 0
      %v2738 = vsel %vm2706, 65537, 0
      %v2739 = vsel %vm2707, 65537, 0
      %v2740 = vsel %vm2708, 65537, 0
      %v2741 = vsel %vm2709, 65537, 0
      %v2742 = vsel %vm2710, 65537, 0
      %v2743 = vsel %vm2711, 65537, 0
      %vm2744 = vcmask 1040384
      %vm2745 = vcmask 1044484
      %vm2746 = vmor %vm2744, %vm2745
      %v2747 = vrot.slane %v2712, 7
      %v2748 = vrot.slane %v2747, 4
      %v2749 = vrot.slane %v2713, 7
      %v2750 = vsel %vm2746, %v2748, %v2749
      %v2751 = vrot.slane %v2749, 4
      %v2752 = vrot.slane %v2714, 7
      %v2753 = vsel %vm2746, %v2751, %v2752
      %v2754 = vrot.slane %v2752, 4
      %v2755 = vrot.slane %v2715, 7
      %v2756 = vsel %vm2746, %v2754, %v2755
      %v2757 = vrot.slane %v2755, 4
      %v2758 = vrot.slane %v2716, 7
      %v2759 = vsel %vm2746, %v2757, %v2758
      %v2760 = vrot.slane %v2758, 4
      %v2761 = vrot.slane %v2717, 7
      %v2762 = vsel %vm2746, %v2760, %v2761
      %v2763 = vrot.slane %v2761, 4
      %v2764 = vrot.slane %v2718, 7
      %v2765 = vsel %vm2746, %v2763, %v2764
      %v2766 = vrot.slane %v2764, 4
      %v2767 = vrot.slane %v2719, 7
      %v2768 = vsel %vm2746, %v2766, %v2767
      %v2769 = vrot.slane %v2767, 4
      %v2770 = vrot.slane %v2720, 7
      %v2771 = vsel %vm2746, %v2769, %v2770
      %v2772 = vrot.slane %v2770, 4
      %v2773 = vrot.slane %v2721, 7
      %v2774 = vsel %vm2746, %v2772, %v2773
      %v2775 = vrot.slane %v2773, 4
      %v2776 = vrot.slane %v2722, 7
      %v2777 = vsel %vm2746, %v2775, %v2776
      %v2778 = vrot.slane %v2776, 4
      %v2779 = vrot.slane %v2723, 7
      %v2780 = vsel %vm2746, %v2778, %v2779
      %v2781 = vrot.slane %v2779, 4
      %v2782 = vrot.slane %v2724, 7
      %v2783 = vsel %vm2746, %v2781, %v2782
      %v2784 = vrot.slane %v2782, 4
      %v2785 = vrot.slane %v2725, 7
      %v2786 = vsel %vm2746, %v2784, %v2785
      %v2787 = vrot.slane %v2785, 4
      %v2788 = vrot.slane %v2726, 7
      %v2789 = vsel %vm2746, %v2787, %v2788
      %v2790 = vrot.slane %v2788, 4
      %v2791 = vrot.slane %v2727, 7
      %v2792 = vsel %vm2746, %v2790, %v2791
      %v2793 = vrot.slane %v2791, 4
      %v2794 = vrot.slane %v2728, 7
      %v2795 = vsel %vm2746, %v2793, %v2794
      %v2796 = vrot.slane %v2794, 4
      %v2797 = vrot.slane %v2729, 7
      %v2798 = vsel %vm2746, %v2796, %v2797
      %v2799 = vrot.slane %v2797, 4
      %v2800 = vrot.slane %v2730, 7
      %v2801 = vsel %vm2746, %v2799, %v2800
      %v2802 = vrot.slane %v2800, 4
      %v2803 = vrot.slane %v2731, 7
      %v2804 = vsel %vm2746, %v2802, %v2803
      %v2805 = vrot.slane %v2803, 4
      %v2806 = vrot.slane %v2732, 7
      %v2807 = vsel %vm2746, %v2805, %v2806
      %v2808 = vrot.slane %v2806, 4
      %v2809 = vrot.slane %v2733, 7
      %v2810 = vsel %vm2746, %v2808, %v2809
      %v2811 = vrot.slane %v2809, 4
      %v2812 = vrot.slane %v2734, 7
      %v2813 = vsel %vm2746, %v2811, %v2812
      %v2814 = vrot.slane %v2812, 4
      %v2815 = vrot.slane %v2735, 7
      %v2816 = vsel %vm2746, %v2814, %v2815
      %v2817 = vrot.slane %v2815, 4
      %v2818 = vrot.slane %v2736, 7
      %v2819 = vsel %vm2746, %v2817, %v2818
      %v2820 = vrot.slane %v2818, 4
      %v2821 = vrot.slane %v2737, 7
      %v2822 = vsel %vm2746, %v2820, %v2821
      %v2823 = vrot.slane %v2821, 4
      %v2824 = vrot.slane %v2738, 7
      %v2825 = vsel %vm2746, %v2823, %v2824
      %v2826 = vrot.slane %v2824, 4
      %v2827 = vrot.slane %v2739, 7
      %v2828 = vsel %vm2746, %v2826, %v2827
      %v2829 = vrot.slane %v2827, 4
      %v2830 = vrot.slane %v2740, 7
      %v2831 = vsel %vm2746, %v2829, %v2830
      %v2832 = vrot.slane %v2830, 4
      %v2833 = vrot.slane %v2741, 7
      %v2834 = vsel %vm2746, %v2832, %v2833
      %v2835 = vrot.slane %v2833, 4
      %v2836 = vrot.slane %v2742, 7
      %v2837 = vsel %vm2746, %v2835, %v2836
      %v2838 = vrot.slane %v2836, 4
      %v2839 = vrot.slane %v2743, 7
      %v2840 = vsel %vm2746, %v2838, %v2839
      %v2841 = vrot.slane %v2839, 4
      %vm2842 = vcmp.ne.s16.totalorder %v2747, 0
      %vm2843 = vcmp.ne.s16.totalorder %v2750, 0
      %vm2844 = vcmp.ne.s16.totalorder %v2753, 0
      %vm2845 = vcmp.ne.s16.totalorder %v2756, 0
      %vm2846 = vcmp.ne.s16.totalorder %v2759, 0
      %vm2847 = vcmp.ne.s16.totalorder %v2762, 0
      %vm2848 = vcmp.ne.s16.totalorder %v2765, 0
      %vm2849 = vcmp.ne.s16.totalorder %v2768, 0
      %vm2850 = vcmp.ne.s16.totalorder %v2771, 0
      %vm2851 = vcmp.ne.s16.totalorder %v2774, 0
      %vm2852 = vcmp.ne.s16.totalorder %v2777, 0
      %vm2853 = vcmp.ne.s16.totalorder %v2780, 0
      %vm2854 = vcmp.ne.s16.totalorder %v2783, 0
      %vm2855 = vcmp.ne.s16.totalorder %v2786, 0
      %vm2856 = vcmp.ne.s16.totalorder %v2789, 0
      %vm2857 = vcmp.ne.s16.totalorder %v2792, 0
      %vm2858 = vcmp.ne.s16.totalorder %v2795, 0
      %vm2859 = vcmp.ne.s16.totalorder %v2798, 0
      %vm2860 = vcmp.ne.s16.totalorder %v2801, 0
      %vm2861 = vcmp.ne.s16.totalorder %v2804, 0
      %vm2862 = vcmp.ne.s16.totalorder %v2807, 0
      %vm2863 = vcmp.ne.s16.totalorder %v2810, 0
      %vm2864 = vcmp.ne.s16.totalorder %v2813, 0
      %vm2865 = vcmp.ne.s16.totalorder %v2816, 0
      %vm2866 = vcmp.ne.s16.totalorder %v2819, 0
      %vm2867 = vcmp.ne.s16.totalorder %v2822, 0
      %vm2868 = vcmp.ne.s16.totalorder %v2825, 0
      %vm2869 = vcmp.ne.s16.totalorder %v2828, 0
      %vm2870 = vcmp.ne.s16.totalorder %v2831, 0
      %vm2871 = vcmp.ne.s16.totalorder %v2834, 0
      %vm2872 = vcmp.ne.s16.totalorder %v2837, 0
      %vm2873 = vcmp.ne.s16.totalorder %v2840, 0
      %vm2874 = vcmp.ne.s16.totalorder %v2841, 0
      %v2875 = vsel %vm2842, %v2583, 0
      %v2876 = vsel %vm2843, %v1666, 0
      %v2877 = vsel %vm2844, %v1667, 0
      %v2878 = vsel %vm2845, %v1668, 0
      %v2879 = vsel %vm2846, %v1669, 0
      %v2880 = vsel %vm2847, %v1670, 0
      %v2881 = vsel %vm2848, %v1671, 0
      %v2882 = vsel %vm2849, %v1672, 0
      %v2883 = vsel %vm2850, %v1673, 0
      %v2884 = vsel %vm2851, %v1674, 0
      %v2885 = vsel %vm2852, %v1675, 0
      %v2886 = vsel %vm2853, %v1676, 0
      %v2887 = vsel %vm2854, %v1677, 0
      %v2888 = vsel %vm2855, %v1678, 0
      %v2889 = vsel %vm2856, %v1679, 0
      %v2890 = vsel %vm2857, %v1680, 0
      %v2891 = vsel %vm2858, %v1681, 0
      %v2892 = vsel %vm2859, %v1682, 0
      %v2893 = vsel %vm2860, %v1683, 0
      %v2894 = vsel %vm2861, %v1684, 0
      %v2895 = vsel %vm2862, %v1685, 0
      %v2896 = vsel %vm2863, %v1686, 0
      %v2897 = vsel %vm2864, %v1687, 0
      %v2898 = vsel %vm2865, %v1688, 0
      %v2899 = vsel %vm2866, %v1689, 0
      %v2900 = vsel %vm2867, %v1690, 0
      %v2901 = vsel %vm2868, %v1691, 0
      %v2902 = vsel %vm2869, %v1692, 0
      %v2903 = vsel %vm2870, %v1693, 0
      %v2904 = vsel %vm2871, %v1694, 0
      %v2905 = vsel %vm2872, %v1695, 0
      %v2906 = vsel %vm2873, %v1696, 0
      %v2907 = vsel %vm2874, %v1858, 0
      %s2908 = scalar_lea.vmem %s5, 4
      %v2909 = vld [vmem:[%s2908] sm:$0x3]
      %v2943 = vunpack.c.l.b16 %v2875
      %v2944 = vunpack.c.l.b16 %v2876
      %v2945 = vunpack.c.l.b16 %v2877
      %v2946 = vunpack.c.l.b16 %v2878
      %v2947 = vunpack.c.l.b16 %v2879
      %v2948 = vunpack.c.l.b16 %v2880
      %v2949 = vunpack.c.l.b16 %v2881
      %v2950 = vunpack.c.l.b16 %v2882
      %v2951 = vunpack.c.l.b16 %v2883
      %v2952 = vunpack.c.l.b16 %v2884
      %v2953 = vunpack.c.l.b16 %v2885
      %v2954 = vunpack.c.l.b16 %v2886
      %v2955 = vunpack.c.l.b16 %v2887
      %v2956 = vunpack.c.l.b16 %v2888
      %v2957 = vunpack.c.l.b16 %v2889
      %v2958 = vunpack.c.l.b16 %v2890
      %v2959 = vunpack.c.l.b16 %v2891
      %v2960 = vunpack.c.l.b16 %v2892
      %v2961 = vunpack.c.l.b16 %v2893
      %v2962 = vunpack.c.l.b16 %v2894
      %v2963 = vunpack.c.l.b16 %v2895
      %v2964 = vunpack.c.l.b16 %v2896
      %v2965 = vunpack.c.l.b16 %v2897
      %v2966 = vunpack.c.l.b16 %v2898
      %v2967 = vunpack.c.l.b16 %v2899
      %v2968 = vunpack.c.l.b16 %v2900
      %v2969 = vunpack.c.l.b16 %v2901
      %v2970 = vunpack.c.l.b16 %v2902
      %v2971 = vunpack.c.l.b16 %v2903
      %v2972 = vunpack.c.l.b16 %v2904
      %v2973 = vunpack.c.l.b16 %v2905
      %v2974 = vunpack.c.l.b16 %v2906
      %v2975 = vunpack.c.l.b16 %v2907
      %v2976 = vpack.c.b16 %v2944, %v2943
      %v2977 = vpack.c.b16 %v2946, %v2945
      %v2978 = vpack.c.b16 %v2948, %v2947
      %v2979 = vpack.c.b16 %v2950, %v2949
      %v2980 = vpack.c.b16 %v2952, %v2951
      %v2981 = vpack.c.b16 %v2954, %v2953
      %v2982 = vpack.c.b16 %v2956, %v2955
      %v2983 = vpack.c.b16 %v2958, %v2957
      %v2984 = vpack.c.b16 %v2960, %v2959
      %v2985 = vpack.c.b16 %v2962, %v2961
      %v2986 = vpack.c.b16 %v2964, %v2963
      %v2987 = vpack.c.b16 %v2966, %v2965
      %v2988 = vpack.c.b16 %v2968, %v2967
      %v2989 = vpack.c.b16 %v2970, %v2969
      %v2990 = vpack.c.b16 %v2972, %v2971
      %v2991 = vpack.c.b16 %v2974, %v2973
      %v2992 = vpack.c.b16 %v2975, %v2975
      %vm2993 = vcmask 1046528
      %v2994 = vrot.slane %v2976, 1
      %v2995 = vrot.slane %v2977, 1
      %v2996 = vsel %vm2993, %v2994, %v2995
      %v2997 = vrot.slane %v2978, 1
      %v2998 = vsel %vm2993, %v2995, %v2997
      %v2999 = vrot.slane %v2979, 1
      %v3000 = vsel %vm2993, %v2997, %v2999
      %v3001 = vrot.slane %v2980, 1
      %v3002 = vsel %vm2993, %v2999, %v3001
      %v3003 = vrot.slane %v2981, 1
      %v3004 = vsel %vm2993, %v3001, %v3003
      %v3005 = vrot.slane %v2982, 1
      %v3006 = vsel %vm2993, %v3003, %v3005
      %v3007 = vrot.slane %v2983, 1
      %v3008 = vsel %vm2993, %v3005, %v3007
      %v3009 = vrot.slane %v2984, 1
      %v3010 = vsel %vm2993, %v3007, %v3009
      %v3011 = vrot.slane %v2985, 1
      %v3012 = vsel %vm2993, %v3009, %v3011
      %v3013 = vrot.slane %v2986, 1
      %v3014 = vsel %vm2993, %v3011, %v3013
      %v3015 = vrot.slane %v2987, 1
      %v3016 = vsel %vm2993, %v3013, %v3015
      %v3017 = vrot.slane %v2988, 1
      %v3018 = vsel %vm2993, %v3015, %v3017
      %v3019 = vrot.slane %v2989, 1
      %v3020 = vsel %vm2993, %v3017, %v3019
      %v3021 = vrot.slane %v2990, 1
      %v3022 = vsel %vm2993, %v3019, %v3021
      %v3023 = vrot.slane %v2991, 1
      %v3024 = vsel %vm2993, %v3021, %v3023
      %v3025 = vrot.slane %v2992, 1
      %v3026 = vsel %vm2993, %v3023, %v3025
      %v3028 = vsel %vm2077, %v2996, 0
      %v3031 = vsel %vm2077, %v2998, 0
      %v3034 = vsel %vm2077, %v3000, 0
      %v3037 = vsel %vm2077, %v3002, 0
      %v3040 = vsel %vm2077, %v3004, 0
      %v3043 = vsel %vm2077, %v3006, 0
      %v3046 = vsel %vm2077, %v3008, 0
      %v3049 = vsel %vm2077, %v3010, 0
      %v3052 = vsel %vm2077, %v3012, 0
      %v3055 = vsel %vm2077, %v3014, 0
      %v3058 = vsel %vm2077, %v3016, 0
      %v3061 = vsel %vm2077, %v3018, 0
      %v3064 = vsel %vm2077, %v3020, 0
      %v3067 = vsel %vm2077, %v3022, 0
      %v3070 = vsel %vm2077, %v3024, 0
      %v3073 = vsel %vm2077, %v3026, 0
      %v3076 = vsel %vm2126, %v2909, 0
      %3078 = vmatprep.subr.bf16.mxu0 0
      %3079 = vmatpush1.bf16.msra.mxu0 %v3076
      %3080 = vmatprep.subr.bf16.mxu0 0
      %3081 = vmatpush1.bf16.msra.mxu0 0
      %3082 = vmatprep.subr.bf16.mxu0 0
      %3083 = vmatpush1.bf16.msra.mxu0 0
      %3084 = vmatprep.subr.bf16.mxu0 0
      %3085 = vmatpush1.bf16.msra.mxu0 0
      %3086 = vmatprep.subr.bf16.mxu0 0
      %3087 = vmatpush1.bf16.msra.mxu0 0
      %3088 = vmatprep.subr.bf16.mxu0 0
      %3089 = vmatpush1.bf16.msra.mxu0 0
      %3090 = vmatprep.subr.bf16.mxu0 0
      %3091 = vmatpush1.bf16.msra.mxu0 0
      %3092 = vmatprep.subr.bf16.mxu0 0
      %3093 = vmatpush1.bf16.msra.mxu0 0
      %3094 = vmatprep.subr.bf16.mxu0 0
      %3095 = vmatpush1.bf16.msra.mxu0 0
      %3096 = vmatprep.subr.bf16.mxu0 0
      %3097 = vmatpush1.bf16.msra.mxu0 0
      %3098 = vmatprep.subr.bf16.mxu0 0
      %3099 = vmatpush1.bf16.msra.mxu0 0
      %3100 = vmatprep.subr.bf16.mxu0 0
      %3101 = vmatpush1.bf16.msra.mxu0 0
      %3102 = vmatprep.subr.bf16.mxu0 0
      %3103 = vmatpush1.bf16.msra.mxu0 0
      %3104 = vmatprep.subr.bf16.mxu0 0
      %3105 = vmatpush1.bf16.msra.mxu0 0
      %3106 = vmatprep.subr.bf16.mxu0 0
      %3107 = vmatpush1.bf16.msra.mxu0 0
      %3108 = vmatprep.subr.bf16.mxu0 0
      %3109 = vmatpush1.bf16.msra.mxu0 0
      %3110 = vmatprep.mubr.bf16.mxu0 0
      %3111 = vmatmul.mubr.bf16.gmra.mrb[0].mxu0 %v3028
      %v3112 = vpop.f32.mrb[0].mxu0
      %v3113 = vadd.f32 0.0, %v3112
      %v3114 = vpop.f32.mrb[0].mxu0
      %v3115 = vpop.f32.mrb[0].mxu0
      %v3116 = vadd.f32 0.0, %v3115
      %v3117 = vpop.f32.mrb[0].mxu0
      %3118 = vmatprep.mubr.bf16.mxu0 0
      %3119 = vmatmul.mubr.bf16.gmra.mrb[0].mxu0 %v3031
      %v3120 = vpop.f32.mrb[0].mxu0
      %v3121 = vadd.f32 0.0, %v3120
      %v3122 = vpop.f32.mrb[0].mxu0
      %v3123 = vpop.f32.mrb[0].mxu0
      %v3124 = vadd.f32 0.0, %v3123
      %v3125 = vpop.f32.mrb[0].mxu0
      %3126 = vmatprep.mubr.bf16.mxu0 0
      %3127 = vmatmul.mubr.bf16.gmra.mrb[0].mxu0 %v3034
      %v3128 = vpop.f32.mrb[0].mxu0
      %v3129 = vadd.f32 0.0, %v3128
      %v3130 = vpop.f32.mrb[0].mxu0
      %v3131 = vpop.f32.mrb[0].mxu0
      %v3132 = vadd.f32 0.0, %v3131
      %v3133 = vpop.f32.mrb[0].mxu0
      %3134 = vmatprep.mubr.bf16.mxu0 0
      %3135 = vmatmul.mubr.bf16.gmra.mrb[0].mxu0 %v3037
      %v3136 = vpop.f32.mrb[0].mxu0
      %v3137 = vadd.f32 0.0, %v3136
      %v3138 = vpop.f32.mrb[0].mxu0
      %v3139 = vpop.f32.mrb[0].mxu0
      %v3140 = vadd.f32 0.0, %v3139
      %v3141 = vpop.f32.mrb[0].mxu0
      %3142 = vmatprep.mubr.bf16.mxu0 0
      %3143 = vmatmul.mubr.bf16.gmra.mrb[0].mxu0 %v3040
      %v3144 = vpop.f32.mrb[0].mxu0
      %v3145 = vadd.f32 0.0, %v3144
      %v3146 = vpop.f32.mrb[0].mxu0
      %v3147 = vpop.f32.mrb[0].mxu0
      %v3148 = vadd.f32 0.0, %v3147
      %v3149 = vpop.f32.mrb[0].mxu0
      %3150 = vmatprep.mubr.bf16.mxu0 0
      %3151 = vmatmul.mubr.bf16.gmra.mrb[0].mxu0 %v3043
      %v3152 = vpop.f32.mrb[0].mxu0
      %v3153 = vadd.f32 0.0, %v3152
      %v3154 = vpop.f32.mrb[0].mxu0
      %v3155 = vpop.f32.mrb[0].mxu0
      %v3156 = vadd.f32 0.0, %v3155
      %v3157 = vpop.f32.mrb[0].mxu0
      %3158 = vmatprep.mubr.bf16.mxu0 0
      %3159 = vmatmul.mubr.bf16.gmra.mrb[0].mxu0 %v3046
      %v3160 = vpop.f32.mrb[0].mxu0
      %v3161 = vadd.f32 0.0, %v3160
      %v3162 = vpop.f32.mrb[0].mxu0
      %v3163 = vpop.f32.mrb[0].mxu0
      %v3164 = vadd.f32 0.0, %v3163
      %v3165 = vpop.f32.mrb[0].mxu0
      %3166 = vmatprep.mubr.bf16.mxu0 0
      %3167 = vmatmul.mubr.bf16.gmra.mrb[0].mxu0 %v3049
      %v3168 = vpop.f32.mrb[0].mxu0
      %v3169 = vadd.f32 0.0, %v3168
      %v3170 = vpop.f32.mrb[0].mxu0
      %v3171 = vpop.f32.mrb[0].mxu0
      %v3172 = vadd.f32 0.0, %v3171
      %v3173 = vpop.f32.mrb[0].mxu0
      %3174 = vmatprep.mubr.bf16.mxu0 0
      %3175 = vmatmul.mubr.bf16.gmra.mrb[0].mxu0 %v3052
      %v3176 = vpop.f32.mrb[0].mxu0
      %v3177 = vadd.f32 0.0, %v3176
      %v3178 = vpop.f32.mrb[0].mxu0
      %v3179 = vpop.f32.mrb[0].mxu0
      %v3180 = vadd.f32 0.0, %v3179
      %v3181 = vpop.f32.mrb[0].mxu0
      %3182 = vmatprep.mubr.bf16.mxu0 0
      %3183 = vmatmul.mubr.bf16.gmra.mrb[0].mxu0 %v3055
      %v3184 = vpop.f32.mrb[0].mxu0
      %v3185 = vadd.f32 0.0, %v3184
      %v3186 = vpop.f32.mrb[0].mxu0
      %v3187 = vpop.f32.mrb[0].mxu0
      %v3188 = vadd.f32 0.0, %v3187
      %v3189 = vpop.f32.mrb[0].mxu0
      %3190 = vmatprep.mubr.bf16.mxu0 0
      %3191 = vmatmul.mubr.bf16.gmra.mrb[0].mxu0 %v3058
      %v3192 = vpop.f32.mrb[0].mxu0
      %v3193 = vadd.f32 0.0, %v3192
      %v3194 = vpop.f32.mrb[0].mxu0
      %v3195 = vpop.f32.mrb[0].mxu0
      %v3196 = vadd.f32 0.0, %v3195
      %v3197 = vpop.f32.mrb[0].mxu0
      %3198 = vmatprep.mubr.bf16.mxu0 0
      %3199 = vmatmul.mubr.bf16.gmra.mrb[0].mxu0 %v3061
      %v3200 = vpop.f32.mrb[0].mxu0
      %v3201 = vadd.f32 0.0, %v3200
      %v3202 = vpop.f32.mrb[0].mxu0
      %v3203 = vpop.f32.mrb[0].mxu0
      %v3204 = vadd.f32 0.0, %v3203
      %v3205 = vpop.f32.mrb[0].mxu0
      %3206 = vmatprep.mubr.bf16.mxu0 0
      %3207 = vmatmul.mubr.bf16.gmra.mrb[0].mxu0 %v3064
      %v3208 = vpop.f32.mrb[0].mxu0
      %v3209 = vadd.f32 0.0, %v3208
      %v3210 = vpop.f32.mrb[0].mxu0
      %v3211 = vpop.f32.mrb[0].mxu0
      %v3212 = vadd.f32 0.0, %v3211
      %v3213 = vpop.f32.mrb[0].mxu0
      %3214 = vmatprep.mubr.bf16.mxu0 0
      %3215 = vmatmul.mubr.bf16.gmra.mrb[0].mxu0 %v3067
      %v3216 = vpop.f32.mrb[0].mxu0
      %v3217 = vadd.f32 0.0, %v3216
      %v3218 = vpop.f32.mrb[0].mxu0
      %v3219 = vpop.f32.mrb[0].mxu0
      %v3220 = vadd.f32 0.0, %v3219
      %v3221 = vpop.f32.mrb[0].mxu0
      %3222 = vmatprep.mubr.bf16.mxu0 0
      %3223 = vmatmul.mubr.bf16.gmra.mrb[0].mxu0 %v3070
      %v3224 = vpop.f32.mrb[0].mxu0
      %v3225 = vadd.f32 0.0, %v3224
      %v3226 = vpop.f32.mrb[0].mxu0
      %v3227 = vpop.f32.mrb[0].mxu0
      %v3228 = vadd.f32 0.0, %v3227
      %v3229 = vpop.f32.mrb[0].mxu0
      %3230 = vmatprep.mubr.bf16.mxu0 0
      %3231 = vmatmul.mubr.bf16.gmra.mrb[0].mxu0 %v3073
      %v3232 = vpop.f32.mrb[0].mxu0
      %v3233 = vadd.f32 0.0, %v3232
      %v3234 = vpop.f32.mrb[0].mxu0
      %v3235 = vpop.f32.mrb[0].mxu0
      %v3236 = vadd.f32 0.0, %v3235
      %v3237 = vpop.f32.mrb[0].mxu0
      %3238 = vdwg.mxu0
      %v3239 = vadd.f32 %v2457, %v3113
      %v3240 = vadd.f32 %v2460, %v3116
      %v3241 = vadd.f32 %v2465, %v3121
      %v3242 = vadd.f32 %v2468, %v3124
      %v3243 = vadd.f32 %v2473, %v3129
      %v3244 = vadd.f32 %v2476, %v3132
      %v3245 = vadd.f32 %v2481, %v3137
      %v3246 = vadd.f32 %v2484, %v3140
      %v3247 = vadd.f32 %v2489, %v3145
      %v3248 = vadd.f32 %v2492, %v3148
      %v3249 = vadd.f32 %v2497, %v3153
      %v3250 = vadd.f32 %v2500, %v3156
      %v3251 = vadd.f32 %v2505, %v3161
      %v3252 = vadd.f32 %v2508, %v3164
      %v3253 = vadd.f32 %v2513, %v3169
      %v3254 = vadd.f32 %v2516, %v3172
      %v3255 = vadd.f32 %v2521, %v3177
      %v3256 = vadd.f32 %v2524, %v3180
      %v3257 = vadd.f32 %v2529, %v3185
      %v3258 = vadd.f32 %v2532, %v3188
      %v3259 = vadd.f32 %v2537, %v3193
      %v3260 = vadd.f32 %v2540, %v3196
      %v3261 = vadd.f32 %v2545, %v3201
      %v3262 = vadd.f32 %v2548, %v3204
      %v3263 = vadd.f32 %v2553, %v3209
      %v3264 = vadd.f32 %v2556, %v3212
      %v3265 = vadd.f32 %v2561, %v3217
      %v3266 = vadd.f32 %v2564, %v3220
      %v3267 = vadd.f32 %v2569, %v3225
      %v3268 = vadd.f32 %v2572, %v3228
      %v3269 = vadd.f32 %v2577, %v3233
      %v3270 = vadd.f32 %v2580, %v3236
      %v3271 = vld [vmem:[#allocation2 + $0x8] sm:$0xf]
      %v3272 = vld [vmem:[#allocation2 + $0xc] sm:$0xf]
      %v3273 = vld [vmem:[#allocation2 + $0x10] sm:$0xf]
      %v3274 = vld [vmem:[#allocation2 + $0x14] sm:$0xf]
      %v3275 = vld [vmem:[#allocation2 + $0x18] sm:$0xf]
      %v3276 = vld [vmem:[#allocation2 + $0x1c] sm:$0xf]
      %v3277 = vld [vmem:[#allocation2 + $0x20] sm:$0xf]
      %v3278 = vld [vmem:[#allocation2 + $0x24] sm:$0xf]
      %v3279 = vld [vmem:[#allocation2 + $0x28] sm:$0xf]
      %v3280 = vld [vmem:[#allocation2 + $0x2c] sm:$0xf]
      %v3281 = vld [vmem:[#allocation2 + $0x30] sm:$0xf]
      %v3282 = vld [vmem:[#allocation2 + $0x34] sm:$0xf]
      %v3283 = vld [vmem:[#allocation2 + $0x38] sm:$0xf]
      %v3284 = vld [vmem:[#allocation2 + $0x3c] sm:$0xf]
      %v3285 = vld [vmem:[#allocation2 + $0x40] sm:$0xf]
      %v3286 = vld [vmem:[#allocation2 + $0x44] sm:$0xf]
      %v3287 = vld [vmem:[#allocation2 + $0x48] sm:$0xf]
      %v3288 = vld [vmem:[#allocation2 + $0x4c] sm:$0xf]
      %v3289 = vld [vmem:[#allocation2 + $0x50] sm:$0xf]
      %v3290 = vld [vmem:[#allocation2 + $0x54] sm:$0xf]
      %v3291 = vld [vmem:[#allocation2 + $0x58] sm:$0xf]
      %v3292 = vld [vmem:[#allocation2 + $0x5c] sm:$0xf]
      %v3293 = vld [vmem:[#allocation2 + $0x60] sm:$0xf]
      %v3294 = vld [vmem:[#allocation2 + $0x64] sm:$0xf]
      %v3295 = vld [vmem:[#allocation2 + $0x68] sm:$0xf]
      %v3296 = vld [vmem:[#allocation2 + $0x6c] sm:$0xf]
      %v3297 = vld [vmem:[#allocation2 + $0x70] sm:$0xf]
      %v3298 = vld [vmem:[#allocation2 + $0x74] sm:$0xf]
      %v3299 = vld [vmem:[#allocation2 + $0x78] sm:$0xf]
      %v3300 = vld [vmem:[#allocation2 + $0x7c] sm:$0xf]
      %v3301 = vld [vmem:[#allocation2 + $0x80] sm:$0xf]
      %v3302 = vld [vmem:[#allocation2 + $0x84] sm:$0xf]
      %v3303 = vsel %vm1793, %v3271, 0
      %v3304 = vsel %vm1794, %v3272, 0
      %v3305 = vsel %vm1795, %v3273, 0
      %v3306 = vsel %vm1796, %v3274, 0
      %v3307 = vsel %vm1797, %v3275, 0
      %v3308 = vsel %vm1798, %v3276, 0
      %v3309 = vsel %vm1799, %v3277, 0
      %v3310 = vsel %vm1800, %v3278, 0
      %v3311 = vsel %vm1801, %v3279, 0
      %v3312 = vsel %vm1802, %v3280, 0
      %v3313 = vsel %vm1803, %v3281, 0
      %v3314 = vsel %vm1804, %v3282, 0
      %v3315 = vsel %vm1805, %v3283, 0
      %v3316 = vsel %vm1806, %v3284, 0
      %v3317 = vsel %vm1807, %v3285, 0
      %v3318 = vsel %vm1808, %v3286, 0
      %v3319 = vsel %vm1809, %v3287, 0
      %v3320 = vsel %vm1810, %v3288, 0
      %v3321 = vsel %vm1811, %v3289, 0
      %v3322 = vsel %vm1812, %v3290, 0
      %v3323 = vsel %vm1813, %v3291, 0
      %v3324 = vsel %vm1814, %v3292, 0
      %v3325 = vsel %vm1815, %v3293, 0
      %v3326 = vsel %vm1816, %v3294, 0
      %v3327 = vsel %vm1817, %v3295, 0
      %v3328 = vsel %vm1818, %v3296, 0
      %v3329 = vsel %vm1819, %v3297, 0
      %v3330 = vsel %vm1820, %v3298, 0
      %v3331 = vsel %vm1821, %v3299, 0
      %v3332 = vsel %vm1822, %v3300, 0
      %v3333 = vsel %vm1823, %v3301, 0
      %v3334 = vsel %vm1824, %v3302, 0
      %s3335 = scalar_lea.vmem %s5, 6
      %v3336 = vld [vmem:[%s3335] sm:$0x3]
      %v3369 = vunpack.c.l.b16 %v3303
      %v3370 = vunpack.c.l.b16 %v3304
      %v3371 = vunpack.c.l.b16 %v3305
      %v3372 = vunpack.c.l.b16 %v3306
      %v3373 = vunpack.c.l.b16 %v3307
      %v3374 = vunpack.c.l.b16 %v3308
      %v3375 = vunpack.c.l.b16 %v3309
      %v3376 = vunpack.c.l.b16 %v3310
      %v3377 = vunpack.c.l.b16 %v3311
      %v3378 = vunpack.c.l.b16 %v3312
      %v3379 = vunpack.c.l.b16 %v3313
      %v3380 = vunpack.c.l.b16 %v3314
      %v3381 = vunpack.c.l.b16 %v3315
      %v3382 = vunpack.c.l.b16 %v3316
      %v3383 = vunpack.c.l.b16 %v3317
      %v3384 = vunpack.c.l.b16 %v3318
      %v3385 = vunpack.c.l.b16 %v3319
      %v3386 = vunpack.c.l.b16 %v3320
      %v3387 = vunpack.c.l.b16 %v3321
      %v3388 = vunpack.c.l.b16 %v3322
      %v3389 = vunpack.c.l.b16 %v3323
      %v3390 = vunpack.c.l.b16 %v3324
      %v3391 = vunpack.c.l.b16 %v3325
      %v3392 = vunpack.c.l.b16 %v3326
      %v3393 = vunpack.c.l.b16 %v3327
      %v3394 = vunpack.c.l.b16 %v3328
      %v3395 = vunpack.c.l.b16 %v3329
      %v3396 = vunpack.c.l.b16 %v3330
      %v3397 = vunpack.c.l.b16 %v3331
      %v3398 = vunpack.c.l.b16 %v3332
      %v3399 = vunpack.c.l.b16 %v3333
      %v3400 = vunpack.c.l.b16 %v3334
      %v3401 = vpack.c.b16 %v3370, %v3369
      %v3402 = vpack.c.b16 %v3372, %v3371
      %v3403 = vpack.c.b16 %v3374, %v3373
      %v3404 = vpack.c.b16 %v3376, %v3375
      %v3405 = vpack.c.b16 %v3378, %v3377
      %v3406 = vpack.c.b16 %v3380, %v3379
      %v3407 = vpack.c.b16 %v3382, %v3381
      %v3408 = vpack.c.b16 %v3384, %v3383
      %v3409 = vpack.c.b16 %v3386, %v3385
      %v3410 = vpack.c.b16 %v3388, %v3387
      %v3411 = vpack.c.b16 %v3390, %v3389
      %v3412 = vpack.c.b16 %v3392, %v3391
      %v3413 = vpack.c.b16 %v3394, %v3393
      %v3414 = vpack.c.b16 %v3396, %v3395
      %v3415 = vpack.c.b16 %v3398, %v3397
      %v3416 = vpack.c.b16 %v3400, %v3399
      %v3418 = vsel %vm2077, %v3401, 0
      %v3421 = vsel %vm2077, %v3402, 0
      %v3424 = vsel %vm2077, %v3403, 0
      %v3427 = vsel %vm2077, %v3404, 0
      %v3430 = vsel %vm2077, %v3405, 0
      %v3433 = vsel %vm2077, %v3406, 0
      %v3436 = vsel %vm2077, %v3407, 0
      %v3439 = vsel %vm2077, %v3408, 0
      %v3442 = vsel %vm2077, %v3409, 0
      %v3445 = vsel %vm2077, %v3410, 0
      %v3448 = vsel %vm2077, %v3411, 0
      %v3451 = vsel %vm2077, %v3412, 0
      %v3454 = vsel %vm2077, %v3413, 0
      %v3457 = vsel %vm2077, %v3414, 0
      %v3460 = vsel %vm2077, %v3415, 0
      %v3463 = vsel %vm2077, %v3416, 0
      %v3466 = vsel %vm2126, %v3336, 0
      %3468 = vmatprep.subr.bf16.mxu0 0
      %3469 = vmatpush1.bf16.msra.mxu0 %v3466
      %3470 = vmatprep.subr.bf16.mxu0 0
      %3471 = vmatpush1.bf16.msra.mxu0 0
      %3472 = vmatprep.subr.bf16.mxu0 0
      %3473 = vmatpush1.bf16.msra.mxu0 0
      %3474 = vmatprep.subr.bf16.mxu0 0
      %3475 = vmatpush1.bf16.msra.mxu0 0
      %3476 = vmatprep.subr.bf16.mxu0 0
      %3477 = vmatpush1.bf16.msra.mxu0 0
      %3478 = vmatprep.subr.bf16.mxu0 0
      %3479 = vmatpush1.bf16.msra.mxu0 0
      %3480 = vmatprep.subr.bf16.mxu0 0
      %3481 = vmatpush1.bf16.msra.mxu0 0
      %3482 = vmatprep.subr.bf16.mxu0 0
      %3483 = vmatpush1.bf16.msra.mxu0 0
      %3484 = vmatprep.subr.bf16.mxu0 0
      %3485 = vmatpush1.bf16.msra.mxu0 0
      %3486 = vmatprep.subr.bf16.mxu0 0
      %3487 = vmatpush1.bf16.msra.mxu0 0
      %3488 = vmatprep.subr.bf16.mxu0 0
      %3489 = vmatpush1.bf16.msra.mxu0 0
      %3490 = vmatprep.subr.bf16.mxu0 0
      %3491 = vmatpush1.bf16.msra.mxu0 0
      %3492 = vmatprep.subr.bf16.mxu0 0
      %3493 = vmatpush1.bf16.msra.mxu0 0
      %3494 = vmatprep.subr.bf16.mxu0 0
      %3495 = vmatpush1.bf16.msra.mxu0 0
      %3496 = vmatprep.subr.bf16.mxu0 0
      %3497 = vmatpush1.bf16.msra.mxu0 0
      %3498 = vmatprep.subr.bf16.mxu0 0
      %3499 = vmatpush1.bf16.msra.mxu0 0
      %3500 = vmatprep.mubr.bf16.mxu0 0
      %3501 = vmatmul.mubr.bf16.gmra.mrb[0].mxu0 %v3418
      %v3502 = vpop.f32.mrb[0].mxu0
      %v3503 = vadd.f32 0.0, %v3502
      %v3504 = vpop.f32.mrb[0].mxu0
      %v3505 = vpop.f32.mrb[0].mxu0
      %v3506 = vadd.f32 0.0, %v3505
      %v3507 = vpop.f32.mrb[0].mxu0
      %3508 = vmatprep.mubr.bf16.mxu0 0
      %3509 = vmatmul.mubr.bf16.gmra.mrb[0].mxu0 %v3421
      %v3510 = vpop.f32.mrb[0].mxu0
      %v3511 = vadd.f32 0.0, %v3510
      %v3512 = vpop.f32.mrb[0].mxu0
      %v3513 = vpop.f32.mrb[0].mxu0
      %v3514 = vadd.f32 0.0, %v3513
      %v3515 = vpop.f32.mrb[0].mxu0
      %3516 = vmatprep.mubr.bf16.mxu0 0
      %3517 = vmatmul.mubr.bf16.gmra.mrb[0].mxu0 %v3424
      %v3518 = vpop.f32.mrb[0].mxu0
      %v3519 = vadd.f32 0.0, %v3518
      %v3520 = vpop.f32.mrb[0].mxu0
      %v3521 = vpop.f32.mrb[0].mxu0
      %v3522 = vadd.f32 0.0, %v3521
      %v3523 = vpop.f32.mrb[0].mxu0
      %3524 = vmatprep.mubr.bf16.mxu0 0
      %3525 = vmatmul.mubr.bf16.gmra.mrb[0].mxu0 %v3427
      %v3526 = vpop.f32.mrb[0].mxu0
      %v3527 = vadd.f32 0.0, %v3526
      %v3528 = vpop.f32.mrb[0].mxu0
      %v3529 = vpop.f32.mrb[0].mxu0
      %v3530 = vadd.f32 0.0, %v3529
      %v3531 = vpop.f32.mrb[0].mxu0
      %3532 = vmatprep.mubr.bf16.mxu0 0
      %3533 = vmatmul.mubr.bf16.gmra.mrb[0].mxu0 %v3430
      %v3534 = vpop.f32.mrb[0].mxu0
      %v3535 = vadd.f32 0.0, %v3534
      %v3536 = vpop.f32.mrb[0].mxu0
      %v3537 = vpop.f32.mrb[0].mxu0
      %v3538 = vadd.f32 0.0, %v3537
      %v3539 = vpop.f32.mrb[0].mxu0
      %3540 = vmatprep.mubr.bf16.mxu0 0
      %3541 = vmatmul.mubr.bf16.gmra.mrb[0].mxu0 %v3433
      %v3542 = vpop.f32.mrb[0].mxu0
      %v3543 = vadd.f32 0.0, %v3542
      %v3544 = vpop.f32.mrb[0].mxu0
      %v3545 = vpop.f32.mrb[0].mxu0
      %v3546 = vadd.f32 0.0, %v3545
      %v3547 = vpop.f32.mrb[0].mxu0
      %3548 = vmatprep.mubr.bf16.mxu0 0
      %3549 = vmatmul.mubr.bf16.gmra.mrb[0].mxu0 %v3436
      %v3550 = vpop.f32.mrb[0].mxu0
      %v3551 = vadd.f32 0.0, %v3550
      %v3552 = vpop.f32.mrb[0].mxu0
      %v3553 = vpop.f32.mrb[0].mxu0
      %v3554 = vadd.f32 0.0, %v3553
      %v3555 = vpop.f32.mrb[0].mxu0
      %3556 = vmatprep.mubr.bf16.mxu0 0
      %3557 = vmatmul.mubr.bf16.gmra.mrb[0].mxu0 %v3439
      %v3558 = vpop.f32.mrb[0].mxu0
      %v3559 = vadd.f32 0.0, %v3558
      %v3560 = vpop.f32.mrb[0].mxu0
      %v3561 = vpop.f32.mrb[0].mxu0
      %v3562 = vadd.f32 0.0, %v3561
      %v3563 = vpop.f32.mrb[0].mxu0
      %3564 = vmatprep.mubr.bf16.mxu0 0
      %3565 = vmatmul.mubr.bf16.gmra.mrb[0].mxu0 %v3442
      %v3566 = vpop.f32.mrb[0].mxu0
      %v3567 = vadd.f32 0.0, %v3566
      %v3568 = vpop.f32.mrb[0].mxu0
      %v3569 = vpop.f32.mrb[0].mxu0
      %v3570 = vadd.f32 0.0, %v3569
      %v3571 = vpop.f32.mrb[0].mxu0
      %3572 = vmatprep.mubr.bf16.mxu0 0
      %3573 = vmatmul.mubr.bf16.gmra.mrb[0].mxu0 %v3445
      %v3574 = vpop.f32.mrb[0].mxu0
      %v3575 = vadd.f32 0.0, %v3574
      %v3576 = vpop.f32.mrb[0].mxu0
      %v3577 = vpop.f32.mrb[0].mxu0
      %v3578 = vadd.f32 0.0, %v3577
      %v3579 = vpop.f32.mrb[0].mxu0
      %3580 = vmatprep.mubr.bf16.mxu0 0
      %3581 = vmatmul.mubr.bf16.gmra.mrb[0].mxu0 %v3448
      %v3582 = vpop.f32.mrb[0].mxu0
      %v3583 = vadd.f32 0.0, %v3582
      %v3584 = vpop.f32.mrb[0].mxu0
      %v3585 = vpop.f32.mrb[0].mxu0
      %v3586 = vadd.f32 0.0, %v3585
      %v3587 = vpop.f32.mrb[0].mxu0
      %3588 = vmatprep.mubr.bf16.mxu0 0
      %3589 = vmatmul.mubr.bf16.gmra.mrb[0].mxu0 %v3451
      %v3590 = vpop.f32.mrb[0].mxu0
      %v3591 = vadd.f32 0.0, %v3590
      %v3592 = vpop.f32.mrb[0].mxu0
      %v3593 = vpop.f32.mrb[0].mxu0
      %v3594 = vadd.f32 0.0, %v3593
      %v3595 = vpop.f32.mrb[0].mxu0
      %3596 = vmatprep.mubr.bf16.mxu0 0
      %3597 = vmatmul.mubr.bf16.gmra.mrb[0].mxu0 %v3454
      %v3598 = vpop.f32.mrb[0].mxu0
      %v3599 = vadd.f32 0.0, %v3598
      %v3600 = vpop.f32.mrb[0].mxu0
      %v3601 = vpop.f32.mrb[0].mxu0
      %v3602 = vadd.f32 0.0, %v3601
      %v3603 = vpop.f32.mrb[0].mxu0
      %3604 = vmatprep.mubr.bf16.mxu0 0
      %3605 = vmatmul.mubr.bf16.gmra.mrb[0].mxu0 %v3457
      %v3606 = vpop.f32.mrb[0].mxu0
      %v3607 = vadd.f32 0.0, %v3606
      %v3608 = vpop.f32.mrb[0].mxu0
      %v3609 = vpop.f32.mrb[0].mxu0
      %v3610 = vadd.f32 0.0, %v3609
      %v3611 = vpop.f32.mrb[0].mxu0
      %3612 = vmatprep.mubr.bf16.mxu0 0
      %3613 = vmatmul.mubr.bf16.gmra.mrb[0].mxu0 %v3460
      %v3614 = vpop.f32.mrb[0].mxu0
      %v3615 = vadd.f32 0.0, %v3614
      %v3616 = vpop.f32.mrb[0].mxu0
      %v3617 = vpop.f32.mrb[0].mxu0
      %v3618 = vadd.f32 0.0, %v3617
      %v3619 = vpop.f32.mrb[0].mxu0
      %3620 = vmatprep.mubr.bf16.mxu0 0
      %3621 = vmatmul.mubr.bf16.gmra.mrb[0].mxu0 %v3463
      %v3622 = vpop.f32.mrb[0].mxu0
      %v3623 = vadd.f32 0.0, %v3622
      %v3624 = vpop.f32.mrb[0].mxu0
      %v3625 = vpop.f32.mrb[0].mxu0
      %v3626 = vadd.f32 0.0, %v3625
      %v3627 = vpop.f32.mrb[0].mxu0
      %3628 = vdwg.mxu0
      %v3629 = vadd.f32 %v3239, %v3503
      %v3630 = vadd.f32 %v3240, %v3506
      %v3631 = vadd.f32 %v3241, %v3511
      %v3632 = vadd.f32 %v3242, %v3514
      %v3633 = vadd.f32 %v3243, %v3519
      %v3634 = vadd.f32 %v3244, %v3522
      %v3635 = vadd.f32 %v3245, %v3527
      %v3636 = vadd.f32 %v3246, %v3530
      %v3637 = vadd.f32 %v3247, %v3535
      %v3638 = vadd.f32 %v3248, %v3538
      %v3639 = vadd.f32 %v3249, %v3543
      %v3640 = vadd.f32 %v3250, %v3546
      %v3641 = vadd.f32 %v3251, %v3551
      %v3642 = vadd.f32 %v3252, %v3554
      %v3643 = vadd.f32 %v3253, %v3559
      %v3644 = vadd.f32 %v3254, %v3562
      %v3645 = vadd.f32 %v3255, %v3567
      %v3646 = vadd.f32 %v3256, %v3570
      %v3647 = vadd.f32 %v3257, %v3575
      %v3648 = vadd.f32 %v3258, %v3578
      %v3649 = vadd.f32 %v3259, %v3583
      %v3650 = vadd.f32 %v3260, %v3586
      %v3651 = vadd.f32 %v3261, %v3591
      %v3652 = vadd.f32 %v3262, %v3594
      %v3653 = vadd.f32 %v3263, %v3599
      %v3654 = vadd.f32 %v3264, %v3602
      %v3655 = vadd.f32 %v3265, %v3607
      %v3656 = vadd.f32 %v3266, %v3610
      %v3657 = vadd.f32 %v3267, %v3615
      %v3658 = vadd.f32 %v3268, %v3618
      %v3659 = vadd.f32 %v3269, %v3623
      %v3660 = vadd.f32 %v3270, %v3626
      %v3661 = vld [vmem:[#allocation2 + $0x8] sm:$0xf]
      %v3662 = vld [vmem:[#allocation2 + $0xc] sm:$0xf]
      %v3663 = vld [vmem:[#allocation2 + $0x10] sm:$0xf]
      %v3664 = vld [vmem:[#allocation2 + $0x14] sm:$0xf]
      %v3665 = vld [vmem:[#allocation2 + $0x18] sm:$0xf]
      %v3666 = vld [vmem:[#allocation2 + $0x1c] sm:$0xf]
      %v3667 = vld [vmem:[#allocation2 + $0x20] sm:$0xf]
      %v3668 = vld [vmem:[#allocation2 + $0x24] sm:$0xf]
      %v3669 = vld [vmem:[#allocation2 + $0x28] sm:$0xf]
      %v3670 = vld [vmem:[#allocation2 + $0x2c] sm:$0xf]
      %v3671 = vld [vmem:[#allocation2 + $0x30] sm:$0xf]
      %v3672 = vld [vmem:[#allocation2 + $0x34] sm:$0xf]
      %v3673 = vld [vmem:[#allocation2 + $0x38] sm:$0xf]
      %v3674 = vld [vmem:[#allocation2 + $0x3c] sm:$0xf]
      %v3675 = vld [vmem:[#allocation2 + $0x40] sm:$0xf]
      %v3676 = vld [vmem:[#allocation2 + $0x44] sm:$0xf]
      %v3677 = vld [vmem:[#allocation2 + $0x48] sm:$0xf]
      %v3678 = vld [vmem:[#allocation2 + $0x4c] sm:$0xf]
      %v3679 = vld [vmem:[#allocation2 + $0x50] sm:$0xf]
      %v3680 = vld [vmem:[#allocation2 + $0x54] sm:$0xf]
      %v3681 = vld [vmem:[#allocation2 + $0x58] sm:$0xf]
      %v3682 = vld [vmem:[#allocation2 + $0x5c] sm:$0xf]
      %v3683 = vld [vmem:[#allocation2 + $0x60] sm:$0xf]
      %v3684 = vld [vmem:[#allocation2 + $0x64] sm:$0xf]
      %v3685 = vld [vmem:[#allocation2 + $0x68] sm:$0xf]
      %v3686 = vld [vmem:[#allocation2 + $0x6c] sm:$0xf]
      %v3687 = vld [vmem:[#allocation2 + $0x70] sm:$0xf]
      %v3688 = vld [vmem:[#allocation2 + $0x74] sm:$0xf]
      %v3689 = vld [vmem:[#allocation2 + $0x78] sm:$0xf]
      %v3690 = vld [vmem:[#allocation2 + $0x7c] sm:$0xf]
      %v3691 = vld [vmem:[#allocation2 + $0x80] sm:$0xf]
      %v3692 = vld [vmem:[#allocation2 + $0x84] sm:$0xf]
      %v3693 = vld [vmem:[#allocation2 + $0x88] sm:$0x1]
      %s3694 = scalar_lea.vmem %s5, 8
      %v3695 = vld [vmem:[%s3694] sm:$0x3]
      %v3729 = vunpack.c.l.b16 %v3661
      %v3730 = vunpack.c.l.b16 %v3662
      %v3731 = vunpack.c.l.b16 %v3663
      %v3732 = vunpack.c.l.b16 %v3664
      %v3733 = vunpack.c.l.b16 %v3665
      %v3734 = vunpack.c.l.b16 %v3666
      %v3735 = vunpack.c.l.b16 %v3667
      %v3736 = vunpack.c.l.b16 %v3668
      %v3737 = vunpack.c.l.b16 %v3669
      %v3738 = vunpack.c.l.b16 %v3670
      %v3739 = vunpack.c.l.b16 %v3671
      %v3740 = vunpack.c.l.b16 %v3672
      %v3741 = vunpack.c.l.b16 %v3673
      %v3742 = vunpack.c.l.b16 %v3674
      %v3743 = vunpack.c.l.b16 %v3675
      %v3744 = vunpack.c.l.b16 %v3676
      %v3745 = vunpack.c.l.b16 %v3677
      %v3746 = vunpack.c.l.b16 %v3678
      %v3747 = vunpack.c.l.b16 %v3679
      %v3748 = vunpack.c.l.b16 %v3680
      %v3749 = vunpack.c.l.b16 %v3681
      %v3750 = vunpack.c.l.b16 %v3682
      %v3751 = vunpack.c.l.b16 %v3683
      %v3752 = vunpack.c.l.b16 %v3684
      %v3753 = vunpack.c.l.b16 %v3685
      %v3754 = vunpack.c.l.b16 %v3686
      %v3755 = vunpack.c.l.b16 %v3687
      %v3756 = vunpack.c.l.b16 %v3688
      %v3757 = vunpack.c.l.b16 %v3689
      %v3758 = vunpack.c.l.b16 %v3690
      %v3759 = vunpack.c.l.b16 %v3691
      %v3760 = vunpack.c.l.b16 %v3692
      %v3761 = vunpack.c.l.b16 %v3693
      %v3762 = vpack.c.b16 %v3730, %v3729
      %v3763 = vpack.c.b16 %v3732, %v3731
      %v3764 = vpack.c.b16 %v3734, %v3733
      %v3765 = vpack.c.b16 %v3736, %v3735
      %v3766 = vpack.c.b16 %v3738, %v3737
      %v3767 = vpack.c.b16 %v3740, %v3739
      %v3768 = vpack.c.b16 %v3742, %v3741
      %v3769 = vpack.c.b16 %v3744, %v3743
      %v3770 = vpack.c.b16 %v3746, %v3745
      %v3771 = vpack.c.b16 %v3748, %v3747
      %v3772 = vpack.c.b16 %v3750, %v3749
      %v3773 = vpack.c.b16 %v3752, %v3751
      %v3774 = vpack.c.b16 %v3754, %v3753
      %v3775 = vpack.c.b16 %v3756, %v3755
      %v3776 = vpack.c.b16 %v3758, %v3757
      %v3777 = vpack.c.b16 %v3760, %v3759
      %v3778 = vpack.c.b16 %v3761, %v3761
      %v3780 = vshrl.u32 %v3762, 16
      %v3782 = vshll.u32 %v3762, 16
      %v3784 = vrot.slane %v3782, 1
      %v3785 = vor.u32 %v3780, %v3784
      %v3787 = vshll.u32 %v3763, 16
      %v3789 = vrot.slane %v3787, 1
      %v3790 = vsel %vm1944, %v3785, %v3789
      %v3791 = vshrl.u32 %v3763, 16
      %v3793 = vor.u32 %v3791, %v3789
      %v3795 = vshll.u32 %v3764, 16
      %v3797 = vrot.slane %v3795, 1
      %v3798 = vsel %vm1944, %v3793, %v3797
      %v3799 = vshrl.u32 %v3764, 16
      %v3801 = vor.u32 %v3799, %v3797
      %v3803 = vshll.u32 %v3765, 16
      %v3805 = vrot.slane %v3803, 1
      %v3806 = vsel %vm1944, %v3801, %v3805
      %v3807 = vshrl.u32 %v3765, 16
      %v3809 = vor.u32 %v3807, %v3805
      %v3811 = vshll.u32 %v3766, 16
      %v3813 = vrot.slane %v3811, 1
      %v3814 = vsel %vm1944, %v3809, %v3813
      %v3815 = vshrl.u32 %v3766, 16
      %v3817 = vor.u32 %v3815, %v3813
      %v3819 = vshll.u32 %v3767, 16
      %v3821 = vrot.slane %v3819, 1
      %v3822 = vsel %vm1944, %v3817, %v3821
      %v3823 = vshrl.u32 %v3767, 16
      %v3825 = vor.u32 %v3823, %v3821
      %v3827 = vshll.u32 %v3768, 16
      %v3829 = vrot.slane %v3827, 1
      %v3830 = vsel %vm1944, %v3825, %v3829
      %v3831 = vshrl.u32 %v3768, 16
      %v3833 = vor.u32 %v3831, %v3829
      %v3835 = vshll.u32 %v3769, 16
      %v3837 = vrot.slane %v3835, 1
      %v3838 = vsel %vm1944, %v3833, %v3837
      %v3839 = vshrl.u32 %v3769, 16
      %v3841 = vor.u32 %v3839, %v3837
      %v3843 = vshll.u32 %v3770, 16
      %v3845 = vrot.slane %v3843, 1
      %v3846 = vsel %vm1944, %v3841, %v3845
      %v3847 = vshrl.u32 %v3770, 16
      %v3849 = vor.u32 %v3847, %v3845
      %v3851 = vshll.u32 %v3771, 16
      %v3853 = vrot.slane %v3851, 1
      %v3854 = vsel %vm1944, %v3849, %v3853
      %v3855 = vshrl.u32 %v3771, 16
      %v3857 = vor.u32 %v3855, %v3853
      %v3859 = vshll.u32 %v3772, 16
      %v3861 = vrot.slane %v3859, 1
      %v3862 = vsel %vm1944, %v3857, %v3861
      %v3863 = vshrl.u32 %v3772, 16
      %v3865 = vor.u32 %v3863, %v3861
      %v3867 = vshll.u32 %v3773, 16
      %v3869 = vrot.slane %v3867, 1
      %v3870 = vsel %vm1944, %v3865, %v3869
      %v3871 = vshrl.u32 %v3773, 16
      %v3873 = vor.u32 %v3871, %v3869
      %v3875 = vshll.u32 %v3774, 16
      %v3877 = vrot.slane %v3875, 1
      %v3878 = vsel %vm1944, %v3873, %v3877
      %v3879 = vshrl.u32 %v3774, 16
      %v3881 = vor.u32 %v3879, %v3877
      %v3883 = vshll.u32 %v3775, 16
      %v3885 = vrot.slane %v3883, 1
      %v3886 = vsel %vm1944, %v3881, %v3885
      %v3887 = vshrl.u32 %v3775, 16
      %v3889 = vor.u32 %v3887, %v3885
      %v3891 = vshll.u32 %v3776, 16
      %v3893 = vrot.slane %v3891, 1
      %v3894 = vsel %vm1944, %v3889, %v3893
      %v3895 = vshrl.u32 %v3776, 16
      %v3897 = vor.u32 %v3895, %v3893
      %v3899 = vshll.u32 %v3777, 16
      %v3901 = vrot.slane %v3899, 1
      %v3902 = vsel %vm1944, %v3897, %v3901
      %v3903 = vshrl.u32 %v3777, 16
      %v3905 = vor.u32 %v3903, %v3901
      %v3907 = vshll.u32 %v3778, 16
      %v3909 = vrot.slane %v3907, 1
      %v3910 = vsel %vm1944, %v3905, %v3909
      %v3912 = vsel %vm2077, %v3790, 0
      %v3915 = vsel %vm2077, %v3798, 0
      %v3918 = vsel %vm2077, %v3806, 0
      %v3921 = vsel %vm2077, %v3814, 0
      %v3924 = vsel %vm2077, %v3822, 0
      %v3927 = vsel %vm2077, %v3830, 0
      %v3930 = vsel %vm2077, %v3838, 0
      %v3933 = vsel %vm2077, %v3846, 0
      %v3936 = vsel %vm2077, %v3854, 0
      %v3939 = vsel %vm2077, %v3862, 0
      %v3942 = vsel %vm2077, %v3870, 0
      %v3945 = vsel %vm2077, %v3878, 0
      %v3948 = vsel %vm2077, %v3886, 0
      %v3951 = vsel %vm2077, %v3894, 0
      %v3954 = vsel %vm2077, %v3902, 0
      %v3957 = vsel %vm2077, %v3910, 0
      %v3960 = vsel %vm2126, %v3695, 0
      %3962 = vmatprep.subr.bf16.mxu0 0
      %3963 = vmatpush1.bf16.msra.mxu0 %v3960
      %3964 = vmatprep.subr.bf16.mxu0 0
      %3965 = vmatpush1.bf16.msra.mxu0 0
      %3966 = vmatprep.subr.bf16.mxu0 0
      %3967 = vmatpush1.bf16.msra.mxu0 0
      %3968 = vmatprep.subr.bf16.mxu0 0
      %3969 = vmatpush1.bf16.msra.mxu0 0
      %3970 = vmatprep.subr.bf16.mxu0 0
      %3971 = vmatpush1.bf16.msra.mxu0 0
      %3972 = vmatprep.subr.bf16.mxu0 0
      %3973 = vmatpush1.bf16.msra.mxu0 0
      %3974 = vmatprep.subr.bf16.mxu0 0
      %3975 = vmatpush1.bf16.msra.mxu0 0
      %3976 = vmatprep.subr.bf16.mxu0 0
      %3977 = vmatpush1.bf16.msra.mxu0 0
      %3978 = vmatprep.subr.bf16.mxu0 0
      %3979 = vmatpush1.bf16.msra.mxu0 0
      %3980 = vmatprep.subr.bf16.mxu0 0
      %3981 = vmatpush1.bf16.msra.mxu0 0
      %3982 = vmatprep.subr.bf16.mxu0 0
      %3983 = vmatpush1.bf16.msra.mxu0 0
      %3984 = vmatprep.subr.bf16.mxu0 0
      %3985 = vmatpush1.bf16.msra.mxu0 0
      %3986 = vmatprep.subr.bf16.mxu0 0
      %3987 = vmatpush1.bf16.msra.mxu0 0
      %3988 = vmatprep.subr.bf16.mxu0 0
      %3989 = vmatpush1.bf16.msra.mxu0 0
      %3990 = vmatprep.subr.bf16.mxu0 0
      %3991 = vmatpush1.bf16.msra.mxu0 0
      %3992 = vmatprep.subr.bf16.mxu0 0
      %3993 = vmatpush1.bf16.msra.mxu0 0
      %3994 = vmatprep.mubr.bf16.mxu0 0
      %3995 = vmatmul.mubr.bf16.gmra.mrb[0].mxu0 %v3912
      %v3996 = vpop.f32.mrb[0].mxu0
      %v3997 = vadd.f32 0.0, %v3996
      %v3998 = vpop.f32.mrb[0].mxu0
      %v3999 = vpop.f32.mrb[0].mxu0
      %v4000 = vadd.f32 0.0, %v3999
      %v4001 = vpop.f32.mrb[0].mxu0
      %4002 = vmatprep.mubr.bf16.mxu0 0
      %4003 = vmatmul.mubr.bf16.gmra.mrb[0].mxu0 %v3915
      %v4004 = vpop.f32.mrb[0].mxu0
      %v4005 = vadd.f32 0.0, %v4004
      %v4006 = vpop.f32.mrb[0].mxu0
      %v4007 = vpop.f32.mrb[0].mxu0
      %v4008 = vadd.f32 0.0, %v4007
      %v4009 = vpop.f32.mrb[0].mxu0
      %4010 = vmatprep.mubr.bf16.mxu0 0
      %4011 = vmatmul.mubr.bf16.gmra.mrb[0].mxu0 %v3918
      %v4012 = vpop.f32.mrb[0].mxu0
      %v4013 = vadd.f32 0.0, %v4012
      %v4014 = vpop.f32.mrb[0].mxu0
      %v4015 = vpop.f32.mrb[0].mxu0
      %v4016 = vadd.f32 0.0, %v4015
      %v4017 = vpop.f32.mrb[0].mxu0
      %4018 = vmatprep.mubr.bf16.mxu0 0
      %4019 = vmatmul.mubr.bf16.gmra.mrb[0].mxu0 %v3921
      %v4020 = vpop.f32.mrb[0].mxu0
      %v4021 = vadd.f32 0.0, %v4020
      %v4022 = vpop.f32.mrb[0].mxu0
      %v4023 = vpop.f32.mrb[0].mxu0
      %v4024 = vadd.f32 0.0, %v4023
      %v4025 = vpop.f32.mrb[0].mxu0
      %4026 = vmatprep.mubr.bf16.mxu0 0
      %4027 = vmatmul.mubr.bf16.gmra.mrb[0].mxu0 %v3924
      %v4028 = vpop.f32.mrb[0].mxu0
      %v4029 = vadd.f32 0.0, %v4028
      %v4030 = vpop.f32.mrb[0].mxu0
      %v4031 = vpop.f32.mrb[0].mxu0
      %v4032 = vadd.f32 0.0, %v4031
      %v4033 = vpop.f32.mrb[0].mxu0
      %4034 = vmatprep.mubr.bf16.mxu0 0
      %4035 = vmatmul.mubr.bf16.gmra.mrb[0].mxu0 %v3927
      %v4036 = vpop.f32.mrb[0].mxu0
      %v4037 = vadd.f32 0.0, %v4036
      %v4038 = vpop.f32.mrb[0].mxu0
      %v4039 = vpop.f32.mrb[0].mxu0
      %v4040 = vadd.f32 0.0, %v4039
      %v4041 = vpop.f32.mrb[0].mxu0
      %4042 = vmatprep.mubr.bf16.mxu0 0
      %4043 = vmatmul.mubr.bf16.gmra.mrb[0].mxu0 %v3930
      %v4044 = vpop.f32.mrb[0].mxu0
      %v4045 = vadd.f32 0.0, %v4044
      %v4046 = vpop.f32.mrb[0].mxu0
      %v4047 = vpop.f32.mrb[0].mxu0
      %v4048 = vadd.f32 0.0, %v4047
      %v4049 = vpop.f32.mrb[0].mxu0
      %4050 = vmatprep.mubr.bf16.mxu0 0
      %4051 = vmatmul.mubr.bf16.gmra.mrb[0].mxu0 %v3933
      %v4052 = vpop.f32.mrb[0].mxu0
      %v4053 = vadd.f32 0.0, %v4052
      %v4054 = vpop.f32.mrb[0].mxu0
      %v4055 = vpop.f32.mrb[0].mxu0
      %v4056 = vadd.f32 0.0, %v4055
      %v4057 = vpop.f32.mrb[0].mxu0
      %4058 = vmatprep.mubr.bf16.mxu0 0
      %4059 = vmatmul.mubr.bf16.gmra.mrb[0].mxu0 %v3936
      %v4060 = vpop.f32.mrb[0].mxu0
      %v4061 = vadd.f32 0.0, %v4060
      %v4062 = vpop.f32.mrb[0].mxu0
      %v4063 = vpop.f32.mrb[0].mxu0
      %v4064 = vadd.f32 0.0, %v4063
      %v4065 = vpop.f32.mrb[0].mxu0
      %4066 = vmatprep.mubr.bf16.mxu0 0
      %4067 = vmatmul.mubr.bf16.gmra.mrb[0].mxu0 %v3939
      %v4068 = vpop.f32.mrb[0].mxu0
      %v4069 = vadd.f32 0.0, %v4068
      %v4070 = vpop.f32.mrb[0].mxu0
      %v4071 = vpop.f32.mrb[0].mxu0
      %v4072 = vadd.f32 0.0, %v4071
      %v4073 = vpop.f32.mrb[0].mxu0
      %4074 = vmatprep.mubr.bf16.mxu0 0
      %4075 = vmatmul.mubr.bf16.gmra.mrb[0].mxu0 %v3942
      %v4076 = vpop.f32.mrb[0].mxu0
      %v4077 = vadd.f32 0.0, %v4076
      %v4078 = vpop.f32.mrb[0].mxu0
      %v4079 = vpop.f32.mrb[0].mxu0
      %v4080 = vadd.f32 0.0, %v4079
      %v4081 = vpop.f32.mrb[0].mxu0
      %4082 = vmatprep.mubr.bf16.mxu0 0
      %4083 = vmatmul.mubr.bf16.gmra.mrb[0].mxu0 %v3945
      %v4084 = vpop.f32.mrb[0].mxu0
      %v4085 = vadd.f32 0.0, %v4084
      %v4086 = vpop.f32.mrb[0].mxu0
      %v4087 = vpop.f32.mrb[0].mxu0
      %v4088 = vadd.f32 0.0, %v4087
      %v4089 = vpop.f32.mrb[0].mxu0
      %4090 = vmatprep.mubr.bf16.mxu0 0
      %4091 = vmatmul.mubr.bf16.gmra.mrb[0].mxu0 %v3948
      %v4092 = vpop.f32.mrb[0].mxu0
      %v4093 = vadd.f32 0.0, %v4092
      %v4094 = vpop.f32.mrb[0].mxu0
      %v4095 = vpop.f32.mrb[0].mxu0
      %v4096 = vadd.f32 0.0, %v4095
      %v4097 = vpop.f32.mrb[0].mxu0
      %4098 = vmatprep.mubr.bf16.mxu0 0
      %4099 = vmatmul.mubr.bf16.gmra.mrb[0].mxu0 %v3951
      %v4100 = vpop.f32.mrb[0].mxu0
      %v4101 = vadd.f32 0.0, %v4100
      %v4102 = vpop.f32.mrb[0].mxu0
      %v4103 = vpop.f32.mrb[0].mxu0
      %v4104 = vadd.f32 0.0, %v4103
      %v4105 = vpop.f32.mrb[0].mxu0
      %4106 = vmatprep.mubr.bf16.mxu0 0
      %4107 = vmatmul.mubr.bf16.gmra.mrb[0].mxu0 %v3954
      %v4108 = vpop.f32.mrb[0].mxu0
      %v4109 = vadd.f32 0.0, %v4108
      %v4110 = vpop.f32.mrb[0].mxu0
      %v4111 = vpop.f32.mrb[0].mxu0
      %v4112 = vadd.f32 0.0, %v4111
      %v4113 = vpop.f32.mrb[0].mxu0
      %4114 = vmatprep.mubr.bf16.mxu0 0
      %4115 = vmatmul.mubr.bf16.gmra.mrb[0].mxu0 %v3957
      %v4116 = vpop.f32.mrb[0].mxu0
      %v4117 = vadd.f32 0.0, %v4116
      %v4118 = vpop.f32.mrb[0].mxu0
      %v4119 = vpop.f32.mrb[0].mxu0
      %v4120 = vadd.f32 0.0, %v4119
      %v4121 = vpop.f32.mrb[0].mxu0
      %4122 = vdwg.mxu0
      %v4123 = vadd.f32 %v3629, %v3997
      %v4124 = vadd.f32 %v3630, %v4000
      %v4125 = vadd.f32 %v3631, %v4005
      %v4126 = vadd.f32 %v3632, %v4008
      %v4127 = vadd.f32 %v3633, %v4013
      %v4128 = vadd.f32 %v3634, %v4016
      %v4129 = vadd.f32 %v3635, %v4021
      %v4130 = vadd.f32 %v3636, %v4024
      %v4131 = vadd.f32 %v3637, %v4029
      %v4132 = vadd.f32 %v3638, %v4032
      %v4133 = vadd.f32 %v3639, %v4037
      %v4134 = vadd.f32 %v3640, %v4040
      %v4135 = vadd.f32 %v3641, %v4045
      %v4136 = vadd.f32 %v3642, %v4048
      %v4137 = vadd.f32 %v3643, %v4053
      %v4138 = vadd.f32 %v3644, %v4056
      %v4139 = vadd.f32 %v3645, %v4061
      %v4140 = vadd.f32 %v3646, %v4064
      %v4141 = vadd.f32 %v3647, %v4069
      %v4142 = vadd.f32 %v3648, %v4072
      %v4143 = vadd.f32 %v3649, %v4077
      %v4144 = vadd.f32 %v3650, %v4080
      %v4145 = vadd.f32 %v3651, %v4085
      %v4146 = vadd.f32 %v3652, %v4088
      %v4147 = vadd.f32 %v3653, %v4093
      %v4148 = vadd.f32 %v3654, %v4096
      %v4149 = vadd.f32 %v3655, %v4101
      %v4150 = vadd.f32 %v3656, %v4104
      %v4151 = vadd.f32 %v3657, %v4109
      %v4152 = vadd.f32 %v3658, %v4112
      %v4153 = vadd.f32 %v3659, %v4117
      %v4154 = vadd.f32 %v3660, %v4120
      %v4155 = vld [vmem:[#allocation2 + $0x8] sm:$0xe]
      %v4156 = vsel %vm2842, %v4155, 0
      %v4157 = vsel %vm2843, %v3662, 0
      %v4158 = vsel %vm2844, %v3663, 0
      %v4159 = vsel %vm2845, %v3664, 0
      %v4160 = vsel %vm2846, %v3665, 0
      %v4161 = vsel %vm2847, %v3666, 0
      %v4162 = vsel %vm2848, %v3667, 0
      %v4163 = vsel %vm2849, %v3668, 0
      %v4164 = vsel %vm2850, %v3669, 0
      %v4165 = vsel %vm2851, %v3670, 0
      %v4166 = vsel %vm2852, %v3671, 0
      %v4167 = vsel %vm2853, %v3672, 0
      %v4168 = vsel %vm2854, %v3673, 0
      %v4169 = vsel %vm2855, %v3674, 0
      %v4170 = vsel %vm2856, %v3675, 0
      %v4171 = vsel %vm2857, %v3676, 0
      %v4172 = vsel %vm2858, %v3677, 0
      %v4173 = vsel %vm2859, %v3678, 0
      %v4174 = vsel %vm2860, %v3679, 0
      %v4175 = vsel %vm2861, %v3680, 0
      %v4176 = vsel %vm2862, %v3681, 0
      %v4177 = vsel %vm2863, %v3682, 0
      %v4178 = vsel %vm2864, %v3683, 0
      %v4179 = vsel %vm2865, %v3684, 0
      %v4180 = vsel %vm2866, %v3685, 0
      %v4181 = vsel %vm2867, %v3686, 0
      %v4182 = vsel %vm2868, %v3687, 0
      %v4183 = vsel %vm2869, %v3688, 0
      %v4184 = vsel %vm2870, %v3689, 0
      %v4185 = vsel %vm2871, %v3690, 0
      %v4186 = vsel %vm2872, %v3691, 0
      %v4187 = vsel %vm2873, %v3692, 0
      %v4188 = vsel %vm2874, %v3693, 0
      %s4189 = scalar_lea.vmem %s5, 10
      %v4190 = vld [vmem:[%s4189] sm:$0x3]
      %v4224 = vunpack.c.l.b16 %v4156
      %v4225 = vunpack.c.l.b16 %v4157
      %v4226 = vunpack.c.l.b16 %v4158
      %v4227 = vunpack.c.l.b16 %v4159
      %v4228 = vunpack.c.l.b16 %v4160
      %v4229 = vunpack.c.l.b16 %v4161
      %v4230 = vunpack.c.l.b16 %v4162
      %v4231 = vunpack.c.l.b16 %v4163
      %v4232 = vunpack.c.l.b16 %v4164
      %v4233 = vunpack.c.l.b16 %v4165
      %v4234 = vunpack.c.l.b16 %v4166
      %v4235 = vunpack.c.l.b16 %v4167
      %v4236 = vunpack.c.l.b16 %v4168
      %v4237 = vunpack.c.l.b16 %v4169
      %v4238 = vunpack.c.l.b16 %v4170
      %v4239 = vunpack.c.l.b16 %v4171
      %v4240 = vunpack.c.l.b16 %v4172
      %v4241 = vunpack.c.l.b16 %v4173
      %v4242 = vunpack.c.l.b16 %v4174
      %v4243 = vunpack.c.l.b16 %v4175
      %v4244 = vunpack.c.l.b16 %v4176
      %v4245 = vunpack.c.l.b16 %v4177
      %v4246 = vunpack.c.l.b16 %v4178
      %v4247 = vunpack.c.l.b16 %v4179
      %v4248 = vunpack.c.l.b16 %v4180
      %v4249 = vunpack.c.l.b16 %v4181
      %v4250 = vunpack.c.l.b16 %v4182
      %v4251 = vunpack.c.l.b16 %v4183
      %v4252 = vunpack.c.l.b16 %v4184
      %v4253 = vunpack.c.l.b16 %v4185
      %v4254 = vunpack.c.l.b16 %v4186
      %v4255 = vunpack.c.l.b16 %v4187
      %v4256 = vunpack.c.l.b16 %v4188
      %v4257 = vpack.c.b16 %v4225, %v4224
      %v4258 = vpack.c.b16 %v4227, %v4226
      %v4259 = vpack.c.b16 %v4229, %v4228
      %v4260 = vpack.c.b16 %v4231, %v4230
      %v4261 = vpack.c.b16 %v4233, %v4232
      %v4262 = vpack.c.b16 %v4235, %v4234
      %v4263 = vpack.c.b16 %v4237, %v4236
      %v4264 = vpack.c.b16 %v4239, %v4238
      %v4265 = vpack.c.b16 %v4241, %v4240
      %v4266 = vpack.c.b16 %v4243, %v4242
      %v4267 = vpack.c.b16 %v4245, %v4244
      %v4268 = vpack.c.b16 %v4247, %v4246
      %v4269 = vpack.c.b16 %v4249, %v4248
      %v4270 = vpack.c.b16 %v4251, %v4250
      %v4271 = vpack.c.b16 %v4253, %v4252
      %v4272 = vpack.c.b16 %v4255, %v4254
      %v4273 = vpack.c.b16 %v4256, %v4256
      %v4274 = vrot.slane %v4257, 1
      %v4275 = vrot.slane %v4258, 1
      %v4276 = vsel %vm2993, %v4274, %v4275
      %v4277 = vrot.slane %v4259, 1
      %v4278 = vsel %vm2993, %v4275, %v4277
      %v4279 = vrot.slane %v4260, 1
      %v4280 = vsel %vm2993, %v4277, %v4279
      %v4281 = vrot.slane %v4261, 1
      %v4282 = vsel %vm2993, %v4279, %v4281
      %v4283 = vrot.slane %v4262, 1
      %v4284 = vsel %vm2993, %v4281, %v4283
      %v4285 = vrot.slane %v4263, 1
      %v4286 = vsel %vm2993, %v4283, %v4285
      %v4287 = vrot.slane %v4264, 1
      %v4288 = vsel %vm2993, %v4285, %v4287
      %v4289 = vrot.slane %v4265, 1
      %v4290 = vsel %vm2993, %v4287, %v4289
      %v4291 = vrot.slane %v4266, 1
      %v4292 = vsel %vm2993, %v4289, %v4291
      %v4293 = vrot.slane %v4267, 1
      %v4294 = vsel %vm2993, %v4291, %v4293
      %v4295 = vrot.slane %v4268, 1
      %v4296 = vsel %vm2993, %v4293, %v4295
      %v4297 = vrot.slane %v4269, 1
      %v4298 = vsel %vm2993, %v4295, %v4297
      %v4299 = vrot.slane %v4270, 1
      %v4300 = vsel %vm2993, %v4297, %v4299
      %v4301 = vrot.slane %v4271, 1
      %v4302 = vsel %vm2993, %v4299, %v4301
      %v4303 = vrot.slane %v4272, 1
      %v4304 = vsel %vm2993, %v4301, %v4303
      %v4305 = vrot.slane %v4273, 1
      %v4306 = vsel %vm2993, %v4303, %v4305
      %v4308 = vsel %vm2077, %v4276, 0
      %v4311 = vsel %vm2077, %v4278, 0
      %v4314 = vsel %vm2077, %v4280, 0
      %v4317 = vsel %vm2077, %v4282, 0
      %v4320 = vsel %vm2077, %v4284, 0
      %v4323 = vsel %vm2077, %v4286, 0
      %v4326 = vsel %vm2077, %v4288, 0
      %v4329 = vsel %vm2077, %v4290, 0
      %v4332 = vsel %vm2077, %v4292, 0
      %v4335 = vsel %vm2077, %v4294, 0
      %v4338 = vsel %vm2077, %v4296, 0
      %v4341 = vsel %vm2077, %v4298, 0
      %v4344 = vsel %vm2077, %v4300, 0
      %v4347 = vsel %vm2077, %v4302, 0
      %v4350 = vsel %vm2077, %v4304, 0
      %v4353 = vsel %vm2077, %v4306, 0
      %v4356 = vsel %vm2126, %v4190, 0
      %4358 = vmatprep.subr.bf16.mxu0 0
      %4359 = vmatpush1.bf16.msra.mxu0 %v4356
      %4360 = vmatprep.subr.bf16.mxu0 0
      %4361 = vmatpush1.bf16.msra.mxu0 0
      %4362 = vmatprep.subr.bf16.mxu0 0
      %4363 = vmatpush1.bf16.msra.mxu0 0
      %4364 = vmatprep.subr.bf16.mxu0 0
      %4365 = vmatpush1.bf16.msra.mxu0 0
      %4366 = vmatprep.subr.bf16.mxu0 0
      %4367 = vmatpush1.bf16.msra.mxu0 0
      %4368 = vmatprep.subr.bf16.mxu0 0
      %4369 = vmatpush1.bf16.msra.mxu0 0
      %4370 = vmatprep.subr.bf16.mxu0 0
      %4371 = vmatpush1.bf16.msra.mxu0 0
      %4372 = vmatprep.subr.bf16.mxu0 0
      %4373 = vmatpush1.bf16.msra.mxu0 0
      %4374 = vmatprep.subr.bf16.mxu0 0
      %4375 = vmatpush1.bf16.msra.mxu0 0
      %4376 = vmatprep.subr.bf16.mxu0 0
      %4377 = vmatpush1.bf16.msra.mxu0 0
      %4378 = vmatprep.subr.bf16.mxu0 0
      %4379 = vmatpush1.bf16.msra.mxu0 0
      %4380 = vmatprep.subr.bf16.mxu0 0
      %4381 = vmatpush1.bf16.msra.mxu0 0
      %4382 = vmatprep.subr.bf16.mxu0 0
      %4383 = vmatpush1.bf16.msra.mxu0 0
      %4384 = vmatprep.subr.bf16.mxu0 0
      %4385 = vmatpush1.bf16.msra.mxu0 0
      %4386 = vmatprep.subr.bf16.mxu0 0
      %4387 = vmatpush1.bf16.msra.mxu0 0
      %4388 = vmatprep.subr.bf16.mxu0 0
      %4389 = vmatpush1.bf16.msra.mxu0 0
      %4390 = vmatprep.mubr.bf16.mxu0 0
      %4391 = vmatmul.mubr.bf16.gmra.mrb[0].mxu0 %v4308
      %v4392 = vpop.f32.mrb[0].mxu0
      %v4393 = vadd.f32 0.0, %v4392
      %v4394 = vpop.f32.mrb[0].mxu0
      %v4395 = vpop.f32.mrb[0].mxu0
      %v4396 = vadd.f32 0.0, %v4395
      %v4397 = vpop.f32.mrb[0].mxu0
      %4398 = vmatprep.mubr.bf16.mxu0 0
      %4399 = vmatmul.mubr.bf16.gmra.mrb[0].mxu0 %v4311
      %v4400 = vpop.f32.mrb[0].mxu0
      %v4401 = vadd.f32 0.0, %v4400
      %v4402 = vpop.f32.mrb[0].mxu0
      %v4403 = vpop.f32.mrb[0].mxu0
      %v4404 = vadd.f32 0.0, %v4403
      %v4405 = vpop.f32.mrb[0].mxu0
      %4406 = vmatprep.mubr.bf16.mxu0 0
      %4407 = vmatmul.mubr.bf16.gmra.mrb[0].mxu0 %v4314
      %v4408 = vpop.f32.mrb[0].mxu0
      %v4409 = vadd.f32 0.0, %v4408
      %v4410 = vpop.f32.mrb[0].mxu0
      %v4411 = vpop.f32.mrb[0].mxu0
      %v4412 = vadd.f32 0.0, %v4411
      %v4413 = vpop.f32.mrb[0].mxu0
      %4414 = vmatprep.mubr.bf16.mxu0 0
      %4415 = vmatmul.mubr.bf16.gmra.mrb[0].mxu0 %v4317
      %v4416 = vpop.f32.mrb[0].mxu0
      %v4417 = vadd.f32 0.0, %v4416
      %v4418 = vpop.f32.mrb[0].mxu0
      %v4419 = vpop.f32.mrb[0].mxu0
      %v4420 = vadd.f32 0.0, %v4419
      %v4421 = vpop.f32.mrb[0].mxu0
      %4422 = vmatprep.mubr.bf16.mxu0 0
      %4423 = vmatmul.mubr.bf16.gmra.mrb[0].mxu0 %v4320
      %v4424 = vpop.f32.mrb[0].mxu0
      %v4425 = vadd.f32 0.0, %v4424
      %v4426 = vpop.f32.mrb[0].mxu0
      %v4427 = vpop.f32.mrb[0].mxu0
      %v4428 = vadd.f32 0.0, %v4427
      %v4429 = vpop.f32.mrb[0].mxu0
      %4430 = vmatprep.mubr.bf16.mxu0 0
      %4431 = vmatmul.mubr.bf16.gmra.mrb[0].mxu0 %v4323
      %v4432 = vpop.f32.mrb[0].mxu0
      %v4433 = vadd.f32 0.0, %v4432
      %v4434 = vpop.f32.mrb[0].mxu0
      %v4435 = vpop.f32.mrb[0].mxu0
      %v4436 = vadd.f32 0.0, %v4435
      %v4437 = vpop.f32.mrb[0].mxu0
      %4438 = vmatprep.mubr.bf16.mxu0 0
      %4439 = vmatmul.mubr.bf16.gmra.mrb[0].mxu0 %v4326
      %v4440 = vpop.f32.mrb[0].mxu0
      %v4441 = vadd.f32 0.0, %v4440
      %v4442 = vpop.f32.mrb[0].mxu0
      %v4443 = vpop.f32.mrb[0].mxu0
      %v4444 = vadd.f32 0.0, %v4443
      %v4445 = vpop.f32.mrb[0].mxu0
      %4446 = vmatprep.mubr.bf16.mxu0 0
      %4447 = vmatmul.mubr.bf16.gmra.mrb[0].mxu0 %v4329
      %v4448 = vpop.f32.mrb[0].mxu0
      %v4449 = vadd.f32 0.0, %v4448
      %v4450 = vpop.f32.mrb[0].mxu0
      %v4451 = vpop.f32.mrb[0].mxu0
      %v4452 = vadd.f32 0.0, %v4451
      %v4453 = vpop.f32.mrb[0].mxu0
      %4454 = vmatprep.mubr.bf16.mxu0 0
      %4455 = vmatmul.mubr.bf16.gmra.mrb[0].mxu0 %v4332
      %v4456 = vpop.f32.mrb[0].mxu0
      %v4457 = vadd.f32 0.0, %v4456
      %v4458 = vpop.f32.mrb[0].mxu0
      %v4459 = vpop.f32.mrb[0].mxu0
      %v4460 = vadd.f32 0.0, %v4459
      %v4461 = vpop.f32.mrb[0].mxu0
      %4462 = vmatprep.mubr.bf16.mxu0 0
      %4463 = vmatmul.mubr.bf16.gmra.mrb[0].mxu0 %v4335
      %v4464 = vpop.f32.mrb[0].mxu0
      %v4465 = vadd.f32 0.0, %v4464
      %v4466 = vpop.f32.mrb[0].mxu0
      %v4467 = vpop.f32.mrb[0].mxu0
      %v4468 = vadd.f32 0.0, %v4467
      %v4469 = vpop.f32.mrb[0].mxu0
      %4470 = vmatprep.mubr.bf16.mxu0 0
      %4471 = vmatmul.mubr.bf16.gmra.mrb[0].mxu0 %v4338
      %v4472 = vpop.f32.mrb[0].mxu0
      %v4473 = vadd.f32 0.0, %v4472
      %v4474 = vpop.f32.mrb[0].mxu0
      %v4475 = vpop.f32.mrb[0].mxu0
      %v4476 = vadd.f32 0.0, %v4475
      %v4477 = vpop.f32.mrb[0].mxu0
      %4478 = vmatprep.mubr.bf16.mxu0 0
      %4479 = vmatmul.mubr.bf16.gmra.mrb[0].mxu0 %v4341
      %v4480 = vpop.f32.mrb[0].mxu0
      %v4481 = vadd.f32 0.0, %v4480
      %v4482 = vpop.f32.mrb[0].mxu0
      %v4483 = vpop.f32.mrb[0].mxu0
      %v4484 = vadd.f32 0.0, %v4483
      %v4485 = vpop.f32.mrb[0].mxu0
      %4486 = vmatprep.mubr.bf16.mxu0 0
      %4487 = vmatmul.mubr.bf16.gmra.mrb[0].mxu0 %v4344
      %v4488 = vpop.f32.mrb[0].mxu0
      %v4489 = vadd.f32 0.0, %v4488
      %v4490 = vpop.f32.mrb[0].mxu0
      %v4491 = vpop.f32.mrb[0].mxu0
      %v4492 = vadd.f32 0.0, %v4491
      %v4493 = vpop.f32.mrb[0].mxu0
      %4494 = vmatprep.mubr.bf16.mxu0 0
      %4495 = vmatmul.mubr.bf16.gmra.mrb[0].mxu0 %v4347
      %v4496 = vpop.f32.mrb[0].mxu0
      %v4497 = vadd.f32 0.0, %v4496
      %v4498 = vpop.f32.mrb[0].mxu0
      %v4499 = vpop.f32.mrb[0].mxu0
      %v4500 = vadd.f32 0.0, %v4499
      %v4501 = vpop.f32.mrb[0].mxu0
      %4502 = vmatprep.mubr.bf16.mxu0 0
      %4503 = vmatmul.mubr.bf16.gmra.mrb[0].mxu0 %v4350
      %v4504 = vpop.f32.mrb[0].mxu0
      %v4505 = vadd.f32 0.0, %v4504
      %v4506 = vpop.f32.mrb[0].mxu0
      %v4507 = vpop.f32.mrb[0].mxu0
      %v4508 = vadd.f32 0.0, %v4507
      %v4509 = vpop.f32.mrb[0].mxu0
      %4510 = vmatprep.mubr.bf16.mxu0 0
      %4511 = vmatmul.mubr.bf16.gmra.mrb[0].mxu0 %v4353
      %v4512 = vpop.f32.mrb[0].mxu0
      %v4513 = vadd.f32 0.0, %v4512
      %v4514 = vpop.f32.mrb[0].mxu0
      %v4515 = vpop.f32.mrb[0].mxu0
      %v4516 = vadd.f32 0.0, %v4515
      %v4517 = vpop.f32.mrb[0].mxu0
      %4518 = vdwg.mxu0
      %v4519 = vadd.f32 %v4123, %v4393
      %v4520 = vadd.f32 %v4124, %v4396
      %v4521 = vadd.f32 %v4125, %v4401
      %v4522 = vadd.f32 %v4126, %v4404
      %v4523 = vadd.f32 %v4127, %v4409
      %v4524 = vadd.f32 %v4128, %v4412
      %v4525 = vadd.f32 %v4129, %v4417
      %v4526 = vadd.f32 %v4130, %v4420
      %v4527 = vadd.f32 %v4131, %v4425
      %v4528 = vadd.f32 %v4132, %v4428
      %v4529 = vadd.f32 %v4133, %v4433
      %v4530 = vadd.f32 %v4134, %v4436
      %v4531 = vadd.f32 %v4135, %v4441
      %v4532 = vadd.f32 %v4136, %v4444
      %v4533 = vadd.f32 %v4137, %v4449
      %v4534 = vadd.f32 %v4138, %v4452
      %v4535 = vadd.f32 %v4139, %v4457
      %v4536 = vadd.f32 %v4140, %v4460
      %v4537 = vadd.f32 %v4141, %v4465
      %v4538 = vadd.f32 %v4142, %v4468
      %v4539 = vadd.f32 %v4143, %v4473
      %v4540 = vadd.f32 %v4144, %v4476
      %v4541 = vadd.f32 %v4145, %v4481
      %v4542 = vadd.f32 %v4146, %v4484
      %v4543 = vadd.f32 %v4147, %v4489
      %v4544 = vadd.f32 %v4148, %v4492
      %v4545 = vadd.f32 %v4149, %v4497
      %v4546 = vadd.f32 %v4150, %v4500
      %v4547 = vadd.f32 %v4151, %v4505
      %v4548 = vadd.f32 %v4152, %v4508
      %v4549 = vadd.f32 %v4153, %v4513
      %v4550 = vadd.f32 %v4154, %v4516
      %v4551 = vld [vmem:[#allocation2 + $0x10] sm:$0xf]
      %v4552 = vld [vmem:[#allocation2 + $0x14] sm:$0xf]
      %v4553 = vld [vmem:[#allocation2 + $0x18] sm:$0xf]
      %v4554 = vld [vmem:[#allocation2 + $0x1c] sm:$0xf]
      %v4555 = vld [vmem:[#allocation2 + $0x20] sm:$0xf]
      %v4556 = vld [vmem:[#allocation2 + $0x24] sm:$0xf]
      %v4557 = vld [vmem:[#allocation2 + $0x28] sm:$0xf]
      %v4558 = vld [vmem:[#allocation2 + $0x2c] sm:$0xf]
      %v4559 = vld [vmem:[#allocation2 + $0x30] sm:$0xf]
      %v4560 = vld [vmem:[#allocation2 + $0x34] sm:$0xf]
      %v4561 = vld [vmem:[#allocation2 + $0x38] sm:$0xf]
      %v4562 = vld [vmem:[#allocation2 + $0x3c] sm:$0xf]
      %v4563 = vld [vmem:[#allocation2 + $0x40] sm:$0xf]
      %v4564 = vld [vmem:[#allocation2 + $0x44] sm:$0xf]
      %v4565 = vld [vmem:[#allocation2 + $0x48] sm:$0xf]
      %v4566 = vld [vmem:[#allocation2 + $0x4c] sm:$0xf]
      %v4567 = vld [vmem:[#allocation2 + $0x50] sm:$0xf]
      %v4568 = vld [vmem:[#allocation2 + $0x54] sm:$0xf]
      %v4569 = vld [vmem:[#allocation2 + $0x58] sm:$0xf]
      %v4570 = vld [vmem:[#allocation2 + $0x5c] sm:$0xf]
      %v4571 = vld [vmem:[#allocation2 + $0x60] sm:$0xf]
      %v4572 = vld [vmem:[#allocation2 + $0x64] sm:$0xf]
      %v4573 = vld [vmem:[#allocation2 + $0x68] sm:$0xf]
      %v4574 = vld [vmem:[#allocation2 + $0x6c] sm:$0xf]
      %v4575 = vld [vmem:[#allocation2 + $0x70] sm:$0xf]
      %v4576 = vld [vmem:[#allocation2 + $0x74] sm:$0xf]
      %v4577 = vld [vmem:[#allocation2 + $0x78] sm:$0xf]
      %v4578 = vld [vmem:[#allocation2 + $0x7c] sm:$0xf]
      %v4579 = vld [vmem:[#allocation2 + $0x80] sm:$0xf]
      %v4580 = vld [vmem:[#allocation2 + $0x84] sm:$0xf]
      %v4581 = vld [vmem:[#allocation2 + $0x88] sm:$0xf]
      %v4582 = vld [vmem:[#allocation2 + $0x8c] sm:$0xf]
      %v4583 = vsel %vm1793, %v4551, 0
      %v4584 = vsel %vm1794, %v4552, 0
      %v4585 = vsel %vm1795, %v4553, 0
      %v4586 = vsel %vm1796, %v4554, 0
      %v4587 = vsel %vm1797, %v4555, 0
      %v4588 = vsel %vm1798, %v4556, 0
      %v4589 = vsel %vm1799, %v4557, 0
      %v4590 = vsel %vm1800, %v4558, 0
      %v4591 = vsel %vm1801, %v4559, 0
      %v4592 = vsel %vm1802, %v4560, 0
      %v4593 = vsel %vm1803, %v4561, 0
      %v4594 = vsel %vm1804, %v4562, 0
      %v4595 = vsel %vm1805, %v4563, 0
      %v4596 = vsel %vm1806, %v4564, 0
      %v4597 = vsel %vm1807, %v4565, 0
      %v4598 = vsel %vm1808, %v4566, 0
      %v4599 = vsel %vm1809, %v4567, 0
      %v4600 = vsel %vm1810, %v4568, 0
      %v4601 = vsel %vm1811, %v4569, 0
      %v4602 = vsel %vm1812, %v4570, 0
      %v4603 = vsel %vm1813, %v4571, 0
      %v4604 = vsel %vm1814, %v4572, 0
      %v4605 = vsel %vm1815, %v4573, 0
      %v4606 = vsel %vm1816, %v4574, 0
      %v4607 = vsel %vm1817, %v4575, 0
      %v4608 = vsel %vm1818, %v4576, 0
      %v4609 = vsel %vm1819, %v4577, 0
      %v4610 = vsel %vm1820, %v4578, 0
      %v4611 = vsel %vm1821, %v4579, 0
      %v4612 = vsel %vm1822, %v4580, 0
      %v4613 = vsel %vm1823, %v4581, 0
      %v4614 = vsel %vm1824, %v4582, 0
      %s4615 = scalar_lea.vmem %s5, 12
      %v4616 = vld [vmem:[%s4615] sm:$0x3]
      %v4649 = vunpack.c.l.b16 %v4583
      %v4650 = vunpack.c.l.b16 %v4584
      %v4651 = vunpack.c.l.b16 %v4585
      %v4652 = vunpack.c.l.b16 %v4586
      %v4653 = vunpack.c.l.b16 %v4587
      %v4654 = vunpack.c.l.b16 %v4588
      %v4655 = vunpack.c.l.b16 %v4589
      %v4656 = vunpack.c.l.b16 %v4590
      %v4657 = vunpack.c.l.b16 %v4591
      %v4658 = vunpack.c.l.b16 %v4592
      %v4659 = vunpack.c.l.b16 %v4593
      %v4660 = vunpack.c.l.b16 %v4594
      %v4661 = vunpack.c.l.b16 %v4595
      %v4662 = vunpack.c.l.b16 %v4596
      %v4663 = vunpack.c.l.b16 %v4597
      %v4664 = vunpack.c.l.b16 %v4598
      %v4665 = vunpack.c.l.b16 %v4599
      %v4666 = vunpack.c.l.b16 %v4600
      %v4667 = vunpack.c.l.b16 %v4601
      %v4668 = vunpack.c.l.b16 %v4602
      %v4669 = vunpack.c.l.b16 %v4603
      %v4670 = vunpack.c.l.b16 %v4604
      %v4671 = vunpack.c.l.b16 %v4605
      %v4672 = vunpack.c.l.b16 %v4606
      %v4673 = vunpack.c.l.b16 %v4607
      %v4674 = vunpack.c.l.b16 %v4608
      %v4675 = vunpack.c.l.b16 %v4609
      %v4676 = vunpack.c.l.b16 %v4610
      %v4677 = vunpack.c.l.b16 %v4611
      %v4678 = vunpack.c.l.b16 %v4612
      %v4679 = vunpack.c.l.b16 %v4613
      %v4680 = vunpack.c.l.b16 %v4614
      %v4681 = vpack.c.b16 %v4650, %v4649
      %v4682 = vpack.c.b16 %v4652, %v4651
      %v4683 = vpack.c.b16 %v4654, %v4653
      %v4684 = vpack.c.b16 %v4656, %v4655
      %v4685 = vpack.c.b16 %v4658, %v4657
      %v4686 = vpack.c.b16 %v4660, %v4659
      %v4687 = vpack.c.b16 %v4662, %v4661
      %v4688 = vpack.c.b16 %v4664, %v4663
      %v4689 = vpack.c.b16 %v4666, %v4665
      %v4690 = vpack.c.b16 %v4668, %v4667
      %v4691 = vpack.c.b16 %v4670, %v4669
      %v4692 = vpack.c.b16 %v4672, %v4671
      %v4693 = vpack.c.b16 %v4674, %v4673
      %v4694 = vpack.c.b16 %v4676, %v4675
      %v4695 = vpack.c.b16 %v4678, %v4677
      %v4696 = vpack.c.b16 %v4680, %v4679
      %v4698 = vsel %vm2077, %v4681, 0
      %v4701 = vsel %vm2077, %v4682, 0
      %v4704 = vsel %vm2077, %v4683, 0
      %v4707 = vsel %vm2077, %v4684, 0
      %v4710 = vsel %vm2077, %v4685, 0
      %v4713 = vsel %vm2077, %v4686, 0
      %v4716 = vsel %vm2077, %v4687, 0
      %v4719 = vsel %vm2077, %v4688, 0
      %v4722 = vsel %vm2077, %v4689, 0
      %v4725 = vsel %vm2077, %v4690, 0
      %v4728 = vsel %vm2077, %v4691, 0
      %v4731 = vsel %vm2077, %v4692, 0
      %v4734 = vsel %vm2077, %v4693, 0
      %v4737 = vsel %vm2077, %v4694, 0
      %v4740 = vsel %vm2077, %v4695, 0
      %v4743 = vsel %vm2077, %v4696, 0
      %v4746 = vsel %vm2126, %v4616, 0
      %4748 = vmatprep.subr.bf16.mxu0 0
      %4749 = vmatpush1.bf16.msra.mxu0 %v4746
      %4750 = vmatprep.subr.bf16.mxu0 0
      %4751 = vmatpush1.bf16.msra.mxu0 0
      %4752 = vmatprep.subr.bf16.mxu0 0
      %4753 = vmatpush1.bf16.msra.mxu0 0
      %4754 = vmatprep.subr.bf16.mxu0 0
      %4755 = vmatpush1.bf16.msra.mxu0 0
      %4756 = vmatprep.subr.bf16.mxu0 0
      %4757 = vmatpush1.bf16.msra.mxu0 0
      %4758 = vmatprep.subr.bf16.mxu0 0
      %4759 = vmatpush1.bf16.msra.mxu0 0
      %4760 = vmatprep.subr.bf16.mxu0 0
      %4761 = vmatpush1.bf16.msra.mxu0 0
      %4762 = vmatprep.subr.bf16.mxu0 0
      %4763 = vmatpush1.bf16.msra.mxu0 0
      %4764 = vmatprep.subr.bf16.mxu0 0
      %4765 = vmatpush1.bf16.msra.mxu0 0
      %4766 = vmatprep.subr.bf16.mxu0 0
      %4767 = vmatpush1.bf16.msra.mxu0 0
      %4768 = vmatprep.subr.bf16.mxu0 0
      %4769 = vmatpush1.bf16.msra.mxu0 0
      %4770 = vmatprep.subr.bf16.mxu0 0
      %4771 = vmatpush1.bf16.msra.mxu0 0
      %4772 = vmatprep.subr.bf16.mxu0 0
      %4773 = vmatpush1.bf16.msra.mxu0 0
      %4774 = vmatprep.subr.bf16.mxu0 0
      %4775 = vmatpush1.bf16.msra.mxu0 0
      %4776 = vmatprep.subr.bf16.mxu0 0
      %4777 = vmatpush1.bf16.msra.mxu0 0
      %4778 = vmatprep.subr.bf16.mxu0 0
      %4779 = vmatpush1.bf16.msra.mxu0 0
      %4780 = vmatprep.mubr.bf16.mxu0 0
      %4781 = vmatmul.mubr.bf16.gmra.mrb[0].mxu0 %v4698
      %v4782 = vpop.f32.mrb[0].mxu0
      %v4783 = vadd.f32 0.0, %v4782
      %v4784 = vpop.f32.mrb[0].mxu0
      %v4785 = vpop.f32.mrb[0].mxu0
      %v4786 = vadd.f32 0.0, %v4785
      %v4787 = vpop.f32.mrb[0].mxu0
      %4788 = vmatprep.mubr.bf16.mxu0 0
      %4789 = vmatmul.mubr.bf16.gmra.mrb[0].mxu0 %v4701
      %v4790 = vpop.f32.mrb[0].mxu0
      %v4791 = vadd.f32 0.0, %v4790
      %v4792 = vpop.f32.mrb[0].mxu0
      %v4793 = vpop.f32.mrb[0].mxu0
      %v4794 = vadd.f32 0.0, %v4793
      %v4795 = vpop.f32.mrb[0].mxu0
      %4796 = vmatprep.mubr.bf16.mxu0 0
      %4797 = vmatmul.mubr.bf16.gmra.mrb[0].mxu0 %v4704
      %v4798 = vpop.f32.mrb[0].mxu0
      %v4799 = vadd.f32 0.0, %v4798
      %v4800 = vpop.f32.mrb[0].mxu0
      %v4801 = vpop.f32.mrb[0].mxu0
      %v4802 = vadd.f32 0.0, %v4801
      %v4803 = vpop.f32.mrb[0].mxu0
      %4804 = vmatprep.mubr.bf16.mxu0 0
      %4805 = vmatmul.mubr.bf16.gmra.mrb[0].mxu0 %v4707
      %v4806 = vpop.f32.mrb[0].mxu0
      %v4807 = vadd.f32 0.0, %v4806
      %v4808 = vpop.f32.mrb[0].mxu0
      %v4809 = vpop.f32.mrb[0].mxu0
      %v4810 = vadd.f32 0.0, %v4809
      %v4811 = vpop.f32.mrb[0].mxu0
      %4812 = vmatprep.mubr.bf16.mxu0 0
      %4813 = vmatmul.mubr.bf16.gmra.mrb[0].mxu0 %v4710
      %v4814 = vpop.f32.mrb[0].mxu0
      %v4815 = vadd.f32 0.0, %v4814
      %v4816 = vpop.f32.mrb[0].mxu0
      %v4817 = vpop.f32.mrb[0].mxu0
      %v4818 = vadd.f32 0.0, %v4817
      %v4819 = vpop.f32.mrb[0].mxu0
      %4820 = vmatprep.mubr.bf16.mxu0 0
      %4821 = vmatmul.mubr.bf16.gmra.mrb[0].mxu0 %v4713
      %v4822 = vpop.f32.mrb[0].mxu0
      %v4823 = vadd.f32 0.0, %v4822
      %v4824 = vpop.f32.mrb[0].mxu0
      %v4825 = vpop.f32.mrb[0].mxu0
      %v4826 = vadd.f32 0.0, %v4825
      %v4827 = vpop.f32.mrb[0].mxu0
      %4828 = vmatprep.mubr.bf16.mxu0 0
      %4829 = vmatmul.mubr.bf16.gmra.mrb[0].mxu0 %v4716
      %v4830 = vpop.f32.mrb[0].mxu0
      %v4831 = vadd.f32 0.0, %v4830
      %v4832 = vpop.f32.mrb[0].mxu0
      %v4833 = vpop.f32.mrb[0].mxu0
      %v4834 = vadd.f32 0.0, %v4833
      %v4835 = vpop.f32.mrb[0].mxu0
      %4836 = vmatprep.mubr.bf16.mxu0 0
      %4837 = vmatmul.mubr.bf16.gmra.mrb[0].mxu0 %v4719
      %v4838 = vpop.f32.mrb[0].mxu0
      %v4839 = vadd.f32 0.0, %v4838
      %v4840 = vpop.f32.mrb[0].mxu0
      %v4841 = vpop.f32.mrb[0].mxu0
      %v4842 = vadd.f32 0.0, %v4841
      %v4843 = vpop.f32.mrb[0].mxu0
      %4844 = vmatprep.mubr.bf16.mxu0 0
      %4845 = vmatmul.mubr.bf16.gmra.mrb[0].mxu0 %v4722
      %v4846 = vpop.f32.mrb[0].mxu0
      %v4847 = vadd.f32 0.0, %v4846
      %v4848 = vpop.f32.mrb[0].mxu0
      %v4849 = vpop.f32.mrb[0].mxu0
      %v4850 = vadd.f32 0.0, %v4849
      %v4851 = vpop.f32.mrb[0].mxu0
      %4852 = vmatprep.mubr.bf16.mxu0 0
      %4853 = vmatmul.mubr.bf16.gmra.mrb[0].mxu0 %v4725
      %v4854 = vpop.f32.mrb[0].mxu0
      %v4855 = vadd.f32 0.0, %v4854
      %v4856 = vpop.f32.mrb[0].mxu0
      %v4857 = vpop.f32.mrb[0].mxu0
      %v4858 = vadd.f32 0.0, %v4857
      %v4859 = vpop.f32.mrb[0].mxu0
      %4860 = vmatprep.mubr.bf16.mxu0 0
      %4861 = vmatmul.mubr.bf16.gmra.mrb[0].mxu0 %v4728
      %v4862 = vpop.f32.mrb[0].mxu0
      %v4863 = vadd.f32 0.0, %v4862
      %v4864 = vpop.f32.mrb[0].mxu0
      %v4865 = vpop.f32.mrb[0].mxu0
      %v4866 = vadd.f32 0.0, %v4865
      %v4867 = vpop.f32.mrb[0].mxu0
      %4868 = vmatprep.mubr.bf16.mxu0 0
      %4869 = vmatmul.mubr.bf16.gmra.mrb[0].mxu0 %v4731
      %v4870 = vpop.f32.mrb[0].mxu0
      %v4871 = vadd.f32 0.0, %v4870
      %v4872 = vpop.f32.mrb[0].mxu0
      %v4873 = vpop.f32.mrb[0].mxu0
      %v4874 = vadd.f32 0.0, %v4873
      %v4875 = vpop.f32.mrb[0].mxu0
      %4876 = vmatprep.mubr.bf16.mxu0 0
      %4877 = vmatmul.mubr.bf16.gmra.mrb[0].mxu0 %v4734
      %v4878 = vpop.f32.mrb[0].mxu0
      %v4879 = vadd.f32 0.0, %v4878
      %v4880 = vpop.f32.mrb[0].mxu0
      %v4881 = vpop.f32.mrb[0].mxu0
      %v4882 = vadd.f32 0.0, %v4881
      %v4883 = vpop.f32.mrb[0].mxu0
      %4884 = vmatprep.mubr.bf16.mxu0 0
      %4885 = vmatmul.mubr.bf16.gmra.mrb[0].mxu0 %v4737
      %v4886 = vpop.f32.mrb[0].mxu0
      %v4887 = vadd.f32 0.0, %v4886
      %v4888 = vpop.f32.mrb[0].mxu0
      %v4889 = vpop.f32.mrb[0].mxu0
      %v4890 = vadd.f32 0.0, %v4889
      %v4891 = vpop.f32.mrb[0].mxu0
      %4892 = vmatprep.mubr.bf16.mxu0 0
      %4893 = vmatmul.mubr.bf16.gmra.mrb[0].mxu0 %v4740
      %v4894 = vpop.f32.mrb[0].mxu0
      %v4895 = vadd.f32 0.0, %v4894
      %v4896 = vpop.f32.mrb[0].mxu0
      %v4897 = vpop.f32.mrb[0].mxu0
      %v4898 = vadd.f32 0.0, %v4897
      %v4899 = vpop.f32.mrb[0].mxu0
      %4900 = vmatprep.mubr.bf16.mxu0 0
      %4901 = vmatmul.mubr.bf16.gmra.mrb[0].mxu0 %v4743
      %v4902 = vpop.f32.mrb[0].mxu0
      %v4903 = vadd.f32 0.0, %v4902
      %v4904 = vpop.f32.mrb[0].mxu0
      %v4905 = vpop.f32.mrb[0].mxu0
      %v4906 = vadd.f32 0.0, %v4905
      %v4907 = vpop.f32.mrb[0].mxu0
      %4908 = vdwg.mxu0
      %v4909 = vadd.f32 %v4519, %v4783
      %v4910 = vadd.f32 %v4520, %v4786
      %v4911 = vadd.f32 %v4521, %v4791
      %v4912 = vadd.f32 %v4522, %v4794
      %v4913 = vadd.f32 %v4523, %v4799
      %v4914 = vadd.f32 %v4524, %v4802
      %v4915 = vadd.f32 %v4525, %v4807
      %v4916 = vadd.f32 %v4526, %v4810
      %v4917 = vadd.f32 %v4527, %v4815
      %v4918 = vadd.f32 %v4528, %v4818
      %v4919 = vadd.f32 %v4529, %v4823
      %v4920 = vadd.f32 %v4530, %v4826
      %v4921 = vadd.f32 %v4531, %v4831
      %v4922 = vadd.f32 %v4532, %v4834
      %v4923 = vadd.f32 %v4533, %v4839
      %v4924 = vadd.f32 %v4534, %v4842
      %v4925 = vadd.f32 %v4535, %v4847
      %v4926 = vadd.f32 %v4536, %v4850
      %v4927 = vadd.f32 %v4537, %v4855
      %v4928 = vadd.f32 %v4538, %v4858
      %v4929 = vadd.f32 %v4539, %v4863
      %v4930 = vadd.f32 %v4540, %v4866
      %v4931 = vadd.f32 %v4541, %v4871
      %v4932 = vadd.f32 %v4542, %v4874
      %v4933 = vadd.f32 %v4543, %v4879
      %v4934 = vadd.f32 %v4544, %v4882
      %v4935 = vadd.f32 %v4545, %v4887
      %v4936 = vadd.f32 %v4546, %v4890
      %v4937 = vadd.f32 %v4547, %v4895
      %v4938 = vadd.f32 %v4548, %v4898
      %v4939 = vadd.f32 %v4549, %v4903
      %v4940 = vadd.f32 %v4550, %v4906
      %v4941 = vld [vmem:[#allocation2 + $0x10] sm:$0xf]
      %v4942 = vld [vmem:[#allocation2 + $0x14] sm:$0xf]
      %v4943 = vld [vmem:[#allocation2 + $0x18] sm:$0xf]
      %v4944 = vld [vmem:[#allocation2 + $0x1c] sm:$0xf]
      %v4945 = vld [vmem:[#allocation2 + $0x20] sm:$0xf]
      %v4946 = vld [vmem:[#allocation2 + $0x24] sm:$0xf]
      %v4947 = vld [vmem:[#allocation2 + $0x28] sm:$0xf]
      %v4948 = vld [vmem:[#allocation2 + $0x2c] sm:$0xf]
      %v4949 = vld [vmem:[#allocation2 + $0x30] sm:$0xf]
      %v4950 = vld [vmem:[#allocation2 + $0x34] sm:$0xf]
      %v4951 = vld [vmem:[#allocation2 + $0x38] sm:$0xf]
      %v4952 = vld [vmem:[#allocation2 + $0x3c] sm:$0xf]
      %v4953 = vld [vmem:[#allocation2 + $0x40] sm:$0xf]
      %v4954 = vld [vmem:[#allocation2 + $0x44] sm:$0xf]
      %v4955 = vld [vmem:[#allocation2 + $0x48] sm:$0xf]
      %v4956 = vld [vmem:[#allocation2 + $0x4c] sm:$0xf]
      %v4957 = vld [vmem:[#allocation2 + $0x50] sm:$0xf]
      %v4958 = vld [vmem:[#allocation2 + $0x54] sm:$0xf]
      %v4959 = vld [vmem:[#allocation2 + $0x58] sm:$0xf]
      %v4960 = vld [vmem:[#allocation2 + $0x5c] sm:$0xf]
      %v4961 = vld [vmem:[#allocation2 + $0x60] sm:$0xf]
      %v4962 = vld [vmem:[#allocation2 + $0x64] sm:$0xf]
      %v4963 = vld [vmem:[#allocation2 + $0x68] sm:$0xf]
      %v4964 = vld [vmem:[#allocation2 + $0x6c] sm:$0xf]
      %v4965 = vld [vmem:[#allocation2 + $0x70] sm:$0xf]
      %v4966 = vld [vmem:[#allocation2 + $0x74] sm:$0xf]
      %v4967 = vld [vmem:[#allocation2 + $0x78] sm:$0xf]
      %v4968 = vld [vmem:[#allocation2 + $0x7c] sm:$0xf]
      %v4969 = vld [vmem:[#allocation2 + $0x80] sm:$0xf]
      %v4970 = vld [vmem:[#allocation2 + $0x84] sm:$0xf]
      %v4971 = vld [vmem:[#allocation2 + $0x88] sm:$0xf]
      %v4972 = vld [vmem:[#allocation2 + $0x8c] sm:$0xf]
      %v4973 = vld [vmem:[#allocation2 + $0x90] sm:$0x1]
      %s4974 = scalar_lea.vmem %s5, 14
      %v4975 = vld [vmem:[%s4974] sm:$0x3]
      %v5009 = vunpack.c.l.b16 %v4941
      %v5010 = vunpack.c.l.b16 %v4942
      %v5011 = vunpack.c.l.b16 %v4943
      %v5012 = vunpack.c.l.b16 %v4944
      %v5013 = vunpack.c.l.b16 %v4945
      %v5014 = vunpack.c.l.b16 %v4946
      %v5015 = vunpack.c.l.b16 %v4947
      %v5016 = vunpack.c.l.b16 %v4948
      %v5017 = vunpack.c.l.b16 %v4949
      %v5018 = vunpack.c.l.b16 %v4950
      %v5019 = vunpack.c.l.b16 %v4951
      %v5020 = vunpack.c.l.b16 %v4952
      %v5021 = vunpack.c.l.b16 %v4953
      %v5022 = vunpack.c.l.b16 %v4954
      %v5023 = vunpack.c.l.b16 %v4955
      %v5024 = vunpack.c.l.b16 %v4956
      %v5025 = vunpack.c.l.b16 %v4957
      %v5026 = vunpack.c.l.b16 %v4958
      %v5027 = vunpack.c.l.b16 %v4959
      %v5028 = vunpack.c.l.b16 %v4960
      %v5029 = vunpack.c.l.b16 %v4961
      %v5030 = vunpack.c.l.b16 %v4962
      %v5031 = vunpack.c.l.b16 %v4963
      %v5032 = vunpack.c.l.b16 %v4964
      %v5033 = vunpack.c.l.b16 %v4965
      %v5034 = vunpack.c.l.b16 %v4966
      %v5035 = vunpack.c.l.b16 %v4967
      %v5036 = vunpack.c.l.b16 %v4968
      %v5037 = vunpack.c.l.b16 %v4969
      %v5038 = vunpack.c.l.b16 %v4970
      %v5039 = vunpack.c.l.b16 %v4971
      %v5040 = vunpack.c.l.b16 %v4972
      %v5041 = vunpack.c.l.b16 %v4973
      %v5042 = vpack.c.b16 %v5010, %v5009
      %v5043 = vpack.c.b16 %v5012, %v5011
      %v5044 = vpack.c.b16 %v5014, %v5013
      %v5045 = vpack.c.b16 %v5016, %v5015
      %v5046 = vpack.c.b16 %v5018, %v5017
      %v5047 = vpack.c.b16 %v5020, %v5019
      %v5048 = vpack.c.b16 %v5022, %v5021
      %v5049 = vpack.c.b16 %v5024, %v5023
      %v5050 = vpack.c.b16 %v5026, %v5025
      %v5051 = vpack.c.b16 %v5028, %v5027
      %v5052 = vpack.c.b16 %v5030, %v5029
      %v5053 = vpack.c.b16 %v5032, %v5031
      %v5054 = vpack.c.b16 %v5034, %v5033
      %v5055 = vpack.c.b16 %v5036, %v5035
      %v5056 = vpack.c.b16 %v5038, %v5037
      %v5057 = vpack.c.b16 %v5040, %v5039
      %v5058 = vpack.c.b16 %v5041, %v5041
      %v5060 = vshrl.u32 %v5042, 16
      %v5062 = vshll.u32 %v5042, 16
      %v5064 = vrot.slane %v5062, 1
      %v5065 = vor.u32 %v5060, %v5064
      %v5067 = vshll.u32 %v5043, 16
      %v5069 = vrot.slane %v5067, 1
      %v5070 = vsel %vm1944, %v5065, %v5069
      %v5071 = vshrl.u32 %v5043, 16
      %v5073 = vor.u32 %v5071, %v5069
      %v5075 = vshll.u32 %v5044, 16
      %v5077 = vrot.slane %v5075, 1
      %v5078 = vsel %vm1944, %v5073, %v5077
      %v5079 = vshrl.u32 %v5044, 16
      %v5081 = vor.u32 %v5079, %v5077
      %v5083 = vshll.u32 %v5045, 16
      %v5085 = vrot.slane %v5083, 1
      %v5086 = vsel %vm1944, %v5081, %v5085
      %v5087 = vshrl.u32 %v5045, 16
      %v5089 = vor.u32 %v5087, %v5085
      %v5091 = vshll.u32 %v5046, 16
      %v5093 = vrot.slane %v5091, 1
      %v5094 = vsel %vm1944, %v5089, %v5093
      %v5095 = vshrl.u32 %v5046, 16
      %v5097 = vor.u32 %v5095, %v5093
      %v5099 = vshll.u32 %v5047, 16
      %v5101 = vrot.slane %v5099, 1
      %v5102 = vsel %vm1944, %v5097, %v5101
      %v5103 = vshrl.u32 %v5047, 16
      %v5105 = vor.u32 %v5103, %v5101
      %v5107 = vshll.u32 %v5048, 16
      %v5109 = vrot.slane %v5107, 1
      %v5110 = vsel %vm1944, %v5105, %v5109
      %v5111 = vshrl.u32 %v5048, 16
      %v5113 = vor.u32 %v5111, %v5109
      %v5115 = vshll.u32 %v5049, 16
      %v5117 = vrot.slane %v5115, 1
      %v5118 = vsel %vm1944, %v5113, %v5117
      %v5119 = vshrl.u32 %v5049, 16
      %v5121 = vor.u32 %v5119, %v5117
      %v5123 = vshll.u32 %v5050, 16
      %v5125 = vrot.slane %v5123, 1
      %v5126 = vsel %vm1944, %v5121, %v5125
      %v5127 = vshrl.u32 %v5050, 16
      %v5129 = vor.u32 %v5127, %v5125
      %v5131 = vshll.u32 %v5051, 16
      %v5133 = vrot.slane %v5131, 1
      %v5134 = vsel %vm1944, %v5129, %v5133
      %v5135 = vshrl.u32 %v5051, 16
      %v5137 = vor.u32 %v5135, %v5133
      %v5139 = vshll.u32 %v5052, 16
      %v5141 = vrot.slane %v5139, 1
      %v5142 = vsel %vm1944, %v5137, %v5141
      %v5143 = vshrl.u32 %v5052, 16
      %v5145 = vor.u32 %v5143, %v5141
      %v5147 = vshll.u32 %v5053, 16
      %v5149 = vrot.slane %v5147, 1
      %v5150 = vsel %vm1944, %v5145, %v5149
      %v5151 = vshrl.u32 %v5053, 16
      %v5153 = vor.u32 %v5151, %v5149
      %v5155 = vshll.u32 %v5054, 16
      %v5157 = vrot.slane %v5155, 1
      %v5158 = vsel %vm1944, %v5153, %v5157
      %v5159 = vshrl.u32 %v5054, 16
      %v5161 = vor.u32 %v5159, %v5157
      %v5163 = vshll.u32 %v5055, 16
      %v5165 = vrot.slane %v5163, 1
      %v5166 = vsel %vm1944, %v5161, %v5165
      %v5167 = vshrl.u32 %v5055, 16
      %v5169 = vor.u32 %v5167, %v5165
      %v5171 = vshll.u32 %v5056, 16
      %v5173 = vrot.slane %v5171, 1
      %v5174 = vsel %vm1944, %v5169, %v5173
      %v5175 = vshrl.u32 %v5056, 16
      %v5177 = vor.u32 %v5175, %v5173
      %v5179 = vshll.u32 %v5057, 16
      %v5181 = vrot.slane %v5179, 1
      %v5182 = vsel %vm1944, %v5177, %v5181
      %v5183 = vshrl.u32 %v5057, 16
      %v5185 = vor.u32 %v5183, %v5181
      %v5187 = vshll.u32 %v5058, 16
      %v5189 = vrot.slane %v5187, 1
      %v5190 = vsel %vm1944, %v5185, %v5189
      %v5192 = vsel %vm2077, %v5070, 0
      %v5195 = vsel %vm2077, %v5078, 0
      %v5198 = vsel %vm2077, %v5086, 0
      %v5201 = vsel %vm2077, %v5094, 0
      %v5204 = vsel %vm2077, %v5102, 0
      %v5207 = vsel %vm2077, %v5110, 0
      %v5210 = vsel %vm2077, %v5118, 0
      %v5213 = vsel %vm2077, %v5126, 0
      %v5216 = vsel %vm2077, %v5134, 0
      %v5219 = vsel %vm2077, %v5142, 0
      %v5222 = vsel %vm2077, %v5150, 0
      %v5225 = vsel %vm2077, %v5158, 0
      %v5228 = vsel %vm2077, %v5166, 0
      %v5231 = vsel %vm2077, %v5174, 0
      %v5234 = vsel %vm2077, %v5182, 0
      %v5237 = vsel %vm2077, %v5190, 0
      %v5240 = vsel %vm2126, %v4975, 0
      %5242 = vmatprep.subr.bf16.mxu0 0
      %5243 = vmatpush1.bf16.msra.mxu0 %v5240
      %5244 = vmatprep.subr.bf16.mxu0 0
      %5245 = vmatpush1.bf16.msra.mxu0 0
      %5246 = vmatprep.subr.bf16.mxu0 0
      %5247 = vmatpush1.bf16.msra.mxu0 0
      %5248 = vmatprep.subr.bf16.mxu0 0
      %5249 = vmatpush1.bf16.msra.mxu0 0
      %5250 = vmatprep.subr.bf16.mxu0 0
      %5251 = vmatpush1.bf16.msra.mxu0 0
      %5252 = vmatprep.subr.bf16.mxu0 0
      %5253 = vmatpush1.bf16.msra.mxu0 0
      %5254 = vmatprep.subr.bf16.mxu0 0
      %5255 = vmatpush1.bf16.msra.mxu0 0
      %5256 = vmatprep.subr.bf16.mxu0 0
      %5257 = vmatpush1.bf16.msra.mxu0 0
      %5258 = vmatprep.subr.bf16.mxu0 0
      %5259 = vmatpush1.bf16.msra.mxu0 0
      %5260 = vmatprep.subr.bf16.mxu0 0
      %5261 = vmatpush1.bf16.msra.mxu0 0
      %5262 = vmatprep.subr.bf16.mxu0 0
      %5263 = vmatpush1.bf16.msra.mxu0 0
      %5264 = vmatprep.subr.bf16.mxu0 0
      %5265 = vmatpush1.bf16.msra.mxu0 0
      %5266 = vmatprep.subr.bf16.mxu0 0
      %5267 = vmatpush1.bf16.msra.mxu0 0
      %5268 = vmatprep.subr.bf16.mxu0 0
      %5269 = vmatpush1.bf16.msra.mxu0 0
      %5270 = vmatprep.subr.bf16.mxu0 0
      %5271 = vmatpush1.bf16.msra.mxu0 0
      %5272 = vmatprep.subr.bf16.mxu0 0
      %5273 = vmatpush1.bf16.msra.mxu0 0
      %5274 = vmatprep.mubr.bf16.mxu0 0
      %5275 = vmatmul.mubr.bf16.gmra.mrb[0].mxu0 %v5192
      %v5276 = vpop.f32.mrb[0].mxu0
      %v5277 = vadd.f32 0.0, %v5276
      %v5278 = vpop.f32.mrb[0].mxu0
      %v5279 = vpop.f32.mrb[0].mxu0
      %v5280 = vadd.f32 0.0, %v5279
      %v5281 = vpop.f32.mrb[0].mxu0
      %5282 = vmatprep.mubr.bf16.mxu0 0
      %5283 = vmatmul.mubr.bf16.gmra.mrb[0].mxu0 %v5195
      %v5284 = vpop.f32.mrb[0].mxu0
      %v5285 = vadd.f32 0.0, %v5284
      %v5286 = vpop.f32.mrb[0].mxu0
      %v5287 = vpop.f32.mrb[0].mxu0
      %v5288 = vadd.f32 0.0, %v5287
      %v5289 = vpop.f32.mrb[0].mxu0
      %5290 = vmatprep.mubr.bf16.mxu0 0
      %5291 = vmatmul.mubr.bf16.gmra.mrb[0].mxu0 %v5198
      %v5292 = vpop.f32.mrb[0].mxu0
      %v5293 = vadd.f32 0.0, %v5292
      %v5294 = vpop.f32.mrb[0].mxu0
      %v5295 = vpop.f32.mrb[0].mxu0
      %v5296 = vadd.f32 0.0, %v5295
      %v5297 = vpop.f32.mrb[0].mxu0
      %5298 = vmatprep.mubr.bf16.mxu0 0
      %5299 = vmatmul.mubr.bf16.gmra.mrb[0].mxu0 %v5201
      %v5300 = vpop.f32.mrb[0].mxu0
      %v5301 = vadd.f32 0.0, %v5300
      %v5302 = vpop.f32.mrb[0].mxu0
      %v5303 = vpop.f32.mrb[0].mxu0
      %v5304 = vadd.f32 0.0, %v5303
      %v5305 = vpop.f32.mrb[0].mxu0
      %5306 = vmatprep.mubr.bf16.mxu0 0
      %5307 = vmatmul.mubr.bf16.gmra.mrb[0].mxu0 %v5204
      %v5308 = vpop.f32.mrb[0].mxu0
      %v5309 = vadd.f32 0.0, %v5308
      %v5310 = vpop.f32.mrb[0].mxu0
      %v5311 = vpop.f32.mrb[0].mxu0
      %v5312 = vadd.f32 0.0, %v5311
      %v5313 = vpop.f32.mrb[0].mxu0
      %5314 = vmatprep.mubr.bf16.mxu0 0
      %5315 = vmatmul.mubr.bf16.gmra.mrb[0].mxu0 %v5207
      %v5316 = vpop.f32.mrb[0].mxu0
      %v5317 = vadd.f32 0.0, %v5316
      %v5318 = vpop.f32.mrb[0].mxu0
      %v5319 = vpop.f32.mrb[0].mxu0
      %v5320 = vadd.f32 0.0, %v5319
      %v5321 = vpop.f32.mrb[0].mxu0
      %5322 = vmatprep.mubr.bf16.mxu0 0
      %5323 = vmatmul.mubr.bf16.gmra.mrb[0].mxu0 %v5210
      %v5324 = vpop.f32.mrb[0].mxu0
      %v5325 = vadd.f32 0.0, %v5324
      %v5326 = vpop.f32.mrb[0].mxu0
      %v5327 = vpop.f32.mrb[0].mxu0
      %v5328 = vadd.f32 0.0, %v5327
      %v5329 = vpop.f32.mrb[0].mxu0
      %5330 = vmatprep.mubr.bf16.mxu0 0
      %5331 = vmatmul.mubr.bf16.gmra.mrb[0].mxu0 %v5213
      %v5332 = vpop.f32.mrb[0].mxu0
      %v5333 = vadd.f32 0.0, %v5332
      %v5334 = vpop.f32.mrb[0].mxu0
      %v5335 = vpop.f32.mrb[0].mxu0
      %v5336 = vadd.f32 0.0, %v5335
      %v5337 = vpop.f32.mrb[0].mxu0
      %5338 = vmatprep.mubr.bf16.mxu0 0
      %5339 = vmatmul.mubr.bf16.gmra.mrb[0].mxu0 %v5216
      %v5340 = vpop.f32.mrb[0].mxu0
      %v5341 = vadd.f32 0.0, %v5340
      %v5342 = vpop.f32.mrb[0].mxu0
      %v5343 = vpop.f32.mrb[0].mxu0
      %v5344 = vadd.f32 0.0, %v5343
      %v5345 = vpop.f32.mrb[0].mxu0
      %5346 = vmatprep.mubr.bf16.mxu0 0
      %5347 = vmatmul.mubr.bf16.gmra.mrb[0].mxu0 %v5219
      %v5348 = vpop.f32.mrb[0].mxu0
      %v5349 = vadd.f32 0.0, %v5348
      %v5350 = vpop.f32.mrb[0].mxu0
      %v5351 = vpop.f32.mrb[0].mxu0
      %v5352 = vadd.f32 0.0, %v5351
      %v5353 = vpop.f32.mrb[0].mxu0
      %5354 = vmatprep.mubr.bf16.mxu0 0
      %5355 = vmatmul.mubr.bf16.gmra.mrb[0].mxu0 %v5222
      %v5356 = vpop.f32.mrb[0].mxu0
      %v5357 = vadd.f32 0.0, %v5356
      %v5358 = vpop.f32.mrb[0].mxu0
      %v5359 = vpop.f32.mrb[0].mxu0
      %v5360 = vadd.f32 0.0, %v5359
      %v5361 = vpop.f32.mrb[0].mxu0
      %5362 = vmatprep.mubr.bf16.mxu0 0
      %5363 = vmatmul.mubr.bf16.gmra.mrb[0].mxu0 %v5225
      %v5364 = vpop.f32.mrb[0].mxu0
      %v5365 = vadd.f32 0.0, %v5364
      %v5366 = vpop.f32.mrb[0].mxu0
      %v5367 = vpop.f32.mrb[0].mxu0
      %v5368 = vadd.f32 0.0, %v5367
      %v5369 = vpop.f32.mrb[0].mxu0
      %5370 = vmatprep.mubr.bf16.mxu0 0
      %5371 = vmatmul.mubr.bf16.gmra.mrb[0].mxu0 %v5228
      %v5372 = vpop.f32.mrb[0].mxu0
      %v5373 = vadd.f32 0.0, %v5372
      %v5374 = vpop.f32.mrb[0].mxu0
      %v5375 = vpop.f32.mrb[0].mxu0
      %v5376 = vadd.f32 0.0, %v5375
      %v5377 = vpop.f32.mrb[0].mxu0
      %5378 = vmatprep.mubr.bf16.mxu0 0
      %5379 = vmatmul.mubr.bf16.gmra.mrb[0].mxu0 %v5231
      %v5380 = vpop.f32.mrb[0].mxu0
      %v5381 = vadd.f32 0.0, %v5380
      %v5382 = vpop.f32.mrb[0].mxu0
      %v5383 = vpop.f32.mrb[0].mxu0
      %v5384 = vadd.f32 0.0, %v5383
      %v5385 = vpop.f32.mrb[0].mxu0
      %5386 = vmatprep.mubr.bf16.mxu0 0
      %5387 = vmatmul.mubr.bf16.gmra.mrb[0].mxu0 %v5234
      %v5388 = vpop.f32.mrb[0].mxu0
      %v5389 = vadd.f32 0.0, %v5388
      %v5390 = vpop.f32.mrb[0].mxu0
      %v5391 = vpop.f32.mrb[0].mxu0
      %v5392 = vadd.f32 0.0, %v5391
      %v5393 = vpop.f32.mrb[0].mxu0
      %5394 = vmatprep.mubr.bf16.mxu0 0
      %5395 = vmatmul.mubr.bf16.gmra.mrb[0].mxu0 %v5237
      %v5396 = vpop.f32.mrb[0].mxu0
      %v5397 = vadd.f32 0.0, %v5396
      %v5398 = vpop.f32.mrb[0].mxu0
      %v5399 = vpop.f32.mrb[0].mxu0
      %v5400 = vadd.f32 0.0, %v5399
      %v5401 = vpop.f32.mrb[0].mxu0
      %5402 = vdwg.mxu0
      %v5403 = vadd.f32 %v4909, %v5277
      %v5404 = vadd.f32 %v4910, %v5280
      %v5405 = vadd.f32 %v4911, %v5285
      %v5406 = vadd.f32 %v4912, %v5288
      %v5407 = vadd.f32 %v4913, %v5293
      %v5408 = vadd.f32 %v4914, %v5296
      %v5409 = vadd.f32 %v4915, %v5301
      %v5410 = vadd.f32 %v4916, %v5304
      %v5411 = vadd.f32 %v4917, %v5309
      %v5412 = vadd.f32 %v4918, %v5312
      %v5413 = vadd.f32 %v4919, %v5317
      %v5414 = vadd.f32 %v4920, %v5320
      %v5415 = vadd.f32 %v4921, %v5325
      %v5416 = vadd.f32 %v4922, %v5328
      %v5417 = vadd.f32 %v4923, %v5333
      %v5418 = vadd.f32 %v4924, %v5336
      %v5419 = vadd.f32 %v4925, %v5341
      %v5420 = vadd.f32 %v4926, %v5344
      %v5421 = vadd.f32 %v4927, %v5349
      %v5422 = vadd.f32 %v4928, %v5352
      %v5423 = vadd.f32 %v4929, %v5357
      %v5424 = vadd.f32 %v4930, %v5360
      %v5425 = vadd.f32 %v4931, %v5365
      %v5426 = vadd.f32 %v4932, %v5368
      %v5427 = vadd.f32 %v4933, %v5373
      %v5428 = vadd.f32 %v4934, %v5376
      %v5429 = vadd.f32 %v4935, %v5381
      %v5430 = vadd.f32 %v4936, %v5384
      %v5431 = vadd.f32 %v4937, %v5389
      %v5432 = vadd.f32 %v4938, %v5392
      %v5433 = vadd.f32 %v4939, %v5397
      %v5434 = vadd.f32 %v4940, %v5400
      %v5435 = vld [vmem:[#allocation2 + $0x10] sm:$0xe]
      %v5436 = vsel %vm2842, %v5435, 0
      %v5437 = vsel %vm2843, %v4942, 0
      %v5438 = vsel %vm2844, %v4943, 0
      %v5439 = vsel %vm2845, %v4944, 0
      %v5440 = vsel %vm2846, %v4945, 0
      %v5441 = vsel %vm2847, %v4946, 0
      %v5442 = vsel %vm2848, %v4947, 0
      %v5443 = vsel %vm2849, %v4948, 0
      %v5444 = vsel %vm2850, %v4949, 0
      %v5445 = vsel %vm2851, %v4950, 0
      %v5446 = vsel %vm2852, %v4951, 0
      %v5447 = vsel %vm2853, %v4952, 0
      %v5448 = vsel %vm2854, %v4953, 0
      %v5449 = vsel %vm2855, %v4954, 0
      %v5450 = vsel %vm2856, %v4955, 0
      %v5451 = vsel %vm2857, %v4956, 0
      %v5452 = vsel %vm2858, %v4957, 0
      %v5453 = vsel %vm2859, %v4958, 0
      %v5454 = vsel %vm2860, %v4959, 0
      %v5455 = vsel %vm2861, %v4960, 0
      %v5456 = vsel %vm2862, %v4961, 0
      %v5457 = vsel %vm2863, %v4962, 0
      %v5458 = vsel %vm2864, %v4963, 0
      %v5459 = vsel %vm2865, %v4964, 0
      %v5460 = vsel %vm2866, %v4965, 0
      %v5461 = vsel %vm2867, %v4966, 0
      %v5462 = vsel %vm2868, %v4967, 0
      %v5463 = vsel %vm2869, %v4968, 0
      %v5464 = vsel %vm2870, %v4969, 0
      %v5465 = vsel %vm2871, %v4970, 0
      %v5466 = vsel %vm2872, %v4971, 0
      %v5467 = vsel %vm2873, %v4972, 0
      %v5468 = vsel %vm2874, %v4973, 0
      %s5469 = scalar_lea.vmem %s5, 16
      %v5470 = vld [vmem:[%s5469] sm:$0x3]
      %v5504 = vunpack.c.l.b16 %v5436
      %v5505 = vunpack.c.l.b16 %v5437
      %v5506 = vunpack.c.l.b16 %v5438
      %v5507 = vunpack.c.l.b16 %v5439
      %v5508 = vunpack.c.l.b16 %v5440
      %v5509 = vunpack.c.l.b16 %v5441
      %v5510 = vunpack.c.l.b16 %v5442
      %v5511 = vunpack.c.l.b16 %v5443
      %v5512 = vunpack.c.l.b16 %v5444
      %v5513 = vunpack.c.l.b16 %v5445
      %v5514 = vunpack.c.l.b16 %v5446
      %v5515 = vunpack.c.l.b16 %v5447
      %v5516 = vunpack.c.l.b16 %v5448
      %v5517 = vunpack.c.l.b16 %v5449
      %v5518 = vunpack.c.l.b16 %v5450
      %v5519 = vunpack.c.l.b16 %v5451
      %v5520 = vunpack.c.l.b16 %v5452
      %v5521 = vunpack.c.l.b16 %v5453
      %v5522 = vunpack.c.l.b16 %v5454
      %v5523 = vunpack.c.l.b16 %v5455
      %v5524 = vunpack.c.l.b16 %v5456
      %v5525 = vunpack.c.l.b16 %v5457
      %v5526 = vunpack.c.l.b16 %v5458
      %v5527 = vunpack.c.l.b16 %v5459
      %v5528 = vunpack.c.l.b16 %v5460
      %v5529 = vunpack.c.l.b16 %v5461
      %v5530 = vunpack.c.l.b16 %v5462
      %v5531 = vunpack.c.l.b16 %v5463
      %v5532 = vunpack.c.l.b16 %v5464
      %v5533 = vunpack.c.l.b16 %v5465
      %v5534 = vunpack.c.l.b16 %v5466
      %v5535 = vunpack.c.l.b16 %v5467
      %v5536 = vunpack.c.l.b16 %v5468
      %v5537 = vpack.c.b16 %v5505, %v5504
      %v5538 = vpack.c.b16 %v5507, %v5506
      %v5539 = vpack.c.b16 %v5509, %v5508
      %v5540 = vpack.c.b16 %v5511, %v5510
      %v5541 = vpack.c.b16 %v5513, %v5512
      %v5542 = vpack.c.b16 %v5515, %v5514
      %v5543 = vpack.c.b16 %v5517, %v5516
      %v5544 = vpack.c.b16 %v5519, %v5518
      %v5545 = vpack.c.b16 %v5521, %v5520
      %v5546 = vpack.c.b16 %v5523, %v5522
      %v5547 = vpack.c.b16 %v5525, %v5524
      %v5548 = vpack.c.b16 %v5527, %v5526
      %v5549 = vpack.c.b16 %v5529, %v5528
      %v5550 = vpack.c.b16 %v5531, %v5530
      %v5551 = vpack.c.b16 %v5533, %v5532
      %v5552 = vpack.c.b16 %v5535, %v5534
      %v5553 = vpack.c.b16 %v5536, %v5536
      %v5554 = vrot.slane %v5537, 1
      %v5555 = vrot.slane %v5538, 1
      %v5556 = vsel %vm2993, %v5554, %v5555
      %v5557 = vrot.slane %v5539, 1
      %v5558 = vsel %vm2993, %v5555, %v5557
      %v5559 = vrot.slane %v5540, 1
      %v5560 = vsel %vm2993, %v5557, %v5559
      %v5561 = vrot.slane %v5541, 1
      %v5562 = vsel %vm2993, %v5559, %v5561
      %v5563 = vrot.slane %v5542, 1
      %v5564 = vsel %vm2993, %v5561, %v5563
      %v5565 = vrot.slane %v5543, 1
      %v5566 = vsel %vm2993, %v5563, %v5565
      %v5567 = vrot.slane %v5544, 1
      %v5568 = vsel %vm2993, %v5565, %v5567
      %v5569 = vrot.slane %v5545, 1
      %v5570 = vsel %vm2993, %v5567, %v5569
      %v5571 = vrot.slane %v5546, 1
      %v5572 = vsel %vm2993, %v5569, %v5571
      %v5573 = vrot.slane %v5547, 1
      %v5574 = vsel %vm2993, %v5571, %v5573
      %v5575 = vrot.slane %v5548, 1
      %v5576 = vsel %vm2993, %v5573, %v5575
      %v5577 = vrot.slane %v5549, 1
      %v5578 = vsel %vm2993, %v5575, %v5577
      %v5579 = vrot.slane %v5550, 1
      %v5580 = vsel %vm2993, %v5577, %v5579
      %v5581 = vrot.slane %v5551, 1
      %v5582 = vsel %vm2993, %v5579, %v5581
      %v5583 = vrot.slane %v5552, 1
      %v5584 = vsel %vm2993, %v5581, %v5583
      %v5585 = vrot.slane %v5553, 1
      %v5586 = vsel %vm2993, %v5583, %v5585
      %v5588 = vsel %vm2077, %v5556, 0
      %v5591 = vsel %vm2077, %v5558, 0
      %v5594 = vsel %vm2077, %v5560, 0
      %v5597 = vsel %vm2077, %v5562, 0
      %v5600 = vsel %vm2077, %v5564, 0
      %v5603 = vsel %vm2077, %v5566, 0
      %v5606 = vsel %vm2077, %v5568, 0
      %v5609 = vsel %vm2077, %v5570, 0
      %v5612 = vsel %vm2077, %v5572, 0
      %v5615 = vsel %vm2077, %v5574, 0
      %v5618 = vsel %vm2077, %v5576, 0
      %v5621 = vsel %vm2077, %v5578, 0
      %v5624 = vsel %vm2077, %v5580, 0
      %v5627 = vsel %vm2077, %v5582, 0
      %v5630 = vsel %vm2077, %v5584, 0
      %v5633 = vsel %vm2077, %v5586, 0
      %v5636 = vsel %vm2126, %v5470, 0
      %5638 = vmatprep.subr.bf16.mxu0 0
      %5639 = vmatpush1.bf16.msra.mxu0 %v5636
      %5640 = vmatprep.subr.bf16.mxu0 0
      %5641 = vmatpush1.bf16.msra.mxu0 0
      %5642 = vmatprep.subr.bf16.mxu0 0
      %5643 = vmatpush1.bf16.msra.mxu0 0
      %5644 = vmatprep.subr.bf16.mxu0 0
      %5645 = vmatpush1.bf16.msra.mxu0 0
      %5646 = vmatprep.subr.bf16.mxu0 0
      %5647 = vmatpush1.bf16.msra.mxu0 0
      %5648 = vmatprep.subr.bf16.mxu0 0
      %5649 = vmatpush1.bf16.msra.mxu0 0
      %5650 = vmatprep.subr.bf16.mxu0 0
      %5651 = vmatpush1.bf16.msra.mxu0 0
      %5652 = vmatprep.subr.bf16.mxu0 0
      %5653 = vmatpush1.bf16.msra.mxu0 0
      %5654 = vmatprep.subr.bf16.mxu0 0
      %5655 = vmatpush1.bf16.msra.mxu0 0
      %5656 = vmatprep.subr.bf16.mxu0 0
      %5657 = vmatpush1.bf16.msra.mxu0 0
      %5658 = vmatprep.subr.bf16.mxu0 0
      %5659 = vmatpush1.bf16.msra.mxu0 0
      %5660 = vmatprep.subr.bf16.mxu0 0
      %5661 = vmatpush1.bf16.msra.mxu0 0
      %5662 = vmatprep.subr.bf16.mxu0 0
      %5663 = vmatpush1.bf16.msra.mxu0 0
      %5664 = vmatprep.subr.bf16.mxu0 0
      %5665 = vmatpush1.bf16.msra.mxu0 0
      %5666 = vmatprep.subr.bf16.mxu0 0
      %5667 = vmatpush1.bf16.msra.mxu0 0
      %5668 = vmatprep.subr.bf16.mxu0 0
      %5669 = vmatpush1.bf16.msra.mxu0 0
      %5670 = vmatprep.mubr.bf16.mxu0 0
      %5671 = vmatmul.mubr.bf16.gmra.mrb[0].mxu0 %v5588
      %v5672 = vpop.f32.mrb[0].mxu0
      %v5673 = vadd.f32 0.0, %v5672
      %v5674 = vpop.f32.mrb[0].mxu0
      %v5675 = vpop.f32.mrb[0].mxu0
      %v5676 = vadd.f32 0.0, %v5675
      %v5677 = vpop.f32.mrb[0].mxu0
      %5678 = vmatprep.mubr.bf16.mxu0 0
      %5679 = vmatmul.mubr.bf16.gmra.mrb[0].mxu0 %v5591
      %v5680 = vpop.f32.mrb[0].mxu0
      %v5681 = vadd.f32 0.0, %v5680
      %v5682 = vpop.f32.mrb[0].mxu0
      %v5683 = vpop.f32.mrb[0].mxu0
      %v5684 = vadd.f32 0.0, %v5683
      %v5685 = vpop.f32.mrb[0].mxu0
      %5686 = vmatprep.mubr.bf16.mxu0 0
      %5687 = vmatmul.mubr.bf16.gmra.mrb[0].mxu0 %v5594
      %v5688 = vpop.f32.mrb[0].mxu0
      %v5689 = vadd.f32 0.0, %v5688
      %v5690 = vpop.f32.mrb[0].mxu0
      %v5691 = vpop.f32.mrb[0].mxu0
      %v5692 = vadd.f32 0.0, %v5691
      %v5693 = vpop.f32.mrb[0].mxu0
      %5694 = vmatprep.mubr.bf16.mxu0 0
      %5695 = vmatmul.mubr.bf16.gmra.mrb[0].mxu0 %v5597
      %v5696 = vpop.f32.mrb[0].mxu0
      %v5697 = vadd.f32 0.0, %v5696
      %v5698 = vpop.f32.mrb[0].mxu0
      %v5699 = vpop.f32.mrb[0].mxu0
      %v5700 = vadd.f32 0.0, %v5699
      %v5701 = vpop.f32.mrb[0].mxu0
      %5702 = vmatprep.mubr.bf16.mxu0 0
      %5703 = vmatmul.mubr.bf16.gmra.mrb[0].mxu0 %v5600
      %v5704 = vpop.f32.mrb[0].mxu0
      %v5705 = vadd.f32 0.0, %v5704
      %v5706 = vpop.f32.mrb[0].mxu0
      %v5707 = vpop.f32.mrb[0].mxu0
      %v5708 = vadd.f32 0.0, %v5707
      %v5709 = vpop.f32.mrb[0].mxu0
      %5710 = vmatprep.mubr.bf16.mxu0 0
      %5711 = vmatmul.mubr.bf16.gmra.mrb[0].mxu0 %v5603
      %v5712 = vpop.f32.mrb[0].mxu0
      %v5713 = vadd.f32 0.0, %v5712
      %v5714 = vpop.f32.mrb[0].mxu0
      %v5715 = vpop.f32.mrb[0].mxu0
      %v5716 = vadd.f32 0.0, %v5715
      %v5717 = vpop.f32.mrb[0].mxu0
      %5718 = vmatprep.mubr.bf16.mxu0 0
      %5719 = vmatmul.mubr.bf16.gmra.mrb[0].mxu0 %v5606
      %v5720 = vpop.f32.mrb[0].mxu0
      %v5721 = vadd.f32 0.0, %v5720
      %v5722 = vpop.f32.mrb[0].mxu0
      %v5723 = vpop.f32.mrb[0].mxu0
      %v5724 = vadd.f32 0.0, %v5723
      %v5725 = vpop.f32.mrb[0].mxu0
      %5726 = vmatprep.mubr.bf16.mxu0 0
      %5727 = vmatmul.mubr.bf16.gmra.mrb[0].mxu0 %v5609
      %v5728 = vpop.f32.mrb[0].mxu0
      %v5729 = vadd.f32 0.0, %v5728
      %v5730 = vpop.f32.mrb[0].mxu0
      %v5731 = vpop.f32.mrb[0].mxu0
      %v5732 = vadd.f32 0.0, %v5731
      %v5733 = vpop.f32.mrb[0].mxu0
      %5734 = vmatprep.mubr.bf16.mxu0 0
      %5735 = vmatmul.mubr.bf16.gmra.mrb[0].mxu0 %v5612
      %v5736 = vpop.f32.mrb[0].mxu0
      %v5737 = vadd.f32 0.0, %v5736
      %v5738 = vpop.f32.mrb[0].mxu0
      %v5739 = vpop.f32.mrb[0].mxu0
      %v5740 = vadd.f32 0.0, %v5739
      %v5741 = vpop.f32.mrb[0].mxu0
      %5742 = vmatprep.mubr.bf16.mxu0 0
      %5743 = vmatmul.mubr.bf16.gmra.mrb[0].mxu0 %v5615
      %v5744 = vpop.f32.mrb[0].mxu0
      %v5745 = vadd.f32 0.0, %v5744
      %v5746 = vpop.f32.mrb[0].mxu0
      %v5747 = vpop.f32.mrb[0].mxu0
      %v5748 = vadd.f32 0.0, %v5747
      %v5749 = vpop.f32.mrb[0].mxu0
      %5750 = vmatprep.mubr.bf16.mxu0 0
      %5751 = vmatmul.mubr.bf16.gmra.mrb[0].mxu0 %v5618
      %v5752 = vpop.f32.mrb[0].mxu0
      %v5753 = vadd.f32 0.0, %v5752
      %v5754 = vpop.f32.mrb[0].mxu0
      %v5755 = vpop.f32.mrb[0].mxu0
      %v5756 = vadd.f32 0.0, %v5755
      %v5757 = vpop.f32.mrb[0].mxu0
      %5758 = vmatprep.mubr.bf16.mxu0 0
      %5759 = vmatmul.mubr.bf16.gmra.mrb[0].mxu0 %v5621
      %v5760 = vpop.f32.mrb[0].mxu0
      %v5761 = vadd.f32 0.0, %v5760
      %v5762 = vpop.f32.mrb[0].mxu0
      %v5763 = vpop.f32.mrb[0].mxu0
      %v5764 = vadd.f32 0.0, %v5763
      %v5765 = vpop.f32.mrb[0].mxu0
      %5766 = vmatprep.mubr.bf16.mxu0 0
      %5767 = vmatmul.mubr.bf16.gmra.mrb[0].mxu0 %v5624
      %v5768 = vpop.f32.mrb[0].mxu0
      %v5769 = vadd.f32 0.0, %v5768
      %v5770 = vpop.f32.mrb[0].mxu0
      %v5771 = vpop.f32.mrb[0].mxu0
      %v5772 = vadd.f32 0.0, %v5771
      %v5773 = vpop.f32.mrb[0].mxu0
      %5774 = vmatprep.mubr.bf16.mxu0 0
      %5775 = vmatmul.mubr.bf16.gmra.mrb[0].mxu0 %v5627
      %v5776 = vpop.f32.mrb[0].mxu0
      %v5777 = vadd.f32 0.0, %v5776
      %v5778 = vpop.f32.mrb[0].mxu0
      %v5779 = vpop.f32.mrb[0].mxu0
      %v5780 = vadd.f32 0.0, %v5779
      %v5781 = vpop.f32.mrb[0].mxu0
      %5782 = vmatprep.mubr.bf16.mxu0 0
      %5783 = vmatmul.mubr.bf16.gmra.mrb[0].mxu0 %v5630
      %v5784 = vpop.f32.mrb[0].mxu0
      %v5785 = vadd.f32 0.0, %v5784
      %v5786 = vpop.f32.mrb[0].mxu0
      %v5787 = vpop.f32.mrb[0].mxu0
      %v5788 = vadd.f32 0.0, %v5787
      %v5789 = vpop.f32.mrb[0].mxu0
      %5790 = vmatprep.mubr.bf16.mxu0 0
      %5791 = vmatmul.mubr.bf16.gmra.mrb[0].mxu0 %v5633
      %v5792 = vpop.f32.mrb[0].mxu0
      %v5793 = vadd.f32 0.0, %v5792
      %v5794 = vpop.f32.mrb[0].mxu0
      %v5795 = vpop.f32.mrb[0].mxu0
      %v5796 = vadd.f32 0.0, %v5795
      %v5797 = vpop.f32.mrb[0].mxu0
      %5798 = vdwg.mxu0
      %v5799 = vadd.f32 %v5403, %v5673
      %v5800 = vadd.f32 %v5404, %v5676
      %v5801 = vadd.f32 %v5405, %v5681
      %v5802 = vadd.f32 %v5406, %v5684
      %v5803 = vadd.f32 %v5407, %v5689
      %v5804 = vadd.f32 %v5408, %v5692
      %v5805 = vadd.f32 %v5409, %v5697
      %v5806 = vadd.f32 %v5410, %v5700
      %v5807 = vadd.f32 %v5411, %v5705
      %v5808 = vadd.f32 %v5412, %v5708
      %v5809 = vadd.f32 %v5413, %v5713
      %v5810 = vadd.f32 %v5414, %v5716
      %v5811 = vadd.f32 %v5415, %v5721
      %v5812 = vadd.f32 %v5416, %v5724
      %v5813 = vadd.f32 %v5417, %v5729
      %v5814 = vadd.f32 %v5418, %v5732
      %v5815 = vadd.f32 %v5419, %v5737
      %v5816 = vadd.f32 %v5420, %v5740
      %v5817 = vadd.f32 %v5421, %v5745
      %v5818 = vadd.f32 %v5422, %v5748
      %v5819 = vadd.f32 %v5423, %v5753
      %v5820 = vadd.f32 %v5424, %v5756
      %v5821 = vadd.f32 %v5425, %v5761
      %v5822 = vadd.f32 %v5426, %v5764
      %v5823 = vadd.f32 %v5427, %v5769
      %v5824 = vadd.f32 %v5428, %v5772
      %v5825 = vadd.f32 %v5429, %v5777
      %v5826 = vadd.f32 %v5430, %v5780
      %v5827 = vadd.f32 %v5431, %v5785
      %v5828 = vadd.f32 %v5432, %v5788
      %v5829 = vadd.f32 %v5433, %v5793
      %v5830 = vadd.f32 %v5434, %v5796
      %v5831 = vld [vmem:[%s6] sm:$0x1]
      %v5833 = vlaneseq
      %v5834 = vshrl.u32 %v5833, 7
      %v5835 = vsub.s32 0, %v5834
      %v5836 = vrot.slane %v5831, %v5835
      %v5838 = vadd.f32 %v5799, %v5836
      %v5839 = vadd.f32 %v5800, %v5836
      %v5840 = vadd.f32 %v5801, %v5836
      %v5841 = vadd.f32 %v5802, %v5836
      %v5842 = vadd.f32 %v5803, %v5836
      %v5843 = vadd.f32 %v5804, %v5836
      %v5844 = vadd.f32 %v5805, %v5836
      %v5845 = vadd.f32 %v5806, %v5836
      %v5846 = vadd.f32 %v5807, %v5836
      %v5847 = vadd.f32 %v5808, %v5836
      %v5848 = vadd.f32 %v5809, %v5836
      %v5849 = vadd.f32 %v5810, %v5836
      %v5850 = vadd.f32 %v5811, %v5836
      %v5851 = vadd.f32 %v5812, %v5836
      %v5852 = vadd.f32 %v5813, %v5836
      %v5853 = vadd.f32 %v5814, %v5836
      %v5854 = vadd.f32 %v5815, %v5836
      %v5855 = vadd.f32 %v5816, %v5836
      %v5856 = vadd.f32 %v5817, %v5836
      %v5857 = vadd.f32 %v5818, %v5836
      %v5858 = vadd.f32 %v5819, %v5836
      %v5859 = vadd.f32 %v5820, %v5836
      %v5860 = vadd.f32 %v5821, %v5836
      %v5861 = vadd.f32 %v5822, %v5836
      %v5862 = vadd.f32 %v5823, %v5836
      %v5863 = vadd.f32 %v5824, %v5836
      %v5864 = vadd.f32 %v5825, %v5836
      %v5865 = vadd.f32 %v5826, %v5836
      %v5866 = vadd.f32 %v5827, %v5836
      %v5867 = vadd.f32 %v5828, %v5836
      %v5868 = vadd.f32 %v5829, %v5836
      %v5869 = vadd.f32 %v5830, %v5836
      %v5870 = vmax.f32 %v5838, 0.0
      %v5871 = vmax.f32 %v5839, 0.0
      %v5872 = vmax.f32 %v5840, 0.0
      %v5873 = vmax.f32 %v5841, 0.0
      %v5874 = vmax.f32 %v5842, 0.0
      %v5875 = vmax.f32 %v5843, 0.0
      %v5876 = vmax.f32 %v5844, 0.0
      %v5877 = vmax.f32 %v5845, 0.0
      %v5878 = vmax.f32 %v5846, 0.0
      %v5879 = vmax.f32 %v5847, 0.0
      %v5880 = vmax.f32 %v5848, 0.0
      %v5881 = vmax.f32 %v5849, 0.0
      %v5882 = vmax.f32 %v5850, 0.0
      %v5883 = vmax.f32 %v5851, 0.0
      %v5884 = vmax.f32 %v5852, 0.0
      %v5885 = vmax.f32 %v5853, 0.0
      %v5886 = vmax.f32 %v5854, 0.0
      %v5887 = vmax.f32 %v5855, 0.0
      %v5888 = vmax.f32 %v5856, 0.0
      %v5889 = vmax.f32 %v5857, 0.0
      %v5890 = vmax.f32 %v5858, 0.0
      %v5891 = vmax.f32 %v5859, 0.0
      %v5892 = vmax.f32 %v5860, 0.0
      %v5893 = vmax.f32 %v5861, 0.0
      %v5894 = vmax.f32 %v5862, 0.0
      %v5895 = vmax.f32 %v5863, 0.0
      %v5896 = vmax.f32 %v5864, 0.0
      %v5897 = vmax.f32 %v5865, 0.0
      %v5898 = vmax.f32 %v5866, 0.0
      %v5899 = vmax.f32 %v5867, 0.0
      %v5900 = vmax.f32 %v5868, 0.0
      %v5901 = vmax.f32 %v5869, 0.0
      %v5902 = vpack.c.bf16 %v5871, %v5870
      %v5903 = vpack.c.bf16 %v5873, %v5872
      %v5904 = vpack.c.bf16 %v5875, %v5874
      %v5905 = vpack.c.bf16 %v5877, %v5876
      %v5906 = vpack.c.bf16 %v5879, %v5878
      %v5907 = vpack.c.bf16 %v5881, %v5880
      %v5908 = vpack.c.bf16 %v5883, %v5882
      %v5909 = vpack.c.bf16 %v5885, %v5884
      %v5910 = vpack.c.bf16 %v5887, %v5886
      %v5911 = vpack.c.bf16 %v5889, %v5888
      %v5912 = vpack.c.bf16 %v5891, %v5890
      %v5913 = vpack.c.bf16 %v5893, %v5892
      %v5914 = vpack.c.bf16 %v5895, %v5894
      %v5915 = vpack.c.bf16 %v5897, %v5896
      %v5916 = vpack.c.bf16 %v5899, %v5898
      %v5917 = vpack.c.bf16 %v5901, %v5900
      %v5918 = vld [vmem:[%s7] sm:$0x3]
      %v5919 = vld [vmem:[%s8] sm:$0x1]
      %v5921 = vlaneseq
      %v5922 = vshrl.u32 %v5921, 7
      %v5923 = vsub.s32 0, %v5922
      %v5924 = vrot.slane %v5919, %v5923
      %v5927 = vsel %vm2077, %v5902, 0
      %v5930 = vsel %vm2077, %v5903, 0
      %v5933 = vsel %vm2077, %v5904, 0
      %v5936 = vsel %vm2077, %v5905, 0
      %v5939 = vsel %vm2077, %v5906, 0
      %v5942 = vsel %vm2077, %v5907, 0
      %v5945 = vsel %vm2077, %v5908, 0
      %v5948 = vsel %vm2077, %v5909, 0
      %v5951 = vsel %vm2077, %v5910, 0
      %v5954 = vsel %vm2077, %v5911, 0
      %v5957 = vsel %vm2077, %v5912, 0
      %v5960 = vsel %vm2077, %v5913, 0
      %v5963 = vsel %vm2077, %v5914, 0
      %v5966 = vsel %vm2077, %v5915, 0
      %v5969 = vsel %vm2077, %v5916, 0
      %v5972 = vsel %vm2077, %v5917, 0
      %v5975 = vsel %vm2126, %v5918, 0
      %5977 = vmatprep.subr.bf16.mxu0 0
      %5978 = vmatpush1.bf16.msra.mxu0 %v5975
      %5979 = vmatprep.subr.bf16.mxu0 0
      %5980 = vmatpush1.bf16.msra.mxu0 0
      %5981 = vmatprep.subr.bf16.mxu0 0
      %5982 = vmatpush1.bf16.msra.mxu0 0
      %5983 = vmatprep.subr.bf16.mxu0 0
      %5984 = vmatpush1.bf16.msra.mxu0 0
      %5985 = vmatprep.subr.bf16.mxu0 0
      %5986 = vmatpush1.bf16.msra.mxu0 0
      %5987 = vmatprep.subr.bf16.mxu0 0
      %5988 = vmatpush1.bf16.msra.mxu0 0
      %5989 = vmatprep.subr.bf16.mxu0 0
      %5990 = vmatpush1.bf16.msra.mxu0 0
      %5991 = vmatprep.subr.bf16.mxu0 0
      %5992 = vmatpush1.bf16.msra.mxu0 0
      %5993 = vmatprep.subr.bf16.mxu0 0
      %5994 = vmatpush1.bf16.msra.mxu0 0
      %5995 = vmatprep.subr.bf16.mxu0 0
      %5996 = vmatpush1.bf16.msra.mxu0 0
      %5997 = vmatprep.subr.bf16.mxu0 0
      %5998 = vmatpush1.bf16.msra.mxu0 0
      %5999 = vmatprep.subr.bf16.mxu0 0
      %6000 = vmatpush1.bf16.msra.mxu0 0
      %6001 = vmatprep.subr.bf16.mxu0 0
      %6002 = vmatpush1.bf16.msra.mxu0 0
      %6003 = vmatprep.subr.bf16.mxu0 0
      %6004 = vmatpush1.bf16.msra.mxu0 0
      %6005 = vmatprep.subr.bf16.mxu0 0
      %6006 = vmatpush1.bf16.msra.mxu0 0
      %6007 = vmatprep.subr.bf16.mxu0 0
      %6008 = vmatpush1.bf16.msra.mxu0 0
      %6009 = vmatprep.mubr.bf16.mxu0 0
      %6010 = vmatmul.mubr.bf16.gmra.mrb[0].mxu0 %v5927
      %v6011 = vpop.f32.mrb[0].mxu0
      %v6012 = vadd.f32 %v5924, %v6011
      %v6013 = vpop.f32.mrb[0].mxu0
      %v6014 = vpop.f32.mrb[0].mxu0
      %v6015 = vadd.f32 %v5924, %v6014
      %v6016 = vpop.f32.mrb[0].mxu0
      %6017 = vmatprep.mubr.bf16.mxu0 0
      %6018 = vmatmul.mubr.bf16.gmra.mrb[0].mxu0 %v5930
      %v6019 = vpop.f32.mrb[0].mxu0
      %v6020 = vadd.f32 %v5924, %v6019
      %v6021 = vpop.f32.mrb[0].mxu0
      %v6022 = vpop.f32.mrb[0].mxu0
      %v6023 = vadd.f32 %v5924, %v6022
      %v6024 = vpop.f32.mrb[0].mxu0
      %6025 = vmatprep.mubr.bf16.mxu0 0
      %6026 = vmatmul.mubr.bf16.gmra.mrb[0].mxu0 %v5933
      %v6027 = vpop.f32.mrb[0].mxu0
      %v6028 = vadd.f32 %v5924, %v6027
      %v6029 = vpop.f32.mrb[0].mxu0
      %v6030 = vpop.f32.mrb[0].mxu0
      %v6031 = vadd.f32 %v5924, %v6030
      %v6032 = vpop.f32.mrb[0].mxu0
      %6033 = vmatprep.mubr.bf16.mxu0 0
      %6034 = vmatmul.mubr.bf16.gmra.mrb[0].mxu0 %v5936
      %v6035 = vpop.f32.mrb[0].mxu0
      %v6036 = vadd.f32 %v5924, %v6035
      %v6037 = vpop.f32.mrb[0].mxu0
      %v6038 = vpop.f32.mrb[0].mxu0
      %v6039 = vadd.f32 %v5924, %v6038
      %v6040 = vpop.f32.mrb[0].mxu0
      %6041 = vmatprep.mubr.bf16.mxu0 0
      %6042 = vmatmul.mubr.bf16.gmra.mrb[0].mxu0 %v5939
      %v6043 = vpop.f32.mrb[0].mxu0
      %v6044 = vadd.f32 %v5924, %v6043
      %v6045 = vpop.f32.mrb[0].mxu0
      %v6046 = vpop.f32.mrb[0].mxu0
      %v6047 = vadd.f32 %v5924, %v6046
      %v6048 = vpop.f32.mrb[0].mxu0
      %6049 = vmatprep.mubr.bf16.mxu0 0
      %6050 = vmatmul.mubr.bf16.gmra.mrb[0].mxu0 %v5942
      %v6051 = vpop.f32.mrb[0].mxu0
      %v6052 = vadd.f32 %v5924, %v6051
      %v6053 = vpop.f32.mrb[0].mxu0
      %v6054 = vpop.f32.mrb[0].mxu0
      %v6055 = vadd.f32 %v5924, %v6054
      %v6056 = vpop.f32.mrb[0].mxu0
      %6057 = vmatprep.mubr.bf16.mxu0 0
      %6058 = vmatmul.mubr.bf16.gmra.mrb[0].mxu0 %v5945
      %v6059 = vpop.f32.mrb[0].mxu0
      %v6060 = vadd.f32 %v5924, %v6059
      %v6061 = vpop.f32.mrb[0].mxu0
      %v6062 = vpop.f32.mrb[0].mxu0
      %v6063 = vadd.f32 %v5924, %v6062
      %v6064 = vpop.f32.mrb[0].mxu0
      %6065 = vmatprep.mubr.bf16.mxu0 0
      %6066 = vmatmul.mubr.bf16.gmra.mrb[0].mxu0 %v5948
      %v6067 = vpop.f32.mrb[0].mxu0
      %v6068 = vadd.f32 %v5924, %v6067
      %v6069 = vpop.f32.mrb[0].mxu0
      %v6070 = vpop.f32.mrb[0].mxu0
      %v6071 = vadd.f32 %v5924, %v6070
      %v6072 = vpop.f32.mrb[0].mxu0
      %6073 = vmatprep.mubr.bf16.mxu0 0
      %6074 = vmatmul.mubr.bf16.gmra.mrb[0].mxu0 %v5951
      %v6075 = vpop.f32.mrb[0].mxu0
      %v6076 = vadd.f32 %v5924, %v6075
      %v6077 = vpop.f32.mrb[0].mxu0
      %v6078 = vpop.f32.mrb[0].mxu0
      %v6079 = vadd.f32 %v5924, %v6078
      %v6080 = vpop.f32.mrb[0].mxu0
      %6081 = vmatprep.mubr.bf16.mxu0 0
      %6082 = vmatmul.mubr.bf16.gmra.mrb[0].mxu0 %v5954
      %v6083 = vpop.f32.mrb[0].mxu0
      %v6084 = vadd.f32 %v5924, %v6083
      %v6085 = vpop.f32.mrb[0].mxu0
      %v6086 = vpop.f32.mrb[0].mxu0
      %v6087 = vadd.f32 %v5924, %v6086
      %v6088 = vpop.f32.mrb[0].mxu0
      %6089 = vmatprep.mubr.bf16.mxu0 0
      %6090 = vmatmul.mubr.bf16.gmra.mrb[0].mxu0 %v5957
      %v6091 = vpop.f32.mrb[0].mxu0
      %v6092 = vadd.f32 %v5924, %v6091
      %v6093 = vpop.f32.mrb[0].mxu0
      %v6094 = vpop.f32.mrb[0].mxu0
      %v6095 = vadd.f32 %v5924, %v6094
      %v6096 = vpop.f32.mrb[0].mxu0
      %6097 = vmatprep.mubr.bf16.mxu0 0
      %6098 = vmatmul.mubr.bf16.gmra.mrb[0].mxu0 %v5960
      %v6099 = vpop.f32.mrb[0].mxu0
      %v6100 = vadd.f32 %v5924, %v6099
      %v6101 = vpop.f32.mrb[0].mxu0
      %v6102 = vpop.f32.mrb[0].mxu0
      %v6103 = vadd.f32 %v5924, %v6102
      %v6104 = vpop.f32.mrb[0].mxu0
      %6105 = vmatprep.mubr.bf16.mxu0 0
      %6106 = vmatmul.mubr.bf16.gmra.mrb[0].mxu0 %v5963
      %v6107 = vpop.f32.mrb[0].mxu0
      %v6108 = vadd.f32 %v5924, %v6107
      %v6109 = vpop.f32.mrb[0].mxu0
      %v6110 = vpop.f32.mrb[0].mxu0
      %v6111 = vadd.f32 %v5924, %v6110
      %v6112 = vpop.f32.mrb[0].mxu0
      %6113 = vmatprep.mubr.bf16.mxu0 0
      %6114 = vmatmul.mubr.bf16.gmra.mrb[0].mxu0 %v5966
      %v6115 = vpop.f32.mrb[0].mxu0
      %v6116 = vadd.f32 %v5924, %v6115
      %v6117 = vpop.f32.mrb[0].mxu0
      %v6118 = vpop.f32.mrb[0].mxu0
      %v6119 = vadd.f32 %v5924, %v6118
      %v6120 = vpop.f32.mrb[0].mxu0
      %6121 = vmatprep.mubr.bf16.mxu0 0
      %6122 = vmatmul.mubr.bf16.gmra.mrb[0].mxu0 %v5969
      %v6123 = vpop.f32.mrb[0].mxu0
      %v6124 = vadd.f32 %v5924, %v6123
      %v6125 = vpop.f32.mrb[0].mxu0
      %v6126 = vpop.f32.mrb[0].mxu0
      %v6127 = vadd.f32 %v5924, %v6126
      %v6128 = vpop.f32.mrb[0].mxu0
      %6129 = vmatprep.mubr.bf16.mxu0 0
      %6130 = vmatmul.mubr.bf16.gmra.mrb[0].mxu0 %v5972
      %v6131 = vpop.f32.mrb[0].mxu0
      %v6132 = vadd.f32 %v5924, %v6131
      %v6133 = vpop.f32.mrb[0].mxu0
      %v6134 = vpop.f32.mrb[0].mxu0
      %v6135 = vadd.f32 %v5924, %v6134
      %v6136 = vpop.f32.mrb[0].mxu0
      %6137 = vdwg.mxu0
      %v6138 = vadd.f32 %v6012, %v336
      %v6139 = vadd.f32 %v6015, %v337
      %v6140 = vadd.f32 %v6020, %v338
      %v6141 = vadd.f32 %v6023, %v339
      %v6142 = vadd.f32 %v6028, %v340
      %v6143 = vadd.f32 %v6031, %v341
      %v6144 = vadd.f32 %v6036, %v342
      %v6145 = vadd.f32 %v6039, %v343
      %v6146 = vadd.f32 %v6044, %v344
      %v6147 = vadd.f32 %v6047, %v345
      %v6148 = vadd.f32 %v6052, %v346
      %v6149 = vadd.f32 %v6055, %v347
      %v6150 = vadd.f32 %v6060, %v348
      %v6151 = vadd.f32 %v6063, %v349
      %v6152 = vadd.f32 %v6068, %v350
      %v6153 = vadd.f32 %v6071, %v351
      %v6154 = vadd.f32 %v6076, %v352
      %v6155 = vadd.f32 %v6079, %v353
      %v6156 = vadd.f32 %v6084, %v354
      %v6157 = vadd.f32 %v6087, %v355
      %v6158 = vadd.f32 %v6092, %v356
      %v6159 = vadd.f32 %v6095, %v357
      %v6160 = vadd.f32 %v6100, %v358
      %v6161 = vadd.f32 %v6103, %v359
      %v6162 = vadd.f32 %v6108, %v360
      %v6163 = vadd.f32 %v6111, %v361
      %v6164 = vadd.f32 %v6116, %v362
      %v6165 = vadd.f32 %v6119, %v363
      %v6166 = vadd.f32 %v6124, %v364
      %v6167 = vadd.f32 %v6127, %v365
      %v6168 = vadd.f32 %v6132, %v366
      %v6169 = vadd.f32 %v6135, %v367
      %6170 = vst.msk [vmem:[%s332] sm:$0xff] %vm502, %v6138
      %6171 = vst.msk [vmem:[%s332 + $0x8] sm:$0xff] %vm502, %v6139
      %6172 = vst.msk [vmem:[%s332 + $0x10] sm:$0xff] %vm502, %v6140
      %6173 = vst.msk [vmem:[%s332 + $0x18] sm:$0xff] %vm502, %v6141
      %6174 = vst.msk [vmem:[%s332 + $0x20] sm:$0xff] %vm502, %v6142
      %6175 = vst.msk [vmem:[%s332 + $0x28] sm:$0xff] %vm502, %v6143
      %6176 = vst.msk [vmem:[%s332 + $0x30] sm:$0xff] %vm502, %v6144
      %6177 = vst.msk [vmem:[%s332 + $0x38] sm:$0xff] %vm502, %v6145
      %6178 = vst.msk [vmem:[%s332 + $0x40] sm:$0xff] %vm502, %v6146
      %6179 = vst.msk [vmem:[%s332 + $0x48] sm:$0xff] %vm502, %v6147
      %6180 = vst.msk [vmem:[%s332 + $0x50] sm:$0xff] %vm502, %v6148
      %6181 = vst.msk [vmem:[%s332 + $0x58] sm:$0xff] %vm502, %v6149
      %6182 = vst.msk [vmem:[%s332 + $0x60] sm:$0xff] %vm502, %v6150
      %6183 = vst.msk [vmem:[%s332 + $0x68] sm:$0xff] %vm502, %v6151
      %6184 = vst.msk [vmem:[%s332 + $0x70] sm:$0xff] %vm502, %v6152
      %6185 = vst.msk [vmem:[%s332 + $0x78] sm:$0xff] %vm502, %v6153
      %6186 = vst.msk [vmem:[%s332 + $0x80] sm:$0xff] %vm502, %v6154
      %6187 = vst.msk [vmem:[%s332 + $0x88] sm:$0xff] %vm502, %v6155
      %6188 = vst.msk [vmem:[%s332 + $0x90] sm:$0xff] %vm502, %v6156
      %6189 = vst.msk [vmem:[%s332 + $0x98] sm:$0xff] %vm502, %v6157
      %6190 = vst.msk [vmem:[%s332 + $0xa0] sm:$0xff] %vm502, %v6158
      %6191 = vst.msk [vmem:[%s332 + $0xa8] sm:$0xff] %vm502, %v6159
      %6192 = vst.msk [vmem:[%s332 + $0xb0] sm:$0xff] %vm502, %v6160
      %6193 = vst.msk [vmem:[%s332 + $0xb8] sm:$0xff] %vm502, %v6161
      %6194 = vst.msk [vmem:[%s332 + $0xc0] sm:$0xff] %vm502, %v6162
      %6195 = vst.msk [vmem:[%s332 + $0xc8] sm:$0xff] %vm502, %v6163
      %6196 = vst.msk [vmem:[%s332 + $0xd0] sm:$0xff] %vm502, %v6164
      %6197 = vst.msk [vmem:[%s332 + $0xd8] sm:$0xff] %vm502, %v6165
      %6198 = vst.msk [vmem:[%s332 + $0xe0] sm:$0xff] %vm502, %v6166
      %6199 = vst.msk [vmem:[%s332 + $0xe8] sm:$0xff] %vm502, %v6167
      %6200 = vst.msk [vmem:[%s332 + $0xf0] sm:$0xff] %vm502, %v6168
      %6201 = vst.msk [vmem:[%s332 + $0xf8] sm:$0xff] %vm502, %v6169
      %p6202 = scmp.lt.s32.totalorder %s20, 1
      %s6203 = scalar_select %p6202, %s20, 1
      %s6204 = smul.addr %s6203, 32
      %s6205 = smul.addr %s6204, 8
      %s6206 = scalar_lea.vmem %s9, %s6205
      // Predicated region
      $region57: #{hourglass_forward.11} parent=55 // pred_check
        %p6207 = pneg %p232
      $region58: #{hourglass_forward.11} parent=55 // pred_check_branch
        %6209 = sbr.rel (%p6207) target = $region60
      $region59: #{hourglass_forward.11} parent=55 // pred_region
        _
      $region60: #{hourglass_forward.11} parent=55 // pred_fallthru
        _
    $region56: #{hourglass_forward.11} parent=5 // pred_fallthru
      _
    %p6210 = scmp.le.s32.totalorder 2, %s15
    // Predicated region
    $region61: #{hourglass_forward.11} parent=5 // pred_check
      %p6211 = pneg %p6210
    $region62: #{hourglass_forward.11} parent=5 // pred_check_branch
      %6213 = sbr.rel (%p6211) target = $region64
    $region63: #{hourglass_forward.11} parent=5 // pred_region
      %s6214 = ssub.s32 %s15, 2
      // Predicated region
      $region65: #{hourglass_forward.11} parent=63 // pred_check
        %p6215 = pneg %p238
      $region66: #{hourglass_forward.11} parent=63 // pred_check_branch
        %6217 = sbr.rel (%p6215) target = $region68
      $region67: #{hourglass_forward.11} parent=63 // pred_region
        %p6218 = scmp.lt.s32.totalorder %s21, 1
        %s6219 = scalar_select %p6218, %s21, 1
        %s6220 = smul.addr %s6219, 32
        %s6221 = smul.addr %s6220, 8
        %s6222 = scalar_lea.vmem %s9, %s6221
      $region68: #{hourglass_forward.11} parent=63 // pred_fallthru
        _
    $region64: #{hourglass_forward.11} parent=5 // pred_fallthru
      _
  $region6: #{hourglass_forward.11} parent=0 // loop_footer
    %s19 = sadd.s32 1, %s15
  $region7: #{hourglass_forward.11} parent=0 // loop_footer_branch
    %14 = sbr.rel target = $region3
  $region8: #{hourglass_forward.11} parent=0 // loop_exit
    _

</llo_original>
